<compile_context>
chip_gen: v7x
topology: tpu7x:2x2x1
jax: 0.10.0
libtpu: 0.0.40
codegen_flags: <defaults>
</compile_context>

<pallas_src>
import functools

import jax
import jax.numpy as jnp
from jax import lax
from jax.experimental import pallas as pl
from jax.experimental.pallas import tpu as pltpu

BN_EPS = 1e-5          # torch.nn.BatchNorm2d default
LRELU_SLOPE = 0.01     # torch.nn.LeakyReLU default
TILE_M = 512           # M (= N*Ho*Wo) tile, multiple of 128
VMEM_LIMIT = 32 * 1024 * 1024


def _round_up(x, m):
    return (x + m - 1) // m * m


# ----------------------------------------------------------------------------
# Pallas kernels
# ----------------------------------------------------------------------------
def _conv_bn_lrelu_kernel(x_ref, w_ref, g_ref, bt_ref, o_ref, sum_ref, ssq_ref,
                          *, m_true, tile_m):
    """Tiled over M.  o_ref is the full (C, M_pad) output, resident in VMEM.

    Per tile:   y = W @ x_tile (MXU, bf16 operands, f32 accumulate)
                accumulate per-channel sum / sumsq into scratch, stash y.
    Last tile:  mean/var over the true M, normalize + LeakyReLU whole output.
    (Conv bias is omitted: it cancels exactly under training-mode BatchNorm.)
    Zero-padded M columns contribute 0 to sum/sumsq, so stats stay exact.
    """
    m = pl.program_id(0)
    nm = pl.num_programs(0)

    @pl.when(m == 0)
    def _():
        sum_ref[...] = jnp.zeros_like(sum_ref)
        ssq_ref[...] = jnp.zeros_like(ssq_ref)

    y = jnp.dot(w_ref[...], x_ref[...], preferred_element_type=jnp.float32)
    sum_ref[...] += jnp.sum(y, axis=1, keepdims=True)
    ssq_ref[...] += jnp.sum(y * y, axis=1, keepdims=True)
    off = pl.multiple_of(m * tile_m, tile_m)
    o_ref[:, pl.ds(off, tile_m)] = y

    @pl.when(m == nm - 1)
    def _():
        inv_m = 1.0 / float(m_true)
        mean = sum_ref[...] * inv_m                      # (C, 1)
        var = ssq_ref[...] * inv_m - mean * mean         # biased, like torch fwd
        scale = g_ref[...] * lax.rsqrt(var + BN_EPS)
        shift = bt_ref[...] - mean * scale
        yf = o_ref[...] * scale + shift
        o_ref[...] = jnp.where(yf >= 0, yf, LRELU_SLOPE * yf)


def _conv_bias_act_kernel(x_ref, w_ref, b_ref, o_ref, *, activation):
    """Tiled over M, no BN: y = act(W @ x_tile + b), lane-dense (C, tile) store."""
    y = jnp.dot(w_ref[...], x_ref[...], preferred_element_type=jnp.float32)
    y = y + b_ref[...]
    if activation == "tanh":
        y = jnp.tanh(y)
    elif activation == "leaky_relu":
        y = jnp.where(y >= 0, y, LRELU_SLOPE * y)
    o_ref[...] = y


def _head_kernel(flat_ref, wmv_ref, bmv_ref, eps_ref, wd_ref, bd_ref,
                 mulv_ref, zd_ref, *, latent_dim):
    """fc_mu + fc_var (fused (2L, C) matmul) + reparameterize + decoder_input."""
    mulv = jnp.dot(wmv_ref[...], flat_ref[...],
                   preferred_element_type=jnp.float32) + bmv_ref[...]
    mulv_ref[...] = mulv
    mu = mulv[:latent_dim, :]
    lv = mulv[latent_dim:, :]
    z = eps_ref[...] * jnp.exp(0.5 * lv) + mu
    zd_ref[...] = jnp.dot(wd_ref[...], z.astype(wd_ref.dtype),
                          preferred_element_type=jnp.float32) + bd_ref[...]


# ----------------------------------------------------------------------------
# pallas_call wrappers
# ----------------------------------------------------------------------------
def _pad_m_axis(patches):
    """Pad (K, M) patches along M to a multiple of the tile (tile itself 128-mult)."""
    _, M = patches.shape
    tile = min(TILE_M, _round_up(M, 128))
    m_pad = _round_up(M, tile)
    if m_pad != M:
        patches = jnp.pad(patches, ((0, 0), (0, m_pad - M)))
    return patches, m_pad, tile


def _matmul_bn_lrelu(patches, w, gamma, beta, *, m_true):
    """patches (K, M) bf16, w (C, K) bf16 -> BN(LeakyReLU) output (C, M_pad) f32."""
    K, _ = patches.shape
    C = w.shape[0]
    patches, m_pad, tile = _pad_m_axis(patches)
    n_m = m_pad // tile
    g2 = gamma.reshape(C, 1).astype(jnp.float32)
    b2 = beta.reshape(C, 1).astype(jnp.float32)
    kernel = functools.partial(_conv_bn_lrelu_kernel, m_true=m_true, tile_m=tile)
    return pl.pallas_call(
        kernel,
        out_shape=jax.ShapeDtypeStruct((C, m_pad), jnp.float32),
        grid=(n_m,),
        in_specs=[
            pl.BlockSpec((K, tile), lambda m: (0, m)),   # patches tile (pipelined)
            pl.BlockSpec((C, K), lambda m: (0, 0)),      # weights (constant)
            pl.BlockSpec((C, 1), lambda m: (0, 0)),      # gamma
            pl.BlockSpec((C, 1), lambda m: (0, 0)),      # beta
        ],
        out_specs=pl.BlockSpec((C, m_pad), lambda m: (0, 0)),  # resident output
        scratch_shapes=[pltpu.VMEM((C, 1), jnp.float32),       # per-channel sum
                        pltpu.VMEM((C, 1), jnp.float32)],      # per-channel sumsq
        compiler_params=pltpu.CompilerParams(
            dimension_semantics=("arbitrary",),
            vmem_limit_bytes=VMEM_LIMIT),
    )(patches, w, g2, b2)


def _matmul_bias_act(patches, w, bias, *, activation):
    """patches (K, M) bf16, w (C, K) bf16, bias (C,) -> act(W@x + b) (C, M_pad) f32."""
    K, _ = patches.shape
    C = w.shape[0]
    patches, m_pad, tile = _pad_m_axis(patches)
    n_m = m_pad // tile
    b2 = bias.reshape(C, 1).astype(jnp.float32)
    kernel = functools.partial(_conv_bias_act_kernel, activation=activation)
    return pl.pallas_call(
        kernel,
        out_shape=jax.ShapeDtypeStruct((C, m_pad), jnp.float32),
        grid=(n_m,),
        in_specs=[
            pl.BlockSpec((K, tile), lambda m: (0, m)),
            pl.BlockSpec((C, K), lambda m: (0, 0)),
            pl.BlockSpec((C, 1), lambda m: (0, 0)),
        ],
        out_specs=pl.BlockSpec((C, tile), lambda m: (0, m)),
        compiler_params=pltpu.CompilerParams(
            dimension_semantics=("parallel",),
            vmem_limit_bytes=VMEM_LIMIT),
    )(patches, w, b2)


def _encode_head(flat, wmv, bmv, eps_t, wd, bd, latent_dim):
    """flat (C_last, N) -> (mu||logvar) (2L, N) and decoder_input output (L, N)."""
    c_last, n = flat.shape
    l2 = wmv.shape[0]
    kernel = functools.partial(_head_kernel, latent_dim=latent_dim)
    mulv, zd = pl.pallas_call(
        kernel,
        out_shape=(jax.ShapeDtypeStruct((l2, n), jnp.float32),
                   jax.ShapeDtypeStruct((latent_dim, n), jnp.float32)),
        grid=(1,),
        in_specs=[
            pl.BlockSpec((c_last, n), lambda i: (0, 0)),
            pl.BlockSpec((l2, c_last), lambda i: (0, 0)),
            pl.BlockSpec((l2, 1), lambda i: (0, 0)),
            pl.BlockSpec((latent_dim, n), lambda i: (0, 0)),
            pl.BlockSpec((latent_dim, latent_dim), lambda i: (0, 0)),
            pl.BlockSpec((latent_dim, 1), lambda i: (0, 0)),
        ],
        out_specs=(pl.BlockSpec((l2, n), lambda i: (0, 0)),
                   pl.BlockSpec((latent_dim, n), lambda i: (0, 0))),
        compiler_params=pltpu.CompilerParams(vmem_limit_bytes=VMEM_LIMIT),
    )(flat.astype(jnp.bfloat16), wmv.astype(jnp.bfloat16),
      bmv.reshape(l2, 1).astype(jnp.float32),
      eps_t.astype(jnp.float32),
      wd.astype(jnp.bfloat16), bd.reshape(latent_dim, 1).astype(jnp.float32))
    return mulv, zd


# ----------------------------------------------------------------------------
# Glue: im2col in (C, N, H, W) layout, conv / deconv wrappers (reshapes only)
# ----------------------------------------------------------------------------
def _im2col_cnhw(xc, k, stride, pad_lo, pad_hi):
    """xc: (C, N, H, W) -> (K=C*k*k, M=N*Ho*Wo); K order (C, kh, kw), M order (N, Ho, Wo)."""
    xp = jnp.pad(xc, ((0, 0), (0, 0), (pad_lo, pad_hi), (pad_lo, pad_hi)))
    C, N, Hp, Wp = xp.shape
    Ho = (Hp - k) // stride + 1
    Wo = (Wp - k) // stride + 1
    cols = []
    for kh in range(k):
        for kw in range(k):
            cols.append(xp[:, :,
                           kh:kh + stride * (Ho - 1) + 1:stride,
                           kw:kw + stride * (Wo - 1) + 1:stride])
    p = jnp.stack(cols, axis=1)                    # (C, k*k, N, Ho, Wo)
    return p.reshape(C * k * k, N * Ho * Wo), Ho, Wo


def conv_bn_lrelu(xc, W, gamma, beta, *, stride, pad):
    """Conv2d (W:(Cout,Cin,k,k), bias cancelled by BN) + BatchNorm + LeakyReLU."""
    Cout, Cin, k = W.shape[0], W.shape[1], W.shape[2]
    N = xc.shape[1]
    patches, Ho, Wo = _im2col_cnhw(xc.astype(jnp.bfloat16), k, stride, pad, pad)
    M = N * Ho * Wo
    out = _matmul_bn_lrelu(patches,
                           W.reshape(Cout, Cin * k * k).astype(jnp.bfloat16),
                           gamma, beta, m_true=M)
    return out[:, :M].reshape(Cout, N, Ho, Wo)


def deconv_bn_lrelu(xc, Wt, gamma, beta, *, stride, pad, out_pad):
    """ConvTranspose2d (Wt:(Cin,Cout,k,k), bias cancelled by BN) + BN + LeakyReLU.

    Lowered as: dilate input by stride, pad (k-1-p, k-1-p+out_pad), stride-1 conv
    with the spatially flipped / channel-transposed kernel.
    """
    Cin, Cout, k = Wt.shape[0], Wt.shape[1], Wt.shape[2]
    xb = xc.astype(jnp.bfloat16)
    C, N, H, Wd = xb.shape
    # TODO(synk): the stride-dilated input is ~75% zeros; an in-kernel
    # phase-decomposed gather would avoid the wasted DMA / MXU work.
    xd = jnp.zeros((C, N, (H - 1) * stride + 1, (Wd - 1) * stride + 1), xb.dtype)
    xd = xd.at[:, :, ::stride, ::stride].set(xb)
    w_conv = jnp.flip(Wt, axis=(-2, -1)).transpose(1, 0, 2, 3)   # (Cout, Cin, k, k)
    patches, Ho, Wo = _im2col_cnhw(xd, k, 1, k - 1 - pad, k - 1 - pad + out_pad)
    M = N * Ho * Wo
    out = _matmul_bn_lrelu(patches,
                           w_conv.reshape(Cout, Cin * k * k).astype(jnp.bfloat16),
                           gamma, beta, m_true=M)
    return out[:, :M].reshape(Cout, N, Ho, Wo)


def conv_bias_act(xc, W, b, *, stride, pad, activation):
    """Conv2d + bias + activation (no BN)."""
    Cout, Cin, k = W.shape[0], W.shape[1], W.shape[2]
    N = xc.shape[1]
    patches, Ho, Wo = _im2col_cnhw(xc.astype(jnp.bfloat16), k, stride, pad, pad)
    M = N * Ho * Wo
    out = _matmul_bias_act(patches,
                           W.reshape(Cout, Cin * k * k).astype(jnp.bfloat16),
                           b, activation=activation)
    return out[:, :M].reshape(Cout, N, Ho, Wo)


# ----------------------------------------------------------------------------
# Parameter construction (deterministic, synthetic)
# ----------------------------------------------------------------------------
def init_params(key, latent_dim, hidden_dims, in_channels, n_cls):
    keys = iter(jax.random.split(key, 64))

    def _w(shape, scale=0.05):
        return jax.random.normal(next(keys), shape, jnp.float32) * scale

    def conv_bn(cin, cout, k=3):
        # Conv bias omitted on purpose: it cancels exactly under training-mode BN.
        return {"w": _w((cout, cin, k, k)),
                "gamma": 1.0 + _w((cout,), 0.1),
                "beta": _w((cout,), 0.05)}

    def deconv_bn(cin, cout, k=3):
        return {"w": _w((cin, cout, k, k)),
                "gamma": 1.0 + _w((cout,), 0.1),
                "beta": _w((cout,), 0.05)}

    def lin(cin, cout):
        return {"w": _w((cout, cin)), "b": _w((cout,), 0.01)}

    p = {}
    h0 = hidden_dims[0]
    p["enc0_1"] = conv_bn(in_channels, h0 // 2)
    p["enc0_2"] = conv_bn(n_cls, h0 // 2)
    cin = h0
    for i, h in enumerate(hidden_dims[1:], start=1):
        p[f"enc{i}"] = conv_bn(cin, h)
        cin = h
    p["fc_mu"] = lin(hidden_dims[-1], latent_dim)
    p["fc_var"] = lin(hidden_dims[-1], latent_dim)
    p["decoder_input"] = lin(latent_dim, latent_dim)

    hd = list(reversed(hidden_dims))
    p["dec0_1"] = deconv_bn(latent_dim, hd[1] // 2)
    p["dec0_2"] = deconv_bn(n_cls, hd[1] // 2)
    for i in range(1, len(hd) - 1):
        p[f"dec{i}"] = deconv_bn(hd[i], hd[i + 1])
    p["final_deconv"] = deconv_bn(hd[-1], hd[-1])
    p["final_conv"] = {"w": _w((1, hd[-1], 3, 3)), "b": _w((1,), 0.01)}
    return p


# ----------------------------------------------------------------------------
# Conv_CVAE forward
# ----------------------------------------------------------------------------
def conv_cvae_forward(params, x, y_enc, y_dec, eps, *, latent_dim, hidden_dims):
    # NCHW -> internal (C, N, H, W) layout: after im2col, channels sit on the
    # sublane axis and N*H*W on the lane axis, so every Pallas output is
    # lane-dense and already channels-first (no per-layer transposes).
    xc = jnp.transpose(x, (1, 0, 2, 3))
    yec = jnp.transpose(y_enc, (1, 0, 2, 3))
    ydc = jnp.transpose(y_dec, (1, 0, 2, 3))
    N = x.shape[0]
    h0 = hidden_dims[0]

    # ---------------- encode ----------------
    # Merged CatConv: one conv over the channel-concatenated input with a
    # block-diagonal weight == torch.cat([conv1(x), conv2(y)], 1); BN is
    # per-channel, so the merge is exact.
    w1, w2 = params["enc0_1"]["w"], params["enc0_2"]["w"]
    cin1, cin2 = w1.shape[1], w2.shape[1]
    wc = jnp.zeros((h0, cin1 + cin2, 3, 3), jnp.float32)
    wc = wc.at[:h0 // 2, :cin1].set(w1).at[h0 // 2:, cin1:].set(w2)
    gc = jnp.concatenate([params["enc0_1"]["gamma"], params["enc0_2"]["gamma"]])
    bc = jnp.concatenate([params["enc0_1"]["beta"], params["enc0_2"]["beta"]])
    h = conv_bn_lrelu(jnp.concatenate([xc, yec], axis=0), wc, gc, bc,
                      stride=2, pad=1)
    for i in range(1, len(hidden_dims)):
        pi = params[f"enc{i}"]
        h = conv_bn_lrelu(h, pi["w"], pi["gamma"], pi["beta"], stride=2, pad=1)

    # torch.flatten(start_dim=1): feature order (C, H, W) per sample.
    flat = jnp.transpose(h, (0, 2, 3, 1)).reshape(-1, N)      # (C*H*W, N)

    # ---------------- fused head: fc_mu/fc_var + reparameterize + decoder_input
    wmv = jnp.concatenate([params["fc_mu"]["w"], params["fc_var"]["w"]], axis=0)
    bmv = jnp.concatenate([params["fc_mu"]["b"], params["fc_var"]["b"]])
    mulv, zd = _encode_head(flat, wmv, bmv, eps.T,
                            params["decoder_input"]["w"],
                            params["decoder_input"]["b"], latent_dim)
    mu = mulv[:latent_dim].T                                   # (N, L)
    log_var = mulv[latent_dim:].T

    # ---------------- decode ----------------
    hd = list(reversed(hidden_dims))
    zimg = zd.reshape(latent_dim, N, 1, 1)
    # Merged decoder CatConv via block-diagonal transposed-conv weights.
    wt1, wt2 = params["dec0_1"]["w"], params["dec0_2"]["w"]
    c1, c2 = wt1.shape[0], wt2.shape[0]
    co = hd[1] // 2
    wtc = jnp.zeros((c1 + c2, 2 * co, 3, 3), jnp.float32)
    wtc = wtc.at[:c1, :co].set(wt1).at[c1:, co:].set(wt2)
    gdc = jnp.concatenate([params["dec0_1"]["gamma"], params["dec0_2"]["gamma"]])
    bdc = jnp.concatenate([params["dec0_1"]["beta"], params["dec0_2"]["beta"]])
    d = deconv_bn_lrelu(jnp.concatenate([zimg, ydc], axis=0), wtc, gdc, bdc,
                        stride=2, pad=1, out_pad=1)
    for i in range(1, len(hd) - 1):
        out_pad = 0 if i == 2 else 1
        pi = params[f"dec{i}"]
        d = deconv_bn_lrelu(d, pi["w"], pi["gamma"], pi["beta"],
                            stride=2, pad=1, out_pad=out_pad)
    # final_layer: deconv + BN + LeakyReLU, then conv + bias + Tanh
    pf = params["final_deconv"]
    d = deconv_bn_lrelu(d, pf["w"], pf["gamma"], pf["beta"],
                        stride=2, pad=1, out_pad=1)
    rec = conv_bias_act(d, params["final_conv"]["w"], params["final_conv"]["b"],
                        stride=1, pad=1, activation="tanh")
    return jnp.transpose(rec, (1, 0, 2, 3)), mu, log_var


# ----------------------------------------------------------------------------
if __name__ == "__main__":
    latent_dim = 16
    hidden_dims = [8, 16, 32, 64, 128]   # same 5-stage architecture, narrower channels
    in_channels, n_cls = 1, 10
    B, H = 2, 28                          # 28x28 so the encoder bottleneck is 1x1

    key = jax.random.PRNGKey(0)
    kp, kx, ky1, ky2, keps = jax.random.split(key, 5)
    params = init_params(kp, latent_dim, hidden_dims, in_channels, n_cls)

    x = jax.random.normal(kx, (B, in_channels, H, H), jnp.float32)
    y_enc = jax.random.normal(ky1, (B, n_cls, H, H), jnp.float32)
    y_dec = jax.random.normal(ky2, (B, n_cls, 1, 1), jnp.float32)
    # TODO(synk): torch.randn_like inside reparameterize has no equivalent that
    # reproduces torch's RNG stream; eps is drawn in glue and fed to the kernel.
    eps = jax.random.normal(keps, (B, latent_dim), jnp.float32)

    fwd = jax.jit(functools.partial(conv_cvae_forward,
                                    latent_dim=latent_dim,
                                    hidden_dims=tuple(hidden_dims)))
    rec, mu, log_var = fwd(params, x, y_enc, y_dec, eps)
    jax.block_until_ready((rec, mu, log_var))

    assert rec.shape == (B, 1, H, H)
    assert mu.shape == (B, latent_dim) and log_var.shape == (B, latent_dim)
    assert bool(jnp.all(jnp.isfinite(rec)))
    assert bool(jnp.all(jnp.isfinite(mu))) and bool(jnp.all(jnp.isfinite(log_var)))
    print("KERNEL_OK")
</pallas_src>

<mosaic_0001>
module attributes {stable_mosaic.version = 11 : i64} {
  func.func @_conv_bn_lrelu_kernel(%arg0: i32, %arg1: memref<99x512xbf16, #tpu.memory_space<vmem>>, %arg2: memref<8x99xbf16, #tpu.memory_space<vmem>>, %arg3: memref<8x1xf32, #tpu.memory_space<vmem>>, %arg4: memref<8x1xf32, #tpu.memory_space<vmem>>, %arg5: memref<8x512xf32, #tpu.memory_space<vmem>>, %arg6: memref<8x1xf32, #tpu.memory_space<vmem>>, %arg7: memref<8x1xf32, #tpu.memory_space<vmem>>) attributes {dimension_semantics = [#tpu.dimension_semantics<arbitrary>], iteration_bounds = array<i64: 1>, scalar_prefetch = 0 : i64, scratch_operands = 2 : i64, tpu.core_type = #tpu.core_type<tc>, window_params = [{transform_indices = @transform_0, window_bounds = array<i64: 99, 512>}, {pipeline_mode = #tpu.pipeline_mode<synchronous>, transform_indices = @transform_1, window_bounds = array<i64: 8, 99>}, {pipeline_mode = #tpu.pipeline_mode<synchronous>, transform_indices = @transform_2, window_bounds = array<i64: 8, 1>}, {pipeline_mode = #tpu.pipeline_mode<synchronous>, transform_indices = @transform_3, window_bounds = array<i64: 8, 1>}, {pipeline_mode = #tpu.pipeline_mode<synchronous>, transform_indices = @transform_4, window_bounds = array<i64: 8, 512>}]} {
    %c0_i32 = arith.constant 0 : i32
    %0 = arith.cmpi eq, %arg0, %c0_i32 : i32
    %1 = arith.extui %0 : i1 to i32
    %c0_i32_0 = arith.constant 0 : i32
    %2 = arith.cmpi ne, %1, %c0_i32_0 : i32
    scf.if %2 {
      %cst_17 = arith.constant 0.000000e+00 : f32
      %24 = vector.broadcast %cst_17 : f32 to vector<8x1xf32>
      %c0_18 = arith.constant 0 : index
      %c0_19 = arith.constant 0 : index
      %25 = vector.load %arg6[%c0_18, %c0_19] : memref<8x1xf32, #tpu.memory_space<vmem>>, vector<8x1xf32>
      tpu.vector_store %arg6[%c0_18, %c0_19], %24 {strides = array<i32>} : memref<8x1xf32, #tpu.memory_space<vmem>>, vector<8x1xf32>,
      %cst_20 = arith.constant 0.000000e+00 : f32
      %26 = vector.broadcast %cst_20 : f32 to vector<8x1xf32>
      %c0_21 = arith.constant 0 : index
      %c0_22 = arith.constant 0 : index
      %27 = vector.load %arg7[%c0_21, %c0_22] : memref<8x1xf32, #tpu.memory_space<vmem>>, vector<8x1xf32>
      tpu.vector_store %arg7[%c0_21, %c0_22], %26 {strides = array<i32>} : memref<8x1xf32, #tpu.memory_space<vmem>>, vector<8x1xf32>,
    } else {
    }
    %c0 = arith.constant 0 : index
    %c0_1 = arith.constant 0 : index
    %3 = vector.load %arg2[%c0, %c0_1] : memref<8x99xbf16, #tpu.memory_space<vmem>>, vector<8x99xbf16>
    %c0_2 = arith.constant 0 : index
    %c0_3 = arith.constant 0 : index
    %4 = vector.load %arg1[%c0_2, %c0_3] : memref<99x512xbf16, #tpu.memory_space<vmem>>, vector<99x512xbf16>
    %cst = arith.constant dense<0.000000e+00> : vector<8x512xf32>
    %5 = tpu.matmul %3, %4, %cst {dimension_numbers = #tpu.dot_dimension_numbers<[1], [0], [0], [1], [0, 0, 1, 1], [], []>} : vector<8x99xbf16>, vector<99x512xbf16>, vector<8x512xf32> -> vector<8x512xf32>
    %c0_4 = arith.constant 0 : index
    %c0_5 = arith.constant 0 : index
    %6 = vector.load %arg6[%c0_4, %c0_5] : memref<8x1xf32, #tpu.memory_space<vmem>>, vector<8x1xf32>
    %cst_6 = arith.constant dense<0.000000e+00> : vector<8xf32>
    %7 = vector.multi_reduction <add>, %5, %cst_6 [1] : vector<8x512xf32> to vector<8xf32>
    %8 = vector.shape_cast %7 : vector<8xf32> to vector<8x1xf32>
    %9 = arith.addf %6, %8 : vector<8x1xf32>
    %c0_7 = arith.constant 0 : index
    %c0_8 = arith.constant 0 : index
    %10 = vector.load %arg6[%c0_7, %c0_8] : memref<8x1xf32, #tpu.memory_space<vmem>>, vector<8x1xf32>
    tpu.vector_store %arg6[%c0_7, %c0_8], %9 {strides = array<i32>} : memref<8x1xf32, #tpu.memory_space<vmem>>, vector<8x1xf32>,
    %c0_9 = arith.constant 0 : index
    %c0_10 = arith.constant 0 : index
    %11 = vector.load %arg7[%c0_9, %c0_10] : memref<8x1xf32, #tpu.memory_space<vmem>>, vector<8x1xf32>
    %12 = arith.mulf %5, %5 : vector<8x512xf32>
    %cst_11 = arith.constant dense<0.000000e+00> : vector<8xf32>
    %13 = vector.multi_reduction <add>, %12, %cst_11 [1] : vector<8x512xf32> to vector<8xf32>
    %14 = vector.shape_cast %13 : vector<8xf32> to vector<8x1xf32>
    %15 = arith.addf %11, %14 : vector<8x1xf32>
    %c0_12 = arith.constant 0 : index
    %c0_13 = arith.constant 0 : index
    %16 = vector.load %arg7[%c0_12, %c0_13] : memref<8x1xf32, #tpu.memory_space<vmem>>, vector<8x1xf32>
    tpu.vector_store %arg7[%c0_12, %c0_13], %15 {strides = array<i32>} : memref<8x1xf32, #tpu.memory_space<vmem>>, vector<8x1xf32>,
    %c512_i32 = arith.constant 512 : i32
    %17 = arith.muli %arg0, %c512_i32 : i32
    %18 = tpu.assume_multiple %17, 512 : i32
    %c0_14 = arith.constant 0 : index
    %19 = arith.index_cast %18 : i32 to index
    %20 = vector.load %arg5[%c0_14, %19] : memref<8x512xf32, #tpu.memory_space<vmem>>, vector<8x512xf32>
    tpu.vector_store %arg5[%c0_14, %19], %5 {strides = array<i32>} : memref<8x512xf32, #tpu.memory_space<vmem>>, vector<8x512xf32>,
    %c0_i32_15 = arith.constant 0 : i32
    %21 = arith.cmpi eq, %arg0, %c0_i32_15 : i32
    %22 = arith.extui %21 : i1 to i32
    %c0_i32_16 = arith.constant 0 : i32
    %23 = arith.cmpi ne, %22, %c0_i32_16 : i32
    scf.if %23 {
      %c0_17 = arith.constant 0 : index
      %c0_18 = arith.constant 0 : index
      %24 = vector.load %arg6[%c0_17, %c0_18] : memref<8x1xf32, #tpu.memory_space<vmem>>, vector<8x1xf32>
      %cst_19 = arith.constant 0.00255102036 : f32
      %25 = vector.broadcast %cst_19 : f32 to vector<8x1xf32>
      %26 = arith.mulf %24, %25 : vector<8x1xf32>
      %c0_20 = arith.constant 0 : index
      %c0_21 = arith.constant 0 : index
      %27 = vector.load %arg7[%c0_20, %c0_21] : memref<8x1xf32, #tpu.memory_space<vmem>>, vector<8x1xf32>
      %cst_22 = arith.constant 0.00255102036 : f32
      %28 = vector.broadcast %cst_22 : f32 to vector<8x1xf32>
      %29 = arith.mulf %27, %28 : vector<8x1xf32>
      %30 = arith.mulf %26, %26 : vector<8x1xf32>
      %31 = arith.subf %29, %30 : vector<8x1xf32>
      %c0_23 = arith.constant 0 : index
      %c0_24 = arith.constant 0 : index
      %32 = vector.load %arg3[%c0_23, %c0_24] : memref<8x1xf32, #tpu.memory_space<vmem>>, vector<8x1xf32>
      %cst_25 = arith.constant 9.99999974E-6 : f32
      %33 = vector.broadcast %cst_25 : f32 to vector<8x1xf32>
      %34 = arith.addf %31, %33 : vector<8x1xf32>
      %35 = math.rsqrt %34 : vector<8x1xf32>
      %36 = arith.mulf %32, %35 : vector<8x1xf32>
      %c0_26 = arith.constant 0 : index
      %c0_27 = arith.constant 0 : index
      %37 = vector.load %arg4[%c0_26, %c0_27] : memref<8x1xf32, #tpu.memory_space<vmem>>, vector<8x1xf32>
      %38 = arith.mulf %26, %36 : vector<8x1xf32>
      %39 = arith.subf %37, %38 : vector<8x1xf32>
      %c0_28 = arith.constant 0 : index
      %c0_29 = arith.constant 0 : index
      %40 = vector.load %arg5[%c0_28, %c0_29] : memref<8x512xf32, #tpu.memory_space<vmem>>, vector<8x512xf32>
      %41 = vector.broadcast %36 : vector<8x1xf32> to vector<8x512xf32>
      %42 = arith.mulf %40, %41 : vector<8x512xf32>
      %43 = vector.broadcast %39 : vector<8x1xf32> to vector<8x512xf32>
      %44 = arith.addf %42, %43 : vector<8x512xf32>
      %cst_30 = arith.constant 0.000000e+00 : f32
      %45 = vector.broadcast %cst_30 : f32 to vector<8x512xf32>
      %46 = arith.cmpf oge, %44, %45 : vector<8x512xf32>
      %cst_31 = arith.constant 0.00999999977 : f32
      %47 = vector.broadcast %cst_31 : f32 to vector<8x512xf32>
      %48 = arith.mulf %47, %44 : vector<8x512xf32>
      %49 = arith.select %46, %44, %48 : vector<8x512xi1>, vector<8x512xf32>
      %c0_32 = arith.constant 0 : index
      %c0_33 = arith.constant 0 : index
      %50 = vector.load %arg5[%c0_32, %c0_33] : memref<8x512xf32, #tpu.memory_space<vmem>>, vector<8x512xf32>
      tpu.vector_store %arg5[%c0_32, %c0_33], %49 {strides = array<i32>} : memref<8x512xf32, #tpu.memory_space<vmem>>, vector<8x512xf32>,
    } else {
    }
    return
  }
  func.func @transform_0(%arg0: i32) -> (i32, i32) {
    %c0_i32 = arith.constant 0 : i32
    %c0_i32_0 = arith.constant 0 : i32
    return %c0_i32, %arg0 : i32, i32
  }
  func.func @transform_1(%arg0: i32) -> (i32, i32) {
    %c0_i32 = arith.constant 0 : i32
    %c0_i32_0 = arith.constant 0 : i32
    %c0_i32_1 = arith.constant 0 : i32
    return %c0_i32, %c0_i32_0 : i32, i32
  }
  func.func @transform_2(%arg0: i32) -> (i32, i32) {
    %c0_i32 = arith.constant 0 : i32
    %c0_i32_0 = arith.constant 0 : i32
    %c0_i32_1 = arith.constant 0 : i32
    return %c0_i32, %c0_i32_0 : i32, i32
  }
  func.func @transform_3(%arg0: i32) -> (i32, i32) {
    %c0_i32 = arith.constant 0 : i32
    %c0_i32_0 = arith.constant 0 : i32
    %c0_i32_1 = arith.constant 0 : i32
    return %c0_i32, %c0_i32_0 : i32, i32
  }
  func.func @transform_4(%arg0: i32) -> (i32, i32) {
    %c0_i32 = arith.constant 0 : i32
    %c0_i32_0 = arith.constant 0 : i32
    %c0_i32_1 = arith.constant 0 : i32
    return %c0_i32, %c0_i32_0 : i32, i32
  }
}

module attributes {stable_mosaic.version = 11 : i64} {
  func.func @_conv_bn_lrelu_kernel(%arg0: i32, %arg1: memref<72x128xbf16, #tpu.memory_space<vmem>>, %arg2: memref<16x72xbf16, #tpu.memory_space<vmem>>, %arg3: memref<16x1xf32, #tpu.memory_space<vmem>>, %arg4: memref<16x1xf32, #tpu.memory_space<vmem>>, %arg5: memref<16x128xf32, #tpu.memory_space<vmem>>, %arg6: memref<16x1xf32, #tpu.memory_space<vmem>>, %arg7: memref<16x1xf32, #tpu.memory_space<vmem>>) attributes {dimension_semantics = [#tpu.dimension_semantics<arbitrary>], iteration_bounds = array<i64: 1>, scalar_prefetch = 0 : i64, scratch_operands = 2 : i64, tpu.core_type = #tpu.core_type<tc>, window_params = [{transform_indices = @transform_0, window_bounds = array<i64: 72, 128>}, {pipeline_mode = #tpu.pipeline_mode<synchronous>, transform_indices = @transform_1, window_bounds = array<i64: 16, 72>}, {pipeline_mode = #tpu.pipeline_mode<synchronous>, transform_indices = @transform_2, window_bounds = array<i64: 16, 1>}, {pipeline_mode = #tpu.pipeline_mode<synchronous>, transform_indices = @transform_3, window_bounds = array<i64: 16, 1>}, {pipeline_mode = #tpu.pipeline_mode<synchronous>, transform_indices = @transform_4, window_bounds = array<i64: 16, 128>}]} {
    %c0_i32 = arith.constant 0 : i32
    %0 = arith.cmpi eq, %arg0, %c0_i32 : i32
    %1 = arith.extui %0 : i1 to i32
    %c0_i32_0 = arith.constant 0 : i32
    %2 = arith.cmpi ne, %1, %c0_i32_0 : i32
    scf.if %2 {
      %cst_17 = arith.constant 0.000000e+00 : f32
      %24 = vector.broadcast %cst_17 : f32 to vector<16x1xf32>
      %c0_18 = arith.constant 0 : index
      %c0_19 = arith.constant 0 : index
      %25 = vector.load %arg6[%c0_18, %c0_19] : memref<16x1xf32, #tpu.memory_space<vmem>>, vector<16x1xf32>
      tpu.vector_store %arg6[%c0_18, %c0_19], %24 {strides = array<i32>} : memref<16x1xf32, #tpu.memory_space<vmem>>, vector<16x1xf32>,
      %cst_20 = arith.constant 0.000000e+00 : f32
      %26 = vector.broadcast %cst_20 : f32 to vector<16x1xf32>
      %c0_21 = arith.constant 0 : index
      %c0_22 = arith.constant 0 : index
      %27 = vector.load %arg7[%c0_21, %c0_22] : memref<16x1xf32, #tpu.memory_space<vmem>>, vector<16x1xf32>
      tpu.vector_store %arg7[%c0_21, %c0_22], %26 {strides = array<i32>} : memref<16x1xf32, #tpu.memory_space<vmem>>, vector<16x1xf32>,
    } else {
    }
    %c0 = arith.constant 0 : index
    %c0_1 = arith.constant 0 : index
    %3 = vector.load %arg2[%c0, %c0_1] : memref<16x72xbf16, #tpu.memory_space<vmem>>, vector<16x72xbf16>
    %c0_2 = arith.constant 0 : index
    %c0_3 = arith.constant 0 : index
    %4 = vector.load %arg1[%c0_2, %c0_3] : memref<72x128xbf16, #tpu.memory_space<vmem>>, vector<72x128xbf16>
    %cst = arith.constant dense<0.000000e+00> : vector<16x128xf32>
    %5 = tpu.matmul %3, %4, %cst {dimension_numbers = #tpu.dot_dimension_numbers<[1], [0], [0], [1], [0, 0, 1, 1], [], []>} : vector<16x72xbf16>, vector<72x128xbf16>, vector<16x128xf32> -> vector<16x128xf32>
    %c0_4 = arith.constant 0 : index
    %c0_5 = arith.constant 0 : index
    %6 = vector.load %arg6[%c0_4, %c0_5] : memref<16x1xf32, #tpu.memory_space<vmem>>, vector<16x1xf32>
    %cst_6 = arith.constant dense<0.000000e+00> : vector<16xf32>
    %7 = vector.multi_reduction <add>, %5, %cst_6 [1] : vector<16x128xf32> to vector<16xf32>
    %8 = vector.shape_cast %7 : vector<16xf32> to vector<16x1xf32>
    %9 = arith.addf %6, %8 : vector<16x1xf32>
    %c0_7 = arith.constant 0 : index
    %c0_8 = arith.constant 0 : index
    %10 = vector.load %arg6[%c0_7, %c0_8] : memref<16x1xf32, #tpu.memory_space<vmem>>, vector<16x1xf32>
    tpu.vector_store %arg6[%c0_7, %c0_8], %9 {strides = array<i32>} : memref<16x1xf32, #tpu.memory_space<vmem>>, vector<16x1xf32>,
    %c0_9 = arith.constant 0 : index
    %c0_10 = arith.constant 0 : index
    %11 = vector.load %arg7[%c0_9, %c0_10] : memref<16x1xf32, #tpu.memory_space<vmem>>, vector<16x1xf32>
    %12 = arith.mulf %5, %5 : vector<16x128xf32>
    %cst_11 = arith.constant dense<0.000000e+00> : vector<16xf32>
    %13 = vector.multi_reduction <add>, %12, %cst_11 [1] : vector<16x128xf32> to vector<16xf32>
    %14 = vector.shape_cast %13 : vector<16xf32> to vector<16x1xf32>
    %15 = arith.addf %11, %14 : vector<16x1xf32>
    %c0_12 = arith.constant 0 : index
    %c0_13 = arith.constant 0 : index
    %16 = vector.load %arg7[%c0_12, %c0_13] : memref<16x1xf32, #tpu.memory_space<vmem>>, vector<16x1xf32>
    tpu.vector_store %arg7[%c0_12, %c0_13], %15 {strides = array<i32>} : memref<16x1xf32, #tpu.memory_space<vmem>>, vector<16x1xf32>,
    %c128_i32 = arith.constant 128 : i32
    %17 = arith.muli %arg0, %c128_i32 : i32
    %18 = tpu.assume_multiple %17, 128 : i32
    %c0_14 = arith.constant 0 : index
    %19 = arith.index_cast %18 : i32 to index
    %20 = vector.load %arg5[%c0_14, %19] : memref<16x128xf32, #tpu.memory_space<vmem>>, vector<16x128xf32>
    tpu.vector_store %arg5[%c0_14, %19], %5 {strides = array<i32>} : memref<16x128xf32, #tpu.memory_space<vmem>>, vector<16x128xf32>,
    %c0_i32_15 = arith.constant 0 : i32
    %21 = arith.cmpi eq, %arg0, %c0_i32_15 : i32
    %22 = arith.extui %21 : i1 to i32
    %c0_i32_16 = arith.constant 0 : i32
    %23 = arith.cmpi ne, %22, %c0_i32_16 : i32
    scf.if %23 {
      %c0_17 = arith.constant 0 : index
      %c0_18 = arith.constant 0 : index
      %24 = vector.load %arg6[%c0_17, %c0_18] : memref<16x1xf32, #tpu.memory_space<vmem>>, vector<16x1xf32>
      %cst_19 = arith.constant 0.0102040814 : f32
      %25 = vector.broadcast %cst_19 : f32 to vector<16x1xf32>
      %26 = arith.mulf %24, %25 : vector<16x1xf32>
      %c0_20 = arith.constant 0 : index
      %c0_21 = arith.constant 0 : index
      %27 = vector.load %arg7[%c0_20, %c0_21] : memref<16x1xf32, #tpu.memory_space<vmem>>, vector<16x1xf32>
      %cst_22 = arith.constant 0.0102040814 : f32
      %28 = vector.broadcast %cst_22 : f32 to vector<16x1xf32>
      %29 = arith.mulf %27, %28 : vector<16x1xf32>
      %30 = arith.mulf %26, %26 : vector<16x1xf32>
      %31 = arith.subf %29, %30 : vector<16x1xf32>
      %c0_23 = arith.constant 0 : index
      %c0_24 = arith.constant 0 : index
      %32 = vector.load %arg3[%c0_23, %c0_24] : memref<16x1xf32, #tpu.memory_space<vmem>>, vector<16x1xf32>
      %cst_25 = arith.constant 9.99999974E-6 : f32
      %33 = vector.broadcast %cst_25 : f32 to vector<16x1xf32>
      %34 = arith.addf %31, %33 : vector<16x1xf32>
      %35 = math.rsqrt %34 : vector<16x1xf32>
      %36 = arith.mulf %32, %35 : vector<16x1xf32>
      %c0_26 = arith.constant 0 : index
      %c0_27 = arith.constant 0 : index
      %37 = vector.load %arg4[%c0_26, %c0_27] : memref<16x1xf32, #tpu.memory_space<vmem>>, vector<16x1xf32>
      %38 = arith.mulf %26, %36 : vector<16x1xf32>
      %39 = arith.subf %37, %38 : vector<16x1xf32>
      %c0_28 = arith.constant 0 : index
      %c0_29 = arith.constant 0 : index
      %40 = vector.load %arg5[%c0_28, %c0_29] : memref<16x128xf32, #tpu.memory_space<vmem>>, vector<16x128xf32>
      %41 = vector.broadcast %36 : vector<16x1xf32> to vector<16x128xf32>
      %42 = arith.mulf %40, %41 : vector<16x128xf32>
      %43 = vector.broadcast %39 : vector<16x1xf32> to vector<16x128xf32>
      %44 = arith.addf %42, %43 : vector<16x128xf32>
      %cst_30 = arith.constant 0.000000e+00 : f32
      %45 = vector.broadcast %cst_30 : f32 to vector<16x128xf32>
      %46 = arith.cmpf oge, %44, %45 : vector<16x128xf32>
      %cst_31 = arith.constant 0.00999999977 : f32
      %47 = vector.broadcast %cst_31 : f32 to vector<16x128xf32>
      %48 = arith.mulf %47, %44 : vector<16x128xf32>
      %49 = arith.select %46, %44, %48 : vector<16x128xi1>, vector<16x128xf32>
      %c0_32 = arith.constant 0 : index
      %c0_33 = arith.constant 0 : index
      %50 = vector.load %arg5[%c0_32, %c0_33] : memref<16x128xf32, #tpu.memory_space<vmem>>, vector<16x128xf32>
      tpu.vector_store %arg5[%c0_32, %c0_33], %49 {strides = array<i32>} : memref<16x128xf32, #tpu.memory_space<vmem>>, vector<16x128xf32>,
    } else {
    }
    return
  }
  func.func @transform_0(%arg0: i32) -> (i32, i32) {
    %c0_i32 = arith.constant 0 : i32
    %c0_i32_0 = arith.constant 0 : i32
    return %c0_i32, %arg0 : i32, i32
  }
  func.func @transform_1(%arg0: i32) -> (i32, i32) {
    %c0_i32 = arith.constant 0 : i32
    %c0_i32_0 = arith.constant 0 : i32
    %c0_i32_1 = arith.constant 0 : i32
    return %c0_i32, %c0_i32_0 : i32, i32
  }
  func.func @transform_2(%arg0: i32) -> (i32, i32) {
    %c0_i32 = arith.constant 0 : i32
    %c0_i32_0 = arith.constant 0 : i32
    %c0_i32_1 = arith.constant 0 : i32
    return %c0_i32, %c0_i32_0 : i32, i32
  }
  func.func @transform_3(%arg0: i32) -> (i32, i32) {
    %c0_i32 = arith.constant 0 : i32
    %c0_i32_0 = arith.constant 0 : i32
    %c0_i32_1 = arith.constant 0 : i32
    return %c0_i32, %c0_i32_0 : i32, i32
  }
  func.func @transform_4(%arg0: i32) -> (i32, i32) {
    %c0_i32 = arith.constant 0 : i32
    %c0_i32_0 = arith.constant 0 : i32
    %c0_i32_1 = arith.constant 0 : i32
    return %c0_i32, %c0_i32_0 : i32, i32
  }
}

module attributes {stable_mosaic.version = 11 : i64} {
  func.func @_conv_bn_lrelu_kernel(%arg0: i32, %arg1: memref<144x128xbf16, #tpu.memory_space<vmem>>, %arg2: memref<32x144xbf16, #tpu.memory_space<vmem>>, %arg3: memref<32x1xf32, #tpu.memory_space<vmem>>, %arg4: memref<32x1xf32, #tpu.memory_space<vmem>>, %arg5: memref<32x128xf32, #tpu.memory_space<vmem>>, %arg6: memref<32x1xf32, #tpu.memory_space<vmem>>, %arg7: memref<32x1xf32, #tpu.memory_space<vmem>>) attributes {dimension_semantics = [#tpu.dimension_semantics<arbitrary>], iteration_bounds = array<i64: 1>, scalar_prefetch = 0 : i64, scratch_operands = 2 : i64, tpu.core_type = #tpu.core_type<tc>, window_params = [{transform_indices = @transform_0, window_bounds = array<i64: 144, 128>}, {pipeline_mode = #tpu.pipeline_mode<synchronous>, transform_indices = @transform_1, window_bounds = array<i64: 32, 144>}, {pipeline_mode = #tpu.pipeline_mode<synchronous>, transform_indices = @transform_2, window_bounds = array<i64: 32, 1>}, {pipeline_mode = #tpu.pipeline_mode<synchronous>, transform_indices = @transform_3, window_bounds = array<i64: 32, 1>}, {pipeline_mode = #tpu.pipeline_mode<synchronous>, transform_indices = @transform_4, window_bounds = array<i64: 32, 128>}]} {
    %c0_i32 = arith.constant 0 : i32
    %0 = arith.cmpi eq, %arg0, %c0_i32 : i32
    %1 = arith.extui %0 : i1 to i32
    %c0_i32_0 = arith.constant 0 : i32
    %2 = arith.cmpi ne, %1, %c0_i32_0 : i32
    scf.if %2 {
      %cst_17 = arith.constant 0.000000e+00 : f32
      %24 = vector.broadcast %cst_17 : f32 to vector<32x1xf32>
      %c0_18 = arith.constant 0 : index
      %c0_19 = arith.constant 0 : index
      %25 = vector.load %arg6[%c0_18, %c0_19] : memref<32x1xf32, #tpu.memory_space<vmem>>, vector<32x1xf32>
      tpu.vector_store %arg6[%c0_18, %c0_19], %24 {strides = array<i32>} : memref<32x1xf32, #tpu.memory_space<vmem>>, vector<32x1xf32>,
      %cst_20 = arith.constant 0.000000e+00 : f32
      %26 = vector.broadcast %cst_20 : f32 to vector<32x1xf32>
      %c0_21 = arith.constant 0 : index
      %c0_22 = arith.constant 0 : index
      %27 = vector.load %arg7[%c0_21, %c0_22] : memref<32x1xf32, #tpu.memory_space<vmem>>, vector<32x1xf32>
      tpu.vector_store %arg7[%c0_21, %c0_22], %26 {strides = array<i32>} : memref<32x1xf32, #tpu.memory_space<vmem>>, vector<32x1xf32>,
    } else {
    }
    %c0 = arith.constant 0 : index
    %c0_1 = arith.constant 0 : index
    %3 = vector.load %arg2[%c0, %c0_1] : memref<32x144xbf16, #tpu.memory_space<vmem>>, vector<32x144xbf16>
    %c0_2 = arith.constant 0 : index
    %c0_3 = arith.constant 0 : index
    %4 = vector.load %arg1[%c0_2, %c0_3] : memref<144x128xbf16, #tpu.memory_space<vmem>>, vector<144x128xbf16>
    %cst = arith.constant dense<0.000000e+00> : vector<32x128xf32>
    %5 = tpu.matmul %3, %4, %cst {dimension_numbers = #tpu.dot_dimension_numbers<[1], [0], [0], [1], [0, 0, 1, 1], [], []>} : vector<32x144xbf16>, vector<144x128xbf16>, vector<32x128xf32> -> vector<32x128xf32>
    %c0_4 = arith.constant 0 : index
    %c0_5 = arith.constant 0 : index
    %6 = vector.load %arg6[%c0_4, %c0_5] : memref<32x1xf32, #tpu.memory_space<vmem>>, vector<32x1xf32>
    %cst_6 = arith.constant dense<0.000000e+00> : vector<32xf32>
    %7 = vector.multi_reduction <add>, %5, %cst_6 [1] : vector<32x128xf32> to vector<32xf32>
    %8 = vector.shape_cast %7 : vector<32xf32> to vector<32x1xf32>
    %9 = arith.addf %6, %8 : vector<32x1xf32>
    %c0_7 = arith.constant 0 : index
    %c0_8 = arith.constant 0 : index
    %10 = vector.load %arg6[%c0_7, %c0_8] : memref<32x1xf32, #tpu.memory_space<vmem>>, vector<32x1xf32>
    tpu.vector_store %arg6[%c0_7, %c0_8], %9 {strides = array<i32>} : memref<32x1xf32, #tpu.memory_space<vmem>>, vector<32x1xf32>,
    %c0_9 = arith.constant 0 : index
    %c0_10 = arith.constant 0 : index
    %11 = vector.load %arg7[%c0_9, %c0_10] : memref<32x1xf32, #tpu.memory_space<vmem>>, vector<32x1xf32>
    %12 = arith.mulf %5, %5 : vector<32x128xf32>
    %cst_11 = arith.constant dense<0.000000e+00> : vector<32xf32>
    %13 = vector.multi_reduction <add>, %12, %cst_11 [1] : vector<32x128xf32> to vector<32xf32>
    %14 = vector.shape_cast %13 : vector<32xf32> to vector<32x1xf32>
    %15 = arith.addf %11, %14 : vector<32x1xf32>
    %c0_12 = arith.constant 0 : index
    %c0_13 = arith.constant 0 : index
    %16 = vector.load %arg7[%c0_12, %c0_13] : memref<32x1xf32, #tpu.memory_space<vmem>>, vector<32x1xf32>
    tpu.vector_store %arg7[%c0_12, %c0_13], %15 {strides = array<i32>} : memref<32x1xf32, #tpu.memory_space<vmem>>, vector<32x1xf32>,
    %c128_i32 = arith.constant 128 : i32
    %17 = arith.muli %arg0, %c128_i32 : i32
    %18 = tpu.assume_multiple %17, 128 : i32
    %c0_14 = arith.constant 0 : index
    %19 = arith.index_cast %18 : i32 to index
    %20 = vector.load %arg5[%c0_14, %19] : memref<32x128xf32, #tpu.memory_space<vmem>>, vector<32x128xf32>
    tpu.vector_store %arg5[%c0_14, %19], %5 {strides = array<i32>} : memref<32x128xf32, #tpu.memory_space<vmem>>, vector<32x128xf32>,
    %c0_i32_15 = arith.constant 0 : i32
    %21 = arith.cmpi eq, %arg0, %c0_i32_15 : i32
    %22 = arith.extui %21 : i1 to i32
    %c0_i32_16 = arith.constant 0 : i32
    %23 = arith.cmpi ne, %22, %c0_i32_16 : i32
    scf.if %23 {
      %c0_17 = arith.constant 0 : index
      %c0_18 = arith.constant 0 : index
      %24 = vector.load %arg6[%c0_17, %c0_18] : memref<32x1xf32, #tpu.memory_space<vmem>>, vector<32x1xf32>
      %cst_19 = arith.constant 3.125000e-02 : f32
      %25 = vector.broadcast %cst_19 : f32 to vector<32x1xf32>
      %26 = arith.mulf %24, %25 : vector<32x1xf32>
      %c0_20 = arith.constant 0 : index
      %c0_21 = arith.constant 0 : index
      %27 = vector.load %arg7[%c0_20, %c0_21] : memref<32x1xf32, #tpu.memory_space<vmem>>, vector<32x1xf32>
      %cst_22 = arith.constant 3.125000e-02 : f32
      %28 = vector.broadcast %cst_22 : f32 to vector<32x1xf32>
      %29 = arith.mulf %27, %28 : vector<32x1xf32>
      %30 = arith.mulf %26, %26 : vector<32x1xf32>
      %31 = arith.subf %29, %30 : vector<32x1xf32>
      %c0_23 = arith.constant 0 : index
      %c0_24 = arith.constant 0 : index
      %32 = vector.load %arg3[%c0_23, %c0_24] : memref<32x1xf32, #tpu.memory_space<vmem>>, vector<32x1xf32>
      %cst_25 = arith.constant 9.99999974E-6 : f32
      %33 = vector.broadcast %cst_25 : f32 to vector<32x1xf32>
      %34 = arith.addf %31, %33 : vector<32x1xf32>
      %35 = math.rsqrt %34 : vector<32x1xf32>
      %36 = arith.mulf %32, %35 : vector<32x1xf32>
      %c0_26 = arith.constant 0 : index
      %c0_27 = arith.constant 0 : index
      %37 = vector.load %arg4[%c0_26, %c0_27] : memref<32x1xf32, #tpu.memory_space<vmem>>, vector<32x1xf32>
      %38 = arith.mulf %26, %36 : vector<32x1xf32>
      %39 = arith.subf %37, %38 : vector<32x1xf32>
      %c0_28 = arith.constant 0 : index
      %c0_29 = arith.constant 0 : index
      %40 = vector.load %arg5[%c0_28, %c0_29] : memref<32x128xf32, #tpu.memory_space<vmem>>, vector<32x128xf32>
      %41 = vector.broadcast %36 : vector<32x1xf32> to vector<32x128xf32>
      %42 = arith.mulf %40, %41 : vector<32x128xf32>
      %43 = vector.broadcast %39 : vector<32x1xf32> to vector<32x128xf32>
      %44 = arith.addf %42, %43 : vector<32x128xf32>
      %cst_30 = arith.constant 0.000000e+00 : f32
      %45 = vector.broadcast %cst_30 : f32 to vector<32x128xf32>
      %46 = arith.cmpf oge, %44, %45 : vector<32x128xf32>
      %cst_31 = arith.constant 0.00999999977 : f32
      %47 = vector.broadcast %cst_31 : f32 to vector<32x128xf32>
      %48 = arith.mulf %47, %44 : vector<32x128xf32>
      %49 = arith.select %46, %44, %48 : vector<32x128xi1>, vector<32x128xf32>
      %c0_32 = arith.constant 0 : index
      %c0_33 = arith.constant 0 : index
      %50 = vector.load %arg5[%c0_32, %c0_33] : memref<32x128xf32, #tpu.memory_space<vmem>>, vector<32x128xf32>
      tpu.vector_store %arg5[%c0_32, %c0_33], %49 {strides = array<i32>} : memref<32x128xf32, #tpu.memory_space<vmem>>, vector<32x128xf32>,
    } else {
    }
    return
  }
  func.func @transform_0(%arg0: i32) -> (i32, i32) {
    %c0_i32 = arith.constant 0 : i32
    %c0_i32_0 = arith.constant 0 : i32
    return %c0_i32, %arg0 : i32, i32
  }
  func.func @transform_1(%arg0: i32) -> (i32, i32) {
    %c0_i32 = arith.constant 0 : i32
    %c0_i32_0 = arith.constant 0 : i32
    %c0_i32_1 = arith.constant 0 : i32
    return %c0_i32, %c0_i32_0 : i32, i32
  }
  func.func @transform_2(%arg0: i32) -> (i32, i32) {
    %c0_i32 = arith.constant 0 : i32
    %c0_i32_0 = arith.constant 0 : i32
    %c0_i32_1 = arith.constant 0 : i32
    return %c0_i32, %c0_i32_0 : i32, i32
  }
  func.func @transform_3(%arg0: i32) -> (i32, i32) {
    %c0_i32 = arith.constant 0 : i32
    %c0_i32_0 = arith.constant 0 : i32
    %c0_i32_1 = arith.constant 0 : i32
    return %c0_i32, %c0_i32_0 : i32, i32
  }
  func.func @transform_4(%arg0: i32) -> (i32, i32) {
    %c0_i32 = arith.constant 0 : i32
    %c0_i32_0 = arith.constant 0 : i32
    %c0_i32_1 = arith.constant 0 : i32
    return %c0_i32, %c0_i32_0 : i32, i32
  }
}

module attributes {stable_mosaic.version = 11 : i64} {
  func.func @_conv_bn_lrelu_kernel(%arg0: i32, %arg1: memref<288x128xbf16, #tpu.memory_space<vmem>>, %arg2: memref<64x288xbf16, #tpu.memory_space<vmem>>, %arg3: memref<64x1xf32, #tpu.memory_space<vmem>>, %arg4: memref<64x1xf32, #tpu.memory_space<vmem>>, %arg5: memref<64x128xf32, #tpu.memory_space<vmem>>, %arg6: memref<64x1xf32, #tpu.memory_space<vmem>>, %arg7: memref<64x1xf32, #tpu.memory_space<vmem>>) attributes {dimension_semantics = [#tpu.dimension_semantics<arbitrary>], iteration_bounds = array<i64: 1>, scalar_prefetch = 0 : i64, scratch_operands = 2 : i64, tpu.core_type = #tpu.core_type<tc>, window_params = [{transform_indices = @transform_0, window_bounds = array<i64: 288, 128>}, {pipeline_mode = #tpu.pipeline_mode<synchronous>, transform_indices = @transform_1, window_bounds = array<i64: 64, 288>}, {pipeline_mode = #tpu.pipeline_mode<synchronous>, transform_indices = @transform_2, window_bounds = array<i64: 64, 1>}, {pipeline_mode = #tpu.pipeline_mode<synchronous>, transform_indices = @transform_3, window_bounds = array<i64: 64, 1>}, {pipeline_mode = #tpu.pipeline_mode<synchronous>, transform_indices = @transform_4, window_bounds = array<i64: 64, 128>}]} {
    %c0_i32 = arith.constant 0 : i32
    %0 = arith.cmpi eq, %arg0, %c0_i32 : i32
    %1 = arith.extui %0 : i1 to i32
    %c0_i32_0 = arith.constant 0 : i32
    %2 = arith.cmpi ne, %1, %c0_i32_0 : i32
    scf.if %2 {
      %cst_17 = arith.constant 0.000000e+00 : f32
      %24 = vector.broadcast %cst_17 : f32 to vector<64x1xf32>
      %c0_18 = arith.constant 0 : index
      %c0_19 = arith.constant 0 : index
      %25 = vector.load %arg6[%c0_18, %c0_19] : memref<64x1xf32, #tpu.memory_space<vmem>>, vector<64x1xf32>
      tpu.vector_store %arg6[%c0_18, %c0_19], %24 {strides = array<i32>} : memref<64x1xf32, #tpu.memory_space<vmem>>, vector<64x1xf32>,
      %cst_20 = arith.constant 0.000000e+00 : f32
      %26 = vector.broadcast %cst_20 : f32 to vector<64x1xf32>
      %c0_21 = arith.constant 0 : index
      %c0_22 = arith.constant 0 : index
      %27 = vector.load %arg7[%c0_21, %c0_22] : memref<64x1xf32, #tpu.memory_space<vmem>>, vector<64x1xf32>
      tpu.vector_store %arg7[%c0_21, %c0_22], %26 {strides = array<i32>} : memref<64x1xf32, #tpu.memory_space<vmem>>, vector<64x1xf32>,
    } else {
    }
    %c0 = arith.constant 0 : index
    %c0_1 = arith.constant 0 : index
    %3 = vector.load %arg2[%c0, %c0_1] : memref<64x288xbf16, #tpu.memory_space<vmem>>, vector<64x288xbf16>
    %c0_2 = arith.constant 0 : index
    %c0_3 = arith.constant 0 : index
    %4 = vector.load %arg1[%c0_2, %c0_3] : memref<288x128xbf16, #tpu.memory_space<vmem>>, vector<288x128xbf16>
    %cst = arith.constant dense<0.000000e+00> : vector<64x128xf32>
    %5 = tpu.matmul %3, %4, %cst {dimension_numbers = #tpu.dot_dimension_numbers<[1], [0], [0], [1], [0, 0, 1, 1], [], []>} : vector<64x288xbf16>, vector<288x128xbf16>, vector<64x128xf32> -> vector<64x128xf32>
    %c0_4 = arith.constant 0 : index
    %c0_5 = arith.constant 0 : index
    %6 = vector.load %arg6[%c0_4, %c0_5] : memref<64x1xf32, #tpu.memory_space<vmem>>, vector<64x1xf32>
    %cst_6 = arith.constant dense<0.000000e+00> : vector<64xf32>
    %7 = vector.multi_reduction <add>, %5, %cst_6 [1] : vector<64x128xf32> to vector<64xf32>
    %8 = vector.shape_cast %7 : vector<64xf32> to vector<64x1xf32>
    %9 = arith.addf %6, %8 : vector<64x1xf32>
    %c0_7 = arith.constant 0 : index
    %c0_8 = arith.constant 0 : index
    %10 = vector.load %arg6[%c0_7, %c0_8] : memref<64x1xf32, #tpu.memory_space<vmem>>, vector<64x1xf32>
    tpu.vector_store %arg6[%c0_7, %c0_8], %9 {strides = array<i32>} : memref<64x1xf32, #tpu.memory_space<vmem>>, vector<64x1xf32>,
    %c0_9 = arith.constant 0 : index
    %c0_10 = arith.constant 0 : index
    %11 = vector.load %arg7[%c0_9, %c0_10] : memref<64x1xf32, #tpu.memory_space<vmem>>, vector<64x1xf32>
    %12 = arith.mulf %5, %5 : vector<64x128xf32>
    %cst_11 = arith.constant dense<0.000000e+00> : vector<64xf32>
    %13 = vector.multi_reduction <add>, %12, %cst_11 [1] : vector<64x128xf32> to vector<64xf32>
    %14 = vector.shape_cast %13 : vector<64xf32> to vector<64x1xf32>
    %15 = arith.addf %11, %14 : vector<64x1xf32>
    %c0_12 = arith.constant 0 : index
    %c0_13 = arith.constant 0 : index
    %16 = vector.load %arg7[%c0_12, %c0_13] : memref<64x1xf32, #tpu.memory_space<vmem>>, vector<64x1xf32>
    tpu.vector_store %arg7[%c0_12, %c0_13], %15 {strides = array<i32>} : memref<64x1xf32, #tpu.memory_space<vmem>>, vector<64x1xf32>,
    %c128_i32 = arith.constant 128 : i32
    %17 = arith.muli %arg0, %c128_i32 : i32
    %18 = tpu.assume_multiple %17, 128 : i32
    %c0_14 = arith.constant 0 : index
    %19 = arith.index_cast %18 : i32 to index
    %20 = vector.load %arg5[%c0_14, %19] : memref<64x128xf32, #tpu.memory_space<vmem>>, vector<64x128xf32>
    tpu.vector_store %arg5[%c0_14, %19], %5 {strides = array<i32>} : memref<64x128xf32, #tpu.memory_space<vmem>>, vector<64x128xf32>,
    %c0_i32_15 = arith.constant 0 : i32
    %21 = arith.cmpi eq, %arg0, %c0_i32_15 : i32
    %22 = arith.extui %21 : i1 to i32
    %c0_i32_16 = arith.constant 0 : i32
    %23 = arith.cmpi ne, %22, %c0_i32_16 : i32
    scf.if %23 {
      %c0_17 = arith.constant 0 : index
      %c0_18 = arith.constant 0 : index
      %24 = vector.load %arg6[%c0_17, %c0_18] : memref<64x1xf32, #tpu.memory_space<vmem>>, vector<64x1xf32>
      %cst_19 = arith.constant 1.250000e-01 : f32
      %25 = vector.broadcast %cst_19 : f32 to vector<64x1xf32>
      %26 = arith.mulf %24, %25 : vector<64x1xf32>
      %c0_20 = arith.constant 0 : index
      %c0_21 = arith.constant 0 : index
      %27 = vector.load %arg7[%c0_20, %c0_21] : memref<64x1xf32, #tpu.memory_space<vmem>>, vector<64x1xf32>
      %cst_22 = arith.constant 1.250000e-01 : f32
      %28 = vector.broadcast %cst_22 : f32 to vector<64x1xf32>
      %29 = arith.mulf %27, %28 : vector<64x1xf32>
      %30 = arith.mulf %26, %26 : vector<64x1xf32>
      %31 = arith.subf %29, %30 : vector<64x1xf32>
      %c0_23 = arith.constant 0 : index
      %c0_24 = arith.constant 0 : index
      %32 = vector.load %arg3[%c0_23, %c0_24] : memref<64x1xf32, #tpu.memory_space<vmem>>, vector<64x1xf32>
      %cst_25 = arith.constant 9.99999974E-6 : f32
      %33 = vector.broadcast %cst_25 : f32 to vector<64x1xf32>
      %34 = arith.addf %31, %33 : vector<64x1xf32>
      %35 = math.rsqrt %34 : vector<64x1xf32>
      %36 = arith.mulf %32, %35 : vector<64x1xf32>
      %c0_26 = arith.constant 0 : index
      %c0_27 = arith.constant 0 : index
      %37 = vector.load %arg4[%c0_26, %c0_27] : memref<64x1xf32, #tpu.memory_space<vmem>>, vector<64x1xf32>
      %38 = arith.mulf %26, %36 : vector<64x1xf32>
      %39 = arith.subf %37, %38 : vector<64x1xf32>
      %c0_28 = arith.constant 0 : index
      %c0_29 = arith.constant 0 : index
      %40 = vector.load %arg5[%c0_28, %c0_29] : memref<64x128xf32, #tpu.memory_space<vmem>>, vector<64x128xf32>
      %41 = vector.broadcast %36 : vector<64x1xf32> to vector<64x128xf32>
      %42 = arith.mulf %40, %41 : vector<64x128xf32>
      %43 = vector.broadcast %39 : vector<64x1xf32> to vector<64x128xf32>
      %44 = arith.addf %42, %43 : vector<64x128xf32>
      %cst_30 = arith.constant 0.000000e+00 : f32
      %45 = vector.broadcast %cst_30 : f32 to vector<64x128xf32>
      %46 = arith.cmpf oge, %44, %45 : vector<64x128xf32>
      %cst_31 = arith.constant 0.00999999977 : f32
      %47 = vector.broadcast %cst_31 : f32 to vector<64x128xf32>
      %48 = arith.mulf %47, %44 : vector<64x128xf32>
      %49 = arith.select %46, %44, %48 : vector<64x128xi1>, vector<64x128xf32>
      %c0_32 = arith.constant 0 : index
      %c0_33 = arith.constant 0 : index
      %50 = vector.load %arg5[%c0_32, %c0_33] : memref<64x128xf32, #tpu.memory_space<vmem>>, vector<64x128xf32>
      tpu.vector_store %arg5[%c0_32, %c0_33], %49 {strides = array<i32>} : memref<64x128xf32, #tpu.memory_space<vmem>>, vector<64x128xf32>,
    } else {
    }
    return
  }
  func.func @transform_0(%arg0: i32) -> (i32, i32) {
    %c0_i32 = arith.constant 0 : i32
    %c0_i32_0 = arith.constant 0 : i32
    return %c0_i32, %arg0 : i32, i32
  }
  func.func @transform_1(%arg0: i32) -> (i32, i32) {
    %c0_i32 = arith.constant 0 : i32
    %c0_i32_0 = arith.constant 0 : i32
    %c0_i32_1 = arith.constant 0 : i32
    return %c0_i32, %c0_i32_0 : i32, i32
  }
  func.func @transform_2(%arg0: i32) -> (i32, i32) {
    %c0_i32 = arith.constant 0 : i32
    %c0_i32_0 = arith.constant 0 : i32
    %c0_i32_1 = arith.constant 0 : i32
    return %c0_i32, %c0_i32_0 : i32, i32
  }
  func.func @transform_3(%arg0: i32) -> (i32, i32) {
    %c0_i32 = arith.constant 0 : i32
    %c0_i32_0 = arith.constant 0 : i32
    %c0_i32_1 = arith.constant 0 : i32
    return %c0_i32, %c0_i32_0 : i32, i32
  }
  func.func @transform_4(%arg0: i32) -> (i32, i32) {
    %c0_i32 = arith.constant 0 : i32
    %c0_i32_0 = arith.constant 0 : i32
    %c0_i32_1 = arith.constant 0 : i32
    return %c0_i32, %c0_i32_0 : i32, i32
  }
}

module attributes {stable_mosaic.version = 11 : i64} {
  func.func @_head_kernel(%arg0: i32, %arg1: memref<128x2xbf16, #tpu.memory_space<vmem>>, %arg2: memref<32x128xbf16, #tpu.memory_space<vmem>>, %arg3: memref<32x1xf32, #tpu.memory_space<vmem>>, %arg4: memref<16x2xf32, #tpu.memory_space<vmem>>, %arg5: memref<16x16xbf16, #tpu.memory_space<vmem>>, %arg6: memref<16x1xf32, #tpu.memory_space<vmem>>, %arg7: memref<32x2xf32, #tpu.memory_space<vmem>>, %arg8: memref<16x2xf32, #tpu.memory_space<vmem>>) attributes {dimension_semantics = [#tpu.dimension_semantics<arbitrary>], iteration_bounds = array<i64: 1>, scalar_prefetch = 0 : i64, scratch_operands = 0 : i64, tpu.core_type = #tpu.core_type<tc>, window_params = [{pipeline_mode = #tpu.pipeline_mode<synchronous>, transform_indices = @transform_0, window_bounds = array<i64: 128, 2>}, {pipeline_mode = #tpu.pipeline_mode<synchronous>, transform_indices = @transform_1, window_bounds = array<i64: 32, 128>}, {pipeline_mode = #tpu.pipeline_mode<synchronous>, transform_indices = @transform_2, window_bounds = array<i64: 32, 1>}, {pipeline_mode = #tpu.pipeline_mode<synchronous>, transform_indices = @transform_3, window_bounds = array<i64: 16, 2>}, {pipeline_mode = #tpu.pipeline_mode<synchronous>, transform_indices = @transform_4, window_bounds = array<i64: 16, 16>}, {pipeline_mode = #tpu.pipeline_mode<synchronous>, transform_indices = @transform_5, window_bounds = array<i64: 16, 1>}, {pipeline_mode = #tpu.pipeline_mode<synchronous>, transform_indices = @transform_6, window_bounds = array<i64: 32, 2>}, {pipeline_mode = #tpu.pipeline_mode<synchronous>, transform_indices = @transform_7, window_bounds = array<i64: 16, 2>}]} {
    %c0 = arith.constant 0 : index
    %c0_0 = arith.constant 0 : index
    %0 = vector.load %arg2[%c0, %c0_0] : memref<32x128xbf16, #tpu.memory_space<vmem>>, vector<32x128xbf16>
    %c0_1 = arith.constant 0 : index
    %c0_2 = arith.constant 0 : index
    %1 = vector.load %arg1[%c0_1, %c0_2] : memref<128x2xbf16, #tpu.memory_space<vmem>>, vector<128x2xbf16>
    %cst = arith.constant dense<0.000000e+00> : vector<32x2xf32>
    %2 = tpu.matmul %0, %1, %cst {dimension_numbers = #tpu.dot_dimension_numbers<[1], [0], [0], [1], [0, 0, 1, 1], [], []>} : vector<32x128xbf16>, vector<128x2xbf16>, vector<32x2xf32> -> vector<32x2xf32>
    %c0_3 = arith.constant 0 : index
    %c0_4 = arith.constant 0 : index
    %3 = vector.load %arg3[%c0_3, %c0_4] : memref<32x1xf32, #tpu.memory_space<vmem>>, vector<32x1xf32>
    %4 = vector.broadcast %3 : vector<32x1xf32> to vector<32x2xf32>
    %5 = arith.addf %2, %4 : vector<32x2xf32>
    %c0_5 = arith.constant 0 : index
    %c0_6 = arith.constant 0 : index
    %6 = vector.load %arg7[%c0_5, %c0_6] : memref<32x2xf32, #tpu.memory_space<vmem>>, vector<32x2xf32>
    tpu.vector_store %arg7[%c0_5, %c0_6], %5 {strides = array<i32>} : memref<32x2xf32, #tpu.memory_space<vmem>>, vector<32x2xf32>,
    %7 = vector.extract_strided_slice %5 {offsets = [0, 0], sizes = [16, 2], strides = [1, 1]} : vector<32x2xf32> to vector<16x2xf32>
    %8 = vector.extract_strided_slice %5 {offsets = [16, 0], sizes = [16, 2], strides = [1, 1]} : vector<32x2xf32> to vector<16x2xf32>
    %c0_7 = arith.constant 0 : index
    %c0_8 = arith.constant 0 : index
    %9 = vector.load %arg4[%c0_7, %c0_8] : memref<16x2xf32, #tpu.memory_space<vmem>>, vector<16x2xf32>
    %cst_9 = arith.constant 5.000000e-01 : f32
    %10 = vector.broadcast %cst_9 : f32 to vector<16x2xf32>
    %11 = arith.mulf %10, %8 : vector<16x2xf32>
    %12 = math.exp %11 : vector<16x2xf32>
    %13 = arith.mulf %9, %12 : vector<16x2xf32>
    %14 = arith.addf %13, %7 : vector<16x2xf32>
    %c0_10 = arith.constant 0 : index
    %c0_11 = arith.constant 0 : index
    %15 = vector.load %arg5[%c0_10, %c0_11] : memref<16x16xbf16, #tpu.memory_space<vmem>>, vector<16x16xbf16>
    %16 = arith.truncf %14 : vector<16x2xf32> to vector<16x2xbf16>
    %cst_12 = arith.constant dense<0.000000e+00> : vector<16x2xf32>
    %17 = tpu.matmul %15, %16, %cst_12 {dimension_numbers = #tpu.dot_dimension_numbers<[1], [0], [0], [1], [0, 0, 1, 1], [], []>} : vector<16x16xbf16>, vector<16x2xbf16>, vector<16x2xf32> -> vector<16x2xf32>
    %c0_13 = arith.constant 0 : index
    %c0_14 = arith.constant 0 : index
    %18 = vector.load %arg6[%c0_13, %c0_14] : memref<16x1xf32, #tpu.memory_space<vmem>>, vector<16x1xf32>
    %19 = vector.broadcast %18 : vector<16x1xf32> to vector<16x2xf32>
    %20 = arith.addf %17, %19 : vector<16x2xf32>
    %c0_15 = arith.constant 0 : index
    %c0_16 = arith.constant 0 : index
    %21 = vector.load %arg8[%c0_15, %c0_16] : memref<16x2xf32, #tpu.memory_space<vmem>>, vector<16x2xf32>
    tpu.vector_store %arg8[%c0_15, %c0_16], %20 {strides = array<i32>} : memref<16x2xf32, #tpu.memory_space<vmem>>, vector<16x2xf32>,
    return
  }
  func.func @transform_0(%arg0: i32) -> (i32, i32) {
    %c0_i32 = arith.constant 0 : i32
    %c0_i32_0 = arith.constant 0 : i32
    %c0_i32_1 = arith.constant 0 : i32
    return %c0_i32, %c0_i32_0 : i32, i32
  }
  func.func @transform_1(%arg0: i32) -> (i32, i32) {
    %c0_i32 = arith.constant 0 : i32
    %c0_i32_0 = arith.constant 0 : i32
    %c0_i32_1 = arith.constant 0 : i32
    return %c0_i32, %c0_i32_0 : i32, i32
  }
  func.func @transform_2(%arg0: i32) -> (i32, i32) {
    %c0_i32 = arith.constant 0 : i32
    %c0_i32_0 = arith.constant 0 : i32
    %c0_i32_1 = arith.constant 0 : i32
    return %c0_i32, %c0_i32_0 : i32, i32
  }
  func.func @transform_3(%arg0: i32) -> (i32, i32) {
    %c0_i32 = arith.constant 0 : i32
    %c0_i32_0 = arith.constant 0 : i32
    %c0_i32_1 = arith.constant 0 : i32
    return %c0_i32, %c0_i32_0 : i32, i32
  }
  func.func @transform_4(%arg0: i32) -> (i32, i32) {
    %c0_i32 = arith.constant 0 : i32
    %c0_i32_0 = arith.constant 0 : i32
    %c0_i32_1 = arith.constant 0 : i32
    return %c0_i32, %c0_i32_0 : i32, i32
  }
  func.func @transform_5(%arg0: i32) -> (i32, i32) {
    %c0_i32 = arith.constant 0 : i32
    %c0_i32_0 = arith.constant 0 : i32
    %c0_i32_1 = arith.constant 0 : i32
    return %c0_i32, %c0_i32_0 : i32, i32
  }
  func.func @transform_6(%arg0: i32) -> (i32, i32) {
    %c0_i32 = arith.constant 0 : i32
    %c0_i32_0 = arith.constant 0 : i32
    %c0_i32_1 = arith.constant 0 : i32
    return %c0_i32, %c0_i32_0 : i32, i32
  }
  func.func @transform_7(%arg0: i32) -> (i32, i32) {
    %c0_i32 = arith.constant 0 : i32
    %c0_i32_0 = arith.constant 0 : i32
    %c0_i32_1 = arith.constant 0 : i32
    return %c0_i32, %c0_i32_0 : i32, i32
  }
}

module attributes {stable_mosaic.version = 11 : i64} {
  func.func @_conv_bn_lrelu_kernel(%arg0: i32, %arg1: memref<576x128xbf16, #tpu.memory_space<vmem>>, %arg2: memref<128x576xbf16, #tpu.memory_space<vmem>>, %arg3: memref<128x1xf32, #tpu.memory_space<vmem>>, %arg4: memref<128x1xf32, #tpu.memory_space<vmem>>, %arg5: memref<128x128xf32, #tpu.memory_space<vmem>>, %arg6: memref<128x1xf32, #tpu.memory_space<vmem>>, %arg7: memref<128x1xf32, #tpu.memory_space<vmem>>) attributes {dimension_semantics = [#tpu.dimension_semantics<arbitrary>], iteration_bounds = array<i64: 1>, scalar_prefetch = 0 : i64, scratch_operands = 2 : i64, tpu.core_type = #tpu.core_type<tc>, window_params = [{transform_indices = @transform_0, window_bounds = array<i64: 576, 128>}, {pipeline_mode = #tpu.pipeline_mode<synchronous>, transform_indices = @transform_1, window_bounds = array<i64: 128, 576>}, {pipeline_mode = #tpu.pipeline_mode<synchronous>, transform_indices = @transform_2, window_bounds = array<i64: 128, 1>}, {pipeline_mode = #tpu.pipeline_mode<synchronous>, transform_indices = @transform_3, window_bounds = array<i64: 128, 1>}, {pipeline_mode = #tpu.pipeline_mode<synchronous>, transform_indices = @transform_4, window_bounds = array<i64: 128, 128>}]} {
    %c0_i32 = arith.constant 0 : i32
    %0 = arith.cmpi eq, %arg0, %c0_i32 : i32
    %1 = arith.extui %0 : i1 to i32
    %c0_i32_0 = arith.constant 0 : i32
    %2 = arith.cmpi ne, %1, %c0_i32_0 : i32
    scf.if %2 {
      %cst_17 = arith.constant 0.000000e+00 : f32
      %24 = vector.broadcast %cst_17 : f32 to vector<128x1xf32>
      %c0_18 = arith.constant 0 : index
      %c0_19 = arith.constant 0 : index
      %25 = vector.load %arg6[%c0_18, %c0_19] : memref<128x1xf32, #tpu.memory_space<vmem>>, vector<128x1xf32>
      tpu.vector_store %arg6[%c0_18, %c0_19], %24 {strides = array<i32>} : memref<128x1xf32, #tpu.memory_space<vmem>>, vector<128x1xf32>,
      %cst_20 = arith.constant 0.000000e+00 : f32
      %26 = vector.broadcast %cst_20 : f32 to vector<128x1xf32>
      %c0_21 = arith.constant 0 : index
      %c0_22 = arith.constant 0 : index
      %27 = vector.load %arg7[%c0_21, %c0_22] : memref<128x1xf32, #tpu.memory_space<vmem>>, vector<128x1xf32>
      tpu.vector_store %arg7[%c0_21, %c0_22], %26 {strides = array<i32>} : memref<128x1xf32, #tpu.memory_space<vmem>>, vector<128x1xf32>,
    } else {
    }
    %c0 = arith.constant 0 : index
    %c0_1 = arith.constant 0 : index
    %3 = vector.load %arg2[%c0, %c0_1] : memref<128x576xbf16, #tpu.memory_space<vmem>>, vector<128x576xbf16>
    %c0_2 = arith.constant 0 : index
    %c0_3 = arith.constant 0 : index
    %4 = vector.load %arg1[%c0_2, %c0_3] : memref<576x128xbf16, #tpu.memory_space<vmem>>, vector<576x128xbf16>
    %cst = arith.constant dense<0.000000e+00> : vector<128x128xf32>
    %5 = tpu.matmul %3, %4, %cst {dimension_numbers = #tpu.dot_dimension_numbers<[1], [0], [0], [1], [0, 0, 1, 1], [], []>} : vector<128x576xbf16>, vector<576x128xbf16>, vector<128x128xf32> -> vector<128x128xf32>
    %c0_4 = arith.constant 0 : index
    %c0_5 = arith.constant 0 : index
    %6 = vector.load %arg6[%c0_4, %c0_5] : memref<128x1xf32, #tpu.memory_space<vmem>>, vector<128x1xf32>
    %cst_6 = arith.constant dense<0.000000e+00> : vector<128xf32>
    %7 = vector.multi_reduction <add>, %5, %cst_6 [1] : vector<128x128xf32> to vector<128xf32>
    %8 = vector.shape_cast %7 : vector<128xf32> to vector<128x1xf32>
    %9 = arith.addf %6, %8 : vector<128x1xf32>
    %c0_7 = arith.constant 0 : index
    %c0_8 = arith.constant 0 : index
    %10 = vector.load %arg6[%c0_7, %c0_8] : memref<128x1xf32, #tpu.memory_space<vmem>>, vector<128x1xf32>
    tpu.vector_store %arg6[%c0_7, %c0_8], %9 {strides = array<i32>} : memref<128x1xf32, #tpu.memory_space<vmem>>, vector<128x1xf32>,
    %c0_9 = arith.constant 0 : index
    %c0_10 = arith.constant 0 : index
    %11 = vector.load %arg7[%c0_9, %c0_10] : memref<128x1xf32, #tpu.memory_space<vmem>>, vector<128x1xf32>
    %12 = arith.mulf %5, %5 : vector<128x128xf32>
    %cst_11 = arith.constant dense<0.000000e+00> : vector<128xf32>
    %13 = vector.multi_reduction <add>, %12, %cst_11 [1] : vector<128x128xf32> to vector<128xf32>
    %14 = vector.shape_cast %13 : vector<128xf32> to vector<128x1xf32>
    %15 = arith.addf %11, %14 : vector<128x1xf32>
    %c0_12 = arith.constant 0 : index
    %c0_13 = arith.constant 0 : index
    %16 = vector.load %arg7[%c0_12, %c0_13] : memref<128x1xf32, #tpu.memory_space<vmem>>, vector<128x1xf32>
    tpu.vector_store %arg7[%c0_12, %c0_13], %15 {strides = array<i32>} : memref<128x1xf32, #tpu.memory_space<vmem>>, vector<128x1xf32>,
    %c128_i32 = arith.constant 128 : i32
    %17 = arith.muli %arg0, %c128_i32 : i32
    %18 = tpu.assume_multiple %17, 128 : i32
    %c0_14 = arith.constant 0 : index
    %19 = arith.index_cast %18 : i32 to index
    %20 = vector.load %arg5[%c0_14, %19] : memref<128x128xf32, #tpu.memory_space<vmem>>, vector<128x128xf32>
    tpu.vector_store %arg5[%c0_14, %19], %5 {strides = array<i32>} : memref<128x128xf32, #tpu.memory_space<vmem>>, vector<128x128xf32>,
    %c0_i32_15 = arith.constant 0 : i32
    %21 = arith.cmpi eq, %arg0, %c0_i32_15 : i32
    %22 = arith.extui %21 : i1 to i32
    %c0_i32_16 = arith.constant 0 : i32
    %23 = arith.cmpi ne, %22, %c0_i32_16 : i32
    scf.if %23 {
      %c0_17 = arith.constant 0 : index
      %c0_18 = arith.constant 0 : index
      %24 = vector.load %arg6[%c0_17, %c0_18] : memref<128x1xf32, #tpu.memory_space<vmem>>, vector<128x1xf32>
      %cst_19 = arith.constant 5.000000e-01 : f32
      %25 = vector.broadcast %cst_19 : f32 to vector<128x1xf32>
      %26 = arith.mulf %24, %25 : vector<128x1xf32>
      %c0_20 = arith.constant 0 : index
      %c0_21 = arith.constant 0 : index
      %27 = vector.load %arg7[%c0_20, %c0_21] : memref<128x1xf32, #tpu.memory_space<vmem>>, vector<128x1xf32>
      %cst_22 = arith.constant 5.000000e-01 : f32
      %28 = vector.broadcast %cst_22 : f32 to vector<128x1xf32>
      %29 = arith.mulf %27, %28 : vector<128x1xf32>
      %30 = arith.mulf %26, %26 : vector<128x1xf32>
      %31 = arith.subf %29, %30 : vector<128x1xf32>
      %c0_23 = arith.constant 0 : index
      %c0_24 = arith.constant 0 : index
      %32 = vector.load %arg3[%c0_23, %c0_24] : memref<128x1xf32, #tpu.memory_space<vmem>>, vector<128x1xf32>
      %cst_25 = arith.constant 9.99999974E-6 : f32
      %33 = vector.broadcast %cst_25 : f32 to vector<128x1xf32>
      %34 = arith.addf %31, %33 : vector<128x1xf32>
      %35 = math.rsqrt %34 : vector<128x1xf32>
      %36 = arith.mulf %32, %35 : vector<128x1xf32>
      %c0_26 = arith.constant 0 : index
      %c0_27 = arith.constant 0 : index
      %37 = vector.load %arg4[%c0_26, %c0_27] : memref<128x1xf32, #tpu.memory_space<vmem>>, vector<128x1xf32>
      %38 = arith.mulf %26, %36 : vector<128x1xf32>
      %39 = arith.subf %37, %38 : vector<128x1xf32>
      %c0_28 = arith.constant 0 : index
      %c0_29 = arith.constant 0 : index
      %40 = vector.load %arg5[%c0_28, %c0_29] : memref<128x128xf32, #tpu.memory_space<vmem>>, vector<128x128xf32>
      %41 = vector.broadcast %36 : vector<128x1xf32> to vector<128x128xf32>
      %42 = arith.mulf %40, %41 : vector<128x128xf32>
      %43 = vector.broadcast %39 : vector<128x1xf32> to vector<128x128xf32>
      %44 = arith.addf %42, %43 : vector<128x128xf32>
      %cst_30 = arith.constant 0.000000e+00 : f32
      %45 = vector.broadcast %cst_30 : f32 to vector<128x128xf32>
      %46 = arith.cmpf oge, %44, %45 : vector<128x128xf32>
      %cst_31 = arith.constant 0.00999999977 : f32
      %47 = vector.broadcast %cst_31 : f32 to vector<128x128xf32>
      %48 = arith.mulf %47, %44 : vector<128x128xf32>
      %49 = arith.select %46, %44, %48 : vector<128x128xi1>, vector<128x128xf32>
      %c0_32 = arith.constant 0 : index
      %c0_33 = arith.constant 0 : index
      %50 = vector.load %arg5[%c0_32, %c0_33] : memref<128x128xf32, #tpu.memory_space<vmem>>, vector<128x128xf32>
      tpu.vector_store %arg5[%c0_32, %c0_33], %49 {strides = array<i32>} : memref<128x128xf32, #tpu.memory_space<vmem>>, vector<128x128xf32>,
    } else {
    }
    return
  }
  func.func @transform_0(%arg0: i32) -> (i32, i32) {
    %c0_i32 = arith.constant 0 : i32
    %c0_i32_0 = arith.constant 0 : i32
    return %c0_i32, %arg0 : i32, i32
  }
  func.func @transform_1(%arg0: i32) -> (i32, i32) {
    %c0_i32 = arith.constant 0 : i32
    %c0_i32_0 = arith.constant 0 : i32
    %c0_i32_1 = arith.constant 0 : i32
    return %c0_i32, %c0_i32_0 : i32, i32
  }
  func.func @transform_2(%arg0: i32) -> (i32, i32) {
    %c0_i32 = arith.constant 0 : i32
    %c0_i32_0 = arith.constant 0 : i32
    %c0_i32_1 = arith.constant 0 : i32
    return %c0_i32, %c0_i32_0 : i32, i32
  }
  func.func @transform_3(%arg0: i32) -> (i32, i32) {
    %c0_i32 = arith.constant 0 : i32
    %c0_i32_0 = arith.constant 0 : i32
    %c0_i32_1 = arith.constant 0 : i32
    return %c0_i32, %c0_i32_0 : i32, i32
  }
  func.func @transform_4(%arg0: i32) -> (i32, i32) {
    %c0_i32 = arith.constant 0 : i32
    %c0_i32_0 = arith.constant 0 : i32
    %c0_i32_1 = arith.constant 0 : i32
    return %c0_i32, %c0_i32_0 : i32, i32
  }
}

module attributes {stable_mosaic.version = 11 : i64} {
  func.func @_conv_bn_lrelu_kernel(%arg0: i32, %arg1: memref<234x128xbf16, #tpu.memory_space<vmem>>, %arg2: memref<64x234xbf16, #tpu.memory_space<vmem>>, %arg3: memref<64x1xf32, #tpu.memory_space<vmem>>, %arg4: memref<64x1xf32, #tpu.memory_space<vmem>>, %arg5: memref<64x128xf32, #tpu.memory_space<vmem>>, %arg6: memref<64x1xf32, #tpu.memory_space<vmem>>, %arg7: memref<64x1xf32, #tpu.memory_space<vmem>>) attributes {dimension_semantics = [#tpu.dimension_semantics<arbitrary>], iteration_bounds = array<i64: 1>, scalar_prefetch = 0 : i64, scratch_operands = 2 : i64, tpu.core_type = #tpu.core_type<tc>, window_params = [{transform_indices = @transform_0, window_bounds = array<i64: 234, 128>}, {pipeline_mode = #tpu.pipeline_mode<synchronous>, transform_indices = @transform_1, window_bounds = array<i64: 64, 234>}, {pipeline_mode = #tpu.pipeline_mode<synchronous>, transform_indices = @transform_2, window_bounds = array<i64: 64, 1>}, {pipeline_mode = #tpu.pipeline_mode<synchronous>, transform_indices = @transform_3, window_bounds = array<i64: 64, 1>}, {pipeline_mode = #tpu.pipeline_mode<synchronous>, transform_indices = @transform_4, window_bounds = array<i64: 64, 128>}]} {
    %c0_i32 = arith.constant 0 : i32
    %0 = arith.cmpi eq, %arg0, %c0_i32 : i32
    %1 = arith.extui %0 : i1 to i32
    %c0_i32_0 = arith.constant 0 : i32
    %2 = arith.cmpi ne, %1, %c0_i32_0 : i32
    scf.if %2 {
      %cst_17 = arith.constant 0.000000e+00 : f32
      %24 = vector.broadcast %cst_17 : f32 to vector<64x1xf32>
      %c0_18 = arith.constant 0 : index
      %c0_19 = arith.constant 0 : index
      %25 = vector.load %arg6[%c0_18, %c0_19] : memref<64x1xf32, #tpu.memory_space<vmem>>, vector<64x1xf32>
      tpu.vector_store %arg6[%c0_18, %c0_19], %24 {strides = array<i32>} : memref<64x1xf32, #tpu.memory_space<vmem>>, vector<64x1xf32>,
      %cst_20 = arith.constant 0.000000e+00 : f32
      %26 = vector.broadcast %cst_20 : f32 to vector<64x1xf32>
      %c0_21 = arith.constant 0 : index
      %c0_22 = arith.constant 0 : index
      %27 = vector.load %arg7[%c0_21, %c0_22] : memref<64x1xf32, #tpu.memory_space<vmem>>, vector<64x1xf32>
      tpu.vector_store %arg7[%c0_21, %c0_22], %26 {strides = array<i32>} : memref<64x1xf32, #tpu.memory_space<vmem>>, vector<64x1xf32>,
    } else {
    }
    %c0 = arith.constant 0 : index
    %c0_1 = arith.constant 0 : index
    %3 = vector.load %arg2[%c0, %c0_1] : memref<64x234xbf16, #tpu.memory_space<vmem>>, vector<64x234xbf16>
    %c0_2 = arith.constant 0 : index
    %c0_3 = arith.constant 0 : index
    %4 = vector.load %arg1[%c0_2, %c0_3] : memref<234x128xbf16, #tpu.memory_space<vmem>>, vector<234x128xbf16>
    %cst = arith.constant dense<0.000000e+00> : vector<64x128xf32>
    %5 = tpu.matmul %3, %4, %cst {dimension_numbers = #tpu.dot_dimension_numbers<[1], [0], [0], [1], [0, 0, 1, 1], [], []>} : vector<64x234xbf16>, vector<234x128xbf16>, vector<64x128xf32> -> vector<64x128xf32>
    %c0_4 = arith.constant 0 : index
    %c0_5 = arith.constant 0 : index
    %6 = vector.load %arg6[%c0_4, %c0_5] : memref<64x1xf32, #tpu.memory_space<vmem>>, vector<64x1xf32>
    %cst_6 = arith.constant dense<0.000000e+00> : vector<64xf32>
    %7 = vector.multi_reduction <add>, %5, %cst_6 [1] : vector<64x128xf32> to vector<64xf32>
    %8 = vector.shape_cast %7 : vector<64xf32> to vector<64x1xf32>
    %9 = arith.addf %6, %8 : vector<64x1xf32>
    %c0_7 = arith.constant 0 : index
    %c0_8 = arith.constant 0 : index
    %10 = vector.load %arg6[%c0_7, %c0_8] : memref<64x1xf32, #tpu.memory_space<vmem>>, vector<64x1xf32>
    tpu.vector_store %arg6[%c0_7, %c0_8], %9 {strides = array<i32>} : memref<64x1xf32, #tpu.memory_space<vmem>>, vector<64x1xf32>,
    %c0_9 = arith.constant 0 : index
    %c0_10 = arith.constant 0 : index
    %11 = vector.load %arg7[%c0_9, %c0_10] : memref<64x1xf32, #tpu.memory_space<vmem>>, vector<64x1xf32>
    %12 = arith.mulf %5, %5 : vector<64x128xf32>
    %cst_11 = arith.constant dense<0.000000e+00> : vector<64xf32>
    %13 = vector.multi_reduction <add>, %12, %cst_11 [1] : vector<64x128xf32> to vector<64xf32>
    %14 = vector.shape_cast %13 : vector<64xf32> to vector<64x1xf32>
    %15 = arith.addf %11, %14 : vector<64x1xf32>
    %c0_12 = arith.constant 0 : index
    %c0_13 = arith.constant 0 : index
    %16 = vector.load %arg7[%c0_12, %c0_13] : memref<64x1xf32, #tpu.memory_space<vmem>>, vector<64x1xf32>
    tpu.vector_store %arg7[%c0_12, %c0_13], %15 {strides = array<i32>} : memref<64x1xf32, #tpu.memory_space<vmem>>, vector<64x1xf32>,
    %c128_i32 = arith.constant 128 : i32
    %17 = arith.muli %arg0, %c128_i32 : i32
    %18 = tpu.assume_multiple %17, 128 : i32
    %c0_14 = arith.constant 0 : index
    %19 = arith.index_cast %18 : i32 to index
    %20 = vector.load %arg5[%c0_14, %19] : memref<64x128xf32, #tpu.memory_space<vmem>>, vector<64x128xf32>
    tpu.vector_store %arg5[%c0_14, %19], %5 {strides = array<i32>} : memref<64x128xf32, #tpu.memory_space<vmem>>, vector<64x128xf32>,
    %c0_i32_15 = arith.constant 0 : i32
    %21 = arith.cmpi eq, %arg0, %c0_i32_15 : i32
    %22 = arith.extui %21 : i1 to i32
    %c0_i32_16 = arith.constant 0 : i32
    %23 = arith.cmpi ne, %22, %c0_i32_16 : i32
    scf.if %23 {
      %c0_17 = arith.constant 0 : index
      %c0_18 = arith.constant 0 : index
      %24 = vector.load %arg6[%c0_17, %c0_18] : memref<64x1xf32, #tpu.memory_space<vmem>>, vector<64x1xf32>
      %cst_19 = arith.constant 1.250000e-01 : f32
      %25 = vector.broadcast %cst_19 : f32 to vector<64x1xf32>
      %26 = arith.mulf %24, %25 : vector<64x1xf32>
      %c0_20 = arith.constant 0 : index
      %c0_21 = arith.constant 0 : index
      %27 = vector.load %arg7[%c0_20, %c0_21] : memref<64x1xf32, #tpu.memory_space<vmem>>, vector<64x1xf32>
      %cst_22 = arith.constant 1.250000e-01 : f32
      %28 = vector.broadcast %cst_22 : f32 to vector<64x1xf32>
      %29 = arith.mulf %27, %28 : vector<64x1xf32>
      %30 = arith.mulf %26, %26 : vector<64x1xf32>
      %31 = arith.subf %29, %30 : vector<64x1xf32>
      %c0_23 = arith.constant 0 : index
      %c0_24 = arith.constant 0 : index
      %32 = vector.load %arg3[%c0_23, %c0_24] : memref<64x1xf32, #tpu.memory_space<vmem>>, vector<64x1xf32>
      %cst_25 = arith.constant 9.99999974E-6 : f32
      %33 = vector.broadcast %cst_25 : f32 to vector<64x1xf32>
      %34 = arith.addf %31, %33 : vector<64x1xf32>
      %35 = math.rsqrt %34 : vector<64x1xf32>
      %36 = arith.mulf %32, %35 : vector<64x1xf32>
      %c0_26 = arith.constant 0 : index
      %c0_27 = arith.constant 0 : index
      %37 = vector.load %arg4[%c0_26, %c0_27] : memref<64x1xf32, #tpu.memory_space<vmem>>, vector<64x1xf32>
      %38 = arith.mulf %26, %36 : vector<64x1xf32>
      %39 = arith.subf %37, %38 : vector<64x1xf32>
      %c0_28 = arith.constant 0 : index
      %c0_29 = arith.constant 0 : index
      %40 = vector.load %arg5[%c0_28, %c0_29] : memref<64x128xf32, #tpu.memory_space<vmem>>, vector<64x128xf32>
      %41 = vector.broadcast %36 : vector<64x1xf32> to vector<64x128xf32>
      %42 = arith.mulf %40, %41 : vector<64x128xf32>
      %43 = vector.broadcast %39 : vector<64x1xf32> to vector<64x128xf32>
      %44 = arith.addf %42, %43 : vector<64x128xf32>
      %cst_30 = arith.constant 0.000000e+00 : f32
      %45 = vector.broadcast %cst_30 : f32 to vector<64x128xf32>
      %46 = arith.cmpf oge, %44, %45 : vector<64x128xf32>
      %cst_31 = arith.constant 0.00999999977 : f32
      %47 = vector.broadcast %cst_31 : f32 to vector<64x128xf32>
      %48 = arith.mulf %47, %44 : vector<64x128xf32>
      %49 = arith.select %46, %44, %48 : vector<64x128xi1>, vector<64x128xf32>
      %c0_32 = arith.constant 0 : index
      %c0_33 = arith.constant 0 : index
      %50 = vector.load %arg5[%c0_32, %c0_33] : memref<64x128xf32, #tpu.memory_space<vmem>>, vector<64x128xf32>
      tpu.vector_store %arg5[%c0_32, %c0_33], %49 {strides = array<i32>} : memref<64x128xf32, #tpu.memory_space<vmem>>, vector<64x128xf32>,
    } else {
    }
    return
  }
  func.func @transform_0(%arg0: i32) -> (i32, i32) {
    %c0_i32 = arith.constant 0 : i32
    %c0_i32_0 = arith.constant 0 : i32
    return %c0_i32, %arg0 : i32, i32
  }
  func.func @transform_1(%arg0: i32) -> (i32, i32) {
    %c0_i32 = arith.constant 0 : i32
    %c0_i32_0 = arith.constant 0 : i32
    %c0_i32_1 = arith.constant 0 : i32
    return %c0_i32, %c0_i32_0 : i32, i32
  }
  func.func @transform_2(%arg0: i32) -> (i32, i32) {
    %c0_i32 = arith.constant 0 : i32
    %c0_i32_0 = arith.constant 0 : i32
    %c0_i32_1 = arith.constant 0 : i32
    return %c0_i32, %c0_i32_0 : i32, i32
  }
  func.func @transform_3(%arg0: i32) -> (i32, i32) {
    %c0_i32 = arith.constant 0 : i32
    %c0_i32_0 = arith.constant 0 : i32
    %c0_i32_1 = arith.constant 0 : i32
    return %c0_i32, %c0_i32_0 : i32, i32
  }
  func.func @transform_4(%arg0: i32) -> (i32, i32) {
    %c0_i32 = arith.constant 0 : i32
    %c0_i32_0 = arith.constant 0 : i32
    %c0_i32_1 = arith.constant 0 : i32
    return %c0_i32, %c0_i32_0 : i32, i32
  }
}

module attributes {stable_mosaic.version = 11 : i64} {
  func.func @_conv_bn_lrelu_kernel(%arg0: i32, %arg1: memref<576x128xbf16, #tpu.memory_space<vmem>>, %arg2: memref<32x576xbf16, #tpu.memory_space<vmem>>, %arg3: memref<32x1xf32, #tpu.memory_space<vmem>>, %arg4: memref<32x1xf32, #tpu.memory_space<vmem>>, %arg5: memref<32x128xf32, #tpu.memory_space<vmem>>, %arg6: memref<32x1xf32, #tpu.memory_space<vmem>>, %arg7: memref<32x1xf32, #tpu.memory_space<vmem>>) attributes {dimension_semantics = [#tpu.dimension_semantics<arbitrary>], iteration_bounds = array<i64: 1>, scalar_prefetch = 0 : i64, scratch_operands = 2 : i64, tpu.core_type = #tpu.core_type<tc>, window_params = [{transform_indices = @transform_0, window_bounds = array<i64: 576, 128>}, {pipeline_mode = #tpu.pipeline_mode<synchronous>, transform_indices = @transform_1, window_bounds = array<i64: 32, 576>}, {pipeline_mode = #tpu.pipeline_mode<synchronous>, transform_indices = @transform_2, window_bounds = array<i64: 32, 1>}, {pipeline_mode = #tpu.pipeline_mode<synchronous>, transform_indices = @transform_3, window_bounds = array<i64: 32, 1>}, {pipeline_mode = #tpu.pipeline_mode<synchronous>, transform_indices = @transform_4, window_bounds = array<i64: 32, 128>}]} {
    %c0_i32 = arith.constant 0 : i32
    %0 = arith.cmpi eq, %arg0, %c0_i32 : i32
    %1 = arith.extui %0 : i1 to i32
    %c0_i32_0 = arith.constant 0 : i32
    %2 = arith.cmpi ne, %1, %c0_i32_0 : i32
    scf.if %2 {
      %cst_17 = arith.constant 0.000000e+00 : f32
      %24 = vector.broadcast %cst_17 : f32 to vector<32x1xf32>
      %c0_18 = arith.constant 0 : index
      %c0_19 = arith.constant 0 : index
      %25 = vector.load %arg6[%c0_18, %c0_19] : memref<32x1xf32, #tpu.memory_space<vmem>>, vector<32x1xf32>
      tpu.vector_store %arg6[%c0_18, %c0_19], %24 {strides = array<i32>} : memref<32x1xf32, #tpu.memory_space<vmem>>, vector<32x1xf32>,
      %cst_20 = arith.constant 0.000000e+00 : f32
      %26 = vector.broadcast %cst_20 : f32 to vector<32x1xf32>
      %c0_21 = arith.constant 0 : index
      %c0_22 = arith.constant 0 : index
      %27 = vector.load %arg7[%c0_21, %c0_22] : memref<32x1xf32, #tpu.memory_space<vmem>>, vector<32x1xf32>
      tpu.vector_store %arg7[%c0_21, %c0_22], %26 {strides = array<i32>} : memref<32x1xf32, #tpu.memory_space<vmem>>, vector<32x1xf32>,
    } else {
    }
    %c0 = arith.constant 0 : index
    %c0_1 = arith.constant 0 : index
    %3 = vector.load %arg2[%c0, %c0_1] : memref<32x576xbf16, #tpu.memory_space<vmem>>, vector<32x576xbf16>
    %c0_2 = arith.constant 0 : index
    %c0_3 = arith.constant 0 : index
    %4 = vector.load %arg1[%c0_2, %c0_3] : memref<576x128xbf16, #tpu.memory_space<vmem>>, vector<576x128xbf16>
    %cst = arith.constant dense<0.000000e+00> : vector<32x128xf32>
    %5 = tpu.matmul %3, %4, %cst {dimension_numbers = #tpu.dot_dimension_numbers<[1], [0], [0], [1], [0, 0, 1, 1], [], []>} : vector<32x576xbf16>, vector<576x128xbf16>, vector<32x128xf32> -> vector<32x128xf32>
    %c0_4 = arith.constant 0 : index
    %c0_5 = arith.constant 0 : index
    %6 = vector.load %arg6[%c0_4, %c0_5] : memref<32x1xf32, #tpu.memory_space<vmem>>, vector<32x1xf32>
    %cst_6 = arith.constant dense<0.000000e+00> : vector<32xf32>
    %7 = vector.multi_reduction <add>, %5, %cst_6 [1] : vector<32x128xf32> to vector<32xf32>
    %8 = vector.shape_cast %7 : vector<32xf32> to vector<32x1xf32>
    %9 = arith.addf %6, %8 : vector<32x1xf32>
    %c0_7 = arith.constant 0 : index
    %c0_8 = arith.constant 0 : index
    %10 = vector.load %arg6[%c0_7, %c0_8] : memref<32x1xf32, #tpu.memory_space<vmem>>, vector<32x1xf32>
    tpu.vector_store %arg6[%c0_7, %c0_8], %9 {strides = array<i32>} : memref<32x1xf32, #tpu.memory_space<vmem>>, vector<32x1xf32>,
    %c0_9 = arith.constant 0 : index
    %c0_10 = arith.constant 0 : index
    %11 = vector.load %arg7[%c0_9, %c0_10] : memref<32x1xf32, #tpu.memory_space<vmem>>, vector<32x1xf32>
    %12 = arith.mulf %5, %5 : vector<32x128xf32>
    %cst_11 = arith.constant dense<0.000000e+00> : vector<32xf32>
    %13 = vector.multi_reduction <add>, %12, %cst_11 [1] : vector<32x128xf32> to vector<32xf32>
    %14 = vector.shape_cast %13 : vector<32xf32> to vector<32x1xf32>
    %15 = arith.addf %11, %14 : vector<32x1xf32>
    %c0_12 = arith.constant 0 : index
    %c0_13 = arith.constant 0 : index
    %16 = vector.load %arg7[%c0_12, %c0_13] : memref<32x1xf32, #tpu.memory_space<vmem>>, vector<32x1xf32>
    tpu.vector_store %arg7[%c0_12, %c0_13], %15 {strides = array<i32>} : memref<32x1xf32, #tpu.memory_space<vmem>>, vector<32x1xf32>,
    %c128_i32 = arith.constant 128 : i32
    %17 = arith.muli %arg0, %c128_i32 : i32
    %18 = tpu.assume_multiple %17, 128 : i32
    %c0_14 = arith.constant 0 : index
    %19 = arith.index_cast %18 : i32 to index
    %20 = vector.load %arg5[%c0_14, %19] : memref<32x128xf32, #tpu.memory_space<vmem>>, vector<32x128xf32>
    tpu.vector_store %arg5[%c0_14, %19], %5 {strides = array<i32>} : memref<32x128xf32, #tpu.memory_space<vmem>>, vector<32x128xf32>,
    %c0_i32_15 = arith.constant 0 : i32
    %21 = arith.cmpi eq, %arg0, %c0_i32_15 : i32
    %22 = arith.extui %21 : i1 to i32
    %c0_i32_16 = arith.constant 0 : i32
    %23 = arith.cmpi ne, %22, %c0_i32_16 : i32
    scf.if %23 {
      %c0_17 = arith.constant 0 : index
      %c0_18 = arith.constant 0 : index
      %24 = vector.load %arg6[%c0_17, %c0_18] : memref<32x1xf32, #tpu.memory_space<vmem>>, vector<32x1xf32>
      %cst_19 = arith.constant 3.125000e-02 : f32
      %25 = vector.broadcast %cst_19 : f32 to vector<32x1xf32>
      %26 = arith.mulf %24, %25 : vector<32x1xf32>
      %c0_20 = arith.constant 0 : index
      %c0_21 = arith.constant 0 : index
      %27 = vector.load %arg7[%c0_20, %c0_21] : memref<32x1xf32, #tpu.memory_space<vmem>>, vector<32x1xf32>
      %cst_22 = arith.constant 3.125000e-02 : f32
      %28 = vector.broadcast %cst_22 : f32 to vector<32x1xf32>
      %29 = arith.mulf %27, %28 : vector<32x1xf32>
      %30 = arith.mulf %26, %26 : vector<32x1xf32>
      %31 = arith.subf %29, %30 : vector<32x1xf32>
      %c0_23 = arith.constant 0 : index
      %c0_24 = arith.constant 0 : index
      %32 = vector.load %arg3[%c0_23, %c0_24] : memref<32x1xf32, #tpu.memory_space<vmem>>, vector<32x1xf32>
      %cst_25 = arith.constant 9.99999974E-6 : f32
      %33 = vector.broadcast %cst_25 : f32 to vector<32x1xf32>
      %34 = arith.addf %31, %33 : vector<32x1xf32>
      %35 = math.rsqrt %34 : vector<32x1xf32>
      %36 = arith.mulf %32, %35 : vector<32x1xf32>
      %c0_26 = arith.constant 0 : index
      %c0_27 = arith.constant 0 : index
      %37 = vector.load %arg4[%c0_26, %c0_27] : memref<32x1xf32, #tpu.memory_space<vmem>>, vector<32x1xf32>
      %38 = arith.mulf %26, %36 : vector<32x1xf32>
      %39 = arith.subf %37, %38 : vector<32x1xf32>
      %c0_28 = arith.constant 0 : index
      %c0_29 = arith.constant 0 : index
      %40 = vector.load %arg5[%c0_28, %c0_29] : memref<32x128xf32, #tpu.memory_space<vmem>>, vector<32x128xf32>
      %41 = vector.broadcast %36 : vector<32x1xf32> to vector<32x128xf32>
      %42 = arith.mulf %40, %41 : vector<32x128xf32>
      %43 = vector.broadcast %39 : vector<32x1xf32> to vector<32x128xf32>
      %44 = arith.addf %42, %43 : vector<32x128xf32>
      %cst_30 = arith.constant 0.000000e+00 : f32
      %45 = vector.broadcast %cst_30 : f32 to vector<32x128xf32>
      %46 = arith.cmpf oge, %44, %45 : vector<32x128xf32>
      %cst_31 = arith.constant 0.00999999977 : f32
      %47 = vector.broadcast %cst_31 : f32 to vector<32x128xf32>
      %48 = arith.mulf %47, %44 : vector<32x128xf32>
      %49 = arith.select %46, %44, %48 : vector<32x128xi1>, vector<32x128xf32>
      %c0_32 = arith.constant 0 : index
      %c0_33 = arith.constant 0 : index
      %50 = vector.load %arg5[%c0_32, %c0_33] : memref<32x128xf32, #tpu.memory_space<vmem>>, vector<32x128xf32>
      tpu.vector_store %arg5[%c0_32, %c0_33], %49 {strides = array<i32>} : memref<32x128xf32, #tpu.memory_space<vmem>>, vector<32x128xf32>,
    } else {
    }
    return
  }
  func.func @transform_0(%arg0: i32) -> (i32, i32) {
    %c0_i32 = arith.constant 0 : i32
    %c0_i32_0 = arith.constant 0 : i32
    return %c0_i32, %arg0 : i32, i32
  }
  func.func @transform_1(%arg0: i32) -> (i32, i32) {
    %c0_i32 = arith.constant 0 : i32
    %c0_i32_0 = arith.constant 0 : i32
    %c0_i32_1 = arith.constant 0 : i32
    return %c0_i32, %c0_i32_0 : i32, i32
  }
  func.func @transform_2(%arg0: i32) -> (i32, i32) {
    %c0_i32 = arith.constant 0 : i32
    %c0_i32_0 = arith.constant 0 : i32
    %c0_i32_1 = arith.constant 0 : i32
    return %c0_i32, %c0_i32_0 : i32, i32
  }
  func.func @transform_3(%arg0: i32) -> (i32, i32) {
    %c0_i32 = arith.constant 0 : i32
    %c0_i32_0 = arith.constant 0 : i32
    %c0_i32_1 = arith.constant 0 : i32
    return %c0_i32, %c0_i32_0 : i32, i32
  }
  func.func @transform_4(%arg0: i32) -> (i32, i32) {
    %c0_i32 = arith.constant 0 : i32
    %c0_i32_0 = arith.constant 0 : i32
    %c0_i32_1 = arith.constant 0 : i32
    return %c0_i32, %c0_i32_0 : i32, i32
  }
}

module attributes {stable_mosaic.version = 11 : i64} {
  func.func @_conv_bn_lrelu_kernel(%arg0: i32, %arg1: memref<288x128xbf16, #tpu.memory_space<vmem>>, %arg2: memref<16x288xbf16, #tpu.memory_space<vmem>>, %arg3: memref<16x1xf32, #tpu.memory_space<vmem>>, %arg4: memref<16x1xf32, #tpu.memory_space<vmem>>, %arg5: memref<16x128xf32, #tpu.memory_space<vmem>>, %arg6: memref<16x1xf32, #tpu.memory_space<vmem>>, %arg7: memref<16x1xf32, #tpu.memory_space<vmem>>) attributes {dimension_semantics = [#tpu.dimension_semantics<arbitrary>], iteration_bounds = array<i64: 1>, scalar_prefetch = 0 : i64, scratch_operands = 2 : i64, tpu.core_type = #tpu.core_type<tc>, window_params = [{transform_indices = @transform_0, window_bounds = array<i64: 288, 128>}, {pipeline_mode = #tpu.pipeline_mode<synchronous>, transform_indices = @transform_1, window_bounds = array<i64: 16, 288>}, {pipeline_mode = #tpu.pipeline_mode<synchronous>, transform_indices = @transform_2, window_bounds = array<i64: 16, 1>}, {pipeline_mode = #tpu.pipeline_mode<synchronous>, transform_indices = @transform_3, window_bounds = array<i64: 16, 1>}, {pipeline_mode = #tpu.pipeline_mode<synchronous>, transform_indices = @transform_4, window_bounds = array<i64: 16, 128>}]} {
    %c0_i32 = arith.constant 0 : i32
    %0 = arith.cmpi eq, %arg0, %c0_i32 : i32
    %1 = arith.extui %0 : i1 to i32
    %c0_i32_0 = arith.constant 0 : i32
    %2 = arith.cmpi ne, %1, %c0_i32_0 : i32
    scf.if %2 {
      %cst_17 = arith.constant 0.000000e+00 : f32
      %24 = vector.broadcast %cst_17 : f32 to vector<16x1xf32>
      %c0_18 = arith.constant 0 : index
      %c0_19 = arith.constant 0 : index
      %25 = vector.load %arg6[%c0_18, %c0_19] : memref<16x1xf32, #tpu.memory_space<vmem>>, vector<16x1xf32>
      tpu.vector_store %arg6[%c0_18, %c0_19], %24 {strides = array<i32>} : memref<16x1xf32, #tpu.memory_space<vmem>>, vector<16x1xf32>,
      %cst_20 = arith.constant 0.000000e+00 : f32
      %26 = vector.broadcast %cst_20 : f32 to vector<16x1xf32>
      %c0_21 = arith.constant 0 : index
      %c0_22 = arith.constant 0 : index
      %27 = vector.load %arg7[%c0_21, %c0_22] : memref<16x1xf32, #tpu.memory_space<vmem>>, vector<16x1xf32>
      tpu.vector_store %arg7[%c0_21, %c0_22], %26 {strides = array<i32>} : memref<16x1xf32, #tpu.memory_space<vmem>>, vector<16x1xf32>,
    } else {
    }
    %c0 = arith.constant 0 : index
    %c0_1 = arith.constant 0 : index
    %3 = vector.load %arg2[%c0, %c0_1] : memref<16x288xbf16, #tpu.memory_space<vmem>>, vector<16x288xbf16>
    %c0_2 = arith.constant 0 : index
    %c0_3 = arith.constant 0 : index
    %4 = vector.load %arg1[%c0_2, %c0_3] : memref<288x128xbf16, #tpu.memory_space<vmem>>, vector<288x128xbf16>
    %cst = arith.constant dense<0.000000e+00> : vector<16x128xf32>
    %5 = tpu.matmul %3, %4, %cst {dimension_numbers = #tpu.dot_dimension_numbers<[1], [0], [0], [1], [0, 0, 1, 1], [], []>} : vector<16x288xbf16>, vector<288x128xbf16>, vector<16x128xf32> -> vector<16x128xf32>
    %c0_4 = arith.constant 0 : index
    %c0_5 = arith.constant 0 : index
    %6 = vector.load %arg6[%c0_4, %c0_5] : memref<16x1xf32, #tpu.memory_space<vmem>>, vector<16x1xf32>
    %cst_6 = arith.constant dense<0.000000e+00> : vector<16xf32>
    %7 = vector.multi_reduction <add>, %5, %cst_6 [1] : vector<16x128xf32> to vector<16xf32>
    %8 = vector.shape_cast %7 : vector<16xf32> to vector<16x1xf32>
    %9 = arith.addf %6, %8 : vector<16x1xf32>
    %c0_7 = arith.constant 0 : index
    %c0_8 = arith.constant 0 : index
    %10 = vector.load %arg6[%c0_7, %c0_8] : memref<16x1xf32, #tpu.memory_space<vmem>>, vector<16x1xf32>
    tpu.vector_store %arg6[%c0_7, %c0_8], %9 {strides = array<i32>} : memref<16x1xf32, #tpu.memory_space<vmem>>, vector<16x1xf32>,
    %c0_9 = arith.constant 0 : index
    %c0_10 = arith.constant 0 : index
    %11 = vector.load %arg7[%c0_9, %c0_10] : memref<16x1xf32, #tpu.memory_space<vmem>>, vector<16x1xf32>
    %12 = arith.mulf %5, %5 : vector<16x128xf32>
    %cst_11 = arith.constant dense<0.000000e+00> : vector<16xf32>
    %13 = vector.multi_reduction <add>, %12, %cst_11 [1] : vector<16x128xf32> to vector<16xf32>
    %14 = vector.shape_cast %13 : vector<16xf32> to vector<16x1xf32>
    %15 = arith.addf %11, %14 : vector<16x1xf32>
    %c0_12 = arith.constant 0 : index
    %c0_13 = arith.constant 0 : index
    %16 = vector.load %arg7[%c0_12, %c0_13] : memref<16x1xf32, #tpu.memory_space<vmem>>, vector<16x1xf32>
    tpu.vector_store %arg7[%c0_12, %c0_13], %15 {strides = array<i32>} : memref<16x1xf32, #tpu.memory_space<vmem>>, vector<16x1xf32>,
    %c128_i32 = arith.constant 128 : i32
    %17 = arith.muli %arg0, %c128_i32 : i32
    %18 = tpu.assume_multiple %17, 128 : i32
    %c0_14 = arith.constant 0 : index
    %19 = arith.index_cast %18 : i32 to index
    %20 = vector.load %arg5[%c0_14, %19] : memref<16x128xf32, #tpu.memory_space<vmem>>, vector<16x128xf32>
    tpu.vector_store %arg5[%c0_14, %19], %5 {strides = array<i32>} : memref<16x128xf32, #tpu.memory_space<vmem>>, vector<16x128xf32>,
    %c0_i32_15 = arith.constant 0 : i32
    %21 = arith.cmpi eq, %arg0, %c0_i32_15 : i32
    %22 = arith.extui %21 : i1 to i32
    %c0_i32_16 = arith.constant 0 : i32
    %23 = arith.cmpi ne, %22, %c0_i32_16 : i32
    scf.if %23 {
      %c0_17 = arith.constant 0 : index
      %c0_18 = arith.constant 0 : index
      %24 = vector.load %arg6[%c0_17, %c0_18] : memref<16x1xf32, #tpu.memory_space<vmem>>, vector<16x1xf32>
      %cst_19 = arith.constant 0.0102040814 : f32
      %25 = vector.broadcast %cst_19 : f32 to vector<16x1xf32>
      %26 = arith.mulf %24, %25 : vector<16x1xf32>
      %c0_20 = arith.constant 0 : index
      %c0_21 = arith.constant 0 : index
      %27 = vector.load %arg7[%c0_20, %c0_21] : memref<16x1xf32, #tpu.memory_space<vmem>>, vector<16x1xf32>
      %cst_22 = arith.constant 0.0102040814 : f32
      %28 = vector.broadcast %cst_22 : f32 to vector<16x1xf32>
      %29 = arith.mulf %27, %28 : vector<16x1xf32>
      %30 = arith.mulf %26, %26 : vector<16x1xf32>
      %31 = arith.subf %29, %30 : vector<16x1xf32>
      %c0_23 = arith.constant 0 : index
      %c0_24 = arith.constant 0 : index
      %32 = vector.load %arg3[%c0_23, %c0_24] : memref<16x1xf32, #tpu.memory_space<vmem>>, vector<16x1xf32>
      %cst_25 = arith.constant 9.99999974E-6 : f32
      %33 = vector.broadcast %cst_25 : f32 to vector<16x1xf32>
      %34 = arith.addf %31, %33 : vector<16x1xf32>
      %35 = math.rsqrt %34 : vector<16x1xf32>
      %36 = arith.mulf %32, %35 : vector<16x1xf32>
      %c0_26 = arith.constant 0 : index
      %c0_27 = arith.constant 0 : index
      %37 = vector.load %arg4[%c0_26, %c0_27] : memref<16x1xf32, #tpu.memory_space<vmem>>, vector<16x1xf32>
      %38 = arith.mulf %26, %36 : vector<16x1xf32>
      %39 = arith.subf %37, %38 : vector<16x1xf32>
      %c0_28 = arith.constant 0 : index
      %c0_29 = arith.constant 0 : index
      %40 = vector.load %arg5[%c0_28, %c0_29] : memref<16x128xf32, #tpu.memory_space<vmem>>, vector<16x128xf32>
      %41 = vector.broadcast %36 : vector<16x1xf32> to vector<16x128xf32>
      %42 = arith.mulf %40, %41 : vector<16x128xf32>
      %43 = vector.broadcast %39 : vector<16x1xf32> to vector<16x128xf32>
      %44 = arith.addf %42, %43 : vector<16x128xf32>
      %cst_30 = arith.constant 0.000000e+00 : f32
      %45 = vector.broadcast %cst_30 : f32 to vector<16x128xf32>
      %46 = arith.cmpf oge, %44, %45 : vector<16x128xf32>
      %cst_31 = arith.constant 0.00999999977 : f32
      %47 = vector.broadcast %cst_31 : f32 to vector<16x128xf32>
      %48 = arith.mulf %47, %44 : vector<16x128xf32>
      %49 = arith.select %46, %44, %48 : vector<16x128xi1>, vector<16x128xf32>
      %c0_32 = arith.constant 0 : index
      %c0_33 = arith.constant 0 : index
      %50 = vector.load %arg5[%c0_32, %c0_33] : memref<16x128xf32, #tpu.memory_space<vmem>>, vector<16x128xf32>
      tpu.vector_store %arg5[%c0_32, %c0_33], %49 {strides = array<i32>} : memref<16x128xf32, #tpu.memory_space<vmem>>, vector<16x128xf32>,
    } else {
    }
    return
  }
  func.func @transform_0(%arg0: i32) -> (i32, i32) {
    %c0_i32 = arith.constant 0 : i32
    %c0_i32_0 = arith.constant 0 : i32
    return %c0_i32, %arg0 : i32, i32
  }
  func.func @transform_1(%arg0: i32) -> (i32, i32) {
    %c0_i32 = arith.constant 0 : i32
    %c0_i32_0 = arith.constant 0 : i32
    %c0_i32_1 = arith.constant 0 : i32
    return %c0_i32, %c0_i32_0 : i32, i32
  }
  func.func @transform_2(%arg0: i32) -> (i32, i32) {
    %c0_i32 = arith.constant 0 : i32
    %c0_i32_0 = arith.constant 0 : i32
    %c0_i32_1 = arith.constant 0 : i32
    return %c0_i32, %c0_i32_0 : i32, i32
  }
  func.func @transform_3(%arg0: i32) -> (i32, i32) {
    %c0_i32 = arith.constant 0 : i32
    %c0_i32_0 = arith.constant 0 : i32
    %c0_i32_1 = arith.constant 0 : i32
    return %c0_i32, %c0_i32_0 : i32, i32
  }
  func.func @transform_4(%arg0: i32) -> (i32, i32) {
    %c0_i32 = arith.constant 0 : i32
    %c0_i32_0 = arith.constant 0 : i32
    %c0_i32_1 = arith.constant 0 : i32
    return %c0_i32, %c0_i32_0 : i32, i32
  }
}

module attributes {stable_mosaic.version = 11 : i64} {
  func.func @_conv_bn_lrelu_kernel(%arg0: i32, %arg1: memref<144x512xbf16, #tpu.memory_space<vmem>>, %arg2: memref<8x144xbf16, #tpu.memory_space<vmem>>, %arg3: memref<8x1xf32, #tpu.memory_space<vmem>>, %arg4: memref<8x1xf32, #tpu.memory_space<vmem>>, %arg5: memref<8x512xf32, #tpu.memory_space<vmem>>, %arg6: memref<8x1xf32, #tpu.memory_space<vmem>>, %arg7: memref<8x1xf32, #tpu.memory_space<vmem>>) attributes {dimension_semantics = [#tpu.dimension_semantics<arbitrary>], iteration_bounds = array<i64: 1>, scalar_prefetch = 0 : i64, scratch_operands = 2 : i64, tpu.core_type = #tpu.core_type<tc>, window_params = [{transform_indices = @transform_0, window_bounds = array<i64: 144, 512>}, {pipeline_mode = #tpu.pipeline_mode<synchronous>, transform_indices = @transform_1, window_bounds = array<i64: 8, 144>}, {pipeline_mode = #tpu.pipeline_mode<synchronous>, transform_indices = @transform_2, window_bounds = array<i64: 8, 1>}, {pipeline_mode = #tpu.pipeline_mode<synchronous>, transform_indices = @transform_3, window_bounds = array<i64: 8, 1>}, {pipeline_mode = #tpu.pipeline_mode<synchronous>, transform_indices = @transform_4, window_bounds = array<i64: 8, 512>}]} {
    %c0_i32 = arith.constant 0 : i32
    %0 = arith.cmpi eq, %arg0, %c0_i32 : i32
    %1 = arith.extui %0 : i1 to i32
    %c0_i32_0 = arith.constant 0 : i32
    %2 = arith.cmpi ne, %1, %c0_i32_0 : i32
    scf.if %2 {
      %cst_17 = arith.constant 0.000000e+00 : f32
      %24 = vector.broadcast %cst_17 : f32 to vector<8x1xf32>
      %c0_18 = arith.constant 0 : index
      %c0_19 = arith.constant 0 : index
      %25 = vector.load %arg6[%c0_18, %c0_19] : memref<8x1xf32, #tpu.memory_space<vmem>>, vector<8x1xf32>
      tpu.vector_store %arg6[%c0_18, %c0_19], %24 {strides = array<i32>} : memref<8x1xf32, #tpu.memory_space<vmem>>, vector<8x1xf32>,
      %cst_20 = arith.constant 0.000000e+00 : f32
      %26 = vector.broadcast %cst_20 : f32 to vector<8x1xf32>
      %c0_21 = arith.constant 0 : index
      %c0_22 = arith.constant 0 : index
      %27 = vector.load %arg7[%c0_21, %c0_22] : memref<8x1xf32, #tpu.memory_space<vmem>>, vector<8x1xf32>
      tpu.vector_store %arg7[%c0_21, %c0_22], %26 {strides = array<i32>} : memref<8x1xf32, #tpu.memory_space<vmem>>, vector<8x1xf32>,
    } else {
    }
    %c0 = arith.constant 0 : index
    %c0_1 = arith.constant 0 : index
    %3 = vector.load %arg2[%c0, %c0_1] : memref<8x144xbf16, #tpu.memory_space<vmem>>, vector<8x144xbf16>
    %c0_2 = arith.constant 0 : index
    %c0_3 = arith.constant 0 : index
    %4 = vector.load %arg1[%c0_2, %c0_3] : memref<144x512xbf16, #tpu.memory_space<vmem>>, vector<144x512xbf16>
    %cst = arith.constant dense<0.000000e+00> : vector<8x512xf32>
    %5 = tpu.matmul %3, %4, %cst {dimension_numbers = #tpu.dot_dimension_numbers<[1], [0], [0], [1], [0, 0, 1, 1], [], []>} : vector<8x144xbf16>, vector<144x512xbf16>, vector<8x512xf32> -> vector<8x512xf32>
    %c0_4 = arith.constant 0 : index
    %c0_5 = arith.constant 0 : index
    %6 = vector.load %arg6[%c0_4, %c0_5] : memref<8x1xf32, #tpu.memory_space<vmem>>, vector<8x1xf32>
    %cst_6 = arith.constant dense<0.000000e+00> : vector<8xf32>
    %7 = vector.multi_reduction <add>, %5, %cst_6 [1] : vector<8x512xf32> to vector<8xf32>
    %8 = vector.shape_cast %7 : vector<8xf32> to vector<8x1xf32>
    %9 = arith.addf %6, %8 : vector<8x1xf32>
    %c0_7 = arith.constant 0 : index
    %c0_8 = arith.constant 0 : index
    %10 = vector.load %arg6[%c0_7, %c0_8] : memref<8x1xf32, #tpu.memory_space<vmem>>, vector<8x1xf32>
    tpu.vector_store %arg6[%c0_7, %c0_8], %9 {strides = array<i32>} : memref<8x1xf32, #tpu.memory_space<vmem>>, vector<8x1xf32>,
    %c0_9 = arith.constant 0 : index
    %c0_10 = arith.constant 0 : index
    %11 = vector.load %arg7[%c0_9, %c0_10] : memref<8x1xf32, #tpu.memory_space<vmem>>, vector<8x1xf32>
    %12 = arith.mulf %5, %5 : vector<8x512xf32>
    %cst_11 = arith.constant dense<0.000000e+00> : vector<8xf32>
    %13 = vector.multi_reduction <add>, %12, %cst_11 [1] : vector<8x512xf32> to vector<8xf32>
    %14 = vector.shape_cast %13 : vector<8xf32> to vector<8x1xf32>
    %15 = arith.addf %11, %14 : vector<8x1xf32>
    %c0_12 = arith.constant 0 : index
    %c0_13 = arith.constant 0 : index
    %16 = vector.load %arg7[%c0_12, %c0_13] : memref<8x1xf32, #tpu.memory_space<vmem>>, vector<8x1xf32>
    tpu.vector_store %arg7[%c0_12, %c0_13], %15 {strides = array<i32>} : memref<8x1xf32, #tpu.memory_space<vmem>>, vector<8x1xf32>,
    %c512_i32 = arith.constant 512 : i32
    %17 = arith.muli %arg0, %c512_i32 : i32
    %18 = tpu.assume_multiple %17, 512 : i32
    %c0_14 = arith.constant 0 : index
    %19 = arith.index_cast %18 : i32 to index
    %20 = vector.load %arg5[%c0_14, %19] : memref<8x512xf32, #tpu.memory_space<vmem>>, vector<8x512xf32>
    tpu.vector_store %arg5[%c0_14, %19], %5 {strides = array<i32>} : memref<8x512xf32, #tpu.memory_space<vmem>>, vector<8x512xf32>,
    %c0_i32_15 = arith.constant 0 : i32
    %21 = arith.cmpi eq, %arg0, %c0_i32_15 : i32
    %22 = arith.extui %21 : i1 to i32
    %c0_i32_16 = arith.constant 0 : i32
    %23 = arith.cmpi ne, %22, %c0_i32_16 : i32
    scf.if %23 {
      %c0_17 = arith.constant 0 : index
      %c0_18 = arith.constant 0 : index
      %24 = vector.load %arg6[%c0_17, %c0_18] : memref<8x1xf32, #tpu.memory_space<vmem>>, vector<8x1xf32>
      %cst_19 = arith.constant 0.00255102036 : f32
      %25 = vector.broadcast %cst_19 : f32 to vector<8x1xf32>
      %26 = arith.mulf %24, %25 : vector<8x1xf32>
      %c0_20 = arith.constant 0 : index
      %c0_21 = arith.constant 0 : index
      %27 = vector.load %arg7[%c0_20, %c0_21] : memref<8x1xf32, #tpu.memory_space<vmem>>, vector<8x1xf32>
      %cst_22 = arith.constant 0.00255102036 : f32
      %28 = vector.broadcast %cst_22 : f32 to vector<8x1xf32>
      %29 = arith.mulf %27, %28 : vector<8x1xf32>
      %30 = arith.mulf %26, %26 : vector<8x1xf32>
      %31 = arith.subf %29, %30 : vector<8x1xf32>
      %c0_23 = arith.constant 0 : index
      %c0_24 = arith.constant 0 : index
      %32 = vector.load %arg3[%c0_23, %c0_24] : memref<8x1xf32, #tpu.memory_space<vmem>>, vector<8x1xf32>
      %cst_25 = arith.constant 9.99999974E-6 : f32
      %33 = vector.broadcast %cst_25 : f32 to vector<8x1xf32>
      %34 = arith.addf %31, %33 : vector<8x1xf32>
      %35 = math.rsqrt %34 : vector<8x1xf32>
      %36 = arith.mulf %32, %35 : vector<8x1xf32>
      %c0_26 = arith.constant 0 : index
      %c0_27 = arith.constant 0 : index
      %37 = vector.load %arg4[%c0_26, %c0_27] : memref<8x1xf32, #tpu.memory_space<vmem>>, vector<8x1xf32>
      %38 = arith.mulf %26, %36 : vector<8x1xf32>
      %39 = arith.subf %37, %38 : vector<8x1xf32>
      %c0_28 = arith.constant 0 : index
      %c0_29 = arith.constant 0 : index
      %40 = vector.load %arg5[%c0_28, %c0_29] : memref<8x512xf32, #tpu.memory_space<vmem>>, vector<8x512xf32>
      %41 = vector.broadcast %36 : vector<8x1xf32> to vector<8x512xf32>
      %42 = arith.mulf %40, %41 : vector<8x512xf32>
      %43 = vector.broadcast %39 : vector<8x1xf32> to vector<8x512xf32>
      %44 = arith.addf %42, %43 : vector<8x512xf32>
      %cst_30 = arith.constant 0.000000e+00 : f32
      %45 = vector.broadcast %cst_30 : f32 to vector<8x512xf32>
      %46 = arith.cmpf oge, %44, %45 : vector<8x512xf32>
      %cst_31 = arith.constant 0.00999999977 : f32
      %47 = vector.broadcast %cst_31 : f32 to vector<8x512xf32>
      %48 = arith.mulf %47, %44 : vector<8x512xf32>
      %49 = arith.select %46, %44, %48 : vector<8x512xi1>, vector<8x512xf32>
      %c0_32 = arith.constant 0 : index
      %c0_33 = arith.constant 0 : index
      %50 = vector.load %arg5[%c0_32, %c0_33] : memref<8x512xf32, #tpu.memory_space<vmem>>, vector<8x512xf32>
      tpu.vector_store %arg5[%c0_32, %c0_33], %49 {strides = array<i32>} : memref<8x512xf32, #tpu.memory_space<vmem>>, vector<8x512xf32>,
    } else {
    }
    return
  }
  func.func @transform_0(%arg0: i32) -> (i32, i32) {
    %c0_i32 = arith.constant 0 : i32
    %c0_i32_0 = arith.constant 0 : i32
    return %c0_i32, %arg0 : i32, i32
  }
  func.func @transform_1(%arg0: i32) -> (i32, i32) {
    %c0_i32 = arith.constant 0 : i32
    %c0_i32_0 = arith.constant 0 : i32
    %c0_i32_1 = arith.constant 0 : i32
    return %c0_i32, %c0_i32_0 : i32, i32
  }
  func.func @transform_2(%arg0: i32) -> (i32, i32) {
    %c0_i32 = arith.constant 0 : i32
    %c0_i32_0 = arith.constant 0 : i32
    %c0_i32_1 = arith.constant 0 : i32
    return %c0_i32, %c0_i32_0 : i32, i32
  }
  func.func @transform_3(%arg0: i32) -> (i32, i32) {
    %c0_i32 = arith.constant 0 : i32
    %c0_i32_0 = arith.constant 0 : i32
    %c0_i32_1 = arith.constant 0 : i32
    return %c0_i32, %c0_i32_0 : i32, i32
  }
  func.func @transform_4(%arg0: i32) -> (i32, i32) {
    %c0_i32 = arith.constant 0 : i32
    %c0_i32_0 = arith.constant 0 : i32
    %c0_i32_1 = arith.constant 0 : i32
    return %c0_i32, %c0_i32_0 : i32, i32
  }
}

module attributes {stable_mosaic.version = 11 : i64} {
  func.func @_conv_bn_lrelu_kernel(%arg0: i32, %arg1: memref<72x512xbf16, #tpu.memory_space<vmem>>, %arg2: memref<8x72xbf16, #tpu.memory_space<vmem>>, %arg3: memref<8x1xf32, #tpu.memory_space<vmem>>, %arg4: memref<8x1xf32, #tpu.memory_space<vmem>>, %arg5: memref<8x2048xf32, #tpu.memory_space<vmem>>, %arg6: memref<8x1xf32, #tpu.memory_space<vmem>>, %arg7: memref<8x1xf32, #tpu.memory_space<vmem>>) attributes {dimension_semantics = [#tpu.dimension_semantics<arbitrary>], iteration_bounds = array<i64: 4>, scalar_prefetch = 0 : i64, scratch_operands = 2 : i64, tpu.core_type = #tpu.core_type<tc>, window_params = [{transform_indices = @transform_0, window_bounds = array<i64: 72, 512>}, {pipeline_mode = #tpu.pipeline_mode<synchronous>, transform_indices = @transform_1, window_bounds = array<i64: 8, 72>}, {pipeline_mode = #tpu.pipeline_mode<synchronous>, transform_indices = @transform_2, window_bounds = array<i64: 8, 1>}, {pipeline_mode = #tpu.pipeline_mode<synchronous>, transform_indices = @transform_3, window_bounds = array<i64: 8, 1>}, {pipeline_mode = #tpu.pipeline_mode<synchronous>, transform_indices = @transform_4, window_bounds = array<i64: 8, 2048>}]} {
    %c0_i32 = arith.constant 0 : i32
    %0 = arith.cmpi eq, %arg0, %c0_i32 : i32
    %1 = arith.extui %0 : i1 to i32
    %c0_i32_0 = arith.constant 0 : i32
    %2 = arith.cmpi ne, %1, %c0_i32_0 : i32
    scf.if %2 {
      %cst_16 = arith.constant 0.000000e+00 : f32
      %24 = vector.broadcast %cst_16 : f32 to vector<8x1xf32>
      %c0_17 = arith.constant 0 : index
      %c0_18 = arith.constant 0 : index
      %25 = vector.load %arg6[%c0_17, %c0_18] : memref<8x1xf32, #tpu.memory_space<vmem>>, vector<8x1xf32>
      tpu.vector_store %arg6[%c0_17, %c0_18], %24 {strides = array<i32>} : memref<8x1xf32, #tpu.memory_space<vmem>>, vector<8x1xf32>,
      %cst_19 = arith.constant 0.000000e+00 : f32
      %26 = vector.broadcast %cst_19 : f32 to vector<8x1xf32>
      %c0_20 = arith.constant 0 : index
      %c0_21 = arith.constant 0 : index
      %27 = vector.load %arg7[%c0_20, %c0_21] : memref<8x1xf32, #tpu.memory_space<vmem>>, vector<8x1xf32>
      tpu.vector_store %arg7[%c0_20, %c0_21], %26 {strides = array<i32>} : memref<8x1xf32, #tpu.memory_space<vmem>>, vector<8x1xf32>,
    } else {
    }
    %c0 = arith.constant 0 : index
    %c0_1 = arith.constant 0 : index
    %3 = vector.load %arg2[%c0, %c0_1] : memref<8x72xbf16, #tpu.memory_space<vmem>>, vector<8x72xbf16>
    %c0_2 = arith.constant 0 : index
    %c0_3 = arith.constant 0 : index
    %4 = vector.load %arg1[%c0_2, %c0_3] : memref<72x512xbf16, #tpu.memory_space<vmem>>, vector<72x512xbf16>
    %cst = arith.constant dense<0.000000e+00> : vector<8x512xf32>
    %5 = tpu.matmul %3, %4, %cst {dimension_numbers = #tpu.dot_dimension_numbers<[1], [0], [0], [1], [0, 0, 1, 1], [], []>} : vector<8x72xbf16>, vector<72x512xbf16>, vector<8x512xf32> -> vector<8x512xf32>
    %c0_4 = arith.constant 0 : index
    %c0_5 = arith.constant 0 : index
    %6 = vector.load %arg6[%c0_4, %c0_5] : memref<8x1xf32, #tpu.memory_space<vmem>>, vector<8x1xf32>
    %cst_6 = arith.constant dense<0.000000e+00> : vector<8xf32>
    %7 = vector.multi_reduction <add>, %5, %cst_6 [1] : vector<8x512xf32> to vector<8xf32>
    %8 = vector.shape_cast %7 : vector<8xf32> to vector<8x1xf32>
    %9 = arith.addf %6, %8 : vector<8x1xf32>
    %c0_7 = arith.constant 0 : index
    %c0_8 = arith.constant 0 : index
    %10 = vector.load %arg6[%c0_7, %c0_8] : memref<8x1xf32, #tpu.memory_space<vmem>>, vector<8x1xf32>
    tpu.vector_store %arg6[%c0_7, %c0_8], %9 {strides = array<i32>} : memref<8x1xf32, #tpu.memory_space<vmem>>, vector<8x1xf32>,
    %c0_9 = arith.constant 0 : index
    %c0_10 = arith.constant 0 : index
    %11 = vector.load %arg7[%c0_9, %c0_10] : memref<8x1xf32, #tpu.memory_space<vmem>>, vector<8x1xf32>
    %12 = arith.mulf %5, %5 : vector<8x512xf32>
    %cst_11 = arith.constant dense<0.000000e+00> : vector<8xf32>
    %13 = vector.multi_reduction <add>, %12, %cst_11 [1] : vector<8x512xf32> to vector<8xf32>
    %14 = vector.shape_cast %13 : vector<8xf32> to vector<8x1xf32>
    %15 = arith.addf %11, %14 : vector<8x1xf32>
    %c0_12 = arith.constant 0 : index
    %c0_13 = arith.constant 0 : index
    %16 = vector.load %arg7[%c0_12, %c0_13] : memref<8x1xf32, #tpu.memory_space<vmem>>, vector<8x1xf32>
    tpu.vector_store %arg7[%c0_12, %c0_13], %15 {strides = array<i32>} : memref<8x1xf32, #tpu.memory_space<vmem>>, vector<8x1xf32>,
    %c512_i32 = arith.constant 512 : i32
    %17 = arith.muli %arg0, %c512_i32 : i32
    %18 = tpu.assume_multiple %17, 512 : i32
    %c0_14 = arith.constant 0 : index
    %19 = arith.index_cast %18 : i32 to index
    %20 = vector.load %arg5[%c0_14, %19] : memref<8x2048xf32, #tpu.memory_space<vmem>>, vector<8x512xf32>
    tpu.vector_store %arg5[%c0_14, %19], %5 {strides = array<i32>} : memref<8x2048xf32, #tpu.memory_space<vmem>>, vector<8x512xf32>,
    %c3_i32 = arith.constant 3 : i32
    %21 = arith.cmpi eq, %arg0, %c3_i32 : i32
    %22 = arith.extui %21 : i1 to i32
    %c0_i32_15 = arith.constant 0 : i32
    %23 = arith.cmpi ne, %22, %c0_i32_15 : i32
    scf.if %23 {
      %c0_16 = arith.constant 0 : index
      %c0_17 = arith.constant 0 : index
      %24 = vector.load %arg6[%c0_16, %c0_17] : memref<8x1xf32, #tpu.memory_space<vmem>>, vector<8x1xf32>
      %cst_18 = arith.constant 6.37755089E-4 : f32
      %25 = vector.broadcast %cst_18 : f32 to vector<8x1xf32>
      %26 = arith.mulf %24, %25 : vector<8x1xf32>
      %c0_19 = arith.constant 0 : index
      %c0_20 = arith.constant 0 : index
      %27 = vector.load %arg7[%c0_19, %c0_20] : memref<8x1xf32, #tpu.memory_space<vmem>>, vector<8x1xf32>
      %cst_21 = arith.constant 6.37755089E-4 : f32
      %28 = vector.broadcast %cst_21 : f32 to vector<8x1xf32>
      %29 = arith.mulf %27, %28 : vector<8x1xf32>
      %30 = arith.mulf %26, %26 : vector<8x1xf32>
      %31 = arith.subf %29, %30 : vector<8x1xf32>
      %c0_22 = arith.constant 0 : index
      %c0_23 = arith.constant 0 : index
      %32 = vector.load %arg3[%c0_22, %c0_23] : memref<8x1xf32, #tpu.memory_space<vmem>>, vector<8x1xf32>
      %cst_24 = arith.constant 9.99999974E-6 : f32
      %33 = vector.broadcast %cst_24 : f32 to vector<8x1xf32>
      %34 = arith.addf %31, %33 : vector<8x1xf32>
      %35 = math.rsqrt %34 : vector<8x1xf32>
      %36 = arith.mulf %32, %35 : vector<8x1xf32>
      %c0_25 = arith.constant 0 : index
      %c0_26 = arith.constant 0 : index
      %37 = vector.load %arg4[%c0_25, %c0_26] : memref<8x1xf32, #tpu.memory_space<vmem>>, vector<8x1xf32>
      %38 = arith.mulf %26, %36 : vector<8x1xf32>
      %39 = arith.subf %37, %38 : vector<8x1xf32>
      %c0_27 = arith.constant 0 : index
      %c0_28 = arith.constant 0 : index
      %40 = vector.load %arg5[%c0_27, %c0_28] : memref<8x2048xf32, #tpu.memory_space<vmem>>, vector<8x2048xf32>
      %41 = vector.broadcast %36 : vector<8x1xf32> to vector<8x2048xf32>
      %42 = arith.mulf %40, %41 : vector<8x2048xf32>
      %43 = vector.broadcast %39 : vector<8x1xf32> to vector<8x2048xf32>
      %44 = arith.addf %42, %43 : vector<8x2048xf32>
      %cst_29 = arith.constant 0.000000e+00 : f32
      %45 = vector.broadcast %cst_29 : f32 to vector<8x2048xf32>
      %46 = arith.cmpf oge, %44, %45 : vector<8x2048xf32>
      %cst_30 = arith.constant 0.00999999977 : f32
      %47 = vector.broadcast %cst_30 : f32 to vector<8x2048xf32>
      %48 = arith.mulf %47, %44 : vector<8x2048xf32>
      %49 = arith.select %46, %44, %48 : vector<8x2048xi1>, vector<8x2048xf32>
      %c0_31 = arith.constant 0 : index
      %c0_32 = arith.constant 0 : index
      %50 = vector.load %arg5[%c0_31, %c0_32] : memref<8x2048xf32, #tpu.memory_space<vmem>>, vector<8x2048xf32>
      tpu.vector_store %arg5[%c0_31, %c0_32], %49 {strides = array<i32>} : memref<8x2048xf32, #tpu.memory_space<vmem>>, vector<8x2048xf32>,
    } else {
    }
    return
  }
  func.func @transform_0(%arg0: i32) -> (i32, i32) {
    %c0_i32 = arith.constant 0 : i32
    %c0_i32_0 = arith.constant 0 : i32
    return %c0_i32, %arg0 : i32, i32
  }
  func.func @transform_1(%arg0: i32) -> (i32, i32) {
    %c0_i32 = arith.constant 0 : i32
    %c0_i32_0 = arith.constant 0 : i32
    %c0_i32_1 = arith.constant 0 : i32
    return %c0_i32, %c0_i32_0 : i32, i32
  }
  func.func @transform_2(%arg0: i32) -> (i32, i32) {
    %c0_i32 = arith.constant 0 : i32
    %c0_i32_0 = arith.constant 0 : i32
    %c0_i32_1 = arith.constant 0 : i32
    return %c0_i32, %c0_i32_0 : i32, i32
  }
  func.func @transform_3(%arg0: i32) -> (i32, i32) {
    %c0_i32 = arith.constant 0 : i32
    %c0_i32_0 = arith.constant 0 : i32
    %c0_i32_1 = arith.constant 0 : i32
    return %c0_i32, %c0_i32_0 : i32, i32
  }
  func.func @transform_4(%arg0: i32) -> (i32, i32) {
    %c0_i32 = arith.constant 0 : i32
    %c0_i32_0 = arith.constant 0 : i32
    %c0_i32_1 = arith.constant 0 : i32
    return %c0_i32, %c0_i32_0 : i32, i32
  }
}

module attributes {stable_mosaic.version = 11 : i64} {
  func.func @_conv_bias_act_kernel(%arg0: i32, %arg1: memref<72x512xbf16, #tpu.memory_space<vmem>>, %arg2: memref<1x72xbf16, #tpu.memory_space<vmem>>, %arg3: memref<1x1xf32, #tpu.memory_space<vmem>>, %arg4: memref<1x512xf32, #tpu.memory_space<vmem>>) attributes {dimension_semantics = [#tpu.dimension_semantics<parallel>], iteration_bounds = array<i64: 4>, scalar_prefetch = 0 : i64, scratch_operands = 0 : i64, tpu.core_type = #tpu.core_type<tc>, window_params = [{transform_indices = @transform_0, window_bounds = array<i64: 72, 512>}, {pipeline_mode = #tpu.pipeline_mode<synchronous>, transform_indices = @transform_1, window_bounds = array<i64: 1, 72>}, {pipeline_mode = #tpu.pipeline_mode<synchronous>, transform_indices = @transform_2, window_bounds = array<i64: 1, 1>}, {transform_indices = @transform_3, window_bounds = array<i64: 1, 512>}]} {
    %c0 = arith.constant 0 : index
    %c0_0 = arith.constant 0 : index
    %0 = vector.load %arg2[%c0, %c0_0] : memref<1x72xbf16, #tpu.memory_space<vmem>>, vector<1x72xbf16>
    %c0_1 = arith.constant 0 : index
    %c0_2 = arith.constant 0 : index
    %1 = vector.load %arg1[%c0_1, %c0_2] : memref<72x512xbf16, #tpu.memory_space<vmem>>, vector<72x512xbf16>
    %cst = arith.constant dense<0.000000e+00> : vector<1x512xf32>
    %2 = tpu.matmul %0, %1, %cst {dimension_numbers = #tpu.dot_dimension_numbers<[1], [0], [0], [1], [0, 0, 1, 1], [], []>} : vector<1x72xbf16>, vector<72x512xbf16>, vector<1x512xf32> -> vector<1x512xf32>
    %c0_3 = arith.constant 0 : index
    %c0_4 = arith.constant 0 : index
    %3 = vector.load %arg3[%c0_3, %c0_4] : memref<1x1xf32, #tpu.memory_space<vmem>>, vector<1x1xf32>
    %4 = vector.broadcast %3 : vector<1x1xf32> to vector<1x512xf32>
    %5 = arith.addf %2, %4 : vector<1x512xf32>
    %6 = math.tanh %5 : vector<1x512xf32>
    %c0_5 = arith.constant 0 : index
    %c0_6 = arith.constant 0 : index
    %7 = vector.load %arg4[%c0_5, %c0_6] : memref<1x512xf32, #tpu.memory_space<vmem>>, vector<1x512xf32>
    tpu.vector_store %arg4[%c0_5, %c0_6], %6 {strides = array<i32>} : memref<1x512xf32, #tpu.memory_space<vmem>>, vector<1x512xf32>,
    return
  }
  func.func @transform_0(%arg0: i32) -> (i32, i32) {
    %c0_i32 = arith.constant 0 : i32
    %c0_i32_0 = arith.constant 0 : i32
    return %c0_i32, %arg0 : i32, i32
  }
  func.func @transform_1(%arg0: i32) -> (i32, i32) {
    %c0_i32 = arith.constant 0 : i32
    %c0_i32_0 = arith.constant 0 : i32
    %c0_i32_1 = arith.constant 0 : i32
    return %c0_i32, %c0_i32_0 : i32, i32
  }
  func.func @transform_2(%arg0: i32) -> (i32, i32) {
    %c0_i32 = arith.constant 0 : i32
    %c0_i32_0 = arith.constant 0 : i32
    %c0_i32_1 = arith.constant 0 : i32
    return %c0_i32, %c0_i32_0 : i32, i32
  }
  func.func @transform_3(%arg0: i32) -> (i32, i32) {
    %c0_i32 = arith.constant 0 : i32
    %c0_i32_0 = arith.constant 0 : i32
    return %c0_i32, %arg0 : i32, i32
  }
}

</mosaic_0001>

<llo_original>
// kernel: conv_cvae_forward.12
$region0: #{conv_cvae_forward.12}
  #allocation0 [shape = 'u32[]', space=smem, size = 0x4, offset = 0x4, fixed_abs, tag = 'smem constant byte address 0x4 - core index']
  #allocation1 [shape = 'u32[144,128]{1,0:T(1,128)}', space=vmem, size = 0x12000, scoped, tag = 'internal scratch']
  #allocation2 [shape = 'f32[8,1]{1,0:T(8,128)}', space=vmem, size = 0x1000, scoped, tag = 'scratch operand']
  #allocation3 [shape = 'f32[8,1]{1,0:T(8,128)}', space=vmem, size = 0x1000, scoped, tag = 'scratch operand']
  %s0 = inlined_call_operand.vmem [shape: bf16[99,512], index: 0, kind: input, shape index: {}]
  %s1 = inlined_call_operand.vmem [shape: bf16[8,99], index: 1, kind: input, shape index: {}]
  %s2 = inlined_call_operand.vmem [shape: f32[8,1], index: 2, kind: input, shape index: {}]
  %s3 = inlined_call_operand.vmem [shape: f32[8,1], index: 3, kind: input, shape index: {}]
  %s4 = inlined_call_operand.vmem [shape: f32[8,512], index: 4, kind: output, shape index: {}]
  %s5 = sld [smem:[#allocation0]]
  $region34: #{conv_cvae_forward.12} parent=0
    _
  %s7 = ssub.s32 1, %s5
  %s8 = scalar_select 0, %s7, %s5
  // Predicated region
  $region2: #{conv_cvae_forward.12} parent=0 // pred_check
    _
  $region3: #{conv_cvae_forward.12} parent=0 // pred_check_branch
    %10 = sbr.rel (0) target = $region5
  $region4: #{conv_cvae_forward.12} parent=0 // pred_region
    _
  $region5: #{conv_cvae_forward.12} parent=0 // pred_fallthru
    _
  // Predicated region
  $region6: #{conv_cvae_forward.12} parent=0 // pred_check
    _
  $region7: #{conv_cvae_forward.12} parent=0 // pred_check_branch
    %12 = sbr.rel (0) target = $region9
  $region8: #{conv_cvae_forward.12} parent=0 // pred_region
    _
  $region9: #{conv_cvae_forward.12} parent=0 // pred_fallthru
    _
  // Predicated region
  $region10: #{conv_cvae_forward.12} parent=0 // pred_check
    _
  $region11: #{conv_cvae_forward.12} parent=0 // pred_check_branch
    %14 = sbr.rel (0) target = $region13
  $region12: #{conv_cvae_forward.12} parent=0 // pred_region
    _
  $region13: #{conv_cvae_forward.12} parent=0 // pred_fallthru
    _
  // Predicated region
  $region14: #{conv_cvae_forward.12} parent=0 // pred_check
    _
  $region15: #{conv_cvae_forward.12} parent=0 // pred_check_branch
    %16 = sbr.rel (0) target = $region17
  $region16: #{conv_cvae_forward.12} parent=0 // pred_region
    _
  $region17: #{conv_cvae_forward.12} parent=0 // pred_fallthru
    _
  %p18 = scmp.eq.s32.totalorder 0, 0
  // Predicated region
  $region18: #{conv_cvae_forward.12} parent=0 // pred_check
    %p19 = pneg %p18
  $region19: #{conv_cvae_forward.12} parent=0 // pred_check_branch
    %21 = sbr.rel (%p19) target = $region21
  $region20: #{conv_cvae_forward.12} parent=0 // pred_region
    %vm22 = vcmask 7168
    %23 = vst.msk [vmem:[#allocation2] sm:$0xff] %vm22, 0.0
    %24 = vst.msk [vmem:[#allocation3] sm:$0xff] %vm22, 0.0
  $region21: #{conv_cvae_forward.12} parent=0 // pred_fallthru
    _
  %v25 = vld [vmem:[%s1] sm:$0xf]
  %v26 = vld [vmem:[%s0] sm:$0xff]
  %v27 = vld [vmem:[%s0 + $0x8] sm:$0xff]
  %v28 = vld [vmem:[%s0 + $0x10] sm:$0xff]
  %v29 = vld [vmem:[%s0 + $0x18] sm:$0xff]
  %v30 = vld [vmem:[%s0 + $0x20] sm:$0xff]
  %v31 = vld [vmem:[%s0 + $0x28] sm:$0xff]
  %v32 = vld [vmem:[%s0 + $0x30] sm:$0xff]
  %v33 = vld [vmem:[%s0 + $0x38] sm:$0xff]
  %v34 = vld [vmem:[%s0 + $0x40] sm:$0xff]
  %v35 = vld [vmem:[%s0 + $0x48] sm:$0xff]
  %v36 = vld [vmem:[%s0 + $0x50] sm:$0xff]
  %v37 = vld [vmem:[%s0 + $0x58] sm:$0xff]
  %v38 = vld [vmem:[%s0 + $0x60] sm:$0xff]
  %v39 = vld [vmem:[%s0 + $0x68] sm:$0xff]
  %v40 = vld [vmem:[%s0 + $0x70] sm:$0xff]
  %v41 = vld [vmem:[%s0 + $0x78] sm:$0xff]
  %v42 = vld [vmem:[%s0 + $0x80] sm:$0xff]
  %v43 = vld [vmem:[%s0 + $0x88] sm:$0xff]
  %v44 = vld [vmem:[%s0 + $0x90] sm:$0xff]
  %v45 = vld [vmem:[%s0 + $0x98] sm:$0xff]
  %v46 = vld [vmem:[%s0 + $0xa0] sm:$0xff]
  %v47 = vld [vmem:[%s0 + $0xa8] sm:$0xff]
  %v48 = vld [vmem:[%s0 + $0xb0] sm:$0xff]
  %v49 = vld [vmem:[%s0 + $0xb8] sm:$0xff]
  %v50 = vld [vmem:[%s0 + $0xc0] sm:$0x33]
  %v51 = vld [vmem:[%s0 + $0xc8] sm:$0x33]
  %v78 = vunpack.c.l.b16 %v26
  %v79 = vunpack.c.h.b16 %v26
  %v80 = vunpack.c.l.b16 %v27
  %v81 = vunpack.c.h.b16 %v27
  %v82 = vunpack.c.l.b16 %v28
  %v83 = vunpack.c.h.b16 %v28
  %v84 = vunpack.c.l.b16 %v29
  %v85 = vunpack.c.h.b16 %v29
  %v86 = vunpack.c.l.b16 %v30
  %v87 = vunpack.c.h.b16 %v30
  %v88 = vunpack.c.l.b16 %v31
  %v89 = vunpack.c.h.b16 %v31
  %v90 = vunpack.c.l.b16 %v32
  %v91 = vunpack.c.h.b16 %v32
  %v92 = vunpack.c.l.b16 %v33
  %v93 = vunpack.c.h.b16 %v33
  %v94 = vunpack.c.l.b16 %v34
  %v95 = vunpack.c.h.b16 %v34
  %v96 = vunpack.c.l.b16 %v35
  %v97 = vunpack.c.h.b16 %v35
  %v98 = vunpack.c.l.b16 %v36
  %v99 = vunpack.c.h.b16 %v36
  %v100 = vunpack.c.l.b16 %v37
  %v101 = vunpack.c.h.b16 %v37
  %v102 = vunpack.c.l.b16 %v38
  %v103 = vunpack.c.h.b16 %v38
  %v104 = vunpack.c.l.b16 %v39
  %v105 = vunpack.c.h.b16 %v39
  %v106 = vunpack.c.l.b16 %v40
  %v107 = vunpack.c.h.b16 %v40
  %v108 = vunpack.c.l.b16 %v41
  %v109 = vunpack.c.h.b16 %v41
  %v110 = vunpack.c.l.b16 %v42
  %v111 = vunpack.c.h.b16 %v42
  %v112 = vunpack.c.l.b16 %v43
  %v113 = vunpack.c.h.b16 %v43
  %v114 = vunpack.c.l.b16 %v44
  %v115 = vunpack.c.h.b16 %v44
  %v116 = vunpack.c.l.b16 %v45
  %v117 = vunpack.c.h.b16 %v45
  %v118 = vunpack.c.l.b16 %v46
  %v119 = vunpack.c.h.b16 %v46
  %v120 = vunpack.c.l.b16 %v47
  %v121 = vunpack.c.h.b16 %v47
  %v122 = vunpack.c.l.b16 %v48
  %v123 = vunpack.c.h.b16 %v48
  %v124 = vunpack.c.l.b16 %v49
  %v125 = vunpack.c.h.b16 %v49
  %v126 = vunpack.c.l.b16 %v50
  %v127 = vunpack.c.h.b16 %v50
  %v128 = vunpack.c.l.b16 %v51
  %v129 = vunpack.c.h.b16 %v51
  %v130 = vpack.c.b16 %v82, %v78
  %v131 = vpack.c.b16 %v83, %v79
  %v132 = vpack.c.b16 %v84, %v80
  %v133 = vpack.c.b16 %v85, %v81
  %v134 = vpack.c.b16 %v90, %v86
  %v135 = vpack.c.b16 %v91, %v87
  %v136 = vpack.c.b16 %v92, %v88
  %v137 = vpack.c.b16 %v93, %v89
  %v138 = vpack.c.b16 %v98, %v94
  %v139 = vpack.c.b16 %v99, %v95
  %v140 = vpack.c.b16 %v100, %v96
  %v141 = vpack.c.b16 %v101, %v97
  %v142 = vpack.c.b16 %v106, %v102
  %v143 = vpack.c.b16 %v107, %v103
  %v144 = vpack.c.b16 %v108, %v104
  %v145 = vpack.c.b16 %v109, %v105
  %v146 = vpack.c.b16 %v114, %v110
  %v147 = vpack.c.b16 %v115, %v111
  %v148 = vpack.c.b16 %v116, %v112
  %v149 = vpack.c.b16 %v117, %v113
  %v150 = vpack.c.b16 %v122, %v118
  %v151 = vpack.c.b16 %v123, %v119
  %v152 = vpack.c.b16 %v124, %v120
  %v153 = vpack.c.b16 %v125, %v121
  %v154 = vpack.c.b16 %v126, %v126
  %v155 = vpack.c.b16 %v127, %v127
  %v156 = vpack.c.b16 %v128, %v128
  %v157 = vpack.c.b16 %v129, %v129
  %vm182 = vcmask 809984
  %v184 = vsel %vm182, %v25, 0
  %vm186 = vcmask 1040384
  %vm187 = vcmask 1041408
  %v188 = vsel %vm186, 4294967295, 65535
  %v189 = vsel %vm187, %v188, 0
  %v191 = vand.u32 %v154, %v189
  %v194 = vand.u32 %v155, %v189
  %v197 = vand.u32 %v156, %v189
  %v200 = vand.u32 %v157, %v189
  %202 = vmatprep.subr.bf16.mxu0 %v131
  %203 = vmatpush1.bf16.msra.mxu0 %v130
  %204 = vmatprep.subr.bf16.mxu0 %v135
  %205 = vmatpush1.bf16.msra.mxu0 %v134
  %206 = vmatprep.subr.bf16.mxu0 %v139
  %207 = vmatpush1.bf16.msra.mxu0 %v138
  %208 = vmatprep.subr.bf16.mxu0 %v143
  %209 = vmatpush1.bf16.msra.mxu0 %v142
  %210 = vmatprep.subr.bf16.mxu0 %v147
  %211 = vmatpush1.bf16.msra.mxu0 %v146
  %212 = vmatprep.subr.bf16.mxu0 %v151
  %213 = vmatpush1.bf16.msra.mxu0 %v150
  %214 = vmatprep.subr.bf16.mxu0 %v194
  %215 = vmatpush1.bf16.msra.mxu0 %v191
  %216 = vmatprep.subr.bf16.mxu0 0
  %217 = vmatpush1.bf16.msra.mxu0 0
  %218 = vmatprep.subr.bf16.mxu0 0
  %219 = vmatpush1.bf16.msra.mxu0 0
  %220 = vmatprep.subr.bf16.mxu0 0
  %221 = vmatpush1.bf16.msra.mxu0 0
  %222 = vmatprep.subr.bf16.mxu0 0
  %223 = vmatpush1.bf16.msra.mxu0 0
  %224 = vmatprep.subr.bf16.mxu0 0
  %225 = vmatpush1.bf16.msra.mxu0 0
  %226 = vmatprep.subr.bf16.mxu0 0
  %227 = vmatpush1.bf16.msra.mxu0 0
  %228 = vmatprep.subr.bf16.mxu0 0
  %229 = vmatpush1.bf16.msra.mxu0 0
  %230 = vmatprep.subr.bf16.mxu0 0
  %231 = vmatpush1.bf16.msra.mxu0 0
  %232 = vmatprep.subr.bf16.mxu0 0
  %233 = vmatpush1.bf16.msra.mxu0 0
  %234 = vmatprep.mubr.bf16.mxu0 0
  %235 = vmatmul.mubr.bf16.gmra.mrb[0].mxu0 %v184
  %v236 = vpop.f32.mrb[0].mxu0
  %v237 = vadd.f32 0.0, %v236
  %v238 = vpop.f32.mrb[0].mxu0
  %v239 = vadd.f32 0.0, %v238
  %v240 = vpop.f32.mrb[0].mxu0
  %v241 = vpop.f32.mrb[0].mxu0
  %242 = vdwg.mxu0
  %243 = vmatprep.subr.bf16.mxu0 %v133
  %244 = vmatpush1.bf16.msra.mxu0 %v132
  %245 = vmatprep.subr.bf16.mxu0 %v137
  %246 = vmatpush1.bf16.msra.mxu0 %v136
  %247 = vmatprep.subr.bf16.mxu0 %v141
  %248 = vmatpush1.bf16.msra.mxu0 %v140
  %249 = vmatprep.subr.bf16.mxu0 %v145
  %250 = vmatpush1.bf16.msra.mxu0 %v144
  %251 = vmatprep.subr.bf16.mxu0 %v149
  %252 = vmatpush1.bf16.msra.mxu0 %v148
  %253 = vmatprep.subr.bf16.mxu0 %v153
  %254 = vmatpush1.bf16.msra.mxu0 %v152
  %255 = vmatprep.subr.bf16.mxu0 %v200
  %256 = vmatpush1.bf16.msra.mxu0 %v197
  %257 = vmatprep.subr.bf16.mxu0 0
  %258 = vmatpush1.bf16.msra.mxu0 0
  %259 = vmatprep.subr.bf16.mxu0 0
  %260 = vmatpush1.bf16.msra.mxu0 0
  %261 = vmatprep.subr.bf16.mxu0 0
  %262 = vmatpush1.bf16.msra.mxu0 0
  %263 = vmatprep.subr.bf16.mxu0 0
  %264 = vmatpush1.bf16.msra.mxu0 0
  %265 = vmatprep.subr.bf16.mxu0 0
  %266 = vmatpush1.bf16.msra.mxu0 0
  %267 = vmatprep.subr.bf16.mxu0 0
  %268 = vmatpush1.bf16.msra.mxu0 0
  %269 = vmatprep.subr.bf16.mxu0 0
  %270 = vmatpush1.bf16.msra.mxu0 0
  %271 = vmatprep.subr.bf16.mxu0 0
  %272 = vmatpush1.bf16.msra.mxu0 0
  %273 = vmatprep.subr.bf16.mxu0 0
  %274 = vmatpush1.bf16.msra.mxu0 0
  %275 = vmatprep.mubr.bf16.mxu0 0
  %276 = vmatmul.mubr.bf16.gmra.mrb[0].mxu0 %v184
  %v277 = vpop.f32.mrb[0].mxu0
  %v278 = vadd.f32 0.0, %v277
  %v279 = vpop.f32.mrb[0].mxu0
  %v280 = vadd.f32 0.0, %v279
  %v281 = vpop.f32.mrb[0].mxu0
  %v282 = vpop.f32.mrb[0].mxu0
  %283 = vdwg.mxu0
  %v284 = vld [vmem:[#allocation2] sm:$0xff]
  %v285 = vadd.f32 %v237, %v239
  %v286 = vadd.f32 %v285, %v278
  %v287 = vadd.f32 %v286, %v280
  %288 = vadd.xlane.f32.xlu0 %v287
  %v289 = vpop.xlane.xlu0 %288
  %v290 = vadd.f32 %v284, %v289
  %vm291 = vcmask 7168
  %292 = vst.msk [vmem:[#allocation2] sm:$0xff] %vm291, %v290
  %v293 = vld [vmem:[#allocation3] sm:$0xff]
  %v294 = vmul.f32 %v237, %v237
  %v295 = vmul.f32 %v239, %v239
  %v296 = vmul.f32 %v278, %v278
  %v297 = vmul.f32 %v280, %v280
  %v298 = vadd.f32 %v294, %v295
  %v299 = vadd.f32 %v298, %v296
  %v300 = vadd.f32 %v299, %v297
  %301 = vadd.xlane.f32.xlu0 %v300
  %v302 = vpop.xlane.xlu0 %301
  %v303 = vadd.f32 %v293, %v302
  %304 = vst.msk [vmem:[#allocation3] sm:$0xff] %vm291, %v303
  %s305 = smul.u32 0, 512
  %s306 = sshra.s32 %s305, 7
  %s307 = sand.u32 %s305, 127
  %s308 = smul.addr %s306, 8
  %s309 = scalar_lea.vmem %s4, %s308
  %310 = vst [vmem:[%s309] sm:$0xff] %v237
  %311 = vst [vmem:[%s309 + $0x8] sm:$0xff] %v239
  %312 = vst [vmem:[%s309 + $0x10] sm:$0xff] %v278
  %313 = vst [vmem:[%s309 + $0x18] sm:$0xff] %v280
  // Predicated region
  $region22: #{conv_cvae_forward.12} parent=0 // pred_check
    %p314 = pneg %p18
  $region23: #{conv_cvae_forward.12} parent=0 // pred_check_branch
    %316 = sbr.rel (%p314) target = $region25
  $region24: #{conv_cvae_forward.12} parent=0 // pred_region
    %v317 = vld [vmem:[#allocation2] sm:$0xff]
    %v318 = vmul.f32 %v317, 0.0025510204
    %v319 = vld [vmem:[#allocation3] sm:$0xff]
    %v320 = vmul.f32 %v319, 0.0025510204
    %v321 = vmul.f32 %v318, %v318
    %v322 = vsub.f32 %v320, %v321
    %v323 = vld [vmem:[%s2] sm:$0xff]
    %v324 = vadd.f32 %v322, 1e-05
    %v325 = vrsqrt.pop %v324
    %v326 = vmul.f32 %v323, %v325
    %v327 = vld [vmem:[%s3] sm:$0xff]
    %v328 = vmul.f32 %v318, %v326
    %v329 = vsub.f32 %v327, %v328
    %v330 = vld [vmem:[%s4] sm:$0xff]
    %v331 = vld [vmem:[%s4 + $0x8] sm:$0xff]
    %v332 = vld [vmem:[%s4 + $0x10] sm:$0xff]
    %v333 = vld [vmem:[%s4 + $0x18] sm:$0xff]
    %335 = vset.pattern.permute.xlu0 0
    %336 = vperm.xlu0 %335, %v326
    %v337 = vpop.permute.xlu0 %336
    %v339 = vmul.f32 %v330, %v337
    %v340 = vmul.f32 %v331, %v337
    %v341 = vmul.f32 %v332, %v337
    %v342 = vmul.f32 %v333, %v337
    %344 = vset.pattern.permute.xlu0 0
    %345 = vperm.xlu0 %344, %v329
    %v346 = vpop.permute.xlu0 %345
    %v348 = vadd.f32 %v339, %v346
    %v349 = vadd.f32 %v340, %v346
    %v350 = vadd.f32 %v341, %v346
    %v351 = vadd.f32 %v342, %v346
    %vm352 = vcmp.ge.f32.partialorder %v348, 0.0
    %vm353 = vcmp.ge.f32.partialorder %v349, 0.0
    %vm354 = vcmp.ge.f32.partialorder %v350, 0.0
    %vm355 = vcmp.ge.f32.partialorder %v351, 0.0
    %v356 = vmul.f32 %v348, 0.01
    %v357 = vmul.f32 %v349, 0.01
    %v358 = vmul.f32 %v350, 0.01
    %v359 = vmul.f32 %v351, 0.01
    %v360 = vsel %vm352, %v348, %v356
    %v361 = vsel %vm353, %v349, %v357
    %v362 = vsel %vm354, %v350, %v358
    %v363 = vsel %vm355, %v351, %v359
    %364 = vst [vmem:[%s4] sm:$0xff] %v360
    %365 = vst [vmem:[%s4 + $0x8] sm:$0xff] %v361
    %366 = vst [vmem:[%s4 + $0x10] sm:$0xff] %v362
    %367 = vst [vmem:[%s4 + $0x18] sm:$0xff] %v363
  $region25: #{conv_cvae_forward.12} parent=0 // pred_fallthru
    _
  // Predicated region
  $region26: #{conv_cvae_forward.12} parent=0 // pred_check
    _
  $region27: #{conv_cvae_forward.12} parent=0 // pred_check_branch
    %369 = sbr.rel (0) target = $region29
  $region28: #{conv_cvae_forward.12} parent=0 // pred_region
    _
  $region29: #{conv_cvae_forward.12} parent=0 // pred_fallthru
    _
  // Predicated region
  $region30: #{conv_cvae_forward.12} parent=0 // pred_check
    _
  $region31: #{conv_cvae_forward.12} parent=0 // pred_check_branch
    %371 = sbr.rel (0) target = $region33
  $region32: #{conv_cvae_forward.12} parent=0 // pred_region
    _
  $region33: #{conv_cvae_forward.12} parent=0 // pred_fallthru
    _

// kernel: conv_cvae_forward.13
$region0: #{conv_cvae_forward.13}
  #allocation0 [shape = 'u32[]', space=smem, size = 0x4, offset = 0x4, fixed_abs, tag = 'smem constant byte address 0x4 - core index']
  #allocation1 [shape = 'u32[144,128]{1,0:T(1,128)}', space=vmem, size = 0x12000, scoped, tag = 'internal scratch']
  #allocation2 [shape = 'f32[16,1]{1,0:T(8,128)}', space=vmem, size = 0x2000, scoped, tag = 'scratch operand']
  #allocation3 [shape = 'f32[16,1]{1,0:T(8,128)}', space=vmem, size = 0x2000, scoped, tag = 'scratch operand']
  %s0 = inlined_call_operand.vmem [shape: bf16[72,128], index: 0, kind: input, shape index: {}]
  %s1 = inlined_call_operand.vmem [shape: bf16[16,72], index: 1, kind: input, shape index: {}]
  %s2 = inlined_call_operand.vmem [shape: f32[16,1], index: 2, kind: input, shape index: {}]
  %s3 = inlined_call_operand.vmem [shape: f32[16,1], index: 3, kind: input, shape index: {}]
  %s4 = inlined_call_operand.vmem [shape: f32[16,128], index: 4, kind: output, shape index: {}]
  %s5 = sld [smem:[#allocation0]]
  $region34: #{conv_cvae_forward.13} parent=0
    _
  %s7 = ssub.s32 1, %s5
  %s8 = scalar_select 0, %s7, %s5
  // Predicated region
  $region2: #{conv_cvae_forward.13} parent=0 // pred_check
    _
  $region3: #{conv_cvae_forward.13} parent=0 // pred_check_branch
    %10 = sbr.rel (0) target = $region5
  $region4: #{conv_cvae_forward.13} parent=0 // pred_region
    _
  $region5: #{conv_cvae_forward.13} parent=0 // pred_fallthru
    _
  // Predicated region
  $region6: #{conv_cvae_forward.13} parent=0 // pred_check
    _
  $region7: #{conv_cvae_forward.13} parent=0 // pred_check_branch
    %12 = sbr.rel (0) target = $region9
  $region8: #{conv_cvae_forward.13} parent=0 // pred_region
    _
  $region9: #{conv_cvae_forward.13} parent=0 // pred_fallthru
    _
  // Predicated region
  $region10: #{conv_cvae_forward.13} parent=0 // pred_check
    _
  $region11: #{conv_cvae_forward.13} parent=0 // pred_check_branch
    %14 = sbr.rel (0) target = $region13
  $region12: #{conv_cvae_forward.13} parent=0 // pred_region
    _
  $region13: #{conv_cvae_forward.13} parent=0 // pred_fallthru
    _
  // Predicated region
  $region14: #{conv_cvae_forward.13} parent=0 // pred_check
    _
  $region15: #{conv_cvae_forward.13} parent=0 // pred_check_branch
    %16 = sbr.rel (0) target = $region17
  $region16: #{conv_cvae_forward.13} parent=0 // pred_region
    _
  $region17: #{conv_cvae_forward.13} parent=0 // pred_fallthru
    _
  %p18 = scmp.eq.s32.totalorder 0, 0
  // Predicated region
  $region18: #{conv_cvae_forward.13} parent=0 // pred_check
    %p19 = pneg %p18
  $region19: #{conv_cvae_forward.13} parent=0 // pred_check_branch
    %21 = sbr.rel (%p19) target = $region21
  $region20: #{conv_cvae_forward.13} parent=0 // pred_region
    %vm22 = vcmask 7168
    %23 = vst.msk [vmem:[#allocation2] sm:$0xff] %vm22, 0.0
    %24 = vst.msk [vmem:[#allocation2 + $0x8] sm:$0xff] %vm22, 0.0
    %25 = vst.msk [vmem:[#allocation3] sm:$0xff] %vm22, 0.0
    %26 = vst.msk [vmem:[#allocation3 + $0x8] sm:$0xff] %vm22, 0.0
  $region21: #{conv_cvae_forward.13} parent=0 // pred_fallthru
    _
  %v27 = vld [vmem:[%s1] sm:$0xf]
  %v28 = vld [vmem:[%s1 + $0x4] sm:$0xf]
  %v29 = vld [vmem:[%s0] sm:$0xf]
  %v30 = vld [vmem:[%s0 + $0x4] sm:$0xf]
  %v31 = vld [vmem:[%s0 + $0x8] sm:$0xf]
  %v32 = vld [vmem:[%s0 + $0xc] sm:$0xf]
  %v33 = vld [vmem:[%s0 + $0x10] sm:$0xf]
  %v34 = vld [vmem:[%s0 + $0x14] sm:$0xf]
  %v35 = vld [vmem:[%s0 + $0x18] sm:$0xf]
  %v36 = vld [vmem:[%s0 + $0x1c] sm:$0xf]
  %v37 = vld [vmem:[%s0 + $0x20] sm:$0xf]
  %v40 = vunpack.c.l.b16 %v27
  %v41 = vunpack.c.l.b16 %v28
  %v42 = vpack.c.b16 %v41, %v40
  %v52 = vunpack.c.l.b16 %v29
  %v53 = vunpack.c.l.b16 %v30
  %v54 = vunpack.c.l.b16 %v31
  %v55 = vunpack.c.l.b16 %v32
  %v56 = vunpack.c.l.b16 %v33
  %v57 = vunpack.c.l.b16 %v34
  %v58 = vunpack.c.l.b16 %v35
  %v59 = vunpack.c.l.b16 %v36
  %v60 = vunpack.c.l.b16 %v37
  %v61 = vpack.c.b16 %v53, %v52
  %v62 = vpack.c.b16 %v55, %v54
  %v63 = vpack.c.b16 %v57, %v56
  %v64 = vpack.c.b16 %v59, %v58
  %v65 = vpack.c.b16 %v60, %v60
  %vm70 = vcmask 588800
  %v72 = vsel %vm70, %v42, 0
  %vm74 = vcmask 1043456
  %v76 = vsel %vm74, %v65, 0
  %78 = vmatprep.subr.bf16.mxu0 0
  %79 = vmatpush1.bf16.msra.mxu0 %v61
  %80 = vmatprep.subr.bf16.mxu0 0
  %81 = vmatpush1.bf16.msra.mxu0 %v62
  %82 = vmatprep.subr.bf16.mxu0 0
  %83 = vmatpush1.bf16.msra.mxu0 %v63
  %84 = vmatprep.subr.bf16.mxu0 0
  %85 = vmatpush1.bf16.msra.mxu0 %v64
  %86 = vmatprep.subr.bf16.mxu0 0
  %87 = vmatpush1.bf16.msra.mxu0 %v76
  %88 = vmatprep.subr.bf16.mxu0 0
  %89 = vmatpush1.bf16.msra.mxu0 0
  %90 = vmatprep.subr.bf16.mxu0 0
  %91 = vmatpush1.bf16.msra.mxu0 0
  %92 = vmatprep.subr.bf16.mxu0 0
  %93 = vmatpush1.bf16.msra.mxu0 0
  %94 = vmatprep.subr.bf16.mxu0 0
  %95 = vmatpush1.bf16.msra.mxu0 0
  %96 = vmatprep.subr.bf16.mxu0 0
  %97 = vmatpush1.bf16.msra.mxu0 0
  %98 = vmatprep.subr.bf16.mxu0 0
  %99 = vmatpush1.bf16.msra.mxu0 0
  %100 = vmatprep.subr.bf16.mxu0 0
  %101 = vmatpush1.bf16.msra.mxu0 0
  %102 = vmatprep.subr.bf16.mxu0 0
  %103 = vmatpush1.bf16.msra.mxu0 0
  %104 = vmatprep.subr.bf16.mxu0 0
  %105 = vmatpush1.bf16.msra.mxu0 0
  %106 = vmatprep.subr.bf16.mxu0 0
  %107 = vmatpush1.bf16.msra.mxu0 0
  %108 = vmatprep.subr.bf16.mxu0 0
  %109 = vmatpush1.bf16.msra.mxu0 0
  %110 = vmatprep.mubr.bf16.mxu0 0
  %111 = vmatmul.mubr.bf16.gmra.mrb[0].mxu0 %v72
  %v112 = vpop.f32.mrb[0].mxu0
  %v113 = vadd.f32 0.0, %v112
  %v114 = vpop.f32.mrb[0].mxu0
  %v115 = vpop.f32.mrb[0].mxu0
  %v116 = vadd.f32 0.0, %v115
  %v117 = vpop.f32.mrb[0].mxu0
  %118 = vdwg.mxu0
  %v119 = vld [vmem:[#allocation2] sm:$0xff]
  %v120 = vld [vmem:[#allocation2 + $0x8] sm:$0xff]
  %121 = vadd.xlane.f32.xlu0 %v113
  %v122 = vpop.xlane.xlu0 %121
  %123 = vadd.xlane.f32.xlu0 %v116
  %v124 = vpop.xlane.xlu0 %123
  %v125 = vadd.f32 %v119, %v122
  %v126 = vadd.f32 %v120, %v124
  %vm127 = vcmask 7168
  %128 = vst.msk [vmem:[#allocation2] sm:$0xff] %vm127, %v125
  %129 = vst.msk [vmem:[#allocation2 + $0x8] sm:$0xff] %vm127, %v126
  %v130 = vld [vmem:[#allocation3] sm:$0xff]
  %v131 = vld [vmem:[#allocation3 + $0x8] sm:$0xff]
  %v132 = vmul.f32 %v113, %v113
  %v133 = vmul.f32 %v116, %v116
  %134 = vadd.xlane.f32.xlu0 %v132
  %v135 = vpop.xlane.xlu0 %134
  %136 = vadd.xlane.f32.xlu0 %v133
  %v137 = vpop.xlane.xlu0 %136
  %v138 = vadd.f32 %v130, %v135
  %v139 = vadd.f32 %v131, %v137
  %140 = vst.msk [vmem:[#allocation3] sm:$0xff] %vm127, %v138
  %141 = vst.msk [vmem:[#allocation3 + $0x8] sm:$0xff] %vm127, %v139
  %s142 = smul.u32 0, 128
  %s143 = sshra.s32 %s142, 7
  %s144 = sand.u32 %s142, 127
  %s145 = scalar_lea.vmem %s4, %s143
  %146 = vst [vmem:[%s145] sm:$0xff] %v113
  %147 = vst [vmem:[%s145 + $0x8] sm:$0xff] %v116
  // Predicated region
  $region22: #{conv_cvae_forward.13} parent=0 // pred_check
    %p148 = pneg %p18
  $region23: #{conv_cvae_forward.13} parent=0 // pred_check_branch
    %150 = sbr.rel (%p148) target = $region25
  $region24: #{conv_cvae_forward.13} parent=0 // pred_region
    %v151 = vld [vmem:[#allocation2] sm:$0xff]
    %v152 = vld [vmem:[#allocation2 + $0x8] sm:$0xff]
    %v153 = vmul.f32 %v151, 0.010204081
    %v154 = vmul.f32 %v152, 0.010204081
    %v155 = vld [vmem:[#allocation3] sm:$0xff]
    %v156 = vld [vmem:[#allocation3 + $0x8] sm:$0xff]
    %v157 = vmul.f32 %v155, 0.010204081
    %v158 = vmul.f32 %v156, 0.010204081
    %v159 = vmul.f32 %v153, %v153
    %v160 = vmul.f32 %v154, %v154
    %v161 = vsub.f32 %v157, %v159
    %v162 = vsub.f32 %v158, %v160
    %v163 = vld [vmem:[%s2] sm:$0xff]
    %v164 = vld [vmem:[%s2 + $0x8] sm:$0xff]
    %v165 = vadd.f32 %v161, 1e-05
    %v166 = vadd.f32 %v162, 1e-05
    %v167 = vrsqrt.pop %v165
    %v168 = vrsqrt.pop %v166
    %v169 = vmul.f32 %v163, %v167
    %v170 = vmul.f32 %v164, %v168
    %v171 = vld [vmem:[%s3] sm:$0xff]
    %v172 = vld [vmem:[%s3 + $0x8] sm:$0xff]
    %v173 = vmul.f32 %v153, %v169
    %v174 = vmul.f32 %v154, %v170
    %v175 = vsub.f32 %v171, %v173
    %v176 = vsub.f32 %v172, %v174
    %v177 = vld [vmem:[%s4] sm:$0xff]
    %v178 = vld [vmem:[%s4 + $0x8] sm:$0xff]
    %180 = vset.pattern.permute.xlu0 0
    %181 = vperm.xlu0 %180, %v169
    %v182 = vpop.permute.xlu0 %181
    %185 = vset.pattern.permute.xlu0 0
    %186 = vperm.xlu0 %185, %v170
    %v187 = vpop.permute.xlu0 %186
    %v189 = vmul.f32 %v177, %v182
    %v190 = vmul.f32 %v178, %v187
    %192 = vset.pattern.permute.xlu0 0
    %193 = vperm.xlu0 %192, %v175
    %v194 = vpop.permute.xlu0 %193
    %197 = vset.pattern.permute.xlu0 0
    %198 = vperm.xlu0 %197, %v176
    %v199 = vpop.permute.xlu0 %198
    %v201 = vadd.f32 %v189, %v194
    %v202 = vadd.f32 %v190, %v199
    %vm203 = vcmp.ge.f32.partialorder %v201, 0.0
    %vm204 = vcmp.ge.f32.partialorder %v202, 0.0
    %v205 = vmul.f32 %v201, 0.01
    %v206 = vmul.f32 %v202, 0.01
    %v207 = vsel %vm203, %v201, %v205
    %v208 = vsel %vm204, %v202, %v206
    %209 = vst [vmem:[%s4] sm:$0xff] %v207
    %210 = vst [vmem:[%s4 + $0x8] sm:$0xff] %v208
  $region25: #{conv_cvae_forward.13} parent=0 // pred_fallthru
    _
  // Predicated region
  $region26: #{conv_cvae_forward.13} parent=0 // pred_check
    _
  $region27: #{conv_cvae_forward.13} parent=0 // pred_check_branch
    %212 = sbr.rel (0) target = $region29
  $region28: #{conv_cvae_forward.13} parent=0 // pred_region
    _
  $region29: #{conv_cvae_forward.13} parent=0 // pred_fallthru
    _
  // Predicated region
  $region30: #{conv_cvae_forward.13} parent=0 // pred_check
    _
  $region31: #{conv_cvae_forward.13} parent=0 // pred_check_branch
    %214 = sbr.rel (0) target = $region33
  $region32: #{conv_cvae_forward.13} parent=0 // pred_region
    _
  $region33: #{conv_cvae_forward.13} parent=0 // pred_fallthru
    _

// kernel: conv_cvae_forward.14
$region0: #{conv_cvae_forward.14}
  #allocation0 [shape = 'u32[]', space=smem, size = 0x4, offset = 0x4, fixed_abs, tag = 'smem constant byte address 0x4 - core index']
  #allocation1 [shape = 'u32[144,128]{1,0:T(1,128)}', space=vmem, size = 0x12000, scoped, tag = 'internal scratch']
  #allocation2 [shape = 'f32[32,1]{1,0:T(8,128)}', space=vmem, size = 0x4000, scoped, tag = 'scratch operand']
  #allocation3 [shape = 'f32[32,1]{1,0:T(8,128)}', space=vmem, size = 0x4000, scoped, tag = 'scratch operand']
  %s0 = inlined_call_operand.vmem [shape: bf16[144,128], index: 0, kind: input, shape index: {}]
  %s1 = inlined_call_operand.vmem [shape: bf16[32,144], index: 1, kind: input, shape index: {}]
  %s2 = inlined_call_operand.vmem [shape: f32[32,1], index: 2, kind: input, shape index: {}]
  %s3 = inlined_call_operand.vmem [shape: f32[32,1], index: 3, kind: input, shape index: {}]
  %s4 = inlined_call_operand.vmem [shape: f32[32,128], index: 4, kind: output, shape index: {}]
  %s5 = sld [smem:[#allocation0]]
  $region34: #{conv_cvae_forward.14} parent=0
    _
  %s7 = ssub.s32 1, %s5
  %s8 = scalar_select 0, %s7, %s5
  // Predicated region
  $region2: #{conv_cvae_forward.14} parent=0 // pred_check
    _
  $region3: #{conv_cvae_forward.14} parent=0 // pred_check_branch
    %10 = sbr.rel (0) target = $region5
  $region4: #{conv_cvae_forward.14} parent=0 // pred_region
    _
  $region5: #{conv_cvae_forward.14} parent=0 // pred_fallthru
    _
  // Predicated region
  $region6: #{conv_cvae_forward.14} parent=0 // pred_check
    _
  $region7: #{conv_cvae_forward.14} parent=0 // pred_check_branch
    %12 = sbr.rel (0) target = $region9
  $region8: #{conv_cvae_forward.14} parent=0 // pred_region
    _
  $region9: #{conv_cvae_forward.14} parent=0 // pred_fallthru
    _
  // Predicated region
  $region10: #{conv_cvae_forward.14} parent=0 // pred_check
    _
  $region11: #{conv_cvae_forward.14} parent=0 // pred_check_branch
    %14 = sbr.rel (0) target = $region13
  $region12: #{conv_cvae_forward.14} parent=0 // pred_region
    _
  $region13: #{conv_cvae_forward.14} parent=0 // pred_fallthru
    _
  // Predicated region
  $region14: #{conv_cvae_forward.14} parent=0 // pred_check
    _
  $region15: #{conv_cvae_forward.14} parent=0 // pred_check_branch
    %16 = sbr.rel (0) target = $region17
  $region16: #{conv_cvae_forward.14} parent=0 // pred_region
    _
  $region17: #{conv_cvae_forward.14} parent=0 // pred_fallthru
    _
  %p18 = scmp.eq.s32.totalorder 0, 0
  // Predicated region
  $region18: #{conv_cvae_forward.14} parent=0 // pred_check
    %p19 = pneg %p18
  $region19: #{conv_cvae_forward.14} parent=0 // pred_check_branch
    %21 = sbr.rel (%p19) target = $region21
  $region20: #{conv_cvae_forward.14} parent=0 // pred_region
    %vm22 = vcmask 7168
    %23 = vst.msk [vmem:[#allocation2] sm:$0xff] %vm22, 0.0
    %24 = vst.msk [vmem:[#allocation2 + $0x8] sm:$0xff] %vm22, 0.0
    %25 = vst.msk [vmem:[#allocation2 + $0x10] sm:$0xff] %vm22, 0.0
    %26 = vst.msk [vmem:[#allocation2 + $0x18] sm:$0xff] %vm22, 0.0
    %27 = vst.msk [vmem:[#allocation3] sm:$0xff] %vm22, 0.0
    %28 = vst.msk [vmem:[#allocation3 + $0x8] sm:$0xff] %vm22, 0.0
    %29 = vst.msk [vmem:[#allocation3 + $0x10] sm:$0xff] %vm22, 0.0
    %30 = vst.msk [vmem:[#allocation3 + $0x18] sm:$0xff] %vm22, 0.0
  $region21: #{conv_cvae_forward.14} parent=0 // pred_fallthru
    _
  %v31 = vld [vmem:[%s1] sm:$0xff]
  %v32 = vld [vmem:[%s1 + $0x8] sm:$0xff]
  %v33 = vld [vmem:[%s1 + $0x10] sm:$0xff]
  %v34 = vld [vmem:[%s1 + $0x18] sm:$0xff]
  %v35 = vld [vmem:[%s0] sm:$0xf]
  %v36 = vld [vmem:[%s0 + $0x4] sm:$0xf]
  %v37 = vld [vmem:[%s0 + $0x8] sm:$0xf]
  %v38 = vld [vmem:[%s0 + $0xc] sm:$0xf]
  %v39 = vld [vmem:[%s0 + $0x10] sm:$0xf]
  %v40 = vld [vmem:[%s0 + $0x14] sm:$0xf]
  %v41 = vld [vmem:[%s0 + $0x18] sm:$0xf]
  %v42 = vld [vmem:[%s0 + $0x1c] sm:$0xf]
  %v43 = vld [vmem:[%s0 + $0x20] sm:$0xf]
  %v44 = vld [vmem:[%s0 + $0x24] sm:$0xf]
  %v45 = vld [vmem:[%s0 + $0x28] sm:$0xf]
  %v46 = vld [vmem:[%s0 + $0x2c] sm:$0xf]
  %v47 = vld [vmem:[%s0 + $0x30] sm:$0xf]
  %v48 = vld [vmem:[%s0 + $0x34] sm:$0xf]
  %v49 = vld [vmem:[%s0 + $0x38] sm:$0xf]
  %v50 = vld [vmem:[%s0 + $0x3c] sm:$0xf]
  %v51 = vld [vmem:[%s0 + $0x40] sm:$0xf]
  %v52 = vld [vmem:[%s0 + $0x44] sm:$0xf]
  %v57 = vunpack.c.l.b16 %v31
  %v58 = vunpack.c.h.b16 %v31
  %v59 = vunpack.c.l.b16 %v32
  %v60 = vunpack.c.h.b16 %v32
  %v61 = vunpack.c.l.b16 %v33
  %v62 = vunpack.c.h.b16 %v33
  %v63 = vunpack.c.l.b16 %v34
  %v64 = vunpack.c.h.b16 %v34
  %v65 = vpack.c.b16 %v59, %v57
  %v66 = vpack.c.b16 %v60, %v58
  %v67 = vpack.c.b16 %v63, %v61
  %v68 = vpack.c.b16 %v64, %v62
  %v89 = vunpack.c.l.b16 %v35
  %v90 = vunpack.c.l.b16 %v36
  %v91 = vunpack.c.l.b16 %v37
  %v92 = vunpack.c.l.b16 %v38
  %v93 = vunpack.c.l.b16 %v39
  %v94 = vunpack.c.l.b16 %v40
  %v95 = vunpack.c.l.b16 %v41
  %v96 = vunpack.c.l.b16 %v42
  %v97 = vunpack.c.l.b16 %v43
  %v98 = vunpack.c.l.b16 %v44
  %v99 = vunpack.c.l.b16 %v45
  %v100 = vunpack.c.l.b16 %v46
  %v101 = vunpack.c.l.b16 %v47
  %v102 = vunpack.c.l.b16 %v48
  %v103 = vunpack.c.l.b16 %v49
  %v104 = vunpack.c.l.b16 %v50
  %v105 = vunpack.c.l.b16 %v51
  %v106 = vunpack.c.l.b16 %v52
  %v107 = vpack.c.b16 %v90, %v89
  %v108 = vpack.c.b16 %v92, %v91
  %v109 = vpack.c.b16 %v94, %v93
  %v110 = vpack.c.b16 %v96, %v95
  %v111 = vpack.c.b16 %v98, %v97
  %v112 = vpack.c.b16 %v100, %v99
  %v113 = vpack.c.b16 %v102, %v101
  %v114 = vpack.c.b16 %v104, %v103
  %v115 = vpack.c.b16 %v106, %v105
  %vm125 = vcmask 130048
  %v127 = vsel %vm125, %v66, 0
  %v130 = vsel %vm125, %v68, 0
  %132 = vmatprep.subr.bf16.mxu0 0
  %133 = vmatpush1.bf16.msra.mxu0 %v107
  %134 = vmatprep.subr.bf16.mxu0 0
  %135 = vmatpush1.bf16.msra.mxu0 %v108
  %136 = vmatprep.subr.bf16.mxu0 0
  %137 = vmatpush1.bf16.msra.mxu0 %v109
  %138 = vmatprep.subr.bf16.mxu0 0
  %139 = vmatpush1.bf16.msra.mxu0 %v110
  %140 = vmatprep.subr.bf16.mxu0 0
  %141 = vmatpush1.bf16.msra.mxu0 %v111
  %142 = vmatprep.subr.bf16.mxu0 0
  %143 = vmatpush1.bf16.msra.mxu0 %v112
  %144 = vmatprep.subr.bf16.mxu0 0
  %145 = vmatpush1.bf16.msra.mxu0 %v113
  %146 = vmatprep.subr.bf16.mxu0 0
  %147 = vmatpush1.bf16.msra.mxu0 %v114
  %148 = vmatprep.subr.bf16.mxu0 0
  %149 = vmatpush1.bf16.msra.mxu0 %v115
  %150 = vmatprep.subr.bf16.mxu0 0
  %151 = vmatpush1.bf16.msra.mxu0 0
  %152 = vmatprep.subr.bf16.mxu0 0
  %153 = vmatpush1.bf16.msra.mxu0 0
  %154 = vmatprep.subr.bf16.mxu0 0
  %155 = vmatpush1.bf16.msra.mxu0 0
  %156 = vmatprep.subr.bf16.mxu0 0
  %157 = vmatpush1.bf16.msra.mxu0 0
  %158 = vmatprep.subr.bf16.mxu0 0
  %159 = vmatpush1.bf16.msra.mxu0 0
  %160 = vmatprep.subr.bf16.mxu0 0
  %161 = vmatpush1.bf16.msra.mxu0 0
  %162 = vmatprep.subr.bf16.mxu0 0
  %163 = vmatpush1.bf16.msra.mxu0 0
  %164 = vmatprep.mubr.bf16.mxu0 %v127
  %165 = vmatmul.mubr.bf16.gmra.mrb[0].mxu0 %v65
  %v166 = vpop.f32.mrb[0].mxu0
  %v167 = vadd.f32 0.0, %v166
  %v168 = vpop.f32.mrb[0].mxu0
  %v169 = vpop.f32.mrb[0].mxu0
  %v170 = vadd.f32 0.0, %v169
  %v171 = vpop.f32.mrb[0].mxu0
  %172 = vmatprep.mubr.bf16.mxu0 %v130
  %173 = vmatmul.mubr.bf16.gmra.mrb[0].mxu0 %v67
  %v174 = vpop.f32.mrb[0].mxu0
  %v175 = vadd.f32 0.0, %v174
  %v176 = vpop.f32.mrb[0].mxu0
  %v177 = vpop.f32.mrb[0].mxu0
  %v178 = vadd.f32 0.0, %v177
  %v179 = vpop.f32.mrb[0].mxu0
  %180 = vdwg.mxu0
  %v181 = vld [vmem:[#allocation2] sm:$0xff]
  %v182 = vld [vmem:[#allocation2 + $0x8] sm:$0xff]
  %v183 = vld [vmem:[#allocation2 + $0x10] sm:$0xff]
  %v184 = vld [vmem:[#allocation2 + $0x18] sm:$0xff]
  %185 = vadd.xlane.f32.xlu0 %v167
  %v186 = vpop.xlane.xlu0 %185
  %187 = vadd.xlane.f32.xlu0 %v170
  %v188 = vpop.xlane.xlu0 %187
  %189 = vadd.xlane.f32.xlu0 %v175
  %v190 = vpop.xlane.xlu0 %189
  %191 = vadd.xlane.f32.xlu0 %v178
  %v192 = vpop.xlane.xlu0 %191
  %v193 = vadd.f32 %v181, %v186
  %v194 = vadd.f32 %v182, %v188
  %v195 = vadd.f32 %v183, %v190
  %v196 = vadd.f32 %v184, %v192
  %vm197 = vcmask 7168
  %198 = vst.msk [vmem:[#allocation2] sm:$0xff] %vm197, %v193
  %199 = vst.msk [vmem:[#allocation2 + $0x8] sm:$0xff] %vm197, %v194
  %200 = vst.msk [vmem:[#allocation2 + $0x10] sm:$0xff] %vm197, %v195
  %201 = vst.msk [vmem:[#allocation2 + $0x18] sm:$0xff] %vm197, %v196
  %v202 = vld [vmem:[#allocation3] sm:$0xff]
  %v203 = vld [vmem:[#allocation3 + $0x8] sm:$0xff]
  %v204 = vld [vmem:[#allocation3 + $0x10] sm:$0xff]
  %v205 = vld [vmem:[#allocation3 + $0x18] sm:$0xff]
  %v206 = vmul.f32 %v167, %v167
  %v207 = vmul.f32 %v170, %v170
  %v208 = vmul.f32 %v175, %v175
  %v209 = vmul.f32 %v178, %v178
  %210 = vadd.xlane.f32.xlu0 %v206
  %v211 = vpop.xlane.xlu0 %210
  %212 = vadd.xlane.f32.xlu0 %v207
  %v213 = vpop.xlane.xlu0 %212
  %214 = vadd.xlane.f32.xlu0 %v208
  %v215 = vpop.xlane.xlu0 %214
  %216 = vadd.xlane.f32.xlu0 %v209
  %v217 = vpop.xlane.xlu0 %216
  %v218 = vadd.f32 %v202, %v211
  %v219 = vadd.f32 %v203, %v213
  %v220 = vadd.f32 %v204, %v215
  %v221 = vadd.f32 %v205, %v217
  %222 = vst.msk [vmem:[#allocation3] sm:$0xff] %vm197, %v218
  %223 = vst.msk [vmem:[#allocation3 + $0x8] sm:$0xff] %vm197, %v219
  %224 = vst.msk [vmem:[#allocation3 + $0x10] sm:$0xff] %vm197, %v220
  %225 = vst.msk [vmem:[#allocation3 + $0x18] sm:$0xff] %vm197, %v221
  %s226 = smul.u32 0, 128
  %s227 = sshra.s32 %s226, 7
  %s228 = sand.u32 %s226, 127
  %s229 = scalar_lea.vmem %s4, %s227
  %230 = vst [vmem:[%s229] sm:$0xff] %v167
  %231 = vst [vmem:[%s229 + $0x8] sm:$0xff] %v170
  %232 = vst [vmem:[%s229 + $0x10] sm:$0xff] %v175
  %233 = vst [vmem:[%s229 + $0x18] sm:$0xff] %v178
  // Predicated region
  $region22: #{conv_cvae_forward.14} parent=0 // pred_check
    %p234 = pneg %p18
  $region23: #{conv_cvae_forward.14} parent=0 // pred_check_branch
    %236 = sbr.rel (%p234) target = $region25
  $region24: #{conv_cvae_forward.14} parent=0 // pred_region
    %v237 = vld [vmem:[#allocation2] sm:$0xff]
    %v238 = vld [vmem:[#allocation2 + $0x8] sm:$0xff]
    %v239 = vld [vmem:[#allocation2 + $0x10] sm:$0xff]
    %v240 = vld [vmem:[#allocation2 + $0x18] sm:$0xff]
    %v241 = vmul.f32 %v237, 0.03125
    %v242 = vmul.f32 %v238, 0.03125
    %v243 = vmul.f32 %v239, 0.03125
    %v244 = vmul.f32 %v240, 0.03125
    %v245 = vld [vmem:[#allocation3] sm:$0xff]
    %v246 = vld [vmem:[#allocation3 + $0x8] sm:$0xff]
    %v247 = vld [vmem:[#allocation3 + $0x10] sm:$0xff]
    %v248 = vld [vmem:[#allocation3 + $0x18] sm:$0xff]
    %v249 = vmul.f32 %v245, 0.03125
    %v250 = vmul.f32 %v246, 0.03125
    %v251 = vmul.f32 %v247, 0.03125
    %v252 = vmul.f32 %v248, 0.03125
    %v253 = vmul.f32 %v241, %v241
    %v254 = vmul.f32 %v242, %v242
    %v255 = vmul.f32 %v243, %v243
    %v256 = vmul.f32 %v244, %v244
    %v257 = vsub.f32 %v249, %v253
    %v258 = vsub.f32 %v250, %v254
    %v259 = vsub.f32 %v251, %v255
    %v260 = vsub.f32 %v252, %v256
    %v261 = vld [vmem:[%s2] sm:$0xff]
    %v262 = vld [vmem:[%s2 + $0x8] sm:$0xff]
    %v263 = vld [vmem:[%s2 + $0x10] sm:$0xff]
    %v264 = vld [vmem:[%s2 + $0x18] sm:$0xff]
    %v265 = vadd.f32 %v257, 1e-05
    %v266 = vadd.f32 %v258, 1e-05
    %v267 = vadd.f32 %v259, 1e-05
    %v268 = vadd.f32 %v260, 1e-05
    %v269 = vrsqrt.pop %v265
    %v270 = vrsqrt.pop %v266
    %v271 = vrsqrt.pop %v267
    %v272 = vrsqrt.pop %v268
    %v273 = vmul.f32 %v261, %v269
    %v274 = vmul.f32 %v262, %v270
    %v275 = vmul.f32 %v263, %v271
    %v276 = vmul.f32 %v264, %v272
    %v277 = vld [vmem:[%s3] sm:$0xff]
    %v278 = vld [vmem:[%s3 + $0x8] sm:$0xff]
    %v279 = vld [vmem:[%s3 + $0x10] sm:$0xff]
    %v280 = vld [vmem:[%s3 + $0x18] sm:$0xff]
    %v281 = vmul.f32 %v241, %v273
    %v282 = vmul.f32 %v242, %v274
    %v283 = vmul.f32 %v243, %v275
    %v284 = vmul.f32 %v244, %v276
    %v285 = vsub.f32 %v277, %v281
    %v286 = vsub.f32 %v278, %v282
    %v287 = vsub.f32 %v279, %v283
    %v288 = vsub.f32 %v280, %v284
    %v289 = vld [vmem:[%s4] sm:$0xff]
    %v290 = vld [vmem:[%s4 + $0x8] sm:$0xff]
    %v291 = vld [vmem:[%s4 + $0x10] sm:$0xff]
    %v292 = vld [vmem:[%s4 + $0x18] sm:$0xff]
    %294 = vset.pattern.permute.xlu0 0
    %295 = vperm.xlu0 %294, %v273
    %v296 = vpop.permute.xlu0 %295
    %299 = vset.pattern.permute.xlu0 0
    %300 = vperm.xlu0 %299, %v274
    %v301 = vpop.permute.xlu0 %300
    %304 = vset.pattern.permute.xlu0 0
    %305 = vperm.xlu0 %304, %v275
    %v306 = vpop.permute.xlu0 %305
    %309 = vset.pattern.permute.xlu0 0
    %310 = vperm.xlu0 %309, %v276
    %v311 = vpop.permute.xlu0 %310
    %v313 = vmul.f32 %v289, %v296
    %v314 = vmul.f32 %v290, %v301
    %v315 = vmul.f32 %v291, %v306
    %v316 = vmul.f32 %v292, %v311
    %318 = vset.pattern.permute.xlu0 0
    %319 = vperm.xlu0 %318, %v285
    %v320 = vpop.permute.xlu0 %319
    %323 = vset.pattern.permute.xlu0 0
    %324 = vperm.xlu0 %323, %v286
    %v325 = vpop.permute.xlu0 %324
    %328 = vset.pattern.permute.xlu0 0
    %329 = vperm.xlu0 %328, %v287
    %v330 = vpop.permute.xlu0 %329
    %333 = vset.pattern.permute.xlu0 0
    %334 = vperm.xlu0 %333, %v288
    %v335 = vpop.permute.xlu0 %334
    %v337 = vadd.f32 %v313, %v320
    %v338 = vadd.f32 %v314, %v325
    %v339 = vadd.f32 %v315, %v330
    %v340 = vadd.f32 %v316, %v335
    %vm341 = vcmp.ge.f32.partialorder %v337, 0.0
    %vm342 = vcmp.ge.f32.partialorder %v338, 0.0
    %vm343 = vcmp.ge.f32.partialorder %v339, 0.0
    %vm344 = vcmp.ge.f32.partialorder %v340, 0.0
    %v345 = vmul.f32 %v337, 0.01
    %v346 = vmul.f32 %v338, 0.01
    %v347 = vmul.f32 %v339, 0.01
    %v348 = vmul.f32 %v340, 0.01
    %v349 = vsel %vm341, %v337, %v345
    %v350 = vsel %vm342, %v338, %v346
    %v351 = vsel %vm343, %v339, %v347
    %v352 = vsel %vm344, %v340, %v348
    %353 = vst [vmem:[%s4] sm:$0xff] %v349
    %354 = vst [vmem:[%s4 + $0x8] sm:$0xff] %v350
    %355 = vst [vmem:[%s4 + $0x10] sm:$0xff] %v351
    %356 = vst [vmem:[%s4 + $0x18] sm:$0xff] %v352
  $region25: #{conv_cvae_forward.14} parent=0 // pred_fallthru
    _
  // Predicated region
  $region26: #{conv_cvae_forward.14} parent=0 // pred_check
    _
  $region27: #{conv_cvae_forward.14} parent=0 // pred_check_branch
    %358 = sbr.rel (0) target = $region29
  $region28: #{conv_cvae_forward.14} parent=0 // pred_region
    _
  $region29: #{conv_cvae_forward.14} parent=0 // pred_fallthru
    _
  // Predicated region
  $region30: #{conv_cvae_forward.14} parent=0 // pred_check
    _
  $region31: #{conv_cvae_forward.14} parent=0 // pred_check_branch
    %360 = sbr.rel (0) target = $region33
  $region32: #{conv_cvae_forward.14} parent=0 // pred_region
    _
  $region33: #{conv_cvae_forward.14} parent=0 // pred_fallthru
    _

// kernel: conv_cvae_forward.15
$region0: #{conv_cvae_forward.15}
  #allocation0 [shape = 'u32[]', space=smem, size = 0x4, offset = 0x4, fixed_abs, tag = 'smem constant byte address 0x4 - core index']
  #allocation1 [shape = 'u32[144,128]{1,0:T(1,128)}', space=vmem, size = 0x12000, scoped, tag = 'internal scratch']
  #allocation2 [shape = 'f32[64,1]{1,0:T(8,128)}', space=vmem, size = 0x8000, scoped, tag = 'scratch operand']
  #allocation3 [shape = 'f32[64,1]{1,0:T(8,128)}', space=vmem, size = 0x8000, scoped, tag = 'scratch operand']
  %s0 = inlined_call_operand.vmem [shape: bf16[288,128], index: 0, kind: input, shape index: {}]
  %s1 = inlined_call_operand.vmem [shape: bf16[64,288], index: 1, kind: input, shape index: {}]
  %s2 = inlined_call_operand.vmem [shape: f32[64,1], index: 2, kind: input, shape index: {}]
  %s3 = inlined_call_operand.vmem [shape: f32[64,1], index: 3, kind: input, shape index: {}]
  %s4 = inlined_call_operand.vmem [shape: f32[64,128], index: 4, kind: output, shape index: {}]
  %s5 = sld [smem:[#allocation0]]
  $region34: #{conv_cvae_forward.15} parent=0
    _
  %s7 = ssub.s32 1, %s5
  %s8 = scalar_select 0, %s7, %s5
  // Predicated region
  $region2: #{conv_cvae_forward.15} parent=0 // pred_check
    _
  $region3: #{conv_cvae_forward.15} parent=0 // pred_check_branch
    %10 = sbr.rel (0) target = $region5
  $region4: #{conv_cvae_forward.15} parent=0 // pred_region
    _
  $region5: #{conv_cvae_forward.15} parent=0 // pred_fallthru
    _
  // Predicated region
  $region6: #{conv_cvae_forward.15} parent=0 // pred_check
    _
  $region7: #{conv_cvae_forward.15} parent=0 // pred_check_branch
    %12 = sbr.rel (0) target = $region9
  $region8: #{conv_cvae_forward.15} parent=0 // pred_region
    _
  $region9: #{conv_cvae_forward.15} parent=0 // pred_fallthru
    _
  // Predicated region
  $region10: #{conv_cvae_forward.15} parent=0 // pred_check
    _
  $region11: #{conv_cvae_forward.15} parent=0 // pred_check_branch
    %14 = sbr.rel (0) target = $region13
  $region12: #{conv_cvae_forward.15} parent=0 // pred_region
    _
  $region13: #{conv_cvae_forward.15} parent=0 // pred_fallthru
    _
  // Predicated region
  $region14: #{conv_cvae_forward.15} parent=0 // pred_check
    _
  $region15: #{conv_cvae_forward.15} parent=0 // pred_check_branch
    %16 = sbr.rel (0) target = $region17
  $region16: #{conv_cvae_forward.15} parent=0 // pred_region
    _
  $region17: #{conv_cvae_forward.15} parent=0 // pred_fallthru
    _
  %p18 = scmp.eq.s32.totalorder 0, 0
  // Predicated region
  $region18: #{conv_cvae_forward.15} parent=0 // pred_check
    %p19 = pneg %p18
  $region19: #{conv_cvae_forward.15} parent=0 // pred_check_branch
    %21 = sbr.rel (%p19) target = $region21
  $region20: #{conv_cvae_forward.15} parent=0 // pred_region
    %vm22 = vcmask 7168
    %23 = vst.msk [vmem:[#allocation2] sm:$0xff] %vm22, 0.0
    %24 = vst.msk [vmem:[#allocation2 + $0x8] sm:$0xff] %vm22, 0.0
    %25 = vst.msk [vmem:[#allocation2 + $0x10] sm:$0xff] %vm22, 0.0
    %26 = vst.msk [vmem:[#allocation2 + $0x18] sm:$0xff] %vm22, 0.0
    %27 = vst.msk [vmem:[#allocation2 + $0x20] sm:$0xff] %vm22, 0.0
    %28 = vst.msk [vmem:[#allocation2 + $0x28] sm:$0xff] %vm22, 0.0
    %29 = vst.msk [vmem:[#allocation2 + $0x30] sm:$0xff] %vm22, 0.0
    %30 = vst.msk [vmem:[#allocation2 + $0x38] sm:$0xff] %vm22, 0.0
    %31 = vst.msk [vmem:[#allocation3] sm:$0xff] %vm22, 0.0
    %32 = vst.msk [vmem:[#allocation3 + $0x8] sm:$0xff] %vm22, 0.0
    %33 = vst.msk [vmem:[#allocation3 + $0x10] sm:$0xff] %vm22, 0.0
    %34 = vst.msk [vmem:[#allocation3 + $0x18] sm:$0xff] %vm22, 0.0
    %35 = vst.msk [vmem:[#allocation3 + $0x20] sm:$0xff] %vm22, 0.0
    %36 = vst.msk [vmem:[#allocation3 + $0x28] sm:$0xff] %vm22, 0.0
    %37 = vst.msk [vmem:[#allocation3 + $0x30] sm:$0xff] %vm22, 0.0
    %38 = vst.msk [vmem:[#allocation3 + $0x38] sm:$0xff] %vm22, 0.0
  $region21: #{conv_cvae_forward.15} parent=0 // pred_fallthru
    _
  %v39 = vld [vmem:[%s1] sm:$0xff]
  %v40 = vld [vmem:[%s1 + $0x8] sm:$0xf]
  %v41 = vld [vmem:[%s1 + $0xc] sm:$0xff]
  %v42 = vld [vmem:[%s1 + $0x14] sm:$0xf]
  %v43 = vld [vmem:[%s1 + $0x18] sm:$0xff]
  %v44 = vld [vmem:[%s1 + $0x20] sm:$0xf]
  %v45 = vld [vmem:[%s1 + $0x24] sm:$0xff]
  %v46 = vld [vmem:[%s1 + $0x2c] sm:$0xf]
  %v47 = vld [vmem:[%s1 + $0x30] sm:$0xff]
  %v48 = vld [vmem:[%s1 + $0x38] sm:$0xf]
  %v49 = vld [vmem:[%s1 + $0x3c] sm:$0xff]
  %v50 = vld [vmem:[%s1 + $0x44] sm:$0xf]
  %v51 = vld [vmem:[%s1 + $0x48] sm:$0xff]
  %v52 = vld [vmem:[%s1 + $0x50] sm:$0xf]
  %v53 = vld [vmem:[%s1 + $0x54] sm:$0xff]
  %v54 = vld [vmem:[%s1 + $0x5c] sm:$0xf]
  %v55 = vld [vmem:[%s0] sm:$0xf]
  %v56 = vld [vmem:[%s0 + $0x4] sm:$0xf]
  %v57 = vld [vmem:[%s0 + $0x8] sm:$0xf]
  %v58 = vld [vmem:[%s0 + $0xc] sm:$0xf]
  %v59 = vld [vmem:[%s0 + $0x10] sm:$0xf]
  %v60 = vld [vmem:[%s0 + $0x14] sm:$0xf]
  %v61 = vld [vmem:[%s0 + $0x18] sm:$0xf]
  %v62 = vld [vmem:[%s0 + $0x1c] sm:$0xf]
  %v63 = vld [vmem:[%s0 + $0x20] sm:$0xf]
  %v64 = vld [vmem:[%s0 + $0x24] sm:$0xf]
  %v65 = vld [vmem:[%s0 + $0x28] sm:$0xf]
  %v66 = vld [vmem:[%s0 + $0x2c] sm:$0xf]
  %v67 = vld [vmem:[%s0 + $0x30] sm:$0xf]
  %v68 = vld [vmem:[%s0 + $0x34] sm:$0xf]
  %v69 = vld [vmem:[%s0 + $0x38] sm:$0xf]
  %v70 = vld [vmem:[%s0 + $0x3c] sm:$0xf]
  %v71 = vld [vmem:[%s0 + $0x40] sm:$0xf]
  %v72 = vld [vmem:[%s0 + $0x44] sm:$0xf]
  %v73 = vld [vmem:[%s0 + $0x48] sm:$0xf]
  %v74 = vld [vmem:[%s0 + $0x4c] sm:$0xf]
  %v75 = vld [vmem:[%s0 + $0x50] sm:$0xf]
  %v76 = vld [vmem:[%s0 + $0x54] sm:$0xf]
  %v77 = vld [vmem:[%s0 + $0x58] sm:$0xf]
  %v78 = vld [vmem:[%s0 + $0x5c] sm:$0xf]
  %v79 = vld [vmem:[%s0 + $0x60] sm:$0xf]
  %v80 = vld [vmem:[%s0 + $0x64] sm:$0xf]
  %v81 = vld [vmem:[%s0 + $0x68] sm:$0xf]
  %v82 = vld [vmem:[%s0 + $0x6c] sm:$0xf]
  %v83 = vld [vmem:[%s0 + $0x70] sm:$0xf]
  %v84 = vld [vmem:[%s0 + $0x74] sm:$0xf]
  %v85 = vld [vmem:[%s0 + $0x78] sm:$0xf]
  %v86 = vld [vmem:[%s0 + $0x7c] sm:$0xf]
  %v87 = vld [vmem:[%s0 + $0x80] sm:$0xf]
  %v88 = vld [vmem:[%s0 + $0x84] sm:$0xf]
  %v89 = vld [vmem:[%s0 + $0x88] sm:$0xf]
  %v90 = vld [vmem:[%s0 + $0x8c] sm:$0xf]
  %v107 = vunpack.c.l.b16 %v39
  %v108 = vunpack.c.h.b16 %v39
  %v109 = vunpack.c.l.b16 %v40
  %v110 = vunpack.c.l.b16 %v41
  %v111 = vunpack.c.h.b16 %v41
  %v112 = vunpack.c.l.b16 %v42
  %v113 = vunpack.c.l.b16 %v43
  %v114 = vunpack.c.h.b16 %v43
  %v115 = vunpack.c.l.b16 %v44
  %v116 = vunpack.c.l.b16 %v45
  %v117 = vunpack.c.h.b16 %v45
  %v118 = vunpack.c.l.b16 %v46
  %v119 = vunpack.c.l.b16 %v47
  %v120 = vunpack.c.h.b16 %v47
  %v121 = vunpack.c.l.b16 %v48
  %v122 = vunpack.c.l.b16 %v49
  %v123 = vunpack.c.h.b16 %v49
  %v124 = vunpack.c.l.b16 %v50
  %v125 = vunpack.c.l.b16 %v51
  %v126 = vunpack.c.h.b16 %v51
  %v127 = vunpack.c.l.b16 %v52
  %v128 = vunpack.c.l.b16 %v53
  %v129 = vunpack.c.h.b16 %v53
  %v130 = vunpack.c.l.b16 %v54
  %v131 = vpack.c.b16 %v110, %v107
  %v132 = vpack.c.b16 %v111, %v108
  %v133 = vpack.c.b16 %v112, %v109
  %v134 = vpack.c.b16 %v116, %v113
  %v135 = vpack.c.b16 %v117, %v114
  %v136 = vpack.c.b16 %v118, %v115
  %v137 = vpack.c.b16 %v122, %v119
  %v138 = vpack.c.b16 %v123, %v120
  %v139 = vpack.c.b16 %v124, %v121
  %v140 = vpack.c.b16 %v128, %v125
  %v141 = vpack.c.b16 %v129, %v126
  %v142 = vpack.c.b16 %v130, %v127
  %v187 = vunpack.c.l.b16 %v55
  %v188 = vunpack.c.l.b16 %v56
  %v189 = vunpack.c.l.b16 %v57
  %v190 = vunpack.c.l.b16 %v58
  %v191 = vunpack.c.l.b16 %v59
  %v192 = vunpack.c.l.b16 %v60
  %v193 = vunpack.c.l.b16 %v61
  %v194 = vunpack.c.l.b16 %v62
  %v195 = vunpack.c.l.b16 %v63
  %v196 = vunpack.c.l.b16 %v64
  %v197 = vunpack.c.l.b16 %v65
  %v198 = vunpack.c.l.b16 %v66
  %v199 = vunpack.c.l.b16 %v67
  %v200 = vunpack.c.l.b16 %v68
  %v201 = vunpack.c.l.b16 %v69
  %v202 = vunpack.c.l.b16 %v70
  %v203 = vunpack.c.l.b16 %v71
  %v204 = vunpack.c.l.b16 %v72
  %v205 = vunpack.c.l.b16 %v73
  %v206 = vunpack.c.l.b16 %v74
  %v207 = vunpack.c.l.b16 %v75
  %v208 = vunpack.c.l.b16 %v76
  %v209 = vunpack.c.l.b16 %v77
  %v210 = vunpack.c.l.b16 %v78
  %v211 = vunpack.c.l.b16 %v79
  %v212 = vunpack.c.l.b16 %v80
  %v213 = vunpack.c.l.b16 %v81
  %v214 = vunpack.c.l.b16 %v82
  %v215 = vunpack.c.l.b16 %v83
  %v216 = vunpack.c.l.b16 %v84
  %v217 = vunpack.c.l.b16 %v85
  %v218 = vunpack.c.l.b16 %v86
  %v219 = vunpack.c.l.b16 %v87
  %v220 = vunpack.c.l.b16 %v88
  %v221 = vunpack.c.l.b16 %v89
  %v222 = vunpack.c.l.b16 %v90
  %v223 = vpack.c.b16 %v188, %v187
  %v224 = vpack.c.b16 %v190, %v189
  %v225 = vpack.c.b16 %v192, %v191
  %v226 = vpack.c.b16 %v194, %v193
  %v227 = vpack.c.b16 %v196, %v195
  %v228 = vpack.c.b16 %v198, %v197
  %v229 = vpack.c.b16 %v200, %v199
  %v230 = vpack.c.b16 %v202, %v201
  %v231 = vpack.c.b16 %v204, %v203
  %v232 = vpack.c.b16 %v206, %v205
  %v233 = vpack.c.b16 %v208, %v207
  %v234 = vpack.c.b16 %v210, %v209
  %v235 = vpack.c.b16 %v212, %v211
  %v236 = vpack.c.b16 %v214, %v213
  %v237 = vpack.c.b16 %v216, %v215
  %v238 = vpack.c.b16 %v218, %v217
  %v239 = vpack.c.b16 %v220, %v219
  %v240 = vpack.c.b16 %v222, %v221
  %vm259 = vcmask 261120
  %v261 = vsel %vm259, %v133, 0
  %v264 = vsel %vm259, %v136, 0
  %v267 = vsel %vm259, %v139, 0
  %v270 = vsel %vm259, %v142, 0
  %272 = vmatprep.subr.bf16.mxu0 0
  %273 = vmatpush1.bf16.msra.mxu0 %v223
  %274 = vmatprep.subr.bf16.mxu0 0
  %275 = vmatpush1.bf16.msra.mxu0 %v224
  %276 = vmatprep.subr.bf16.mxu0 0
  %277 = vmatpush1.bf16.msra.mxu0 %v225
  %278 = vmatprep.subr.bf16.mxu0 0
  %279 = vmatpush1.bf16.msra.mxu0 %v226
  %280 = vmatprep.subr.bf16.mxu0 0
  %281 = vmatpush1.bf16.msra.mxu0 %v227
  %282 = vmatprep.subr.bf16.mxu0 0
  %283 = vmatpush1.bf16.msra.mxu0 %v228
  %284 = vmatprep.subr.bf16.mxu0 0
  %285 = vmatpush1.bf16.msra.mxu0 %v229
  %286 = vmatprep.subr.bf16.mxu0 0
  %287 = vmatpush1.bf16.msra.mxu0 %v230
  %288 = vmatprep.subr.bf16.mxu0 0
  %289 = vmatpush1.bf16.msra.mxu0 %v231
  %290 = vmatprep.subr.bf16.mxu0 0
  %291 = vmatpush1.bf16.msra.mxu0 %v232
  %292 = vmatprep.subr.bf16.mxu0 0
  %293 = vmatpush1.bf16.msra.mxu0 %v233
  %294 = vmatprep.subr.bf16.mxu0 0
  %295 = vmatpush1.bf16.msra.mxu0 %v234
  %296 = vmatprep.subr.bf16.mxu0 0
  %297 = vmatpush1.bf16.msra.mxu0 %v235
  %298 = vmatprep.subr.bf16.mxu0 0
  %299 = vmatpush1.bf16.msra.mxu0 %v236
  %300 = vmatprep.subr.bf16.mxu0 0
  %301 = vmatpush1.bf16.msra.mxu0 %v237
  %302 = vmatprep.subr.bf16.mxu0 0
  %303 = vmatpush1.bf16.msra.mxu0 %v238
  %304 = vmatprep.mubr.bf16.mxu0 %v132
  %305 = vmatmul.mubr.bf16.gmra.mrb[0].mxu0 %v131
  %v306 = vpop.f32.mrb[0].mxu0
  %v307 = vadd.f32 0.0, %v306
  %v308 = vpop.f32.mrb[0].mxu0
  %v309 = vpop.f32.mrb[0].mxu0
  %v310 = vadd.f32 0.0, %v309
  %v311 = vpop.f32.mrb[0].mxu0
  %312 = vmatprep.mubr.bf16.mxu0 %v135
  %313 = vmatmul.mubr.bf16.gmra.mrb[0].mxu0 %v134
  %v314 = vpop.f32.mrb[0].mxu0
  %v315 = vadd.f32 0.0, %v314
  %v316 = vpop.f32.mrb[0].mxu0
  %v317 = vpop.f32.mrb[0].mxu0
  %v318 = vadd.f32 0.0, %v317
  %v319 = vpop.f32.mrb[0].mxu0
  %320 = vmatprep.mubr.bf16.mxu0 %v138
  %321 = vmatmul.mubr.bf16.gmra.mrb[0].mxu0 %v137
  %v322 = vpop.f32.mrb[0].mxu0
  %v323 = vadd.f32 0.0, %v322
  %v324 = vpop.f32.mrb[0].mxu0
  %v325 = vpop.f32.mrb[0].mxu0
  %v326 = vadd.f32 0.0, %v325
  %v327 = vpop.f32.mrb[0].mxu0
  %328 = vmatprep.mubr.bf16.mxu0 %v141
  %329 = vmatmul.mubr.bf16.gmra.mrb[0].mxu0 %v140
  %v330 = vpop.f32.mrb[0].mxu0
  %v331 = vadd.f32 0.0, %v330
  %v332 = vpop.f32.mrb[0].mxu0
  %v333 = vpop.f32.mrb[0].mxu0
  %v334 = vadd.f32 0.0, %v333
  %v335 = vpop.f32.mrb[0].mxu0
  %336 = vdwg.mxu0
  %337 = vmatprep.subr.bf16.mxu0 0
  %338 = vmatpush1.bf16.msra.mxu0 %v239
  %339 = vmatprep.subr.bf16.mxu0 0
  %340 = vmatpush1.bf16.msra.mxu0 %v240
  %341 = vmatprep.subr.bf16.mxu0 0
  %342 = vmatpush1.bf16.msra.mxu0 0
  %343 = vmatprep.subr.bf16.mxu0 0
  %344 = vmatpush1.bf16.msra.mxu0 0
  %345 = vmatprep.subr.bf16.mxu0 0
  %346 = vmatpush1.bf16.msra.mxu0 0
  %347 = vmatprep.subr.bf16.mxu0 0
  %348 = vmatpush1.bf16.msra.mxu0 0
  %349 = vmatprep.subr.bf16.mxu0 0
  %350 = vmatpush1.bf16.msra.mxu0 0
  %351 = vmatprep.subr.bf16.mxu0 0
  %352 = vmatpush1.bf16.msra.mxu0 0
  %353 = vmatprep.subr.bf16.mxu0 0
  %354 = vmatpush1.bf16.msra.mxu0 0
  %355 = vmatprep.subr.bf16.mxu0 0
  %356 = vmatpush1.bf16.msra.mxu0 0
  %357 = vmatprep.subr.bf16.mxu0 0
  %358 = vmatpush1.bf16.msra.mxu0 0
  %359 = vmatprep.subr.bf16.mxu0 0
  %360 = vmatpush1.bf16.msra.mxu0 0
  %361 = vmatprep.subr.bf16.mxu0 0
  %362 = vmatpush1.bf16.msra.mxu0 0
  %363 = vmatprep.subr.bf16.mxu0 0
  %364 = vmatpush1.bf16.msra.mxu0 0
  %365 = vmatprep.subr.bf16.mxu0 0
  %366 = vmatpush1.bf16.msra.mxu0 0
  %367 = vmatprep.subr.bf16.mxu0 0
  %368 = vmatpush1.bf16.msra.mxu0 0
  %369 = vmatprep.mubr.bf16.mxu0 0
  %370 = vmatmul.mubr.bf16.gmra.mrb[0].mxu0 %v261
  %v371 = vpop.f32.mrb[0].mxu0
  %v372 = vadd.f32 %v307, %v371
  %v373 = vpop.f32.mrb[0].mxu0
  %v374 = vpop.f32.mrb[0].mxu0
  %v375 = vadd.f32 %v310, %v374
  %v376 = vpop.f32.mrb[0].mxu0
  %377 = vmatprep.mubr.bf16.mxu0 0
  %378 = vmatmul.mubr.bf16.gmra.mrb[0].mxu0 %v264
  %v379 = vpop.f32.mrb[0].mxu0
  %v380 = vadd.f32 %v315, %v379
  %v381 = vpop.f32.mrb[0].mxu0
  %v382 = vpop.f32.mrb[0].mxu0
  %v383 = vadd.f32 %v318, %v382
  %v384 = vpop.f32.mrb[0].mxu0
  %385 = vmatprep.mubr.bf16.mxu0 0
  %386 = vmatmul.mubr.bf16.gmra.mrb[0].mxu0 %v267
  %v387 = vpop.f32.mrb[0].mxu0
  %v388 = vadd.f32 %v323, %v387
  %v389 = vpop.f32.mrb[0].mxu0
  %v390 = vpop.f32.mrb[0].mxu0
  %v391 = vadd.f32 %v326, %v390
  %v392 = vpop.f32.mrb[0].mxu0
  %393 = vmatprep.mubr.bf16.mxu0 0
  %394 = vmatmul.mubr.bf16.gmra.mrb[0].mxu0 %v270
  %v395 = vpop.f32.mrb[0].mxu0
  %v396 = vadd.f32 %v331, %v395
  %v397 = vpop.f32.mrb[0].mxu0
  %v398 = vpop.f32.mrb[0].mxu0
  %v399 = vadd.f32 %v334, %v398
  %v400 = vpop.f32.mrb[0].mxu0
  %401 = vdwg.mxu0
  %v402 = vld [vmem:[#allocation2] sm:$0xff]
  %v403 = vld [vmem:[#allocation2 + $0x8] sm:$0xff]
  %v404 = vld [vmem:[#allocation2 + $0x10] sm:$0xff]
  %v405 = vld [vmem:[#allocation2 + $0x18] sm:$0xff]
  %v406 = vld [vmem:[#allocation2 + $0x20] sm:$0xff]
  %v407 = vld [vmem:[#allocation2 + $0x28] sm:$0xff]
  %v408 = vld [vmem:[#allocation2 + $0x30] sm:$0xff]
  %v409 = vld [vmem:[#allocation2 + $0x38] sm:$0xff]
  %410 = vadd.xlane.f32.xlu0 %v372
  %v411 = vpop.xlane.xlu0 %410
  %412 = vadd.xlane.f32.xlu0 %v375
  %v413 = vpop.xlane.xlu0 %412
  %414 = vadd.xlane.f32.xlu0 %v380
  %v415 = vpop.xlane.xlu0 %414
  %416 = vadd.xlane.f32.xlu0 %v383
  %v417 = vpop.xlane.xlu0 %416
  %418 = vadd.xlane.f32.xlu0 %v388
  %v419 = vpop.xlane.xlu0 %418
  %420 = vadd.xlane.f32.xlu0 %v391
  %v421 = vpop.xlane.xlu0 %420
  %422 = vadd.xlane.f32.xlu0 %v396
  %v423 = vpop.xlane.xlu0 %422
  %424 = vadd.xlane.f32.xlu0 %v399
  %v425 = vpop.xlane.xlu0 %424
  %v426 = vadd.f32 %v402, %v411
  %v427 = vadd.f32 %v403, %v413
  %v428 = vadd.f32 %v404, %v415
  %v429 = vadd.f32 %v405, %v417
  %v430 = vadd.f32 %v406, %v419
  %v431 = vadd.f32 %v407, %v421
  %v432 = vadd.f32 %v408, %v423
  %v433 = vadd.f32 %v409, %v425
  %vm434 = vcmask 7168
  %435 = vst.msk [vmem:[#allocation2] sm:$0xff] %vm434, %v426
  %436 = vst.msk [vmem:[#allocation2 + $0x8] sm:$0xff] %vm434, %v427
  %437 = vst.msk [vmem:[#allocation2 + $0x10] sm:$0xff] %vm434, %v428
  %438 = vst.msk [vmem:[#allocation2 + $0x18] sm:$0xff] %vm434, %v429
  %439 = vst.msk [vmem:[#allocation2 + $0x20] sm:$0xff] %vm434, %v430
  %440 = vst.msk [vmem:[#allocation2 + $0x28] sm:$0xff] %vm434, %v431
  %441 = vst.msk [vmem:[#allocation2 + $0x30] sm:$0xff] %vm434, %v432
  %442 = vst.msk [vmem:[#allocation2 + $0x38] sm:$0xff] %vm434, %v433
  %v443 = vld [vmem:[#allocation3] sm:$0xff]
  %v444 = vld [vmem:[#allocation3 + $0x8] sm:$0xff]
  %v445 = vld [vmem:[#allocation3 + $0x10] sm:$0xff]
  %v446 = vld [vmem:[#allocation3 + $0x18] sm:$0xff]
  %v447 = vld [vmem:[#allocation3 + $0x20] sm:$0xff]
  %v448 = vld [vmem:[#allocation3 + $0x28] sm:$0xff]
  %v449 = vld [vmem:[#allocation3 + $0x30] sm:$0xff]
  %v450 = vld [vmem:[#allocation3 + $0x38] sm:$0xff]
  %v451 = vmul.f32 %v372, %v372
  %v452 = vmul.f32 %v375, %v375
  %v453 = vmul.f32 %v380, %v380
  %v454 = vmul.f32 %v383, %v383
  %v455 = vmul.f32 %v388, %v388
  %v456 = vmul.f32 %v391, %v391
  %v457 = vmul.f32 %v396, %v396
  %v458 = vmul.f32 %v399, %v399
  %459 = vadd.xlane.f32.xlu0 %v451
  %v460 = vpop.xlane.xlu0 %459
  %461 = vadd.xlane.f32.xlu0 %v452
  %v462 = vpop.xlane.xlu0 %461
  %463 = vadd.xlane.f32.xlu0 %v453
  %v464 = vpop.xlane.xlu0 %463
  %465 = vadd.xlane.f32.xlu0 %v454
  %v466 = vpop.xlane.xlu0 %465
  %467 = vadd.xlane.f32.xlu0 %v455
  %v468 = vpop.xlane.xlu0 %467
  %469 = vadd.xlane.f32.xlu0 %v456
  %v470 = vpop.xlane.xlu0 %469
  %471 = vadd.xlane.f32.xlu0 %v457
  %v472 = vpop.xlane.xlu0 %471
  %473 = vadd.xlane.f32.xlu0 %v458
  %v474 = vpop.xlane.xlu0 %473
  %v475 = vadd.f32 %v443, %v460
  %v476 = vadd.f32 %v444, %v462
  %v477 = vadd.f32 %v445, %v464
  %v478 = vadd.f32 %v446, %v466
  %v479 = vadd.f32 %v447, %v468
  %v480 = vadd.f32 %v448, %v470
  %v481 = vadd.f32 %v449, %v472
  %v482 = vadd.f32 %v450, %v474
  %483 = vst.msk [vmem:[#allocation3] sm:$0xff] %vm434, %v475
  %484 = vst.msk [vmem:[#allocation3 + $0x8] sm:$0xff] %vm434, %v476
  %485 = vst.msk [vmem:[#allocation3 + $0x10] sm:$0xff] %vm434, %v477
  %486 = vst.msk [vmem:[#allocation3 + $0x18] sm:$0xff] %vm434, %v478
  %487 = vst.msk [vmem:[#allocation3 + $0x20] sm:$0xff] %vm434, %v479
  %488 = vst.msk [vmem:[#allocation3 + $0x28] sm:$0xff] %vm434, %v480
  %489 = vst.msk [vmem:[#allocation3 + $0x30] sm:$0xff] %vm434, %v481
  %490 = vst.msk [vmem:[#allocation3 + $0x38] sm:$0xff] %vm434, %v482
  %s491 = smul.u32 0, 128
  %s492 = sshra.s32 %s491, 7
  %s493 = sand.u32 %s491, 127
  %s494 = scalar_lea.vmem %s4, %s492
  %495 = vst [vmem:[%s494] sm:$0xff] %v372
  %496 = vst [vmem:[%s494 + $0x8] sm:$0xff] %v375
  %497 = vst [vmem:[%s494 + $0x10] sm:$0xff] %v380
  %498 = vst [vmem:[%s494 + $0x18] sm:$0xff] %v383
  %499 = vst [vmem:[%s494 + $0x20] sm:$0xff] %v388
  %500 = vst [vmem:[%s494 + $0x28] sm:$0xff] %v391
  %501 = vst [vmem:[%s494 + $0x30] sm:$0xff] %v396
  %502 = vst [vmem:[%s494 + $0x38] sm:$0xff] %v399
  // Predicated region
  $region22: #{conv_cvae_forward.15} parent=0 // pred_check
    %p503 = pneg %p18
  $region23: #{conv_cvae_forward.15} parent=0 // pred_check_branch
    %505 = sbr.rel (%p503) target = $region25
  $region24: #{conv_cvae_forward.15} parent=0 // pred_region
    %v506 = vld [vmem:[#allocation2] sm:$0xff]
    %v507 = vld [vmem:[#allocation2 + $0x8] sm:$0xff]
    %v508 = vld [vmem:[#allocation2 + $0x10] sm:$0xff]
    %v509 = vld [vmem:[#allocation2 + $0x18] sm:$0xff]
    %v510 = vld [vmem:[#allocation2 + $0x20] sm:$0xff]
    %v511 = vld [vmem:[#allocation2 + $0x28] sm:$0xff]
    %v512 = vld [vmem:[#allocation2 + $0x30] sm:$0xff]
    %v513 = vld [vmem:[#allocation2 + $0x38] sm:$0xff]
    %v514 = vmul.f32 %v506, 0.125
    %v515 = vmul.f32 %v507, 0.125
    %v516 = vmul.f32 %v508, 0.125
    %v517 = vmul.f32 %v509, 0.125
    %v518 = vmul.f32 %v510, 0.125
    %v519 = vmul.f32 %v511, 0.125
    %v520 = vmul.f32 %v512, 0.125
    %v521 = vmul.f32 %v513, 0.125
    %v522 = vld [vmem:[#allocation3] sm:$0xff]
    %v523 = vld [vmem:[#allocation3 + $0x8] sm:$0xff]
    %v524 = vld [vmem:[#allocation3 + $0x10] sm:$0xff]
    %v525 = vld [vmem:[#allocation3 + $0x18] sm:$0xff]
    %v526 = vld [vmem:[#allocation3 + $0x20] sm:$0xff]
    %v527 = vld [vmem:[#allocation3 + $0x28] sm:$0xff]
    %v528 = vld [vmem:[#allocation3 + $0x30] sm:$0xff]
    %v529 = vld [vmem:[#allocation3 + $0x38] sm:$0xff]
    %v530 = vmul.f32 %v522, 0.125
    %v531 = vmul.f32 %v523, 0.125
    %v532 = vmul.f32 %v524, 0.125
    %v533 = vmul.f32 %v525, 0.125
    %v534 = vmul.f32 %v526, 0.125
    %v535 = vmul.f32 %v527, 0.125
    %v536 = vmul.f32 %v528, 0.125
    %v537 = vmul.f32 %v529, 0.125
    %v538 = vmul.f32 %v514, %v514
    %v539 = vmul.f32 %v515, %v515
    %v540 = vmul.f32 %v516, %v516
    %v541 = vmul.f32 %v517, %v517
    %v542 = vmul.f32 %v518, %v518
    %v543 = vmul.f32 %v519, %v519
    %v544 = vmul.f32 %v520, %v520
    %v545 = vmul.f32 %v521, %v521
    %v546 = vsub.f32 %v530, %v538
    %v547 = vsub.f32 %v531, %v539
    %v548 = vsub.f32 %v532, %v540
    %v549 = vsub.f32 %v533, %v541
    %v550 = vsub.f32 %v534, %v542
    %v551 = vsub.f32 %v535, %v543
    %v552 = vsub.f32 %v536, %v544
    %v553 = vsub.f32 %v537, %v545
    %v554 = vld [vmem:[%s2] sm:$0xff]
    %v555 = vld [vmem:[%s2 + $0x8] sm:$0xff]
    %v556 = vld [vmem:[%s2 + $0x10] sm:$0xff]
    %v557 = vld [vmem:[%s2 + $0x18] sm:$0xff]
    %v558 = vld [vmem:[%s2 + $0x20] sm:$0xff]
    %v559 = vld [vmem:[%s2 + $0x28] sm:$0xff]
    %v560 = vld [vmem:[%s2 + $0x30] sm:$0xff]
    %v561 = vld [vmem:[%s2 + $0x38] sm:$0xff]
    %v562 = vadd.f32 %v546, 1e-05
    %v563 = vadd.f32 %v547, 1e-05
    %v564 = vadd.f32 %v548, 1e-05
    %v565 = vadd.f32 %v549, 1e-05
    %v566 = vadd.f32 %v550, 1e-05
    %v567 = vadd.f32 %v551, 1e-05
    %v568 = vadd.f32 %v552, 1e-05
    %v569 = vadd.f32 %v553, 1e-05
    %v570 = vrsqrt.pop %v562
    %v571 = vrsqrt.pop %v563
    %v572 = vrsqrt.pop %v564
    %v573 = vrsqrt.pop %v565
    %v574 = vrsqrt.pop %v566
    %v575 = vrsqrt.pop %v567
    %v576 = vrsqrt.pop %v568
    %v577 = vrsqrt.pop %v569
    %v578 = vmul.f32 %v554, %v570
    %v579 = vmul.f32 %v555, %v571
    %v580 = vmul.f32 %v556, %v572
    %v581 = vmul.f32 %v557, %v573
    %v582 = vmul.f32 %v558, %v574
    %v583 = vmul.f32 %v559, %v575
    %v584 = vmul.f32 %v560, %v576
    %v585 = vmul.f32 %v561, %v577
    %v586 = vld [vmem:[%s3] sm:$0xff]
    %v587 = vld [vmem:[%s3 + $0x8] sm:$0xff]
    %v588 = vld [vmem:[%s3 + $0x10] sm:$0xff]
    %v589 = vld [vmem:[%s3 + $0x18] sm:$0xff]
    %v590 = vld [vmem:[%s3 + $0x20] sm:$0xff]
    %v591 = vld [vmem:[%s3 + $0x28] sm:$0xff]
    %v592 = vld [vmem:[%s3 + $0x30] sm:$0xff]
    %v593 = vld [vmem:[%s3 + $0x38] sm:$0xff]
    %v594 = vmul.f32 %v514, %v578
    %v595 = vmul.f32 %v515, %v579
    %v596 = vmul.f32 %v516, %v580
    %v597 = vmul.f32 %v517, %v581
    %v598 = vmul.f32 %v518, %v582
    %v599 = vmul.f32 %v519, %v583
    %v600 = vmul.f32 %v520, %v584
    %v601 = vmul.f32 %v521, %v585
    %v602 = vsub.f32 %v586, %v594
    %v603 = vsub.f32 %v587, %v595
    %v604 = vsub.f32 %v588, %v596
    %v605 = vsub.f32 %v589, %v597
    %v606 = vsub.f32 %v590, %v598
    %v607 = vsub.f32 %v591, %v599
    %v608 = vsub.f32 %v592, %v600
    %v609 = vsub.f32 %v593, %v601
    %v610 = vld [vmem:[%s4] sm:$0xff]
    %v611 = vld [vmem:[%s4 + $0x8] sm:$0xff]
    %v612 = vld [vmem:[%s4 + $0x10] sm:$0xff]
    %v613 = vld [vmem:[%s4 + $0x18] sm:$0xff]
    %v614 = vld [vmem:[%s4 + $0x20] sm:$0xff]
    %v615 = vld [vmem:[%s4 + $0x28] sm:$0xff]
    %v616 = vld [vmem:[%s4 + $0x30] sm:$0xff]
    %v617 = vld [vmem:[%s4 + $0x38] sm:$0xff]
    %619 = vset.pattern.permute.xlu0 0
    %620 = vperm.xlu0 %619, %v578
    %v621 = vpop.permute.xlu0 %620
    %624 = vset.pattern.permute.xlu0 0
    %625 = vperm.xlu0 %624, %v579
    %v626 = vpop.permute.xlu0 %625
    %629 = vset.pattern.permute.xlu0 0
    %630 = vperm.xlu0 %629, %v580
    %v631 = vpop.permute.xlu0 %630
    %634 = vset.pattern.permute.xlu0 0
    %635 = vperm.xlu0 %634, %v581
    %v636 = vpop.permute.xlu0 %635
    %639 = vset.pattern.permute.xlu0 0
    %640 = vperm.xlu0 %639, %v582
    %v641 = vpop.permute.xlu0 %640
    %644 = vset.pattern.permute.xlu0 0
    %645 = vperm.xlu0 %644, %v583
    %v646 = vpop.permute.xlu0 %645
    %649 = vset.pattern.permute.xlu0 0
    %650 = vperm.xlu0 %649, %v584
    %v651 = vpop.permute.xlu0 %650
    %654 = vset.pattern.permute.xlu0 0
    %655 = vperm.xlu0 %654, %v585
    %v656 = vpop.permute.xlu0 %655
    %v658 = vmul.f32 %v610, %v621
    %v659 = vmul.f32 %v611, %v626
    %v660 = vmul.f32 %v612, %v631
    %v661 = vmul.f32 %v613, %v636
    %v662 = vmul.f32 %v614, %v641
    %v663 = vmul.f32 %v615, %v646
    %v664 = vmul.f32 %v616, %v651
    %v665 = vmul.f32 %v617, %v656
    %667 = vset.pattern.permute.xlu0 0
    %668 = vperm.xlu0 %667, %v602
    %v669 = vpop.permute.xlu0 %668
    %672 = vset.pattern.permute.xlu0 0
    %673 = vperm.xlu0 %672, %v603
    %v674 = vpop.permute.xlu0 %673
    %677 = vset.pattern.permute.xlu0 0
    %678 = vperm.xlu0 %677, %v604
    %v679 = vpop.permute.xlu0 %678
    %682 = vset.pattern.permute.xlu0 0
    %683 = vperm.xlu0 %682, %v605
    %v684 = vpop.permute.xlu0 %683
    %687 = vset.pattern.permute.xlu0 0
    %688 = vperm.xlu0 %687, %v606
    %v689 = vpop.permute.xlu0 %688
    %692 = vset.pattern.permute.xlu0 0
    %693 = vperm.xlu0 %692, %v607
    %v694 = vpop.permute.xlu0 %693
    %697 = vset.pattern.permute.xlu0 0
    %698 = vperm.xlu0 %697, %v608
    %v699 = vpop.permute.xlu0 %698
    %702 = vset.pattern.permute.xlu0 0
    %703 = vperm.xlu0 %702, %v609
    %v704 = vpop.permute.xlu0 %703
    %v706 = vadd.f32 %v658, %v669
    %v707 = vadd.f32 %v659, %v674
    %v708 = vadd.f32 %v660, %v679
    %v709 = vadd.f32 %v661, %v684
    %v710 = vadd.f32 %v662, %v689
    %v711 = vadd.f32 %v663, %v694
    %v712 = vadd.f32 %v664, %v699
    %v713 = vadd.f32 %v665, %v704
    %vm714 = vcmp.ge.f32.partialorder %v706, 0.0
    %vm715 = vcmp.ge.f32.partialorder %v707, 0.0
    %vm716 = vcmp.ge.f32.partialorder %v708, 0.0
    %vm717 = vcmp.ge.f32.partialorder %v709, 0.0
    %vm718 = vcmp.ge.f32.partialorder %v710, 0.0
    %vm719 = vcmp.ge.f32.partialorder %v711, 0.0
    %vm720 = vcmp.ge.f32.partialorder %v712, 0.0
    %vm721 = vcmp.ge.f32.partialorder %v713, 0.0
    %v722 = vmul.f32 %v706, 0.01
    %v723 = vmul.f32 %v707, 0.01
    %v724 = vmul.f32 %v708, 0.01
    %v725 = vmul.f32 %v709, 0.01
    %v726 = vmul.f32 %v710, 0.01
    %v727 = vmul.f32 %v711, 0.01
    %v728 = vmul.f32 %v712, 0.01
    %v729 = vmul.f32 %v713, 0.01
    %v730 = vsel %vm714, %v706, %v722
    %v731 = vsel %vm715, %v707, %v723
    %v732 = vsel %vm716, %v708, %v724
    %v733 = vsel %vm717, %v709, %v725
    %v734 = vsel %vm718, %v710, %v726
    %v735 = vsel %vm719, %v711, %v727
    %v736 = vsel %vm720, %v712, %v728
    %v737 = vsel %vm721, %v713, %v729
    %738 = vst [vmem:[%s4] sm:$0xff] %v730
    %739 = vst [vmem:[%s4 + $0x8] sm:$0xff] %v731
    %740 = vst [vmem:[%s4 + $0x10] sm:$0xff] %v732
    %741 = vst [vmem:[%s4 + $0x18] sm:$0xff] %v733
    %742 = vst [vmem:[%s4 + $0x20] sm:$0xff] %v734
    %743 = vst [vmem:[%s4 + $0x28] sm:$0xff] %v735
    %744 = vst [vmem:[%s4 + $0x30] sm:$0xff] %v736
    %745 = vst [vmem:[%s4 + $0x38] sm:$0xff] %v737
  $region25: #{conv_cvae_forward.15} parent=0 // pred_fallthru
    _
  // Predicated region
  $region26: #{conv_cvae_forward.15} parent=0 // pred_check
    _
  $region27: #{conv_cvae_forward.15} parent=0 // pred_check_branch
    %747 = sbr.rel (0) target = $region29
  $region28: #{conv_cvae_forward.15} parent=0 // pred_region
    _
  $region29: #{conv_cvae_forward.15} parent=0 // pred_fallthru
    _
  // Predicated region
  $region30: #{conv_cvae_forward.15} parent=0 // pred_check
    _
  $region31: #{conv_cvae_forward.15} parent=0 // pred_check_branch
    %749 = sbr.rel (0) target = $region33
  $region32: #{conv_cvae_forward.15} parent=0 // pred_region
    _
  $region33: #{conv_cvae_forward.15} parent=0 // pred_fallthru
    _

// kernel: conv_cvae_forward.17
$region0: #{conv_cvae_forward.17}
  #allocation0 [shape = 'u32[]', space=smem, size = 0x4, offset = 0x4, fixed_abs, tag = 'smem constant byte address 0x4 - core index']
  #allocation1 [shape = 'u32[144,128]{1,0:T(1,128)}', space=vmem, size = 0x12000, scoped, tag = 'internal scratch']
  %s0 = inlined_call_operand.vmem [shape: bf16[128,2], index: 0, kind: input, shape index: {}]
  %s1 = inlined_call_operand.vmem [shape: bf16[32,128], index: 1, kind: input, shape index: {}]
  %s2 = inlined_call_operand.vmem [shape: f32[32,1], index: 2, kind: input, shape index: {}]
  %s3 = inlined_call_operand.vmem [shape: f32[16,2], index: 3, kind: input, shape index: {}]
  %s4 = inlined_call_operand.vmem [shape: bf16[16,16], index: 4, kind: input, shape index: {}]
  %s5 = inlined_call_operand.vmem [shape: f32[16,1], index: 5, kind: input, shape index: {}]
  %s6 = inlined_call_operand.vmem [shape: f32[32,2], index: 6, kind: output, shape index: {0}]
  %s7 = inlined_call_operand.vmem [shape: f32[16,2], index: 7, kind: output, shape index: {1}]
  %8 = xla_tuple %s6, %s7
  %s9 = sld [smem:[#allocation0]]
  $region42: #{conv_cvae_forward.17} parent=0
    _
  %s11 = ssub.s32 1, %s9
  %s12 = scalar_select 0, %s11, %s9
  // Predicated region
  $region2: #{conv_cvae_forward.17} parent=0 // pred_check
    _
  $region3: #{conv_cvae_forward.17} parent=0 // pred_check_branch
    %14 = sbr.rel (0) target = $region5
  $region4: #{conv_cvae_forward.17} parent=0 // pred_region
    _
  $region5: #{conv_cvae_forward.17} parent=0 // pred_fallthru
    _
  // Predicated region
  $region6: #{conv_cvae_forward.17} parent=0 // pred_check
    _
  $region7: #{conv_cvae_forward.17} parent=0 // pred_check_branch
    %16 = sbr.rel (0) target = $region9
  $region8: #{conv_cvae_forward.17} parent=0 // pred_region
    _
  $region9: #{conv_cvae_forward.17} parent=0 // pred_fallthru
    _
  // Predicated region
  $region10: #{conv_cvae_forward.17} parent=0 // pred_check
    _
  $region11: #{conv_cvae_forward.17} parent=0 // pred_check_branch
    %18 = sbr.rel (0) target = $region13
  $region12: #{conv_cvae_forward.17} parent=0 // pred_region
    _
  $region13: #{conv_cvae_forward.17} parent=0 // pred_fallthru
    _
  // Predicated region
  $region14: #{conv_cvae_forward.17} parent=0 // pred_check
    _
  $region15: #{conv_cvae_forward.17} parent=0 // pred_check_branch
    %20 = sbr.rel (0) target = $region17
  $region16: #{conv_cvae_forward.17} parent=0 // pred_region
    _
  $region17: #{conv_cvae_forward.17} parent=0 // pred_fallthru
    _
  // Predicated region
  $region18: #{conv_cvae_forward.17} parent=0 // pred_check
    _
  $region19: #{conv_cvae_forward.17} parent=0 // pred_check_branch
    %22 = sbr.rel (0) target = $region21
  $region20: #{conv_cvae_forward.17} parent=0 // pred_region
    _
  $region21: #{conv_cvae_forward.17} parent=0 // pred_fallthru
    _
  // Predicated region
  $region22: #{conv_cvae_forward.17} parent=0 // pred_check
    _
  $region23: #{conv_cvae_forward.17} parent=0 // pred_check_branch
    %24 = sbr.rel (0) target = $region25
  $region24: #{conv_cvae_forward.17} parent=0 // pred_region
    _
  $region25: #{conv_cvae_forward.17} parent=0 // pred_fallthru
    _
  %v26 = vld [vmem:[%s1] sm:$0xf]
  %v27 = vld [vmem:[%s1 + $0x4] sm:$0xf]
  %v28 = vld [vmem:[%s1 + $0x8] sm:$0xf]
  %v29 = vld [vmem:[%s1 + $0xc] sm:$0xf]
  %v30 = vld [vmem:[%s0] sm:$0xf]
  %v31 = vld [vmem:[%s0 + $0x4] sm:$0xf]
  %v32 = vld [vmem:[%s0 + $0x8] sm:$0xf]
  %v33 = vld [vmem:[%s0 + $0xc] sm:$0xf]
  %v34 = vld [vmem:[%s0 + $0x10] sm:$0xf]
  %v35 = vld [vmem:[%s0 + $0x14] sm:$0xf]
  %v36 = vld [vmem:[%s0 + $0x18] sm:$0xf]
  %v37 = vld [vmem:[%s0 + $0x1c] sm:$0xf]
  %v38 = vld [vmem:[%s0 + $0x20] sm:$0xf]
  %v39 = vld [vmem:[%s0 + $0x24] sm:$0xf]
  %v40 = vld [vmem:[%s0 + $0x28] sm:$0xf]
  %v41 = vld [vmem:[%s0 + $0x2c] sm:$0xf]
  %v42 = vld [vmem:[%s0 + $0x30] sm:$0xf]
  %v43 = vld [vmem:[%s0 + $0x34] sm:$0xf]
  %v44 = vld [vmem:[%s0 + $0x38] sm:$0xf]
  %v45 = vld [vmem:[%s0 + $0x3c] sm:$0xf]
  %v46 = vld [vmem:[%s2] sm:$0xff]
  %v47 = vld [vmem:[%s2 + $0x8] sm:$0xff]
  %v48 = vld [vmem:[%s2 + $0x10] sm:$0xff]
  %v49 = vld [vmem:[%s2 + $0x18] sm:$0xff]
  %51 = vset.pattern.permute.xlu0 0
  %52 = vperm.xlu0 %51, %v46
  %v53 = vpop.permute.xlu0 %52
  %56 = vset.pattern.permute.xlu0 0
  %57 = vperm.xlu0 %56, %v47
  %v58 = vpop.permute.xlu0 %57
  %61 = vset.pattern.permute.xlu0 0
  %62 = vperm.xlu0 %61, %v48
  %v63 = vpop.permute.xlu0 %62
  %66 = vset.pattern.permute.xlu0 0
  %67 = vperm.xlu0 %66, %v49
  %v68 = vpop.permute.xlu0 %67
  %v74 = vunpack.c.l.b16 %v26
  %v75 = vunpack.c.l.b16 %v27
  %v76 = vunpack.c.l.b16 %v28
  %v77 = vunpack.c.l.b16 %v29
  %v78 = vpack.c.b16 %v75, %v74
  %v79 = vpack.c.b16 %v77, %v76
  %v98 = vunpack.c.l.b16 %v30
  %v99 = vunpack.c.l.b16 %v31
  %v100 = vunpack.c.l.b16 %v32
  %v101 = vunpack.c.l.b16 %v33
  %v102 = vunpack.c.l.b16 %v34
  %v103 = vunpack.c.l.b16 %v35
  %v104 = vunpack.c.l.b16 %v36
  %v105 = vunpack.c.l.b16 %v37
  %v106 = vunpack.c.l.b16 %v38
  %v107 = vunpack.c.l.b16 %v39
  %v108 = vunpack.c.l.b16 %v40
  %v109 = vunpack.c.l.b16 %v41
  %v110 = vunpack.c.l.b16 %v42
  %v111 = vunpack.c.l.b16 %v43
  %v112 = vunpack.c.l.b16 %v44
  %v113 = vunpack.c.l.b16 %v45
  %v114 = vpack.c.b16 %v99, %v98
  %v115 = vpack.c.b16 %v101, %v100
  %v116 = vpack.c.b16 %v103, %v102
  %v117 = vpack.c.b16 %v105, %v104
  %v118 = vpack.c.b16 %v107, %v106
  %v119 = vpack.c.b16 %v109, %v108
  %v120 = vpack.c.b16 %v111, %v110
  %v121 = vpack.c.b16 %v113, %v112
  %130 = vmatprep.subr.bf16.mxu0 0
  %131 = vmatpush1.bf16.msra.mxu0 %v114
  %132 = vmatprep.subr.bf16.mxu0 0
  %133 = vmatpush1.bf16.msra.mxu0 %v115
  %134 = vmatprep.subr.bf16.mxu0 0
  %135 = vmatpush1.bf16.msra.mxu0 %v116
  %136 = vmatprep.subr.bf16.mxu0 0
  %137 = vmatpush1.bf16.msra.mxu0 %v117
  %138 = vmatprep.subr.bf16.mxu0 0
  %139 = vmatpush1.bf16.msra.mxu0 %v118
  %140 = vmatprep.subr.bf16.mxu0 0
  %141 = vmatpush1.bf16.msra.mxu0 %v119
  %142 = vmatprep.subr.bf16.mxu0 0
  %143 = vmatpush1.bf16.msra.mxu0 %v120
  %144 = vmatprep.subr.bf16.mxu0 0
  %145 = vmatpush1.bf16.msra.mxu0 %v121
  %146 = vmatprep.subr.bf16.mxu0 0
  %147 = vmatpush1.bf16.msra.mxu0 0
  %148 = vmatprep.subr.bf16.mxu0 0
  %149 = vmatpush1.bf16.msra.mxu0 0
  %150 = vmatprep.subr.bf16.mxu0 0
  %151 = vmatpush1.bf16.msra.mxu0 0
  %152 = vmatprep.subr.bf16.mxu0 0
  %153 = vmatpush1.bf16.msra.mxu0 0
  %154 = vmatprep.subr.bf16.mxu0 0
  %155 = vmatpush1.bf16.msra.mxu0 0
  %156 = vmatprep.subr.bf16.mxu0 0
  %157 = vmatpush1.bf16.msra.mxu0 0
  %158 = vmatprep.subr.bf16.mxu0 0
  %159 = vmatpush1.bf16.msra.mxu0 0
  %160 = vmatprep.subr.bf16.mxu0 0
  %161 = vmatpush1.bf16.msra.mxu0 0
  %162 = vmatprep.mubr.bf16.mxu0 0
  %163 = vmatmul.mubr.bf16.gmra.mrb[0].mxu0 %v78
  %v164 = vpop.f32.mrb[0].mxu0
  %v165 = vadd.f32 %v53, %v164
  %v166 = vpop.f32.mrb[0].mxu0
  %v167 = vpop.f32.mrb[0].mxu0
  %v168 = vadd.f32 %v58, %v167
  %v169 = vpop.f32.mrb[0].mxu0
  %170 = vmatprep.mubr.bf16.mxu0 0
  %171 = vmatmul.mubr.bf16.gmra.mrb[0].mxu0 %v79
  %v172 = vpop.f32.mrb[0].mxu0
  %v173 = vadd.f32 %v63, %v172
  %v174 = vpop.f32.mrb[0].mxu0
  %v175 = vpop.f32.mrb[0].mxu0
  %v176 = vadd.f32 %v68, %v175
  %v177 = vpop.f32.mrb[0].mxu0
  %178 = vdwg.mxu0
  %vm179 = vcmask 15360
  %180 = vst.msk [vmem:[%s6] sm:$0xff] %vm179, %v165
  %181 = vst.msk [vmem:[%s6 + $0x8] sm:$0xff] %vm179, %v168
  %182 = vst.msk [vmem:[%s6 + $0x10] sm:$0xff] %vm179, %v173
  %183 = vst.msk [vmem:[%s6 + $0x18] sm:$0xff] %vm179, %v176
  %v184 = vld [vmem:[%s3] sm:$0xff]
  %v185 = vld [vmem:[%s3 + $0x8] sm:$0xff]
  %v186 = vmul.f32 %v173, 0.5
  %v187 = vmul.f32 %v176, 0.5
  %v188 = vmul.f32 %v186, 1.442695
  %v189 = vpow.pop %v188
  %v190 = vmul.f32 %v187, 1.442695
  %v191 = vpow.pop %v190
  %v192 = vmul.f32 %v184, %v189
  %v193 = vmul.f32 %v185, %v191
  %v194 = vadd.f32 %v192, %v165
  %v195 = vadd.f32 %v193, %v168
  %v196 = vld [vmem:[%s4] sm:$0xf]
  %v197 = vld [vmem:[%s4 + $0x4] sm:$0xf]
  %v198 = vpack.c.bf16 %v195, %v194
  %v199 = vld [vmem:[%s5] sm:$0xff]
  %v200 = vld [vmem:[%s5 + $0x8] sm:$0xff]
  %202 = vset.pattern.permute.xlu0 0
  %203 = vperm.xlu0 %202, %v199
  %v204 = vpop.permute.xlu0 %203
  %207 = vset.pattern.permute.xlu0 0
  %208 = vperm.xlu0 %207, %v200
  %v209 = vpop.permute.xlu0 %208
  %v213 = vunpack.c.l.b16 %v196
  %v214 = vunpack.c.l.b16 %v197
  %v215 = vpack.c.b16 %v214, %v213
  %vm216 = vcmask 130048
  %v218 = vsel %vm216, %v215, 0
  %220 = vmatprep.subr.bf16.mxu0 0
  %221 = vmatpush1.bf16.msra.mxu0 %v198
  %222 = vmatprep.subr.bf16.mxu0 0
  %223 = vmatpush1.bf16.msra.mxu0 0
  %224 = vmatprep.subr.bf16.mxu0 0
  %225 = vmatpush1.bf16.msra.mxu0 0
  %226 = vmatprep.subr.bf16.mxu0 0
  %227 = vmatpush1.bf16.msra.mxu0 0
  %228 = vmatprep.subr.bf16.mxu0 0
  %229 = vmatpush1.bf16.msra.mxu0 0
  %230 = vmatprep.subr.bf16.mxu0 0
  %231 = vmatpush1.bf16.msra.mxu0 0
  %232 = vmatprep.subr.bf16.mxu0 0
  %233 = vmatpush1.bf16.msra.mxu0 0
  %234 = vmatprep.subr.bf16.mxu0 0
  %235 = vmatpush1.bf16.msra.mxu0 0
  %236 = vmatprep.subr.bf16.mxu0 0
  %237 = vmatpush1.bf16.msra.mxu0 0
  %238 = vmatprep.subr.bf16.mxu0 0
  %239 = vmatpush1.bf16.msra.mxu0 0
  %240 = vmatprep.subr.bf16.mxu0 0
  %241 = vmatpush1.bf16.msra.mxu0 0
  %242 = vmatprep.subr.bf16.mxu0 0
  %243 = vmatpush1.bf16.msra.mxu0 0
  %244 = vmatprep.subr.bf16.mxu0 0
  %245 = vmatpush1.bf16.msra.mxu0 0
  %246 = vmatprep.subr.bf16.mxu0 0
  %247 = vmatpush1.bf16.msra.mxu0 0
  %248 = vmatprep.subr.bf16.mxu0 0
  %249 = vmatpush1.bf16.msra.mxu0 0
  %250 = vmatprep.subr.bf16.mxu0 0
  %251 = vmatpush1.bf16.msra.mxu0 0
  %252 = vmatprep.mubr.bf16.mxu0 0
  %253 = vmatmul.mubr.bf16.gmra.mrb[0].mxu0 %v218
  %v254 = vpop.f32.mrb[0].mxu0
  %v255 = vadd.f32 %v204, %v254
  %v256 = vpop.f32.mrb[0].mxu0
  %v257 = vpop.f32.mrb[0].mxu0
  %v258 = vadd.f32 %v209, %v257
  %v259 = vpop.f32.mrb[0].mxu0
  %260 = vdwg.mxu0
  %261 = vst.msk [vmem:[%s7] sm:$0xff] %vm179, %v255
  %262 = vst.msk [vmem:[%s7 + $0x8] sm:$0xff] %vm179, %v258
  // Predicated region
  $region26: #{conv_cvae_forward.17} parent=0 // pred_check
    _
  $region27: #{conv_cvae_forward.17} parent=0 // pred_check_branch
    %264 = sbr.rel (0) target = $region29
  $region28: #{conv_cvae_forward.17} parent=0 // pred_region
    _
  $region29: #{conv_cvae_forward.17} parent=0 // pred_fallthru
    _
  // Predicated region
  $region30: #{conv_cvae_forward.17} parent=0 // pred_check
    _
  $region31: #{conv_cvae_forward.17} parent=0 // pred_check_branch
    %266 = sbr.rel (0) target = $region33
  $region32: #{conv_cvae_forward.17} parent=0 // pred_region
    _
  $region33: #{conv_cvae_forward.17} parent=0 // pred_fallthru
    _
  // Predicated region
  $region34: #{conv_cvae_forward.17} parent=0 // pred_check
    _
  $region35: #{conv_cvae_forward.17} parent=0 // pred_check_branch
    %268 = sbr.rel (0) target = $region37
  $region36: #{conv_cvae_forward.17} parent=0 // pred_region
    _
  $region37: #{conv_cvae_forward.17} parent=0 // pred_fallthru
    _
  // Predicated region
  $region38: #{conv_cvae_forward.17} parent=0 // pred_check
    _
  $region39: #{conv_cvae_forward.17} parent=0 // pred_check_branch
    %270 = sbr.rel (0) target = $region41
  $region40: #{conv_cvae_forward.17} parent=0 // pred_region
    _
  $region41: #{conv_cvae_forward.17} parent=0 // pred_fallthru
    _

// kernel: conv_cvae_forward.16
$region0: #{conv_cvae_forward.16}
  #allocation0 [shape = 'u32[]', space=smem, size = 0x4, offset = 0x4, fixed_abs, tag = 'smem constant byte address 0x4 - core index']
  #allocation1 [shape = 'u32[144,128]{1,0:T(1,128)}', space=vmem, size = 0x12000, scoped, tag = 'internal scratch']
  #allocation2 [shape = 'f32[128,1]{1,0:T(8,128)}', space=vmem, size = 0x10000, scoped, tag = 'scratch operand']
  #allocation3 [shape = 'f32[128,1]{1,0:T(8,128)}', space=vmem, size = 0x10000, scoped, tag = 'scratch operand']
  %s0 = inlined_call_operand.vmem [shape: bf16[576,128], index: 0, kind: input, shape index: {}]
  %s1 = inlined_call_operand.vmem [shape: bf16[128,576], index: 1, kind: input, shape index: {}]
  %s2 = inlined_call_operand.vmem [shape: f32[128,1], index: 2, kind: input, shape index: {}]
  %s3 = inlined_call_operand.vmem [shape: f32[128,1], index: 3, kind: input, shape index: {}]
  %s4 = inlined_call_operand.vmem [shape: f32[128,128], index: 4, kind: output, shape index: {}]
  %s5 = sld [smem:[#allocation0]]
  $region34: #{conv_cvae_forward.16} parent=0
    _
  %s7 = ssub.s32 1, %s5
  %s8 = scalar_select 0, %s7, %s5
  // Predicated region
  $region2: #{conv_cvae_forward.16} parent=0 // pred_check
    _
  $region3: #{conv_cvae_forward.16} parent=0 // pred_check_branch
    %10 = sbr.rel (0) target = $region5
  $region4: #{conv_cvae_forward.16} parent=0 // pred_region
    _
  $region5: #{conv_cvae_forward.16} parent=0 // pred_fallthru
    _
  // Predicated region
  $region6: #{conv_cvae_forward.16} parent=0 // pred_check
    _
  $region7: #{conv_cvae_forward.16} parent=0 // pred_check_branch
    %12 = sbr.rel (0) target = $region9
  $region8: #{conv_cvae_forward.16} parent=0 // pred_region
    _
  $region9: #{conv_cvae_forward.16} parent=0 // pred_fallthru
    _
  // Predicated region
  $region10: #{conv_cvae_forward.16} parent=0 // pred_check
    _
  $region11: #{conv_cvae_forward.16} parent=0 // pred_check_branch
    %14 = sbr.rel (0) target = $region13
  $region12: #{conv_cvae_forward.16} parent=0 // pred_region
    _
  $region13: #{conv_cvae_forward.16} parent=0 // pred_fallthru
    _
  // Predicated region
  $region14: #{conv_cvae_forward.16} parent=0 // pred_check
    _
  $region15: #{conv_cvae_forward.16} parent=0 // pred_check_branch
    %16 = sbr.rel (0) target = $region17
  $region16: #{conv_cvae_forward.16} parent=0 // pred_region
    _
  $region17: #{conv_cvae_forward.16} parent=0 // pred_fallthru
    _
  %p18 = scmp.eq.s32.totalorder 0, 0
  // Predicated region
  $region18: #{conv_cvae_forward.16} parent=0 // pred_check
    %p19 = pneg %p18
  $region19: #{conv_cvae_forward.16} parent=0 // pred_check_branch
    %21 = sbr.rel (%p19) target = $region21
  $region20: #{conv_cvae_forward.16} parent=0 // pred_region
    %vm22 = vcmask 7168
    %23 = vst.msk [vmem:[#allocation2] sm:$0xff] %vm22, 0.0
    %24 = vst.msk [vmem:[#allocation2 + $0x8] sm:$0xff] %vm22, 0.0
    %25 = vst.msk [vmem:[#allocation2 + $0x10] sm:$0xff] %vm22, 0.0
    %26 = vst.msk [vmem:[#allocation2 + $0x18] sm:$0xff] %vm22, 0.0
    %27 = vst.msk [vmem:[#allocation2 + $0x20] sm:$0xff] %vm22, 0.0
    %28 = vst.msk [vmem:[#allocation2 + $0x28] sm:$0xff] %vm22, 0.0
    %29 = vst.msk [vmem:[#allocation2 + $0x30] sm:$0xff] %vm22, 0.0
    %30 = vst.msk [vmem:[#allocation2 + $0x38] sm:$0xff] %vm22, 0.0
    %31 = vst.msk [vmem:[#allocation2 + $0x40] sm:$0xff] %vm22, 0.0
    %32 = vst.msk [vmem:[#allocation2 + $0x48] sm:$0xff] %vm22, 0.0
    %33 = vst.msk [vmem:[#allocation2 + $0x50] sm:$0xff] %vm22, 0.0
    %34 = vst.msk [vmem:[#allocation2 + $0x58] sm:$0xff] %vm22, 0.0
    %35 = vst.msk [vmem:[#allocation2 + $0x60] sm:$0xff] %vm22, 0.0
    %36 = vst.msk [vmem:[#allocation2 + $0x68] sm:$0xff] %vm22, 0.0
    %37 = vst.msk [vmem:[#allocation2 + $0x70] sm:$0xff] %vm22, 0.0
    %38 = vst.msk [vmem:[#allocation2 + $0x78] sm:$0xff] %vm22, 0.0
    %39 = vst.msk [vmem:[#allocation3] sm:$0xff] %vm22, 0.0
    %40 = vst.msk [vmem:[#allocation3 + $0x8] sm:$0xff] %vm22, 0.0
    %41 = vst.msk [vmem:[#allocation3 + $0x10] sm:$0xff] %vm22, 0.0
    %42 = vst.msk [vmem:[#allocation3 + $0x18] sm:$0xff] %vm22, 0.0
    %43 = vst.msk [vmem:[#allocation3 + $0x20] sm:$0xff] %vm22, 0.0
    %44 = vst.msk [vmem:[#allocation3 + $0x28] sm:$0xff] %vm22, 0.0
    %45 = vst.msk [vmem:[#allocation3 + $0x30] sm:$0xff] %vm22, 0.0
    %46 = vst.msk [vmem:[#allocation3 + $0x38] sm:$0xff] %vm22, 0.0
    %47 = vst.msk [vmem:[#allocation3 + $0x40] sm:$0xff] %vm22, 0.0
    %48 = vst.msk [vmem:[#allocation3 + $0x48] sm:$0xff] %vm22, 0.0
    %49 = vst.msk [vmem:[#allocation3 + $0x50] sm:$0xff] %vm22, 0.0
    %50 = vst.msk [vmem:[#allocation3 + $0x58] sm:$0xff] %vm22, 0.0
    %51 = vst.msk [vmem:[#allocation3 + $0x60] sm:$0xff] %vm22, 0.0
    %52 = vst.msk [vmem:[#allocation3 + $0x68] sm:$0xff] %vm22, 0.0
    %53 = vst.msk [vmem:[#allocation3 + $0x70] sm:$0xff] %vm22, 0.0
    %54 = vst.msk [vmem:[#allocation3 + $0x78] sm:$0xff] %vm22, 0.0
  $region21: #{conv_cvae_forward.16} parent=0 // pred_fallthru
    _
  %v55 = vld [vmem:[%s1] sm:$0xff]
  %v56 = vld [vmem:[%s1 + $0x8] sm:$0xff]
  %v57 = vld [vmem:[%s1 + $0x10] sm:$0xf]
  %v58 = vld [vmem:[%s1 + $0x14] sm:$0xff]
  %v59 = vld [vmem:[%s1 + $0x1c] sm:$0xff]
  %v60 = vld [vmem:[%s1 + $0x24] sm:$0xf]
  %v61 = vld [vmem:[%s1 + $0x28] sm:$0xff]
  %v62 = vld [vmem:[%s1 + $0x30] sm:$0xff]
  %v63 = vld [vmem:[%s1 + $0x38] sm:$0xf]
  %v64 = vld [vmem:[%s1 + $0x3c] sm:$0xff]
  %v65 = vld [vmem:[%s1 + $0x44] sm:$0xff]
  %v66 = vld [vmem:[%s1 + $0x4c] sm:$0xf]
  %v67 = vld [vmem:[%s1 + $0x50] sm:$0xff]
  %v68 = vld [vmem:[%s1 + $0x58] sm:$0xff]
  %v69 = vld [vmem:[%s1 + $0x60] sm:$0xf]
  %v70 = vld [vmem:[%s1 + $0x64] sm:$0xff]
  %v71 = vld [vmem:[%s1 + $0x6c] sm:$0xff]
  %v72 = vld [vmem:[%s1 + $0x74] sm:$0xf]
  %v73 = vld [vmem:[%s1 + $0x78] sm:$0xff]
  %v74 = vld [vmem:[%s1 + $0x80] sm:$0xff]
  %v75 = vld [vmem:[%s1 + $0x88] sm:$0xf]
  %v76 = vld [vmem:[%s1 + $0x8c] sm:$0xff]
  %v77 = vld [vmem:[%s1 + $0x94] sm:$0xff]
  %v78 = vld [vmem:[%s1 + $0x9c] sm:$0xf]
  %v79 = vld [vmem:[%s1 + $0xa0] sm:$0xff]
  %v80 = vld [vmem:[%s1 + $0xa8] sm:$0xff]
  %v81 = vld [vmem:[%s1 + $0xb0] sm:$0xf]
  %v82 = vld [vmem:[%s1 + $0xb4] sm:$0xff]
  %v83 = vld [vmem:[%s1 + $0xbc] sm:$0xff]
  %v84 = vld [vmem:[%s1 + $0xc4] sm:$0xf]
  %v85 = vld [vmem:[%s1 + $0xc8] sm:$0xff]
  %v86 = vld [vmem:[%s1 + $0xd0] sm:$0xff]
  %v87 = vld [vmem:[%s1 + $0xd8] sm:$0xf]
  %v88 = vld [vmem:[%s1 + $0xdc] sm:$0xff]
  %v89 = vld [vmem:[%s1 + $0xe4] sm:$0xff]
  %v90 = vld [vmem:[%s1 + $0xec] sm:$0xf]
  %v91 = vld [vmem:[%s1 + $0xf0] sm:$0xff]
  %v92 = vld [vmem:[%s1 + $0xf8] sm:$0xff]
  %v93 = vld [vmem:[%s1 + $0x100] sm:$0xf]
  %v94 = vld [vmem:[%s1 + $0x104] sm:$0xff]
  %v95 = vld [vmem:[%s1 + $0x10c] sm:$0xff]
  %v96 = vld [vmem:[%s1 + $0x114] sm:$0xf]
  %v97 = vld [vmem:[%s1 + $0x118] sm:$0xff]
  %v98 = vld [vmem:[%s1 + $0x120] sm:$0xff]
  %v99 = vld [vmem:[%s1 + $0x128] sm:$0xf]
  %v100 = vld [vmem:[%s1 + $0x12c] sm:$0xff]
  %v101 = vld [vmem:[%s1 + $0x134] sm:$0xff]
  %v102 = vld [vmem:[%s1 + $0x13c] sm:$0xf]
  %v103 = vld [vmem:[%s0] sm:$0xf]
  %v104 = vld [vmem:[%s0 + $0x4] sm:$0xf]
  %v105 = vld [vmem:[%s0 + $0x8] sm:$0xf]
  %v106 = vld [vmem:[%s0 + $0xc] sm:$0xf]
  %v107 = vld [vmem:[%s0 + $0x10] sm:$0xf]
  %v108 = vld [vmem:[%s0 + $0x14] sm:$0xf]
  %v109 = vld [vmem:[%s0 + $0x18] sm:$0xf]
  %v110 = vld [vmem:[%s0 + $0x1c] sm:$0xf]
  %v111 = vld [vmem:[%s0 + $0x20] sm:$0xf]
  %v112 = vld [vmem:[%s0 + $0x24] sm:$0xf]
  %v113 = vld [vmem:[%s0 + $0x28] sm:$0xf]
  %v114 = vld [vmem:[%s0 + $0x2c] sm:$0xf]
  %v115 = vld [vmem:[%s0 + $0x30] sm:$0xf]
  %v116 = vld [vmem:[%s0 + $0x34] sm:$0xf]
  %v117 = vld [vmem:[%s0 + $0x38] sm:$0xf]
  %v118 = vld [vmem:[%s0 + $0x3c] sm:$0xf]
  %v119 = vld [vmem:[%s0 + $0x40] sm:$0xf]
  %v120 = vld [vmem:[%s0 + $0x44] sm:$0xf]
  %v121 = vld [vmem:[%s0 + $0x48] sm:$0xf]
  %v122 = vld [vmem:[%s0 + $0x4c] sm:$0xf]
  %v123 = vld [vmem:[%s0 + $0x50] sm:$0xf]
  %v124 = vld [vmem:[%s0 + $0x54] sm:$0xf]
  %v125 = vld [vmem:[%s0 + $0x58] sm:$0xf]
  %v126 = vld [vmem:[%s0 + $0x5c] sm:$0xf]
  %v127 = vld [vmem:[%s0 + $0x60] sm:$0xf]
  %v128 = vld [vmem:[%s0 + $0x64] sm:$0xf]
  %v129 = vld [vmem:[%s0 + $0x68] sm:$0xf]
  %v130 = vld [vmem:[%s0 + $0x6c] sm:$0xf]
  %v131 = vld [vmem:[%s0 + $0x70] sm:$0xf]
  %v132 = vld [vmem:[%s0 + $0x74] sm:$0xf]
  %v133 = vld [vmem:[%s0 + $0x78] sm:$0xf]
  %v134 = vld [vmem:[%s0 + $0x7c] sm:$0xf]
  %v135 = vld [vmem:[%s0 + $0x80] sm:$0xf]
  %v136 = vld [vmem:[%s0 + $0x84] sm:$0xf]
  %v137 = vld [vmem:[%s0 + $0x88] sm:$0xf]
  %v138 = vld [vmem:[%s0 + $0x8c] sm:$0xf]
  %v139 = vld [vmem:[%s0 + $0x90] sm:$0xf]
  %v140 = vld [vmem:[%s0 + $0x94] sm:$0xf]
  %v141 = vld [vmem:[%s0 + $0x98] sm:$0xf]
  %v142 = vld [vmem:[%s0 + $0x9c] sm:$0xf]
  %v143 = vld [vmem:[%s0 + $0xa0] sm:$0xf]
  %v144 = vld [vmem:[%s0 + $0xa4] sm:$0xf]
  %v145 = vld [vmem:[%s0 + $0xa8] sm:$0xf]
  %v146 = vld [vmem:[%s0 + $0xac] sm:$0xf]
  %v147 = vld [vmem:[%s0 + $0xb0] sm:$0xf]
  %v148 = vld [vmem:[%s0 + $0xb4] sm:$0xf]
  %v149 = vld [vmem:[%s0 + $0xb8] sm:$0xf]
  %v150 = vld [vmem:[%s0 + $0xbc] sm:$0xf]
  %v151 = vld [vmem:[%s0 + $0xc0] sm:$0xf]
  %v152 = vld [vmem:[%s0 + $0xc4] sm:$0xf]
  %v153 = vld [vmem:[%s0 + $0xc8] sm:$0xf]
  %v154 = vld [vmem:[%s0 + $0xcc] sm:$0xf]
  %v155 = vld [vmem:[%s0 + $0xd0] sm:$0xf]
  %v156 = vld [vmem:[%s0 + $0xd4] sm:$0xf]
  %v157 = vld [vmem:[%s0 + $0xd8] sm:$0xf]
  %v158 = vld [vmem:[%s0 + $0xdc] sm:$0xf]
  %v159 = vld [vmem:[%s0 + $0xe0] sm:$0xf]
  %v160 = vld [vmem:[%s0 + $0xe4] sm:$0xf]
  %v161 = vld [vmem:[%s0 + $0xe8] sm:$0xf]
  %v162 = vld [vmem:[%s0 + $0xec] sm:$0xf]
  %v163 = vld [vmem:[%s0 + $0xf0] sm:$0xf]
  %v164 = vld [vmem:[%s0 + $0xf4] sm:$0xf]
  %v165 = vld [vmem:[%s0 + $0xf8] sm:$0xf]
  %v166 = vld [vmem:[%s0 + $0xfc] sm:$0xf]
  %v167 = vld [vmem:[%s0 + $0x100] sm:$0xf]
  %v168 = vld [vmem:[%s0 + $0x104] sm:$0xf]
  %v169 = vld [vmem:[%s0 + $0x108] sm:$0xf]
  %v170 = vld [vmem:[%s0 + $0x10c] sm:$0xf]
  %v171 = vld [vmem:[%s0 + $0x110] sm:$0xf]
  %v172 = vld [vmem:[%s0 + $0x114] sm:$0xf]
  %v173 = vld [vmem:[%s0 + $0x118] sm:$0xf]
  %v174 = vld [vmem:[%s0 + $0x11c] sm:$0xf]
  %v223 = vunpack.c.l.b16 %v55
  %v224 = vunpack.c.h.b16 %v55
  %v225 = vunpack.c.l.b16 %v56
  %v226 = vunpack.c.h.b16 %v56
  %v227 = vunpack.c.l.b16 %v57
  %v228 = vunpack.c.l.b16 %v58
  %v229 = vunpack.c.h.b16 %v58
  %v230 = vunpack.c.l.b16 %v59
  %v231 = vunpack.c.h.b16 %v59
  %v232 = vunpack.c.l.b16 %v60
  %v233 = vunpack.c.l.b16 %v61
  %v234 = vunpack.c.h.b16 %v61
  %v235 = vunpack.c.l.b16 %v62
  %v236 = vunpack.c.h.b16 %v62
  %v237 = vunpack.c.l.b16 %v63
  %v238 = vunpack.c.l.b16 %v64
  %v239 = vunpack.c.h.b16 %v64
  %v240 = vunpack.c.l.b16 %v65
  %v241 = vunpack.c.h.b16 %v65
  %v242 = vunpack.c.l.b16 %v66
  %v243 = vunpack.c.l.b16 %v67
  %v244 = vunpack.c.h.b16 %v67
  %v245 = vunpack.c.l.b16 %v68
  %v246 = vunpack.c.h.b16 %v68
  %v247 = vunpack.c.l.b16 %v69
  %v248 = vunpack.c.l.b16 %v70
  %v249 = vunpack.c.h.b16 %v70
  %v250 = vunpack.c.l.b16 %v71
  %v251 = vunpack.c.h.b16 %v71
  %v252 = vunpack.c.l.b16 %v72
  %v253 = vunpack.c.l.b16 %v73
  %v254 = vunpack.c.h.b16 %v73
  %v255 = vunpack.c.l.b16 %v74
  %v256 = vunpack.c.h.b16 %v74
  %v257 = vunpack.c.l.b16 %v75
  %v258 = vunpack.c.l.b16 %v76
  %v259 = vunpack.c.h.b16 %v76
  %v260 = vunpack.c.l.b16 %v77
  %v261 = vunpack.c.h.b16 %v77
  %v262 = vunpack.c.l.b16 %v78
  %v263 = vunpack.c.l.b16 %v79
  %v264 = vunpack.c.h.b16 %v79
  %v265 = vunpack.c.l.b16 %v80
  %v266 = vunpack.c.h.b16 %v80
  %v267 = vunpack.c.l.b16 %v81
  %v268 = vunpack.c.l.b16 %v82
  %v269 = vunpack.c.h.b16 %v82
  %v270 = vunpack.c.l.b16 %v83
  %v271 = vunpack.c.h.b16 %v83
  %v272 = vunpack.c.l.b16 %v84
  %v273 = vunpack.c.l.b16 %v85
  %v274 = vunpack.c.h.b16 %v85
  %v275 = vunpack.c.l.b16 %v86
  %v276 = vunpack.c.h.b16 %v86
  %v277 = vunpack.c.l.b16 %v87
  %v278 = vunpack.c.l.b16 %v88
  %v279 = vunpack.c.h.b16 %v88
  %v280 = vunpack.c.l.b16 %v89
  %v281 = vunpack.c.h.b16 %v89
  %v282 = vunpack.c.l.b16 %v90
  %v283 = vunpack.c.l.b16 %v91
  %v284 = vunpack.c.h.b16 %v91
  %v285 = vunpack.c.l.b16 %v92
  %v286 = vunpack.c.h.b16 %v92
  %v287 = vunpack.c.l.b16 %v93
  %v288 = vunpack.c.l.b16 %v94
  %v289 = vunpack.c.h.b16 %v94
  %v290 = vunpack.c.l.b16 %v95
  %v291 = vunpack.c.h.b16 %v95
  %v292 = vunpack.c.l.b16 %v96
  %v293 = vunpack.c.l.b16 %v97
  %v294 = vunpack.c.h.b16 %v97
  %v295 = vunpack.c.l.b16 %v98
  %v296 = vunpack.c.h.b16 %v98
  %v297 = vunpack.c.l.b16 %v99
  %v298 = vunpack.c.l.b16 %v100
  %v299 = vunpack.c.h.b16 %v100
  %v300 = vunpack.c.l.b16 %v101
  %v301 = vunpack.c.h.b16 %v101
  %v302 = vunpack.c.l.b16 %v102
  %v303 = vpack.c.b16 %v228, %v223
  %v304 = vpack.c.b16 %v229, %v224
  %v305 = vpack.c.b16 %v230, %v225
  %v306 = vpack.c.b16 %v231, %v226
  %v307 = vpack.c.b16 %v232, %v227
  %v308 = vpack.c.b16 %v238, %v233
  %v309 = vpack.c.b16 %v239, %v234
  %v310 = vpack.c.b16 %v240, %v235
  %v311 = vpack.c.b16 %v241, %v236
  %v312 = vpack.c.b16 %v242, %v237
  %v313 = vpack.c.b16 %v248, %v243
  %v314 = vpack.c.b16 %v249, %v244
  %v315 = vpack.c.b16 %v250, %v245
  %v316 = vpack.c.b16 %v251, %v246
  %v317 = vpack.c.b16 %v252, %v247
  %v318 = vpack.c.b16 %v258, %v253
  %v319 = vpack.c.b16 %v259, %v254
  %v320 = vpack.c.b16 %v260, %v255
  %v321 = vpack.c.b16 %v261, %v256
  %v322 = vpack.c.b16 %v262, %v257
  %v323 = vpack.c.b16 %v268, %v263
  %v324 = vpack.c.b16 %v269, %v264
  %v325 = vpack.c.b16 %v270, %v265
  %v326 = vpack.c.b16 %v271, %v266
  %v327 = vpack.c.b16 %v272, %v267
  %v328 = vpack.c.b16 %v278, %v273
  %v329 = vpack.c.b16 %v279, %v274
  %v330 = vpack.c.b16 %v280, %v275
  %v331 = vpack.c.b16 %v281, %v276
  %v332 = vpack.c.b16 %v282, %v277
  %v333 = vpack.c.b16 %v288, %v283
  %v334 = vpack.c.b16 %v289, %v284
  %v335 = vpack.c.b16 %v290, %v285
  %v336 = vpack.c.b16 %v291, %v286
  %v337 = vpack.c.b16 %v292, %v287
  %v338 = vpack.c.b16 %v298, %v293
  %v339 = vpack.c.b16 %v299, %v294
  %v340 = vpack.c.b16 %v300, %v295
  %v341 = vpack.c.b16 %v301, %v296
  %v342 = vpack.c.b16 %v302, %v297
  %v447 = vunpack.c.l.b16 %v103
  %v448 = vunpack.c.l.b16 %v104
  %v449 = vunpack.c.l.b16 %v105
  %v450 = vunpack.c.l.b16 %v106
  %v451 = vunpack.c.l.b16 %v107
  %v452 = vunpack.c.l.b16 %v108
  %v453 = vunpack.c.l.b16 %v109
  %v454 = vunpack.c.l.b16 %v110
  %v455 = vunpack.c.l.b16 %v111
  %v456 = vunpack.c.l.b16 %v112
  %v457 = vunpack.c.l.b16 %v113
  %v458 = vunpack.c.l.b16 %v114
  %v459 = vunpack.c.l.b16 %v115
  %v460 = vunpack.c.l.b16 %v116
  %v461 = vunpack.c.l.b16 %v117
  %v462 = vunpack.c.l.b16 %v118
  %v463 = vunpack.c.l.b16 %v119
  %v464 = vunpack.c.l.b16 %v120
  %v465 = vunpack.c.l.b16 %v121
  %v466 = vunpack.c.l.b16 %v122
  %v467 = vunpack.c.l.b16 %v123
  %v468 = vunpack.c.l.b16 %v124
  %v469 = vunpack.c.l.b16 %v125
  %v470 = vunpack.c.l.b16 %v126
  %v471 = vunpack.c.l.b16 %v127
  %v472 = vunpack.c.l.b16 %v128
  %v473 = vunpack.c.l.b16 %v129
  %v474 = vunpack.c.l.b16 %v130
  %v475 = vunpack.c.l.b16 %v131
  %v476 = vunpack.c.l.b16 %v132
  %v477 = vunpack.c.l.b16 %v133
  %v478 = vunpack.c.l.b16 %v134
  %v479 = vunpack.c.l.b16 %v135
  %v480 = vunpack.c.l.b16 %v136
  %v481 = vunpack.c.l.b16 %v137
  %v482 = vunpack.c.l.b16 %v138
  %v483 = vunpack.c.l.b16 %v139
  %v484 = vunpack.c.l.b16 %v140
  %v485 = vunpack.c.l.b16 %v141
  %v486 = vunpack.c.l.b16 %v142
  %v487 = vunpack.c.l.b16 %v143
  %v488 = vunpack.c.l.b16 %v144
  %v489 = vunpack.c.l.b16 %v145
  %v490 = vunpack.c.l.b16 %v146
  %v491 = vunpack.c.l.b16 %v147
  %v492 = vunpack.c.l.b16 %v148
  %v493 = vunpack.c.l.b16 %v149
  %v494 = vunpack.c.l.b16 %v150
  %v495 = vunpack.c.l.b16 %v151
  %v496 = vunpack.c.l.b16 %v152
  %v497 = vunpack.c.l.b16 %v153
  %v498 = vunpack.c.l.b16 %v154
  %v499 = vunpack.c.l.b16 %v155
  %v500 = vunpack.c.l.b16 %v156
  %v501 = vunpack.c.l.b16 %v157
  %v502 = vunpack.c.l.b16 %v158
  %v503 = vunpack.c.l.b16 %v159
  %v504 = vunpack.c.l.b16 %v160
  %v505 = vunpack.c.l.b16 %v161
  %v506 = vunpack.c.l.b16 %v162
  %v507 = vunpack.c.l.b16 %v163
  %v508 = vunpack.c.l.b16 %v164
  %v509 = vunpack.c.l.b16 %v165
  %v510 = vunpack.c.l.b16 %v166
  %v511 = vunpack.c.l.b16 %v167
  %v512 = vunpack.c.l.b16 %v168
  %v513 = vunpack.c.l.b16 %v169
  %v514 = vunpack.c.l.b16 %v170
  %v515 = vunpack.c.l.b16 %v171
  %v516 = vunpack.c.l.b16 %v172
  %v517 = vunpack.c.l.b16 %v173
  %v518 = vunpack.c.l.b16 %v174
  %v519 = vpack.c.b16 %v448, %v447
  %v520 = vpack.c.b16 %v450, %v449
  %v521 = vpack.c.b16 %v452, %v451
  %v522 = vpack.c.b16 %v454, %v453
  %v523 = vpack.c.b16 %v456, %v455
  %v524 = vpack.c.b16 %v458, %v457
  %v525 = vpack.c.b16 %v460, %v459
  %v526 = vpack.c.b16 %v462, %v461
  %v527 = vpack.c.b16 %v464, %v463
  %v528 = vpack.c.b16 %v466, %v465
  %v529 = vpack.c.b16 %v468, %v467
  %v530 = vpack.c.b16 %v470, %v469
  %v531 = vpack.c.b16 %v472, %v471
  %v532 = vpack.c.b16 %v474, %v473
  %v533 = vpack.c.b16 %v476, %v475
  %v534 = vpack.c.b16 %v478, %v477
  %v535 = vpack.c.b16 %v480, %v479
  %v536 = vpack.c.b16 %v482, %v481
  %v537 = vpack.c.b16 %v484, %v483
  %v538 = vpack.c.b16 %v486, %v485
  %v539 = vpack.c.b16 %v488, %v487
  %v540 = vpack.c.b16 %v490, %v489
  %v541 = vpack.c.b16 %v492, %v491
  %v542 = vpack.c.b16 %v494, %v493
  %v543 = vpack.c.b16 %v496, %v495
  %v544 = vpack.c.b16 %v498, %v497
  %v545 = vpack.c.b16 %v500, %v499
  %v546 = vpack.c.b16 %v502, %v501
  %v547 = vpack.c.b16 %v504, %v503
  %v548 = vpack.c.b16 %v506, %v505
  %v549 = vpack.c.b16 %v508, %v507
  %v550 = vpack.c.b16 %v510, %v509
  %v551 = vpack.c.b16 %v512, %v511
  %v552 = vpack.c.b16 %v514, %v513
  %v553 = vpack.c.b16 %v516, %v515
  %v554 = vpack.c.b16 %v518, %v517
  %vm591 = vcmask 523264
  %v593 = vsel %vm591, %v307, 0
  %v596 = vsel %vm591, %v312, 0
  %v599 = vsel %vm591, %v317, 0
  %v602 = vsel %vm591, %v322, 0
  %v605 = vsel %vm591, %v327, 0
  %v608 = vsel %vm591, %v332, 0
  %v611 = vsel %vm591, %v337, 0
  %v614 = vsel %vm591, %v342, 0
  %616 = vmatprep.subr.bf16.mxu0 0
  %617 = vmatpush1.bf16.msra.mxu0 %v519
  %618 = vmatprep.subr.bf16.mxu0 0
  %619 = vmatpush1.bf16.msra.mxu0 %v520
  %620 = vmatprep.subr.bf16.mxu0 0
  %621 = vmatpush1.bf16.msra.mxu0 %v521
  %622 = vmatprep.subr.bf16.mxu0 0
  %623 = vmatpush1.bf16.msra.mxu0 %v522
  %624 = vmatprep.subr.bf16.mxu0 0
  %625 = vmatpush1.bf16.msra.mxu0 %v523
  %626 = vmatprep.subr.bf16.mxu0 0
  %627 = vmatpush1.bf16.msra.mxu0 %v524
  %628 = vmatprep.subr.bf16.mxu0 0
  %629 = vmatpush1.bf16.msra.mxu0 %v525
  %630 = vmatprep.subr.bf16.mxu0 0
  %631 = vmatpush1.bf16.msra.mxu0 %v526
  %632 = vmatprep.subr.bf16.mxu0 0
  %633 = vmatpush1.bf16.msra.mxu0 %v527
  %634 = vmatprep.subr.bf16.mxu0 0
  %635 = vmatpush1.bf16.msra.mxu0 %v528
  %636 = vmatprep.subr.bf16.mxu0 0
  %637 = vmatpush1.bf16.msra.mxu0 %v529
  %638 = vmatprep.subr.bf16.mxu0 0
  %639 = vmatpush1.bf16.msra.mxu0 %v530
  %640 = vmatprep.subr.bf16.mxu0 0
  %641 = vmatpush1.bf16.msra.mxu0 %v531
  %642 = vmatprep.subr.bf16.mxu0 0
  %643 = vmatpush1.bf16.msra.mxu0 %v532
  %644 = vmatprep.subr.bf16.mxu0 0
  %645 = vmatpush1.bf16.msra.mxu0 %v533
  %646 = vmatprep.subr.bf16.mxu0 0
  %647 = vmatpush1.bf16.msra.mxu0 %v534
  %648 = vmatprep.mubr.bf16.mxu0 %v304
  %649 = vmatmul.mubr.bf16.gmra.mrb[0].mxu0 %v303
  %v650 = vpop.f32.mrb[0].mxu0
  %v651 = vadd.f32 0.0, %v650
  %v652 = vpop.f32.mrb[0].mxu0
  %v653 = vpop.f32.mrb[0].mxu0
  %v654 = vadd.f32 0.0, %v653
  %v655 = vpop.f32.mrb[0].mxu0
  %656 = vmatprep.mubr.bf16.mxu0 %v309
  %657 = vmatmul.mubr.bf16.gmra.mrb[0].mxu0 %v308
  %v658 = vpop.f32.mrb[0].mxu0
  %v659 = vadd.f32 0.0, %v658
  %v660 = vpop.f32.mrb[0].mxu0
  %v661 = vpop.f32.mrb[0].mxu0
  %v662 = vadd.f32 0.0, %v661
  %v663 = vpop.f32.mrb[0].mxu0
  %664 = vmatprep.mubr.bf16.mxu0 %v314
  %665 = vmatmul.mubr.bf16.gmra.mrb[0].mxu0 %v313
  %v666 = vpop.f32.mrb[0].mxu0
  %v667 = vadd.f32 0.0, %v666
  %v668 = vpop.f32.mrb[0].mxu0
  %v669 = vpop.f32.mrb[0].mxu0
  %v670 = vadd.f32 0.0, %v669
  %v671 = vpop.f32.mrb[0].mxu0
  %672 = vmatprep.mubr.bf16.mxu0 %v319
  %673 = vmatmul.mubr.bf16.gmra.mrb[0].mxu0 %v318
  %v674 = vpop.f32.mrb[0].mxu0
  %v675 = vadd.f32 0.0, %v674
  %v676 = vpop.f32.mrb[0].mxu0
  %v677 = vpop.f32.mrb[0].mxu0
  %v678 = vadd.f32 0.0, %v677
  %v679 = vpop.f32.mrb[0].mxu0
  %680 = vmatprep.mubr.bf16.mxu0 %v324
  %681 = vmatmul.mubr.bf16.gmra.mrb[0].mxu0 %v323
  %v682 = vpop.f32.mrb[0].mxu0
  %v683 = vadd.f32 0.0, %v682
  %v684 = vpop.f32.mrb[0].mxu0
  %v685 = vpop.f32.mrb[0].mxu0
  %v686 = vadd.f32 0.0, %v685
  %v687 = vpop.f32.mrb[0].mxu0
  %688 = vmatprep.mubr.bf16.mxu0 %v329
  %689 = vmatmul.mubr.bf16.gmra.mrb[0].mxu0 %v328
  %v690 = vpop.f32.mrb[0].mxu0
  %v691 = vadd.f32 0.0, %v690
  %v692 = vpop.f32.mrb[0].mxu0
  %v693 = vpop.f32.mrb[0].mxu0
  %v694 = vadd.f32 0.0, %v693
  %v695 = vpop.f32.mrb[0].mxu0
  %696 = vmatprep.mubr.bf16.mxu0 %v334
  %697 = vmatmul.mubr.bf16.gmra.mrb[0].mxu0 %v333
  %v698 = vpop.f32.mrb[0].mxu0
  %v699 = vadd.f32 0.0, %v698
  %v700 = vpop.f32.mrb[0].mxu0
  %v701 = vpop.f32.mrb[0].mxu0
  %v702 = vadd.f32 0.0, %v701
  %v703 = vpop.f32.mrb[0].mxu0
  %704 = vmatprep.mubr.bf16.mxu0 %v339
  %705 = vmatmul.mubr.bf16.gmra.mrb[0].mxu0 %v338
  %v706 = vpop.f32.mrb[0].mxu0
  %v707 = vadd.f32 0.0, %v706
  %v708 = vpop.f32.mrb[0].mxu0
  %v709 = vpop.f32.mrb[0].mxu0
  %v710 = vadd.f32 0.0, %v709
  %v711 = vpop.f32.mrb[0].mxu0
  %712 = vdwg.mxu0
  %713 = vmatprep.subr.bf16.mxu0 0
  %714 = vmatpush1.bf16.msra.mxu0 %v535
  %715 = vmatprep.subr.bf16.mxu0 0
  %716 = vmatpush1.bf16.msra.mxu0 %v536
  %717 = vmatprep.subr.bf16.mxu0 0
  %718 = vmatpush1.bf16.msra.mxu0 %v537
  %719 = vmatprep.subr.bf16.mxu0 0
  %720 = vmatpush1.bf16.msra.mxu0 %v538
  %721 = vmatprep.subr.bf16.mxu0 0
  %722 = vmatpush1.bf16.msra.mxu0 %v539
  %723 = vmatprep.subr.bf16.mxu0 0
  %724 = vmatpush1.bf16.msra.mxu0 %v540
  %725 = vmatprep.subr.bf16.mxu0 0
  %726 = vmatpush1.bf16.msra.mxu0 %v541
  %727 = vmatprep.subr.bf16.mxu0 0
  %728 = vmatpush1.bf16.msra.mxu0 %v542
  %729 = vmatprep.subr.bf16.mxu0 0
  %730 = vmatpush1.bf16.msra.mxu0 %v543
  %731 = vmatprep.subr.bf16.mxu0 0
  %732 = vmatpush1.bf16.msra.mxu0 %v544
  %733 = vmatprep.subr.bf16.mxu0 0
  %734 = vmatpush1.bf16.msra.mxu0 %v545
  %735 = vmatprep.subr.bf16.mxu0 0
  %736 = vmatpush1.bf16.msra.mxu0 %v546
  %737 = vmatprep.subr.bf16.mxu0 0
  %738 = vmatpush1.bf16.msra.mxu0 %v547
  %739 = vmatprep.subr.bf16.mxu0 0
  %740 = vmatpush1.bf16.msra.mxu0 %v548
  %741 = vmatprep.subr.bf16.mxu0 0
  %742 = vmatpush1.bf16.msra.mxu0 %v549
  %743 = vmatprep.subr.bf16.mxu0 0
  %744 = vmatpush1.bf16.msra.mxu0 %v550
  %745 = vmatprep.mubr.bf16.mxu0 %v306
  %746 = vmatmul.mubr.bf16.gmra.mrb[0].mxu0 %v305
  %v747 = vpop.f32.mrb[0].mxu0
  %v748 = vadd.f32 %v651, %v747
  %v749 = vpop.f32.mrb[0].mxu0
  %v750 = vpop.f32.mrb[0].mxu0
  %v751 = vadd.f32 %v654, %v750
  %v752 = vpop.f32.mrb[0].mxu0
  %753 = vmatprep.mubr.bf16.mxu0 %v311
  %754 = vmatmul.mubr.bf16.gmra.mrb[0].mxu0 %v310
  %v755 = vpop.f32.mrb[0].mxu0
  %v756 = vadd.f32 %v659, %v755
  %v757 = vpop.f32.mrb[0].mxu0
  %v758 = vpop.f32.mrb[0].mxu0
  %v759 = vadd.f32 %v662, %v758
  %v760 = vpop.f32.mrb[0].mxu0
  %761 = vmatprep.mubr.bf16.mxu0 %v316
  %762 = vmatmul.mubr.bf16.gmra.mrb[0].mxu0 %v315
  %v763 = vpop.f32.mrb[0].mxu0
  %v764 = vadd.f32 %v667, %v763
  %v765 = vpop.f32.mrb[0].mxu0
  %v766 = vpop.f32.mrb[0].mxu0
  %v767 = vadd.f32 %v670, %v766
  %v768 = vpop.f32.mrb[0].mxu0
  %769 = vmatprep.mubr.bf16.mxu0 %v321
  %770 = vmatmul.mubr.bf16.gmra.mrb[0].mxu0 %v320
  %v771 = vpop.f32.mrb[0].mxu0
  %v772 = vadd.f32 %v675, %v771
  %v773 = vpop.f32.mrb[0].mxu0
  %v774 = vpop.f32.mrb[0].mxu0
  %v775 = vadd.f32 %v678, %v774
  %v776 = vpop.f32.mrb[0].mxu0
  %777 = vmatprep.mubr.bf16.mxu0 %v326
  %778 = vmatmul.mubr.bf16.gmra.mrb[0].mxu0 %v325
  %v779 = vpop.f32.mrb[0].mxu0
  %v780 = vadd.f32 %v683, %v779
  %v781 = vpop.f32.mrb[0].mxu0
  %v782 = vpop.f32.mrb[0].mxu0
  %v783 = vadd.f32 %v686, %v782
  %v784 = vpop.f32.mrb[0].mxu0
  %785 = vmatprep.mubr.bf16.mxu0 %v331
  %786 = vmatmul.mubr.bf16.gmra.mrb[0].mxu0 %v330
  %v787 = vpop.f32.mrb[0].mxu0
  %v788 = vadd.f32 %v691, %v787
  %v789 = vpop.f32.mrb[0].mxu0
  %v790 = vpop.f32.mrb[0].mxu0
  %v791 = vadd.f32 %v694, %v790
  %v792 = vpop.f32.mrb[0].mxu0
  %793 = vmatprep.mubr.bf16.mxu0 %v336
  %794 = vmatmul.mubr.bf16.gmra.mrb[0].mxu0 %v335
  %v795 = vpop.f32.mrb[0].mxu0
  %v796 = vadd.f32 %v699, %v795
  %v797 = vpop.f32.mrb[0].mxu0
  %v798 = vpop.f32.mrb[0].mxu0
  %v799 = vadd.f32 %v702, %v798
  %v800 = vpop.f32.mrb[0].mxu0
  %801 = vmatprep.mubr.bf16.mxu0 %v341
  %802 = vmatmul.mubr.bf16.gmra.mrb[0].mxu0 %v340
  %v803 = vpop.f32.mrb[0].mxu0
  %v804 = vadd.f32 %v707, %v803
  %v805 = vpop.f32.mrb[0].mxu0
  %v806 = vpop.f32.mrb[0].mxu0
  %v807 = vadd.f32 %v710, %v806
  %v808 = vpop.f32.mrb[0].mxu0
  %809 = vdwg.mxu0
  %810 = vmatprep.subr.bf16.mxu0 0
  %811 = vmatpush1.bf16.msra.mxu0 %v551
  %812 = vmatprep.subr.bf16.mxu0 0
  %813 = vmatpush1.bf16.msra.mxu0 %v552
  %814 = vmatprep.subr.bf16.mxu0 0
  %815 = vmatpush1.bf16.msra.mxu0 %v553
  %816 = vmatprep.subr.bf16.mxu0 0
  %817 = vmatpush1.bf16.msra.mxu0 %v554
  %818 = vmatprep.subr.bf16.mxu0 0
  %819 = vmatpush1.bf16.msra.mxu0 0
  %820 = vmatprep.subr.bf16.mxu0 0
  %821 = vmatpush1.bf16.msra.mxu0 0
  %822 = vmatprep.subr.bf16.mxu0 0
  %823 = vmatpush1.bf16.msra.mxu0 0
  %824 = vmatprep.subr.bf16.mxu0 0
  %825 = vmatpush1.bf16.msra.mxu0 0
  %826 = vmatprep.subr.bf16.mxu0 0
  %827 = vmatpush1.bf16.msra.mxu0 0
  %828 = vmatprep.subr.bf16.mxu0 0
  %829 = vmatpush1.bf16.msra.mxu0 0
  %830 = vmatprep.subr.bf16.mxu0 0
  %831 = vmatpush1.bf16.msra.mxu0 0
  %832 = vmatprep.subr.bf16.mxu0 0
  %833 = vmatpush1.bf16.msra.mxu0 0
  %834 = vmatprep.subr.bf16.mxu0 0
  %835 = vmatpush1.bf16.msra.mxu0 0
  %836 = vmatprep.subr.bf16.mxu0 0
  %837 = vmatpush1.bf16.msra.mxu0 0
  %838 = vmatprep.subr.bf16.mxu0 0
  %839 = vmatpush1.bf16.msra.mxu0 0
  %840 = vmatprep.subr.bf16.mxu0 0
  %841 = vmatpush1.bf16.msra.mxu0 0
  %842 = vmatprep.mubr.bf16.mxu0 0
  %843 = vmatmul.mubr.bf16.gmra.mrb[0].mxu0 %v593
  %v844 = vpop.f32.mrb[0].mxu0
  %v845 = vadd.f32 %v748, %v844
  %v846 = vpop.f32.mrb[0].mxu0
  %v847 = vpop.f32.mrb[0].mxu0
  %v848 = vadd.f32 %v751, %v847
  %v849 = vpop.f32.mrb[0].mxu0
  %850 = vmatprep.mubr.bf16.mxu0 0
  %851 = vmatmul.mubr.bf16.gmra.mrb[0].mxu0 %v596
  %v852 = vpop.f32.mrb[0].mxu0
  %v853 = vadd.f32 %v756, %v852
  %v854 = vpop.f32.mrb[0].mxu0
  %v855 = vpop.f32.mrb[0].mxu0
  %v856 = vadd.f32 %v759, %v855
  %v857 = vpop.f32.mrb[0].mxu0
  %858 = vmatprep.mubr.bf16.mxu0 0
  %859 = vmatmul.mubr.bf16.gmra.mrb[0].mxu0 %v599
  %v860 = vpop.f32.mrb[0].mxu0
  %v861 = vadd.f32 %v764, %v860
  %v862 = vpop.f32.mrb[0].mxu0
  %v863 = vpop.f32.mrb[0].mxu0
  %v864 = vadd.f32 %v767, %v863
  %v865 = vpop.f32.mrb[0].mxu0
  %866 = vmatprep.mubr.bf16.mxu0 0
  %867 = vmatmul.mubr.bf16.gmra.mrb[0].mxu0 %v602
  %v868 = vpop.f32.mrb[0].mxu0
  %v869 = vadd.f32 %v772, %v868
  %v870 = vpop.f32.mrb[0].mxu0
  %v871 = vpop.f32.mrb[0].mxu0
  %v872 = vadd.f32 %v775, %v871
  %v873 = vpop.f32.mrb[0].mxu0
  %874 = vmatprep.mubr.bf16.mxu0 0
  %875 = vmatmul.mubr.bf16.gmra.mrb[0].mxu0 %v605
  %v876 = vpop.f32.mrb[0].mxu0
  %v877 = vadd.f32 %v780, %v876
  %v878 = vpop.f32.mrb[0].mxu0
  %v879 = vpop.f32.mrb[0].mxu0
  %v880 = vadd.f32 %v783, %v879
  %v881 = vpop.f32.mrb[0].mxu0
  %882 = vmatprep.mubr.bf16.mxu0 0
  %883 = vmatmul.mubr.bf16.gmra.mrb[0].mxu0 %v608
  %v884 = vpop.f32.mrb[0].mxu0
  %v885 = vadd.f32 %v788, %v884
  %v886 = vpop.f32.mrb[0].mxu0
  %v887 = vpop.f32.mrb[0].mxu0
  %v888 = vadd.f32 %v791, %v887
  %v889 = vpop.f32.mrb[0].mxu0
  %890 = vmatprep.mubr.bf16.mxu0 0
  %891 = vmatmul.mubr.bf16.gmra.mrb[0].mxu0 %v611
  %v892 = vpop.f32.mrb[0].mxu0
  %v893 = vadd.f32 %v796, %v892
  %v894 = vpop.f32.mrb[0].mxu0
  %v895 = vpop.f32.mrb[0].mxu0
  %v896 = vadd.f32 %v799, %v895
  %v897 = vpop.f32.mrb[0].mxu0
  %898 = vmatprep.mubr.bf16.mxu0 0
  %899 = vmatmul.mubr.bf16.gmra.mrb[0].mxu0 %v614
  %v900 = vpop.f32.mrb[0].mxu0
  %v901 = vadd.f32 %v804, %v900
  %v902 = vpop.f32.mrb[0].mxu0
  %v903 = vpop.f32.mrb[0].mxu0
  %v904 = vadd.f32 %v807, %v903
  %v905 = vpop.f32.mrb[0].mxu0
  %906 = vdwg.mxu0
  %v907 = vld [vmem:[#allocation2] sm:$0xff]
  %v908 = vld [vmem:[#allocation2 + $0x8] sm:$0xff]
  %v909 = vld [vmem:[#allocation2 + $0x10] sm:$0xff]
  %v910 = vld [vmem:[#allocation2 + $0x18] sm:$0xff]
  %v911 = vld [vmem:[#allocation2 + $0x20] sm:$0xff]
  %v912 = vld [vmem:[#allocation2 + $0x28] sm:$0xff]
  %v913 = vld [vmem:[#allocation2 + $0x30] sm:$0xff]
  %v914 = vld [vmem:[#allocation2 + $0x38] sm:$0xff]
  %v915 = vld [vmem:[#allocation2 + $0x40] sm:$0xff]
  %v916 = vld [vmem:[#allocation2 + $0x48] sm:$0xff]
  %v917 = vld [vmem:[#allocation2 + $0x50] sm:$0xff]
  %v918 = vld [vmem:[#allocation2 + $0x58] sm:$0xff]
  %v919 = vld [vmem:[#allocation2 + $0x60] sm:$0xff]
  %v920 = vld [vmem:[#allocation2 + $0x68] sm:$0xff]
  %v921 = vld [vmem:[#allocation2 + $0x70] sm:$0xff]
  %v922 = vld [vmem:[#allocation2 + $0x78] sm:$0xff]
  %923 = vadd.xlane.f32.xlu0 %v845
  %v924 = vpop.xlane.xlu0 %923
  %925 = vadd.xlane.f32.xlu0 %v848
  %v926 = vpop.xlane.xlu0 %925
  %927 = vadd.xlane.f32.xlu0 %v853
  %v928 = vpop.xlane.xlu0 %927
  %929 = vadd.xlane.f32.xlu0 %v856
  %v930 = vpop.xlane.xlu0 %929
  %931 = vadd.xlane.f32.xlu0 %v861
  %v932 = vpop.xlane.xlu0 %931
  %933 = vadd.xlane.f32.xlu0 %v864
  %v934 = vpop.xlane.xlu0 %933
  %935 = vadd.xlane.f32.xlu0 %v869
  %v936 = vpop.xlane.xlu0 %935
  %937 = vadd.xlane.f32.xlu0 %v872
  %v938 = vpop.xlane.xlu0 %937
  %939 = vadd.xlane.f32.xlu0 %v877
  %v940 = vpop.xlane.xlu0 %939
  %941 = vadd.xlane.f32.xlu0 %v880
  %v942 = vpop.xlane.xlu0 %941
  %943 = vadd.xlane.f32.xlu0 %v885
  %v944 = vpop.xlane.xlu0 %943
  %945 = vadd.xlane.f32.xlu0 %v888
  %v946 = vpop.xlane.xlu0 %945
  %947 = vadd.xlane.f32.xlu0 %v893
  %v948 = vpop.xlane.xlu0 %947
  %949 = vadd.xlane.f32.xlu0 %v896
  %v950 = vpop.xlane.xlu0 %949
  %951 = vadd.xlane.f32.xlu0 %v901
  %v952 = vpop.xlane.xlu0 %951
  %953 = vadd.xlane.f32.xlu0 %v904
  %v954 = vpop.xlane.xlu0 %953
  %v955 = vadd.f32 %v907, %v924
  %v956 = vadd.f32 %v908, %v926
  %v957 = vadd.f32 %v909, %v928
  %v958 = vadd.f32 %v910, %v930
  %v959 = vadd.f32 %v911, %v932
  %v960 = vadd.f32 %v912, %v934
  %v961 = vadd.f32 %v913, %v936
  %v962 = vadd.f32 %v914, %v938
  %v963 = vadd.f32 %v915, %v940
  %v964 = vadd.f32 %v916, %v942
  %v965 = vadd.f32 %v917, %v944
  %v966 = vadd.f32 %v918, %v946
  %v967 = vadd.f32 %v919, %v948
  %v968 = vadd.f32 %v920, %v950
  %v969 = vadd.f32 %v921, %v952
  %v970 = vadd.f32 %v922, %v954
  %vm971 = vcmask 7168
  %972 = vst.msk [vmem:[#allocation2] sm:$0xff] %vm971, %v955
  %973 = vst.msk [vmem:[#allocation2 + $0x8] sm:$0xff] %vm971, %v956
  %974 = vst.msk [vmem:[#allocation2 + $0x10] sm:$0xff] %vm971, %v957
  %975 = vst.msk [vmem:[#allocation2 + $0x18] sm:$0xff] %vm971, %v958
  %976 = vst.msk [vmem:[#allocation2 + $0x20] sm:$0xff] %vm971, %v959
  %977 = vst.msk [vmem:[#allocation2 + $0x28] sm:$0xff] %vm971, %v960
  %978 = vst.msk [vmem:[#allocation2 + $0x30] sm:$0xff] %vm971, %v961
  %979 = vst.msk [vmem:[#allocation2 + $0x38] sm:$0xff] %vm971, %v962
  %980 = vst.msk [vmem:[#allocation2 + $0x40] sm:$0xff] %vm971, %v963
  %981 = vst.msk [vmem:[#allocation2 + $0x48] sm:$0xff] %vm971, %v964
  %982 = vst.msk [vmem:[#allocation2 + $0x50] sm:$0xff] %vm971, %v965
  %983 = vst.msk [vmem:[#allocation2 + $0x58] sm:$0xff] %vm971, %v966
  %984 = vst.msk [vmem:[#allocation2 + $0x60] sm:$0xff] %vm971, %v967
  %985 = vst.msk [vmem:[#allocation2 + $0x68] sm:$0xff] %vm971, %v968
  %986 = vst.msk [vmem:[#allocation2 + $0x70] sm:$0xff] %vm971, %v969
  %987 = vst.msk [vmem:[#allocation2 + $0x78] sm:$0xff] %vm971, %v970
  %v988 = vld [vmem:[#allocation3] sm:$0xff]
  %v989 = vld [vmem:[#allocation3 + $0x8] sm:$0xff]
  %v990 = vld [vmem:[#allocation3 + $0x10] sm:$0xff]
  %v991 = vld [vmem:[#allocation3 + $0x18] sm:$0xff]
  %v992 = vld [vmem:[#allocation3 + $0x20] sm:$0xff]
  %v993 = vld [vmem:[#allocation3 + $0x28] sm:$0xff]
  %v994 = vld [vmem:[#allocation3 + $0x30] sm:$0xff]
  %v995 = vld [vmem:[#allocation3 + $0x38] sm:$0xff]
  %v996 = vld [vmem:[#allocation3 + $0x40] sm:$0xff]
  %v997 = vld [vmem:[#allocation3 + $0x48] sm:$0xff]
  %v998 = vld [vmem:[#allocation3 + $0x50] sm:$0xff]
  %v999 = vld [vmem:[#allocation3 + $0x58] sm:$0xff]
  %v1000 = vld [vmem:[#allocation3 + $0x60] sm:$0xff]
  %v1001 = vld [vmem:[#allocation3 + $0x68] sm:$0xff]
  %v1002 = vld [vmem:[#allocation3 + $0x70] sm:$0xff]
  %v1003 = vld [vmem:[#allocation3 + $0x78] sm:$0xff]
  %v1004 = vmul.f32 %v845, %v845
  %v1005 = vmul.f32 %v848, %v848
  %v1006 = vmul.f32 %v853, %v853
  %v1007 = vmul.f32 %v856, %v856
  %v1008 = vmul.f32 %v861, %v861
  %v1009 = vmul.f32 %v864, %v864
  %v1010 = vmul.f32 %v869, %v869
  %v1011 = vmul.f32 %v872, %v872
  %v1012 = vmul.f32 %v877, %v877
  %v1013 = vmul.f32 %v880, %v880
  %v1014 = vmul.f32 %v885, %v885
  %v1015 = vmul.f32 %v888, %v888
  %v1016 = vmul.f32 %v893, %v893
  %v1017 = vmul.f32 %v896, %v896
  %v1018 = vmul.f32 %v901, %v901
  %v1019 = vmul.f32 %v904, %v904
  %1020 = vadd.xlane.f32.xlu0 %v1004
  %v1021 = vpop.xlane.xlu0 %1020
  %1022 = vadd.xlane.f32.xlu0 %v1005
  %v1023 = vpop.xlane.xlu0 %1022
  %1024 = vadd.xlane.f32.xlu0 %v1006
  %v1025 = vpop.xlane.xlu0 %1024
  %1026 = vadd.xlane.f32.xlu0 %v1007
  %v1027 = vpop.xlane.xlu0 %1026
  %1028 = vadd.xlane.f32.xlu0 %v1008
  %v1029 = vpop.xlane.xlu0 %1028
  %1030 = vadd.xlane.f32.xlu0 %v1009
  %v1031 = vpop.xlane.xlu0 %1030
  %1032 = vadd.xlane.f32.xlu0 %v1010
  %v1033 = vpop.xlane.xlu0 %1032
  %1034 = vadd.xlane.f32.xlu0 %v1011
  %v1035 = vpop.xlane.xlu0 %1034
  %1036 = vadd.xlane.f32.xlu0 %v1012
  %v1037 = vpop.xlane.xlu0 %1036
  %1038 = vadd.xlane.f32.xlu0 %v1013
  %v1039 = vpop.xlane.xlu0 %1038
  %1040 = vadd.xlane.f32.xlu0 %v1014
  %v1041 = vpop.xlane.xlu0 %1040
  %1042 = vadd.xlane.f32.xlu0 %v1015
  %v1043 = vpop.xlane.xlu0 %1042
  %1044 = vadd.xlane.f32.xlu0 %v1016
  %v1045 = vpop.xlane.xlu0 %1044
  %1046 = vadd.xlane.f32.xlu0 %v1017
  %v1047 = vpop.xlane.xlu0 %1046
  %1048 = vadd.xlane.f32.xlu0 %v1018
  %v1049 = vpop.xlane.xlu0 %1048
  %1050 = vadd.xlane.f32.xlu0 %v1019
  %v1051 = vpop.xlane.xlu0 %1050
  %v1052 = vadd.f32 %v988, %v1021
  %v1053 = vadd.f32 %v989, %v1023
  %v1054 = vadd.f32 %v990, %v1025
  %v1055 = vadd.f32 %v991, %v1027
  %v1056 = vadd.f32 %v992, %v1029
  %v1057 = vadd.f32 %v993, %v1031
  %v1058 = vadd.f32 %v994, %v1033
  %v1059 = vadd.f32 %v995, %v1035
  %v1060 = vadd.f32 %v996, %v1037
  %v1061 = vadd.f32 %v997, %v1039
  %v1062 = vadd.f32 %v998, %v1041
  %v1063 = vadd.f32 %v999, %v1043
  %v1064 = vadd.f32 %v1000, %v1045
  %v1065 = vadd.f32 %v1001, %v1047
  %v1066 = vadd.f32 %v1002, %v1049
  %v1067 = vadd.f32 %v1003, %v1051
  %1068 = vst.msk [vmem:[#allocation3] sm:$0xff] %vm971, %v1052
  %1069 = vst.msk [vmem:[#allocation3 + $0x8] sm:$0xff] %vm971, %v1053
  %1070 = vst.msk [vmem:[#allocation3 + $0x10] sm:$0xff] %vm971, %v1054
  %1071 = vst.msk [vmem:[#allocation3 + $0x18] sm:$0xff] %vm971, %v1055
  %1072 = vst.msk [vmem:[#allocation3 + $0x20] sm:$0xff] %vm971, %v1056
  %1073 = vst.msk [vmem:[#allocation3 + $0x28] sm:$0xff] %vm971, %v1057
  %1074 = vst.msk [vmem:[#allocation3 + $0x30] sm:$0xff] %vm971, %v1058
  %1075 = vst.msk [vmem:[#allocation3 + $0x38] sm:$0xff] %vm971, %v1059
  %1076 = vst.msk [vmem:[#allocation3 + $0x40] sm:$0xff] %vm971, %v1060
  %1077 = vst.msk [vmem:[#allocation3 + $0x48] sm:$0xff] %vm971, %v1061
  %1078 = vst.msk [vmem:[#allocation3 + $0x50] sm:$0xff] %vm971, %v1062
  %1079 = vst.msk [vmem:[#allocation3 + $0x58] sm:$0xff] %vm971, %v1063
  %1080 = vst.msk [vmem:[#allocation3 + $0x60] sm:$0xff] %vm971, %v1064
  %1081 = vst.msk [vmem:[#allocation3 + $0x68] sm:$0xff] %vm971, %v1065
  %1082 = vst.msk [vmem:[#allocation3 + $0x70] sm:$0xff] %vm971, %v1066
  %1083 = vst.msk [vmem:[#allocation3 + $0x78] sm:$0xff] %vm971, %v1067
  %s1084 = smul.u32 0, 128
  %s1085 = sshra.s32 %s1084, 7
  %s1086 = sand.u32 %s1084, 127
  %s1087 = scalar_lea.vmem %s4, %s1085
  %1088 = vst [vmem:[%s1087] sm:$0xff] %v845
  %1089 = vst [vmem:[%s1087 + $0x8] sm:$0xff] %v848
  %1090 = vst [vmem:[%s1087 + $0x10] sm:$0xff] %v853
  %1091 = vst [vmem:[%s1087 + $0x18] sm:$0xff] %v856
  %1092 = vst [vmem:[%s1087 + $0x20] sm:$0xff] %v861
  %1093 = vst [vmem:[%s1087 + $0x28] sm:$0xff] %v864
  %1094 = vst [vmem:[%s1087 + $0x30] sm:$0xff] %v869
  %1095 = vst [vmem:[%s1087 + $0x38] sm:$0xff] %v872
  %1096 = vst [vmem:[%s1087 + $0x40] sm:$0xff] %v877
  %1097 = vst [vmem:[%s1087 + $0x48] sm:$0xff] %v880
  %1098 = vst [vmem:[%s1087 + $0x50] sm:$0xff] %v885
  %1099 = vst [vmem:[%s1087 + $0x58] sm:$0xff] %v888
  %1100 = vst [vmem:[%s1087 + $0x60] sm:$0xff] %v893
  %1101 = vst [vmem:[%s1087 + $0x68] sm:$0xff] %v896
  %1102 = vst [vmem:[%s1087 + $0x70] sm:$0xff] %v901
  %1103 = vst [vmem:[%s1087 + $0x78] sm:$0xff] %v904
  // Predicated region
  $region22: #{conv_cvae_forward.16} parent=0 // pred_check
    %p1104 = pneg %p18
  $region23: #{conv_cvae_forward.16} parent=0 // pred_check_branch
    %1106 = sbr.rel (%p1104) target = $region25
  $region24: #{conv_cvae_forward.16} parent=0 // pred_region
    %v1107 = vld [vmem:[#allocation2] sm:$0xff]
    %v1108 = vld [vmem:[#allocation2 + $0x8] sm:$0xff]
    %v1109 = vld [vmem:[#allocation2 + $0x10] sm:$0xff]
    %v1110 = vld [vmem:[#allocation2 + $0x18] sm:$0xff]
    %v1111 = vld [vmem:[#allocation2 + $0x20] sm:$0xff]
    %v1112 = vld [vmem:[#allocation2 + $0x28] sm:$0xff]
    %v1113 = vld [vmem:[#allocation2 + $0x30] sm:$0xff]
    %v1114 = vld [vmem:[#allocation2 + $0x38] sm:$0xff]
    %v1115 = vld [vmem:[#allocation2 + $0x40] sm:$0xff]
    %v1116 = vld [vmem:[#allocation2 + $0x48] sm:$0xff]
    %v1117 = vld [vmem:[#allocation2 + $0x50] sm:$0xff]
    %v1118 = vld [vmem:[#allocation2 + $0x58] sm:$0xff]
    %v1119 = vld [vmem:[#allocation2 + $0x60] sm:$0xff]
    %v1120 = vld [vmem:[#allocation2 + $0x68] sm:$0xff]
    %v1121 = vld [vmem:[#allocation2 + $0x70] sm:$0xff]
    %v1122 = vld [vmem:[#allocation2 + $0x78] sm:$0xff]
    %v1123 = vmul.f32 %v1107, 0.5
    %v1124 = vmul.f32 %v1108, 0.5
    %v1125 = vmul.f32 %v1109, 0.5
    %v1126 = vmul.f32 %v1110, 0.5
    %v1127 = vmul.f32 %v1111, 0.5
    %v1128 = vmul.f32 %v1112, 0.5
    %v1129 = vmul.f32 %v1113, 0.5
    %v1130 = vmul.f32 %v1114, 0.5
    %v1131 = vmul.f32 %v1115, 0.5
    %v1132 = vmul.f32 %v1116, 0.5
    %v1133 = vmul.f32 %v1117, 0.5
    %v1134 = vmul.f32 %v1118, 0.5
    %v1135 = vmul.f32 %v1119, 0.5
    %v1136 = vmul.f32 %v1120, 0.5
    %v1137 = vmul.f32 %v1121, 0.5
    %v1138 = vmul.f32 %v1122, 0.5
    %v1139 = vld [vmem:[#allocation3] sm:$0xff]
    %v1140 = vld [vmem:[#allocation3 + $0x8] sm:$0xff]
    %v1141 = vld [vmem:[#allocation3 + $0x10] sm:$0xff]
    %v1142 = vld [vmem:[#allocation3 + $0x18] sm:$0xff]
    %v1143 = vld [vmem:[#allocation3 + $0x20] sm:$0xff]
    %v1144 = vld [vmem:[#allocation3 + $0x28] sm:$0xff]
    %v1145 = vld [vmem:[#allocation3 + $0x30] sm:$0xff]
    %v1146 = vld [vmem:[#allocation3 + $0x38] sm:$0xff]
    %v1147 = vld [vmem:[#allocation3 + $0x40] sm:$0xff]
    %v1148 = vld [vmem:[#allocation3 + $0x48] sm:$0xff]
    %v1149 = vld [vmem:[#allocation3 + $0x50] sm:$0xff]
    %v1150 = vld [vmem:[#allocation3 + $0x58] sm:$0xff]
    %v1151 = vld [vmem:[#allocation3 + $0x60] sm:$0xff]
    %v1152 = vld [vmem:[#allocation3 + $0x68] sm:$0xff]
    %v1153 = vld [vmem:[#allocation3 + $0x70] sm:$0xff]
    %v1154 = vld [vmem:[#allocation3 + $0x78] sm:$0xff]
    %v1155 = vmul.f32 %v1139, 0.5
    %v1156 = vmul.f32 %v1140, 0.5
    %v1157 = vmul.f32 %v1141, 0.5
    %v1158 = vmul.f32 %v1142, 0.5
    %v1159 = vmul.f32 %v1143, 0.5
    %v1160 = vmul.f32 %v1144, 0.5
    %v1161 = vmul.f32 %v1145, 0.5
    %v1162 = vmul.f32 %v1146, 0.5
    %v1163 = vmul.f32 %v1147, 0.5
    %v1164 = vmul.f32 %v1148, 0.5
    %v1165 = vmul.f32 %v1149, 0.5
    %v1166 = vmul.f32 %v1150, 0.5
    %v1167 = vmul.f32 %v1151, 0.5
    %v1168 = vmul.f32 %v1152, 0.5
    %v1169 = vmul.f32 %v1153, 0.5
    %v1170 = vmul.f32 %v1154, 0.5
    %v1171 = vmul.f32 %v1123, %v1123
    %v1172 = vmul.f32 %v1124, %v1124
    %v1173 = vmul.f32 %v1125, %v1125
    %v1174 = vmul.f32 %v1126, %v1126
    %v1175 = vmul.f32 %v1127, %v1127
    %v1176 = vmul.f32 %v1128, %v1128
    %v1177 = vmul.f32 %v1129, %v1129
    %v1178 = vmul.f32 %v1130, %v1130
    %v1179 = vmul.f32 %v1131, %v1131
    %v1180 = vmul.f32 %v1132, %v1132
    %v1181 = vmul.f32 %v1133, %v1133
    %v1182 = vmul.f32 %v1134, %v1134
    %v1183 = vmul.f32 %v1135, %v1135
    %v1184 = vmul.f32 %v1136, %v1136
    %v1185 = vmul.f32 %v1137, %v1137
    %v1186 = vmul.f32 %v1138, %v1138
    %v1187 = vsub.f32 %v1155, %v1171
    %v1188 = vsub.f32 %v1156, %v1172
    %v1189 = vsub.f32 %v1157, %v1173
    %v1190 = vsub.f32 %v1158, %v1174
    %v1191 = vsub.f32 %v1159, %v1175
    %v1192 = vsub.f32 %v1160, %v1176
    %v1193 = vsub.f32 %v1161, %v1177
    %v1194 = vsub.f32 %v1162, %v1178
    %v1195 = vsub.f32 %v1163, %v1179
    %v1196 = vsub.f32 %v1164, %v1180
    %v1197 = vsub.f32 %v1165, %v1181
    %v1198 = vsub.f32 %v1166, %v1182
    %v1199 = vsub.f32 %v1167, %v1183
    %v1200 = vsub.f32 %v1168, %v1184
    %v1201 = vsub.f32 %v1169, %v1185
    %v1202 = vsub.f32 %v1170, %v1186
    %v1203 = vld [vmem:[%s2] sm:$0xff]
    %v1204 = vld [vmem:[%s2 + $0x8] sm:$0xff]
    %v1205 = vld [vmem:[%s2 + $0x10] sm:$0xff]
    %v1206 = vld [vmem:[%s2 + $0x18] sm:$0xff]
    %v1207 = vld [vmem:[%s2 + $0x20] sm:$0xff]
    %v1208 = vld [vmem:[%s2 + $0x28] sm:$0xff]
    %v1209 = vld [vmem:[%s2 + $0x30] sm:$0xff]
    %v1210 = vld [vmem:[%s2 + $0x38] sm:$0xff]
    %v1211 = vld [vmem:[%s2 + $0x40] sm:$0xff]
    %v1212 = vld [vmem:[%s2 + $0x48] sm:$0xff]
    %v1213 = vld [vmem:[%s2 + $0x50] sm:$0xff]
    %v1214 = vld [vmem:[%s2 + $0x58] sm:$0xff]
    %v1215 = vld [vmem:[%s2 + $0x60] sm:$0xff]
    %v1216 = vld [vmem:[%s2 + $0x68] sm:$0xff]
    %v1217 = vld [vmem:[%s2 + $0x70] sm:$0xff]
    %v1218 = vld [vmem:[%s2 + $0x78] sm:$0xff]
    %v1219 = vadd.f32 %v1187, 1e-05
    %v1220 = vadd.f32 %v1188, 1e-05
    %v1221 = vadd.f32 %v1189, 1e-05
    %v1222 = vadd.f32 %v1190, 1e-05
    %v1223 = vadd.f32 %v1191, 1e-05
    %v1224 = vadd.f32 %v1192, 1e-05
    %v1225 = vadd.f32 %v1193, 1e-05
    %v1226 = vadd.f32 %v1194, 1e-05
    %v1227 = vadd.f32 %v1195, 1e-05
    %v1228 = vadd.f32 %v1196, 1e-05
    %v1229 = vadd.f32 %v1197, 1e-05
    %v1230 = vadd.f32 %v1198, 1e-05
    %v1231 = vadd.f32 %v1199, 1e-05
    %v1232 = vadd.f32 %v1200, 1e-05
    %v1233 = vadd.f32 %v1201, 1e-05
    %v1234 = vadd.f32 %v1202, 1e-05
    %v1235 = vrsqrt.pop %v1219
    %v1236 = vrsqrt.pop %v1220
    %v1237 = vrsqrt.pop %v1221
    %v1238 = vrsqrt.pop %v1222
    %v1239 = vrsqrt.pop %v1223
    %v1240 = vrsqrt.pop %v1224
    %v1241 = vrsqrt.pop %v1225
    %v1242 = vrsqrt.pop %v1226
    %v1243 = vrsqrt.pop %v1227
    %v1244 = vrsqrt.pop %v1228
    %v1245 = vrsqrt.pop %v1229
    %v1246 = vrsqrt.pop %v1230
    %v1247 = vrsqrt.pop %v1231
    %v1248 = vrsqrt.pop %v1232
    %v1249 = vrsqrt.pop %v1233
    %v1250 = vrsqrt.pop %v1234
    %v1251 = vmul.f32 %v1203, %v1235
    %v1252 = vmul.f32 %v1204, %v1236
    %v1253 = vmul.f32 %v1205, %v1237
    %v1254 = vmul.f32 %v1206, %v1238
    %v1255 = vmul.f32 %v1207, %v1239
    %v1256 = vmul.f32 %v1208, %v1240
    %v1257 = vmul.f32 %v1209, %v1241
    %v1258 = vmul.f32 %v1210, %v1242
    %v1259 = vmul.f32 %v1211, %v1243
    %v1260 = vmul.f32 %v1212, %v1244
    %v1261 = vmul.f32 %v1213, %v1245
    %v1262 = vmul.f32 %v1214, %v1246
    %v1263 = vmul.f32 %v1215, %v1247
    %v1264 = vmul.f32 %v1216, %v1248
    %v1265 = vmul.f32 %v1217, %v1249
    %v1266 = vmul.f32 %v1218, %v1250
    %v1267 = vld [vmem:[%s3] sm:$0xff]
    %v1268 = vld [vmem:[%s3 + $0x8] sm:$0xff]
    %v1269 = vld [vmem:[%s3 + $0x10] sm:$0xff]
    %v1270 = vld [vmem:[%s3 + $0x18] sm:$0xff]
    %v1271 = vld [vmem:[%s3 + $0x20] sm:$0xff]
    %v1272 = vld [vmem:[%s3 + $0x28] sm:$0xff]
    %v1273 = vld [vmem:[%s3 + $0x30] sm:$0xff]
    %v1274 = vld [vmem:[%s3 + $0x38] sm:$0xff]
    %v1275 = vld [vmem:[%s3 + $0x40] sm:$0xff]
    %v1276 = vld [vmem:[%s3 + $0x48] sm:$0xff]
    %v1277 = vld [vmem:[%s3 + $0x50] sm:$0xff]
    %v1278 = vld [vmem:[%s3 + $0x58] sm:$0xff]
    %v1279 = vld [vmem:[%s3 + $0x60] sm:$0xff]
    %v1280 = vld [vmem:[%s3 + $0x68] sm:$0xff]
    %v1281 = vld [vmem:[%s3 + $0x70] sm:$0xff]
    %v1282 = vld [vmem:[%s3 + $0x78] sm:$0xff]
    %v1283 = vmul.f32 %v1123, %v1251
    %v1284 = vmul.f32 %v1124, %v1252
    %v1285 = vmul.f32 %v1125, %v1253
    %v1286 = vmul.f32 %v1126, %v1254
    %v1287 = vmul.f32 %v1127, %v1255
    %v1288 = vmul.f32 %v1128, %v1256
    %v1289 = vmul.f32 %v1129, %v1257
    %v1290 = vmul.f32 %v1130, %v1258
    %v1291 = vmul.f32 %v1131, %v1259
    %v1292 = vmul.f32 %v1132, %v1260
    %v1293 = vmul.f32 %v1133, %v1261
    %v1294 = vmul.f32 %v1134, %v1262
    %v1295 = vmul.f32 %v1135, %v1263
    %v1296 = vmul.f32 %v1136, %v1264
    %v1297 = vmul.f32 %v1137, %v1265
    %v1298 = vmul.f32 %v1138, %v1266
    %v1299 = vsub.f32 %v1267, %v1283
    %v1300 = vsub.f32 %v1268, %v1284
    %v1301 = vsub.f32 %v1269, %v1285
    %v1302 = vsub.f32 %v1270, %v1286
    %v1303 = vsub.f32 %v1271, %v1287
    %v1304 = vsub.f32 %v1272, %v1288
    %v1305 = vsub.f32 %v1273, %v1289
    %v1306 = vsub.f32 %v1274, %v1290
    %v1307 = vsub.f32 %v1275, %v1291
    %v1308 = vsub.f32 %v1276, %v1292
    %v1309 = vsub.f32 %v1277, %v1293
    %v1310 = vsub.f32 %v1278, %v1294
    %v1311 = vsub.f32 %v1279, %v1295
    %v1312 = vsub.f32 %v1280, %v1296
    %v1313 = vsub.f32 %v1281, %v1297
    %v1314 = vsub.f32 %v1282, %v1298
    %v1315 = vld [vmem:[%s4] sm:$0xff]
    %v1316 = vld [vmem:[%s4 + $0x8] sm:$0xff]
    %v1317 = vld [vmem:[%s4 + $0x10] sm:$0xff]
    %v1318 = vld [vmem:[%s4 + $0x18] sm:$0xff]
    %v1319 = vld [vmem:[%s4 + $0x20] sm:$0xff]
    %v1320 = vld [vmem:[%s4 + $0x28] sm:$0xff]
    %v1321 = vld [vmem:[%s4 + $0x30] sm:$0xff]
    %v1322 = vld [vmem:[%s4 + $0x38] sm:$0xff]
    %v1323 = vld [vmem:[%s4 + $0x40] sm:$0xff]
    %v1324 = vld [vmem:[%s4 + $0x48] sm:$0xff]
    %v1325 = vld [vmem:[%s4 + $0x50] sm:$0xff]
    %v1326 = vld [vmem:[%s4 + $0x58] sm:$0xff]
    %v1327 = vld [vmem:[%s4 + $0x60] sm:$0xff]
    %v1328 = vld [vmem:[%s4 + $0x68] sm:$0xff]
    %v1329 = vld [vmem:[%s4 + $0x70] sm:$0xff]
    %v1330 = vld [vmem:[%s4 + $0x78] sm:$0xff]
    %1332 = vset.pattern.permute.xlu0 0
    %1333 = vperm.xlu0 %1332, %v1251
    %v1334 = vpop.permute.xlu0 %1333
    %1337 = vset.pattern.permute.xlu0 0
    %1338 = vperm.xlu0 %1337, %v1252
    %v1339 = vpop.permute.xlu0 %1338
    %1342 = vset.pattern.permute.xlu0 0
    %1343 = vperm.xlu0 %1342, %v1253
    %v1344 = vpop.permute.xlu0 %1343
    %1347 = vset.pattern.permute.xlu0 0
    %1348 = vperm.xlu0 %1347, %v1254
    %v1349 = vpop.permute.xlu0 %1348
    %1352 = vset.pattern.permute.xlu0 0
    %1353 = vperm.xlu0 %1352, %v1255
    %v1354 = vpop.permute.xlu0 %1353
    %1357 = vset.pattern.permute.xlu0 0
    %1358 = vperm.xlu0 %1357, %v1256
    %v1359 = vpop.permute.xlu0 %1358
    %1362 = vset.pattern.permute.xlu0 0
    %1363 = vperm.xlu0 %1362, %v1257
    %v1364 = vpop.permute.xlu0 %1363
    %1367 = vset.pattern.permute.xlu0 0
    %1368 = vperm.xlu0 %1367, %v1258
    %v1369 = vpop.permute.xlu0 %1368
    %1372 = vset.pattern.permute.xlu0 0
    %1373 = vperm.xlu0 %1372, %v1259
    %v1374 = vpop.permute.xlu0 %1373
    %1377 = vset.pattern.permute.xlu0 0
    %1378 = vperm.xlu0 %1377, %v1260
    %v1379 = vpop.permute.xlu0 %1378
    %1382 = vset.pattern.permute.xlu0 0
    %1383 = vperm.xlu0 %1382, %v1261
    %v1384 = vpop.permute.xlu0 %1383
    %1387 = vset.pattern.permute.xlu0 0
    %1388 = vperm.xlu0 %1387, %v1262
    %v1389 = vpop.permute.xlu0 %1388
    %1392 = vset.pattern.permute.xlu0 0
    %1393 = vperm.xlu0 %1392, %v1263
    %v1394 = vpop.permute.xlu0 %1393
    %1397 = vset.pattern.permute.xlu0 0
    %1398 = vperm.xlu0 %1397, %v1264
    %v1399 = vpop.permute.xlu0 %1398
    %1402 = vset.pattern.permute.xlu0 0
    %1403 = vperm.xlu0 %1402, %v1265
    %v1404 = vpop.permute.xlu0 %1403
    %1407 = vset.pattern.permute.xlu0 0
    %1408 = vperm.xlu0 %1407, %v1266
    %v1409 = vpop.permute.xlu0 %1408
    %v1411 = vmul.f32 %v1315, %v1334
    %v1412 = vmul.f32 %v1316, %v1339
    %v1413 = vmul.f32 %v1317, %v1344
    %v1414 = vmul.f32 %v1318, %v1349
    %v1415 = vmul.f32 %v1319, %v1354
    %v1416 = vmul.f32 %v1320, %v1359
    %v1417 = vmul.f32 %v1321, %v1364
    %v1418 = vmul.f32 %v1322, %v1369
    %v1419 = vmul.f32 %v1323, %v1374
    %v1420 = vmul.f32 %v1324, %v1379
    %v1421 = vmul.f32 %v1325, %v1384
    %v1422 = vmul.f32 %v1326, %v1389
    %v1423 = vmul.f32 %v1327, %v1394
    %v1424 = vmul.f32 %v1328, %v1399
    %v1425 = vmul.f32 %v1329, %v1404
    %v1426 = vmul.f32 %v1330, %v1409
    %1428 = vset.pattern.permute.xlu0 0
    %1429 = vperm.xlu0 %1428, %v1299
    %v1430 = vpop.permute.xlu0 %1429
    %1433 = vset.pattern.permute.xlu0 0
    %1434 = vperm.xlu0 %1433, %v1300
    %v1435 = vpop.permute.xlu0 %1434
    %1438 = vset.pattern.permute.xlu0 0
    %1439 = vperm.xlu0 %1438, %v1301
    %v1440 = vpop.permute.xlu0 %1439
    %1443 = vset.pattern.permute.xlu0 0
    %1444 = vperm.xlu0 %1443, %v1302
    %v1445 = vpop.permute.xlu0 %1444
    %1448 = vset.pattern.permute.xlu0 0
    %1449 = vperm.xlu0 %1448, %v1303
    %v1450 = vpop.permute.xlu0 %1449
    %1453 = vset.pattern.permute.xlu0 0
    %1454 = vperm.xlu0 %1453, %v1304
    %v1455 = vpop.permute.xlu0 %1454
    %1458 = vset.pattern.permute.xlu0 0
    %1459 = vperm.xlu0 %1458, %v1305
    %v1460 = vpop.permute.xlu0 %1459
    %1463 = vset.pattern.permute.xlu0 0
    %1464 = vperm.xlu0 %1463, %v1306
    %v1465 = vpop.permute.xlu0 %1464
    %1468 = vset.pattern.permute.xlu0 0
    %1469 = vperm.xlu0 %1468, %v1307
    %v1470 = vpop.permute.xlu0 %1469
    %1473 = vset.pattern.permute.xlu0 0
    %1474 = vperm.xlu0 %1473, %v1308
    %v1475 = vpop.permute.xlu0 %1474
    %1478 = vset.pattern.permute.xlu0 0
    %1479 = vperm.xlu0 %1478, %v1309
    %v1480 = vpop.permute.xlu0 %1479
    %1483 = vset.pattern.permute.xlu0 0
    %1484 = vperm.xlu0 %1483, %v1310
    %v1485 = vpop.permute.xlu0 %1484
    %1488 = vset.pattern.permute.xlu0 0
    %1489 = vperm.xlu0 %1488, %v1311
    %v1490 = vpop.permute.xlu0 %1489
    %1493 = vset.pattern.permute.xlu0 0
    %1494 = vperm.xlu0 %1493, %v1312
    %v1495 = vpop.permute.xlu0 %1494
    %1498 = vset.pattern.permute.xlu0 0
    %1499 = vperm.xlu0 %1498, %v1313
    %v1500 = vpop.permute.xlu0 %1499
    %1503 = vset.pattern.permute.xlu0 0
    %1504 = vperm.xlu0 %1503, %v1314
    %v1505 = vpop.permute.xlu0 %1504
    %v1507 = vadd.f32 %v1411, %v1430
    %v1508 = vadd.f32 %v1412, %v1435
    %v1509 = vadd.f32 %v1413, %v1440
    %v1510 = vadd.f32 %v1414, %v1445
    %v1511 = vadd.f32 %v1415, %v1450
    %v1512 = vadd.f32 %v1416, %v1455
    %v1513 = vadd.f32 %v1417, %v1460
    %v1514 = vadd.f32 %v1418, %v1465
    %v1515 = vadd.f32 %v1419, %v1470
    %v1516 = vadd.f32 %v1420, %v1475
    %v1517 = vadd.f32 %v1421, %v1480
    %v1518 = vadd.f32 %v1422, %v1485
    %v1519 = vadd.f32 %v1423, %v1490
    %v1520 = vadd.f32 %v1424, %v1495
    %v1521 = vadd.f32 %v1425, %v1500
    %v1522 = vadd.f32 %v1426, %v1505
    %vm1523 = vcmp.ge.f32.partialorder %v1507, 0.0
    %vm1524 = vcmp.ge.f32.partialorder %v1508, 0.0
    %vm1525 = vcmp.ge.f32.partialorder %v1509, 0.0
    %vm1526 = vcmp.ge.f32.partialorder %v1510, 0.0
    %vm1527 = vcmp.ge.f32.partialorder %v1511, 0.0
    %vm1528 = vcmp.ge.f32.partialorder %v1512, 0.0
    %vm1529 = vcmp.ge.f32.partialorder %v1513, 0.0
    %vm1530 = vcmp.ge.f32.partialorder %v1514, 0.0
    %vm1531 = vcmp.ge.f32.partialorder %v1515, 0.0
    %vm1532 = vcmp.ge.f32.partialorder %v1516, 0.0
    %vm1533 = vcmp.ge.f32.partialorder %v1517, 0.0
    %vm1534 = vcmp.ge.f32.partialorder %v1518, 0.0
    %vm1535 = vcmp.ge.f32.partialorder %v1519, 0.0
    %vm1536 = vcmp.ge.f32.partialorder %v1520, 0.0
    %vm1537 = vcmp.ge.f32.partialorder %v1521, 0.0
    %vm1538 = vcmp.ge.f32.partialorder %v1522, 0.0
    %v1539 = vmul.f32 %v1507, 0.01
    %v1540 = vmul.f32 %v1508, 0.01
    %v1541 = vmul.f32 %v1509, 0.01
    %v1542 = vmul.f32 %v1510, 0.01
    %v1543 = vmul.f32 %v1511, 0.01
    %v1544 = vmul.f32 %v1512, 0.01
    %v1545 = vmul.f32 %v1513, 0.01
    %v1546 = vmul.f32 %v1514, 0.01
    %v1547 = vmul.f32 %v1515, 0.01
    %v1548 = vmul.f32 %v1516, 0.01
    %v1549 = vmul.f32 %v1517, 0.01
    %v1550 = vmul.f32 %v1518, 0.01
    %v1551 = vmul.f32 %v1519, 0.01
    %v1552 = vmul.f32 %v1520, 0.01
    %v1553 = vmul.f32 %v1521, 0.01
    %v1554 = vmul.f32 %v1522, 0.01
    %v1555 = vsel %vm1523, %v1507, %v1539
    %v1556 = vsel %vm1524, %v1508, %v1540
    %v1557 = vsel %vm1525, %v1509, %v1541
    %v1558 = vsel %vm1526, %v1510, %v1542
    %v1559 = vsel %vm1527, %v1511, %v1543
    %v1560 = vsel %vm1528, %v1512, %v1544
    %v1561 = vsel %vm1529, %v1513, %v1545
    %v1562 = vsel %vm1530, %v1514, %v1546
    %v1563 = vsel %vm1531, %v1515, %v1547
    %v1564 = vsel %vm1532, %v1516, %v1548
    %v1565 = vsel %vm1533, %v1517, %v1549
    %v1566 = vsel %vm1534, %v1518, %v1550
    %v1567 = vsel %vm1535, %v1519, %v1551
    %v1568 = vsel %vm1536, %v1520, %v1552
    %v1569 = vsel %vm1537, %v1521, %v1553
    %v1570 = vsel %vm1538, %v1522, %v1554
    %1571 = vst [vmem:[%s4] sm:$0xff] %v1555
    %1572 = vst [vmem:[%s4 + $0x8] sm:$0xff] %v1556
    %1573 = vst [vmem:[%s4 + $0x10] sm:$0xff] %v1557
    %1574 = vst [vmem:[%s4 + $0x18] sm:$0xff] %v1558
    %1575 = vst [vmem:[%s4 + $0x20] sm:$0xff] %v1559
    %1576 = vst [vmem:[%s4 + $0x28] sm:$0xff] %v1560
    %1577 = vst [vmem:[%s4 + $0x30] sm:$0xff] %v1561
    %1578 = vst [vmem:[%s4 + $0x38] sm:$0xff] %v1562
    %1579 = vst [vmem:[%s4 + $0x40] sm:$0xff] %v1563
    %1580 = vst [vmem:[%s4 + $0x48] sm:$0xff] %v1564
    %1581 = vst [vmem:[%s4 + $0x50] sm:$0xff] %v1565
    %1582 = vst [vmem:[%s4 + $0x58] sm:$0xff] %v1566
    %1583 = vst [vmem:[%s4 + $0x60] sm:$0xff] %v1567
    %1584 = vst [vmem:[%s4 + $0x68] sm:$0xff] %v1568
    %1585 = vst [vmem:[%s4 + $0x70] sm:$0xff] %v1569
    %1586 = vst [vmem:[%s4 + $0x78] sm:$0xff] %v1570
  $region25: #{conv_cvae_forward.16} parent=0 // pred_fallthru
    _
  // Predicated region
  $region26: #{conv_cvae_forward.16} parent=0 // pred_check
    _
  $region27: #{conv_cvae_forward.16} parent=0 // pred_check_branch
    %1588 = sbr.rel (0) target = $region29
  $region28: #{conv_cvae_forward.16} parent=0 // pred_region
    _
  $region29: #{conv_cvae_forward.16} parent=0 // pred_fallthru
    _
  // Predicated region
  $region30: #{conv_cvae_forward.16} parent=0 // pred_check
    _
  $region31: #{conv_cvae_forward.16} parent=0 // pred_check_branch
    %1590 = sbr.rel (0) target = $region33
  $region32: #{conv_cvae_forward.16} parent=0 // pred_region
    _
  $region33: #{conv_cvae_forward.16} parent=0 // pred_fallthru
    _

// kernel: conv_cvae_forward.18
$region0: #{conv_cvae_forward.18}
  #allocation0 [shape = 'u32[]', space=smem, size = 0x4, offset = 0x4, fixed_abs, tag = 'smem constant byte address 0x4 - core index']
  #allocation1 [shape = 'u32[144,128]{1,0:T(1,128)}', space=vmem, size = 0x12000, scoped, tag = 'internal scratch']
  #allocation2 [shape = 'f32[64,1]{1,0:T(8,128)}', space=vmem, size = 0x8000, scoped, tag = 'scratch operand']
  #allocation3 [shape = 'f32[64,1]{1,0:T(8,128)}', space=vmem, size = 0x8000, scoped, tag = 'scratch operand']
  %s0 = inlined_call_operand.vmem [shape: bf16[234,128], index: 0, kind: input, shape index: {}]
  %s1 = inlined_call_operand.vmem [shape: bf16[64,234], index: 1, kind: input, shape index: {}]
  %s2 = inlined_call_operand.vmem [shape: f32[64,1], index: 2, kind: input, shape index: {}]
  %s3 = inlined_call_operand.vmem [shape: f32[64,1], index: 3, kind: input, shape index: {}]
  %s4 = inlined_call_operand.vmem [shape: f32[64,128], index: 4, kind: output, shape index: {}]
  %s5 = sld [smem:[#allocation0]]
  $region34: #{conv_cvae_forward.18} parent=0
    _
  %s7 = ssub.s32 1, %s5
  %s8 = scalar_select 0, %s7, %s5
  // Predicated region
  $region2: #{conv_cvae_forward.18} parent=0 // pred_check
    _
  $region3: #{conv_cvae_forward.18} parent=0 // pred_check_branch
    %10 = sbr.rel (0) target = $region5
  $region4: #{conv_cvae_forward.18} parent=0 // pred_region
    _
  $region5: #{conv_cvae_forward.18} parent=0 // pred_fallthru
    _
  // Predicated region
  $region6: #{conv_cvae_forward.18} parent=0 // pred_check
    _
  $region7: #{conv_cvae_forward.18} parent=0 // pred_check_branch
    %12 = sbr.rel (0) target = $region9
  $region8: #{conv_cvae_forward.18} parent=0 // pred_region
    _
  $region9: #{conv_cvae_forward.18} parent=0 // pred_fallthru
    _
  // Predicated region
  $region10: #{conv_cvae_forward.18} parent=0 // pred_check
    _
  $region11: #{conv_cvae_forward.18} parent=0 // pred_check_branch
    %14 = sbr.rel (0) target = $region13
  $region12: #{conv_cvae_forward.18} parent=0 // pred_region
    _
  $region13: #{conv_cvae_forward.18} parent=0 // pred_fallthru
    _
  // Predicated region
  $region14: #{conv_cvae_forward.18} parent=0 // pred_check
    _
  $region15: #{conv_cvae_forward.18} parent=0 // pred_check_branch
    %16 = sbr.rel (0) target = $region17
  $region16: #{conv_cvae_forward.18} parent=0 // pred_region
    _
  $region17: #{conv_cvae_forward.18} parent=0 // pred_fallthru
    _
  %p18 = scmp.eq.s32.totalorder 0, 0
  // Predicated region
  $region18: #{conv_cvae_forward.18} parent=0 // pred_check
    %p19 = pneg %p18
  $region19: #{conv_cvae_forward.18} parent=0 // pred_check_branch
    %21 = sbr.rel (%p19) target = $region21
  $region20: #{conv_cvae_forward.18} parent=0 // pred_region
    %vm22 = vcmask 7168
    %23 = vst.msk [vmem:[#allocation2] sm:$0xff] %vm22, 0.0
    %24 = vst.msk [vmem:[#allocation2 + $0x8] sm:$0xff] %vm22, 0.0
    %25 = vst.msk [vmem:[#allocation2 + $0x10] sm:$0xff] %vm22, 0.0
    %26 = vst.msk [vmem:[#allocation2 + $0x18] sm:$0xff] %vm22, 0.0
    %27 = vst.msk [vmem:[#allocation2 + $0x20] sm:$0xff] %vm22, 0.0
    %28 = vst.msk [vmem:[#allocation2 + $0x28] sm:$0xff] %vm22, 0.0
    %29 = vst.msk [vmem:[#allocation2 + $0x30] sm:$0xff] %vm22, 0.0
    %30 = vst.msk [vmem:[#allocation2 + $0x38] sm:$0xff] %vm22, 0.0
    %31 = vst.msk [vmem:[#allocation3] sm:$0xff] %vm22, 0.0
    %32 = vst.msk [vmem:[#allocation3 + $0x8] sm:$0xff] %vm22, 0.0
    %33 = vst.msk [vmem:[#allocation3 + $0x10] sm:$0xff] %vm22, 0.0
    %34 = vst.msk [vmem:[#allocation3 + $0x18] sm:$0xff] %vm22, 0.0
    %35 = vst.msk [vmem:[#allocation3 + $0x20] sm:$0xff] %vm22, 0.0
    %36 = vst.msk [vmem:[#allocation3 + $0x28] sm:$0xff] %vm22, 0.0
    %37 = vst.msk [vmem:[#allocation3 + $0x30] sm:$0xff] %vm22, 0.0
    %38 = vst.msk [vmem:[#allocation3 + $0x38] sm:$0xff] %vm22, 0.0
  $region21: #{conv_cvae_forward.18} parent=0 // pred_fallthru
    _
  %v39 = vld [vmem:[%s1] sm:$0xff]
  %v40 = vld [vmem:[%s1 + $0x8] sm:$0xff]
  %v41 = vld [vmem:[%s1 + $0x10] sm:$0xff]
  %v42 = vld [vmem:[%s1 + $0x18] sm:$0xff]
  %v43 = vld [vmem:[%s1 + $0x20] sm:$0xff]
  %v44 = vld [vmem:[%s1 + $0x28] sm:$0xff]
  %v45 = vld [vmem:[%s1 + $0x30] sm:$0xff]
  %v46 = vld [vmem:[%s1 + $0x38] sm:$0xff]
  %v47 = vld [vmem:[%s0] sm:$0xf]
  %v48 = vld [vmem:[%s0 + $0x4] sm:$0xf]
  %v49 = vld [vmem:[%s0 + $0x8] sm:$0xf]
  %v50 = vld [vmem:[%s0 + $0xc] sm:$0xf]
  %v51 = vld [vmem:[%s0 + $0x10] sm:$0xf]
  %v52 = vld [vmem:[%s0 + $0x14] sm:$0xf]
  %v53 = vld [vmem:[%s0 + $0x18] sm:$0xf]
  %v54 = vld [vmem:[%s0 + $0x1c] sm:$0xf]
  %v55 = vld [vmem:[%s0 + $0x20] sm:$0xf]
  %v56 = vld [vmem:[%s0 + $0x24] sm:$0xf]
  %v57 = vld [vmem:[%s0 + $0x28] sm:$0xf]
  %v58 = vld [vmem:[%s0 + $0x2c] sm:$0xf]
  %v59 = vld [vmem:[%s0 + $0x30] sm:$0xf]
  %v60 = vld [vmem:[%s0 + $0x34] sm:$0xf]
  %v61 = vld [vmem:[%s0 + $0x38] sm:$0xf]
  %v62 = vld [vmem:[%s0 + $0x3c] sm:$0xf]
  %v63 = vld [vmem:[%s0 + $0x40] sm:$0xf]
  %v64 = vld [vmem:[%s0 + $0x44] sm:$0xf]
  %v65 = vld [vmem:[%s0 + $0x48] sm:$0xf]
  %v66 = vld [vmem:[%s0 + $0x4c] sm:$0xf]
  %v67 = vld [vmem:[%s0 + $0x50] sm:$0xf]
  %v68 = vld [vmem:[%s0 + $0x54] sm:$0xf]
  %v69 = vld [vmem:[%s0 + $0x58] sm:$0xf]
  %v70 = vld [vmem:[%s0 + $0x5c] sm:$0xf]
  %v71 = vld [vmem:[%s0 + $0x60] sm:$0xf]
  %v72 = vld [vmem:[%s0 + $0x64] sm:$0xf]
  %v73 = vld [vmem:[%s0 + $0x68] sm:$0xf]
  %v74 = vld [vmem:[%s0 + $0x6c] sm:$0xf]
  %v75 = vld [vmem:[%s0 + $0x70] sm:$0xf]
  %v76 = vld [vmem:[%s0 + $0x74] sm:$0x1]
  %v85 = vunpack.c.l.b16 %v39
  %v86 = vunpack.c.h.b16 %v39
  %v87 = vunpack.c.l.b16 %v40
  %v88 = vunpack.c.h.b16 %v40
  %v89 = vunpack.c.l.b16 %v41
  %v90 = vunpack.c.h.b16 %v41
  %v91 = vunpack.c.l.b16 %v42
  %v92 = vunpack.c.h.b16 %v42
  %v93 = vunpack.c.l.b16 %v43
  %v94 = vunpack.c.h.b16 %v43
  %v95 = vunpack.c.l.b16 %v44
  %v96 = vunpack.c.h.b16 %v44
  %v97 = vunpack.c.l.b16 %v45
  %v98 = vunpack.c.h.b16 %v45
  %v99 = vunpack.c.l.b16 %v46
  %v100 = vunpack.c.h.b16 %v46
  %v101 = vpack.c.b16 %v87, %v85
  %v102 = vpack.c.b16 %v88, %v86
  %v103 = vpack.c.b16 %v91, %v89
  %v104 = vpack.c.b16 %v92, %v90
  %v105 = vpack.c.b16 %v95, %v93
  %v106 = vpack.c.b16 %v96, %v94
  %v107 = vpack.c.b16 %v99, %v97
  %v108 = vpack.c.b16 %v100, %v98
  %v143 = vunpack.c.l.b16 %v47
  %v144 = vunpack.c.l.b16 %v48
  %v145 = vunpack.c.l.b16 %v49
  %v146 = vunpack.c.l.b16 %v50
  %v147 = vunpack.c.l.b16 %v51
  %v148 = vunpack.c.l.b16 %v52
  %v149 = vunpack.c.l.b16 %v53
  %v150 = vunpack.c.l.b16 %v54
  %v151 = vunpack.c.l.b16 %v55
  %v152 = vunpack.c.l.b16 %v56
  %v153 = vunpack.c.l.b16 %v57
  %v154 = vunpack.c.l.b16 %v58
  %v155 = vunpack.c.l.b16 %v59
  %v156 = vunpack.c.l.b16 %v60
  %v157 = vunpack.c.l.b16 %v61
  %v158 = vunpack.c.l.b16 %v62
  %v159 = vunpack.c.l.b16 %v63
  %v160 = vunpack.c.l.b16 %v64
  %v161 = vunpack.c.l.b16 %v65
  %v162 = vunpack.c.l.b16 %v66
  %v163 = vunpack.c.l.b16 %v67
  %v164 = vunpack.c.l.b16 %v68
  %v165 = vunpack.c.l.b16 %v69
  %v166 = vunpack.c.l.b16 %v70
  %v167 = vunpack.c.l.b16 %v71
  %v168 = vunpack.c.l.b16 %v72
  %v169 = vunpack.c.l.b16 %v73
  %v170 = vunpack.c.l.b16 %v74
  %v171 = vunpack.c.l.b16 %v75
  %v172 = vunpack.c.l.b16 %v76
  %v173 = vpack.c.b16 %v144, %v143
  %v174 = vpack.c.b16 %v146, %v145
  %v175 = vpack.c.b16 %v148, %v147
  %v176 = vpack.c.b16 %v150, %v149
  %v177 = vpack.c.b16 %v152, %v151
  %v178 = vpack.c.b16 %v154, %v153
  %v179 = vpack.c.b16 %v156, %v155
  %v180 = vpack.c.b16 %v158, %v157
  %v181 = vpack.c.b16 %v160, %v159
  %v182 = vpack.c.b16 %v162, %v161
  %v183 = vpack.c.b16 %v164, %v163
  %v184 = vpack.c.b16 %v166, %v165
  %v185 = vpack.c.b16 %v168, %v167
  %v186 = vpack.c.b16 %v170, %v169
  %v187 = vpack.c.b16 %v172, %v171
  %vm202 = vcmask 867328
  %v204 = vsel %vm202, %v102, 0
  %v207 = vsel %vm202, %v104, 0
  %v210 = vsel %vm202, %v106, 0
  %v213 = vsel %vm202, %v108, 0
  %vm215 = vcmask 1044480
  %v217 = vsel %vm215, %v187, 0
  %219 = vmatprep.subr.bf16.mxu0 0
  %220 = vmatpush1.bf16.msra.mxu0 %v173
  %221 = vmatprep.subr.bf16.mxu0 0
  %222 = vmatpush1.bf16.msra.mxu0 %v174
  %223 = vmatprep.subr.bf16.mxu0 0
  %224 = vmatpush1.bf16.msra.mxu0 %v175
  %225 = vmatprep.subr.bf16.mxu0 0
  %226 = vmatpush1.bf16.msra.mxu0 %v176
  %227 = vmatprep.subr.bf16.mxu0 0
  %228 = vmatpush1.bf16.msra.mxu0 %v177
  %229 = vmatprep.subr.bf16.mxu0 0
  %230 = vmatpush1.bf16.msra.mxu0 %v178
  %231 = vmatprep.subr.bf16.mxu0 0
  %232 = vmatpush1.bf16.msra.mxu0 %v179
  %233 = vmatprep.subr.bf16.mxu0 0
  %234 = vmatpush1.bf16.msra.mxu0 %v180
  %235 = vmatprep.subr.bf16.mxu0 0
  %236 = vmatpush1.bf16.msra.mxu0 %v181
  %237 = vmatprep.subr.bf16.mxu0 0
  %238 = vmatpush1.bf16.msra.mxu0 %v182
  %239 = vmatprep.subr.bf16.mxu0 0
  %240 = vmatpush1.bf16.msra.mxu0 %v183
  %241 = vmatprep.subr.bf16.mxu0 0
  %242 = vmatpush1.bf16.msra.mxu0 %v184
  %243 = vmatprep.subr.bf16.mxu0 0
  %244 = vmatpush1.bf16.msra.mxu0 %v185
  %245 = vmatprep.subr.bf16.mxu0 0
  %246 = vmatpush1.bf16.msra.mxu0 %v186
  %247 = vmatprep.subr.bf16.mxu0 0
  %248 = vmatpush1.bf16.msra.mxu0 %v217
  %249 = vmatprep.subr.bf16.mxu0 0
  %250 = vmatpush1.bf16.msra.mxu0 0
  %251 = vmatprep.mubr.bf16.mxu0 %v204
  %252 = vmatmul.mubr.bf16.gmra.mrb[0].mxu0 %v101
  %v253 = vpop.f32.mrb[0].mxu0
  %v254 = vadd.f32 0.0, %v253
  %v255 = vpop.f32.mrb[0].mxu0
  %v256 = vpop.f32.mrb[0].mxu0
  %v257 = vadd.f32 0.0, %v256
  %v258 = vpop.f32.mrb[0].mxu0
  %259 = vmatprep.mubr.bf16.mxu0 %v207
  %260 = vmatmul.mubr.bf16.gmra.mrb[0].mxu0 %v103
  %v261 = vpop.f32.mrb[0].mxu0
  %v262 = vadd.f32 0.0, %v261
  %v263 = vpop.f32.mrb[0].mxu0
  %v264 = vpop.f32.mrb[0].mxu0
  %v265 = vadd.f32 0.0, %v264
  %v266 = vpop.f32.mrb[0].mxu0
  %267 = vmatprep.mubr.bf16.mxu0 %v210
  %268 = vmatmul.mubr.bf16.gmra.mrb[0].mxu0 %v105
  %v269 = vpop.f32.mrb[0].mxu0
  %v270 = vadd.f32 0.0, %v269
  %v271 = vpop.f32.mrb[0].mxu0
  %v272 = vpop.f32.mrb[0].mxu0
  %v273 = vadd.f32 0.0, %v272
  %v274 = vpop.f32.mrb[0].mxu0
  %275 = vmatprep.mubr.bf16.mxu0 %v213
  %276 = vmatmul.mubr.bf16.gmra.mrb[0].mxu0 %v107
  %v277 = vpop.f32.mrb[0].mxu0
  %v278 = vadd.f32 0.0, %v277
  %v279 = vpop.f32.mrb[0].mxu0
  %v280 = vpop.f32.mrb[0].mxu0
  %v281 = vadd.f32 0.0, %v280
  %v282 = vpop.f32.mrb[0].mxu0
  %283 = vdwg.mxu0
  %v284 = vld [vmem:[#allocation2] sm:$0xff]
  %v285 = vld [vmem:[#allocation2 + $0x8] sm:$0xff]
  %v286 = vld [vmem:[#allocation2 + $0x10] sm:$0xff]
  %v287 = vld [vmem:[#allocation2 + $0x18] sm:$0xff]
  %v288 = vld [vmem:[#allocation2 + $0x20] sm:$0xff]
  %v289 = vld [vmem:[#allocation2 + $0x28] sm:$0xff]
  %v290 = vld [vmem:[#allocation2 + $0x30] sm:$0xff]
  %v291 = vld [vmem:[#allocation2 + $0x38] sm:$0xff]
  %292 = vadd.xlane.f32.xlu0 %v254
  %v293 = vpop.xlane.xlu0 %292
  %294 = vadd.xlane.f32.xlu0 %v257
  %v295 = vpop.xlane.xlu0 %294
  %296 = vadd.xlane.f32.xlu0 %v262
  %v297 = vpop.xlane.xlu0 %296
  %298 = vadd.xlane.f32.xlu0 %v265
  %v299 = vpop.xlane.xlu0 %298
  %300 = vadd.xlane.f32.xlu0 %v270
  %v301 = vpop.xlane.xlu0 %300
  %302 = vadd.xlane.f32.xlu0 %v273
  %v303 = vpop.xlane.xlu0 %302
  %304 = vadd.xlane.f32.xlu0 %v278
  %v305 = vpop.xlane.xlu0 %304
  %306 = vadd.xlane.f32.xlu0 %v281
  %v307 = vpop.xlane.xlu0 %306
  %v308 = vadd.f32 %v284, %v293
  %v309 = vadd.f32 %v285, %v295
  %v310 = vadd.f32 %v286, %v297
  %v311 = vadd.f32 %v287, %v299
  %v312 = vadd.f32 %v288, %v301
  %v313 = vadd.f32 %v289, %v303
  %v314 = vadd.f32 %v290, %v305
  %v315 = vadd.f32 %v291, %v307
  %vm316 = vcmask 7168
  %317 = vst.msk [vmem:[#allocation2] sm:$0xff] %vm316, %v308
  %318 = vst.msk [vmem:[#allocation2 + $0x8] sm:$0xff] %vm316, %v309
  %319 = vst.msk [vmem:[#allocation2 + $0x10] sm:$0xff] %vm316, %v310
  %320 = vst.msk [vmem:[#allocation2 + $0x18] sm:$0xff] %vm316, %v311
  %321 = vst.msk [vmem:[#allocation2 + $0x20] sm:$0xff] %vm316, %v312
  %322 = vst.msk [vmem:[#allocation2 + $0x28] sm:$0xff] %vm316, %v313
  %323 = vst.msk [vmem:[#allocation2 + $0x30] sm:$0xff] %vm316, %v314
  %324 = vst.msk [vmem:[#allocation2 + $0x38] sm:$0xff] %vm316, %v315
  %v325 = vld [vmem:[#allocation3] sm:$0xff]
  %v326 = vld [vmem:[#allocation3 + $0x8] sm:$0xff]
  %v327 = vld [vmem:[#allocation3 + $0x10] sm:$0xff]
  %v328 = vld [vmem:[#allocation3 + $0x18] sm:$0xff]
  %v329 = vld [vmem:[#allocation3 + $0x20] sm:$0xff]
  %v330 = vld [vmem:[#allocation3 + $0x28] sm:$0xff]
  %v331 = vld [vmem:[#allocation3 + $0x30] sm:$0xff]
  %v332 = vld [vmem:[#allocation3 + $0x38] sm:$0xff]
  %v333 = vmul.f32 %v254, %v254
  %v334 = vmul.f32 %v257, %v257
  %v335 = vmul.f32 %v262, %v262
  %v336 = vmul.f32 %v265, %v265
  %v337 = vmul.f32 %v270, %v270
  %v338 = vmul.f32 %v273, %v273
  %v339 = vmul.f32 %v278, %v278
  %v340 = vmul.f32 %v281, %v281
  %341 = vadd.xlane.f32.xlu0 %v333
  %v342 = vpop.xlane.xlu0 %341
  %343 = vadd.xlane.f32.xlu0 %v334
  %v344 = vpop.xlane.xlu0 %343
  %345 = vadd.xlane.f32.xlu0 %v335
  %v346 = vpop.xlane.xlu0 %345
  %347 = vadd.xlane.f32.xlu0 %v336
  %v348 = vpop.xlane.xlu0 %347
  %349 = vadd.xlane.f32.xlu0 %v337
  %v350 = vpop.xlane.xlu0 %349
  %351 = vadd.xlane.f32.xlu0 %v338
  %v352 = vpop.xlane.xlu0 %351
  %353 = vadd.xlane.f32.xlu0 %v339
  %v354 = vpop.xlane.xlu0 %353
  %355 = vadd.xlane.f32.xlu0 %v340
  %v356 = vpop.xlane.xlu0 %355
  %v357 = vadd.f32 %v325, %v342
  %v358 = vadd.f32 %v326, %v344
  %v359 = vadd.f32 %v327, %v346
  %v360 = vadd.f32 %v328, %v348
  %v361 = vadd.f32 %v329, %v350
  %v362 = vadd.f32 %v330, %v352
  %v363 = vadd.f32 %v331, %v354
  %v364 = vadd.f32 %v332, %v356
  %365 = vst.msk [vmem:[#allocation3] sm:$0xff] %vm316, %v357
  %366 = vst.msk [vmem:[#allocation3 + $0x8] sm:$0xff] %vm316, %v358
  %367 = vst.msk [vmem:[#allocation3 + $0x10] sm:$0xff] %vm316, %v359
  %368 = vst.msk [vmem:[#allocation3 + $0x18] sm:$0xff] %vm316, %v360
  %369 = vst.msk [vmem:[#allocation3 + $0x20] sm:$0xff] %vm316, %v361
  %370 = vst.msk [vmem:[#allocation3 + $0x28] sm:$0xff] %vm316, %v362
  %371 = vst.msk [vmem:[#allocation3 + $0x30] sm:$0xff] %vm316, %v363
  %372 = vst.msk [vmem:[#allocation3 + $0x38] sm:$0xff] %vm316, %v364
  %s373 = smul.u32 0, 128
  %s374 = sshra.s32 %s373, 7
  %s375 = sand.u32 %s373, 127
  %s376 = scalar_lea.vmem %s4, %s374
  %377 = vst [vmem:[%s376] sm:$0xff] %v254
  %378 = vst [vmem:[%s376 + $0x8] sm:$0xff] %v257
  %379 = vst [vmem:[%s376 + $0x10] sm:$0xff] %v262
  %380 = vst [vmem:[%s376 + $0x18] sm:$0xff] %v265
  %381 = vst [vmem:[%s376 + $0x20] sm:$0xff] %v270
  %382 = vst [vmem:[%s376 + $0x28] sm:$0xff] %v273
  %383 = vst [vmem:[%s376 + $0x30] sm:$0xff] %v278
  %384 = vst [vmem:[%s376 + $0x38] sm:$0xff] %v281
  // Predicated region
  $region22: #{conv_cvae_forward.18} parent=0 // pred_check
    %p385 = pneg %p18
  $region23: #{conv_cvae_forward.18} parent=0 // pred_check_branch
    %387 = sbr.rel (%p385) target = $region25
  $region24: #{conv_cvae_forward.18} parent=0 // pred_region
    %v388 = vld [vmem:[#allocation2] sm:$0xff]
    %v389 = vld [vmem:[#allocation2 + $0x8] sm:$0xff]
    %v390 = vld [vmem:[#allocation2 + $0x10] sm:$0xff]
    %v391 = vld [vmem:[#allocation2 + $0x18] sm:$0xff]
    %v392 = vld [vmem:[#allocation2 + $0x20] sm:$0xff]
    %v393 = vld [vmem:[#allocation2 + $0x28] sm:$0xff]
    %v394 = vld [vmem:[#allocation2 + $0x30] sm:$0xff]
    %v395 = vld [vmem:[#allocation2 + $0x38] sm:$0xff]
    %v396 = vmul.f32 %v388, 0.125
    %v397 = vmul.f32 %v389, 0.125
    %v398 = vmul.f32 %v390, 0.125
    %v399 = vmul.f32 %v391, 0.125
    %v400 = vmul.f32 %v392, 0.125
    %v401 = vmul.f32 %v393, 0.125
    %v402 = vmul.f32 %v394, 0.125
    %v403 = vmul.f32 %v395, 0.125
    %v404 = vld [vmem:[#allocation3] sm:$0xff]
    %v405 = vld [vmem:[#allocation3 + $0x8] sm:$0xff]
    %v406 = vld [vmem:[#allocation3 + $0x10] sm:$0xff]
    %v407 = vld [vmem:[#allocation3 + $0x18] sm:$0xff]
    %v408 = vld [vmem:[#allocation3 + $0x20] sm:$0xff]
    %v409 = vld [vmem:[#allocation3 + $0x28] sm:$0xff]
    %v410 = vld [vmem:[#allocation3 + $0x30] sm:$0xff]
    %v411 = vld [vmem:[#allocation3 + $0x38] sm:$0xff]
    %v412 = vmul.f32 %v404, 0.125
    %v413 = vmul.f32 %v405, 0.125
    %v414 = vmul.f32 %v406, 0.125
    %v415 = vmul.f32 %v407, 0.125
    %v416 = vmul.f32 %v408, 0.125
    %v417 = vmul.f32 %v409, 0.125
    %v418 = vmul.f32 %v410, 0.125
    %v419 = vmul.f32 %v411, 0.125
    %v420 = vmul.f32 %v396, %v396
    %v421 = vmul.f32 %v397, %v397
    %v422 = vmul.f32 %v398, %v398
    %v423 = vmul.f32 %v399, %v399
    %v424 = vmul.f32 %v400, %v400
    %v425 = vmul.f32 %v401, %v401
    %v426 = vmul.f32 %v402, %v402
    %v427 = vmul.f32 %v403, %v403
    %v428 = vsub.f32 %v412, %v420
    %v429 = vsub.f32 %v413, %v421
    %v430 = vsub.f32 %v414, %v422
    %v431 = vsub.f32 %v415, %v423
    %v432 = vsub.f32 %v416, %v424
    %v433 = vsub.f32 %v417, %v425
    %v434 = vsub.f32 %v418, %v426
    %v435 = vsub.f32 %v419, %v427
    %v436 = vld [vmem:[%s2] sm:$0xff]
    %v437 = vld [vmem:[%s2 + $0x8] sm:$0xff]
    %v438 = vld [vmem:[%s2 + $0x10] sm:$0xff]
    %v439 = vld [vmem:[%s2 + $0x18] sm:$0xff]
    %v440 = vld [vmem:[%s2 + $0x20] sm:$0xff]
    %v441 = vld [vmem:[%s2 + $0x28] sm:$0xff]
    %v442 = vld [vmem:[%s2 + $0x30] sm:$0xff]
    %v443 = vld [vmem:[%s2 + $0x38] sm:$0xff]
    %v444 = vadd.f32 %v428, 1e-05
    %v445 = vadd.f32 %v429, 1e-05
    %v446 = vadd.f32 %v430, 1e-05
    %v447 = vadd.f32 %v431, 1e-05
    %v448 = vadd.f32 %v432, 1e-05
    %v449 = vadd.f32 %v433, 1e-05
    %v450 = vadd.f32 %v434, 1e-05
    %v451 = vadd.f32 %v435, 1e-05
    %v452 = vrsqrt.pop %v444
    %v453 = vrsqrt.pop %v445
    %v454 = vrsqrt.pop %v446
    %v455 = vrsqrt.pop %v447
    %v456 = vrsqrt.pop %v448
    %v457 = vrsqrt.pop %v449
    %v458 = vrsqrt.pop %v450
    %v459 = vrsqrt.pop %v451
    %v460 = vmul.f32 %v436, %v452
    %v461 = vmul.f32 %v437, %v453
    %v462 = vmul.f32 %v438, %v454
    %v463 = vmul.f32 %v439, %v455
    %v464 = vmul.f32 %v440, %v456
    %v465 = vmul.f32 %v441, %v457
    %v466 = vmul.f32 %v442, %v458
    %v467 = vmul.f32 %v443, %v459
    %v468 = vld [vmem:[%s3] sm:$0xff]
    %v469 = vld [vmem:[%s3 + $0x8] sm:$0xff]
    %v470 = vld [vmem:[%s3 + $0x10] sm:$0xff]
    %v471 = vld [vmem:[%s3 + $0x18] sm:$0xff]
    %v472 = vld [vmem:[%s3 + $0x20] sm:$0xff]
    %v473 = vld [vmem:[%s3 + $0x28] sm:$0xff]
    %v474 = vld [vmem:[%s3 + $0x30] sm:$0xff]
    %v475 = vld [vmem:[%s3 + $0x38] sm:$0xff]
    %v476 = vmul.f32 %v396, %v460
    %v477 = vmul.f32 %v397, %v461
    %v478 = vmul.f32 %v398, %v462
    %v479 = vmul.f32 %v399, %v463
    %v480 = vmul.f32 %v400, %v464
    %v481 = vmul.f32 %v401, %v465
    %v482 = vmul.f32 %v402, %v466
    %v483 = vmul.f32 %v403, %v467
    %v484 = vsub.f32 %v468, %v476
    %v485 = vsub.f32 %v469, %v477
    %v486 = vsub.f32 %v470, %v478
    %v487 = vsub.f32 %v471, %v479
    %v488 = vsub.f32 %v472, %v480
    %v489 = vsub.f32 %v473, %v481
    %v490 = vsub.f32 %v474, %v482
    %v491 = vsub.f32 %v475, %v483
    %v492 = vld [vmem:[%s4] sm:$0xff]
    %v493 = vld [vmem:[%s4 + $0x8] sm:$0xff]
    %v494 = vld [vmem:[%s4 + $0x10] sm:$0xff]
    %v495 = vld [vmem:[%s4 + $0x18] sm:$0xff]
    %v496 = vld [vmem:[%s4 + $0x20] sm:$0xff]
    %v497 = vld [vmem:[%s4 + $0x28] sm:$0xff]
    %v498 = vld [vmem:[%s4 + $0x30] sm:$0xff]
    %v499 = vld [vmem:[%s4 + $0x38] sm:$0xff]
    %501 = vset.pattern.permute.xlu0 0
    %502 = vperm.xlu0 %501, %v460
    %v503 = vpop.permute.xlu0 %502
    %506 = vset.pattern.permute.xlu0 0
    %507 = vperm.xlu0 %506, %v461
    %v508 = vpop.permute.xlu0 %507
    %511 = vset.pattern.permute.xlu0 0
    %512 = vperm.xlu0 %511, %v462
    %v513 = vpop.permute.xlu0 %512
    %516 = vset.pattern.permute.xlu0 0
    %517 = vperm.xlu0 %516, %v463
    %v518 = vpop.permute.xlu0 %517
    %521 = vset.pattern.permute.xlu0 0
    %522 = vperm.xlu0 %521, %v464
    %v523 = vpop.permute.xlu0 %522
    %526 = vset.pattern.permute.xlu0 0
    %527 = vperm.xlu0 %526, %v465
    %v528 = vpop.permute.xlu0 %527
    %531 = vset.pattern.permute.xlu0 0
    %532 = vperm.xlu0 %531, %v466
    %v533 = vpop.permute.xlu0 %532
    %536 = vset.pattern.permute.xlu0 0
    %537 = vperm.xlu0 %536, %v467
    %v538 = vpop.permute.xlu0 %537
    %v540 = vmul.f32 %v492, %v503
    %v541 = vmul.f32 %v493, %v508
    %v542 = vmul.f32 %v494, %v513
    %v543 = vmul.f32 %v495, %v518
    %v544 = vmul.f32 %v496, %v523
    %v545 = vmul.f32 %v497, %v528
    %v546 = vmul.f32 %v498, %v533
    %v547 = vmul.f32 %v499, %v538
    %549 = vset.pattern.permute.xlu0 0
    %550 = vperm.xlu0 %549, %v484
    %v551 = vpop.permute.xlu0 %550
    %554 = vset.pattern.permute.xlu0 0
    %555 = vperm.xlu0 %554, %v485
    %v556 = vpop.permute.xlu0 %555
    %559 = vset.pattern.permute.xlu0 0
    %560 = vperm.xlu0 %559, %v486
    %v561 = vpop.permute.xlu0 %560
    %564 = vset.pattern.permute.xlu0 0
    %565 = vperm.xlu0 %564, %v487
    %v566 = vpop.permute.xlu0 %565
    %569 = vset.pattern.permute.xlu0 0
    %570 = vperm.xlu0 %569, %v488
    %v571 = vpop.permute.xlu0 %570
    %574 = vset.pattern.permute.xlu0 0
    %575 = vperm.xlu0 %574, %v489
    %v576 = vpop.permute.xlu0 %575
    %579 = vset.pattern.permute.xlu0 0
    %580 = vperm.xlu0 %579, %v490
    %v581 = vpop.permute.xlu0 %580
    %584 = vset.pattern.permute.xlu0 0
    %585 = vperm.xlu0 %584, %v491
    %v586 = vpop.permute.xlu0 %585
    %v588 = vadd.f32 %v540, %v551
    %v589 = vadd.f32 %v541, %v556
    %v590 = vadd.f32 %v542, %v561
    %v591 = vadd.f32 %v543, %v566
    %v592 = vadd.f32 %v544, %v571
    %v593 = vadd.f32 %v545, %v576
    %v594 = vadd.f32 %v546, %v581
    %v595 = vadd.f32 %v547, %v586
    %vm596 = vcmp.ge.f32.partialorder %v588, 0.0
    %vm597 = vcmp.ge.f32.partialorder %v589, 0.0
    %vm598 = vcmp.ge.f32.partialorder %v590, 0.0
    %vm599 = vcmp.ge.f32.partialorder %v591, 0.0
    %vm600 = vcmp.ge.f32.partialorder %v592, 0.0
    %vm601 = vcmp.ge.f32.partialorder %v593, 0.0
    %vm602 = vcmp.ge.f32.partialorder %v594, 0.0
    %vm603 = vcmp.ge.f32.partialorder %v595, 0.0
    %v604 = vmul.f32 %v588, 0.01
    %v605 = vmul.f32 %v589, 0.01
    %v606 = vmul.f32 %v590, 0.01
    %v607 = vmul.f32 %v591, 0.01
    %v608 = vmul.f32 %v592, 0.01
    %v609 = vmul.f32 %v593, 0.01
    %v610 = vmul.f32 %v594, 0.01
    %v611 = vmul.f32 %v595, 0.01
    %v612 = vsel %vm596, %v588, %v604
    %v613 = vsel %vm597, %v589, %v605
    %v614 = vsel %vm598, %v590, %v606
    %v615 = vsel %vm599, %v591, %v607
    %v616 = vsel %vm600, %v592, %v608
    %v617 = vsel %vm601, %v593, %v609
    %v618 = vsel %vm602, %v594, %v610
    %v619 = vsel %vm603, %v595, %v611
    %620 = vst [vmem:[%s4] sm:$0xff] %v612
    %621 = vst [vmem:[%s4 + $0x8] sm:$0xff] %v613
    %622 = vst [vmem:[%s4 + $0x10] sm:$0xff] %v614
    %623 = vst [vmem:[%s4 + $0x18] sm:$0xff] %v615
    %624 = vst [vmem:[%s4 + $0x20] sm:$0xff] %v616
    %625 = vst [vmem:[%s4 + $0x28] sm:$0xff] %v617
    %626 = vst [vmem:[%s4 + $0x30] sm:$0xff] %v618
    %627 = vst [vmem:[%s4 + $0x38] sm:$0xff] %v619
  $region25: #{conv_cvae_forward.18} parent=0 // pred_fallthru
    _
  // Predicated region
  $region26: #{conv_cvae_forward.18} parent=0 // pred_check
    _
  $region27: #{conv_cvae_forward.18} parent=0 // pred_check_branch
    %629 = sbr.rel (0) target = $region29
  $region28: #{conv_cvae_forward.18} parent=0 // pred_region
    _
  $region29: #{conv_cvae_forward.18} parent=0 // pred_fallthru
    _
  // Predicated region
  $region30: #{conv_cvae_forward.18} parent=0 // pred_check
    _
  $region31: #{conv_cvae_forward.18} parent=0 // pred_check_branch
    %631 = sbr.rel (0) target = $region33
  $region32: #{conv_cvae_forward.18} parent=0 // pred_region
    _
  $region33: #{conv_cvae_forward.18} parent=0 // pred_fallthru
    _

// kernel: conv_cvae_forward.19
$region0: #{conv_cvae_forward.19}
  #allocation0 [shape = 'u32[]', space=smem, size = 0x4, offset = 0x4, fixed_abs, tag = 'smem constant byte address 0x4 - core index']
  #allocation1 [shape = 'u32[144,128]{1,0:T(1,128)}', space=vmem, size = 0x12000, scoped, tag = 'internal scratch']
  #allocation2 [shape = 'f32[32,1]{1,0:T(8,128)}', space=vmem, size = 0x4000, scoped, tag = 'scratch operand']
  #allocation3 [shape = 'f32[32,1]{1,0:T(8,128)}', space=vmem, size = 0x4000, scoped, tag = 'scratch operand']
  %s0 = inlined_call_operand.vmem [shape: bf16[576,128], index: 0, kind: input, shape index: {}]
  %s1 = inlined_call_operand.vmem [shape: bf16[32,576], index: 1, kind: input, shape index: {}]
  %s2 = inlined_call_operand.vmem [shape: f32[32,1], index: 2, kind: input, shape index: {}]
  %s3 = inlined_call_operand.vmem [shape: f32[32,1], index: 3, kind: input, shape index: {}]
  %s4 = inlined_call_operand.vmem [shape: f32[32,128], index: 4, kind: output, shape index: {}]
  %s5 = sld [smem:[#allocation0]]
  $region34: #{conv_cvae_forward.19} parent=0
    _
  %s7 = ssub.s32 1, %s5
  %s8 = scalar_select 0, %s7, %s5
  // Predicated region
  $region2: #{conv_cvae_forward.19} parent=0 // pred_check
    _
  $region3: #{conv_cvae_forward.19} parent=0 // pred_check_branch
    %10 = sbr.rel (0) target = $region5
  $region4: #{conv_cvae_forward.19} parent=0 // pred_region
    _
  $region5: #{conv_cvae_forward.19} parent=0 // pred_fallthru
    _
  // Predicated region
  $region6: #{conv_cvae_forward.19} parent=0 // pred_check
    _
  $region7: #{conv_cvae_forward.19} parent=0 // pred_check_branch
    %12 = sbr.rel (0) target = $region9
  $region8: #{conv_cvae_forward.19} parent=0 // pred_region
    _
  $region9: #{conv_cvae_forward.19} parent=0 // pred_fallthru
    _
  // Predicated region
  $region10: #{conv_cvae_forward.19} parent=0 // pred_check
    _
  $region11: #{conv_cvae_forward.19} parent=0 // pred_check_branch
    %14 = sbr.rel (0) target = $region13
  $region12: #{conv_cvae_forward.19} parent=0 // pred_region
    _
  $region13: #{conv_cvae_forward.19} parent=0 // pred_fallthru
    _
  // Predicated region
  $region14: #{conv_cvae_forward.19} parent=0 // pred_check
    _
  $region15: #{conv_cvae_forward.19} parent=0 // pred_check_branch
    %16 = sbr.rel (0) target = $region17
  $region16: #{conv_cvae_forward.19} parent=0 // pred_region
    _
  $region17: #{conv_cvae_forward.19} parent=0 // pred_fallthru
    _
  %p18 = scmp.eq.s32.totalorder 0, 0
  // Predicated region
  $region18: #{conv_cvae_forward.19} parent=0 // pred_check
    %p19 = pneg %p18
  $region19: #{conv_cvae_forward.19} parent=0 // pred_check_branch
    %21 = sbr.rel (%p19) target = $region21
  $region20: #{conv_cvae_forward.19} parent=0 // pred_region
    %vm22 = vcmask 7168
    %23 = vst.msk [vmem:[#allocation2] sm:$0xff] %vm22, 0.0
    %24 = vst.msk [vmem:[#allocation2 + $0x8] sm:$0xff] %vm22, 0.0
    %25 = vst.msk [vmem:[#allocation2 + $0x10] sm:$0xff] %vm22, 0.0
    %26 = vst.msk [vmem:[#allocation2 + $0x18] sm:$0xff] %vm22, 0.0
    %27 = vst.msk [vmem:[#allocation3] sm:$0xff] %vm22, 0.0
    %28 = vst.msk [vmem:[#allocation3 + $0x8] sm:$0xff] %vm22, 0.0
    %29 = vst.msk [vmem:[#allocation3 + $0x10] sm:$0xff] %vm22, 0.0
    %30 = vst.msk [vmem:[#allocation3 + $0x18] sm:$0xff] %vm22, 0.0
  $region21: #{conv_cvae_forward.19} parent=0 // pred_fallthru
    _
  %v31 = vld [vmem:[%s1] sm:$0xff]
  %v32 = vld [vmem:[%s1 + $0x8] sm:$0xff]
  %v33 = vld [vmem:[%s1 + $0x10] sm:$0xf]
  %v34 = vld [vmem:[%s1 + $0x14] sm:$0xff]
  %v35 = vld [vmem:[%s1 + $0x1c] sm:$0xff]
  %v36 = vld [vmem:[%s1 + $0x24] sm:$0xf]
  %v37 = vld [vmem:[%s1 + $0x28] sm:$0xff]
  %v38 = vld [vmem:[%s1 + $0x30] sm:$0xff]
  %v39 = vld [vmem:[%s1 + $0x38] sm:$0xf]
  %v40 = vld [vmem:[%s1 + $0x3c] sm:$0xff]
  %v41 = vld [vmem:[%s1 + $0x44] sm:$0xff]
  %v42 = vld [vmem:[%s1 + $0x4c] sm:$0xf]
  %v43 = vld [vmem:[%s0] sm:$0xf]
  %v44 = vld [vmem:[%s0 + $0x4] sm:$0xf]
  %v45 = vld [vmem:[%s0 + $0x8] sm:$0xf]
  %v46 = vld [vmem:[%s0 + $0xc] sm:$0xf]
  %v47 = vld [vmem:[%s0 + $0x10] sm:$0xf]
  %v48 = vld [vmem:[%s0 + $0x14] sm:$0xf]
  %v49 = vld [vmem:[%s0 + $0x18] sm:$0xf]
  %v50 = vld [vmem:[%s0 + $0x1c] sm:$0xf]
  %v51 = vld [vmem:[%s0 + $0x20] sm:$0xf]
  %v52 = vld [vmem:[%s0 + $0x24] sm:$0xf]
  %v53 = vld [vmem:[%s0 + $0x28] sm:$0xf]
  %v54 = vld [vmem:[%s0 + $0x2c] sm:$0xf]
  %v55 = vld [vmem:[%s0 + $0x30] sm:$0xf]
  %v56 = vld [vmem:[%s0 + $0x34] sm:$0xf]
  %v57 = vld [vmem:[%s0 + $0x38] sm:$0xf]
  %v58 = vld [vmem:[%s0 + $0x3c] sm:$0xf]
  %v59 = vld [vmem:[%s0 + $0x40] sm:$0xf]
  %v60 = vld [vmem:[%s0 + $0x44] sm:$0xf]
  %v61 = vld [vmem:[%s0 + $0x48] sm:$0xf]
  %v62 = vld [vmem:[%s0 + $0x4c] sm:$0xf]
  %v63 = vld [vmem:[%s0 + $0x50] sm:$0xf]
  %v64 = vld [vmem:[%s0 + $0x54] sm:$0xf]
  %v65 = vld [vmem:[%s0 + $0x58] sm:$0xf]
  %v66 = vld [vmem:[%s0 + $0x5c] sm:$0xf]
  %v67 = vld [vmem:[%s0 + $0x60] sm:$0xf]
  %v68 = vld [vmem:[%s0 + $0x64] sm:$0xf]
  %v69 = vld [vmem:[%s0 + $0x68] sm:$0xf]
  %v70 = vld [vmem:[%s0 + $0x6c] sm:$0xf]
  %v71 = vld [vmem:[%s0 + $0x70] sm:$0xf]
  %v72 = vld [vmem:[%s0 + $0x74] sm:$0xf]
  %v73 = vld [vmem:[%s0 + $0x78] sm:$0xf]
  %v74 = vld [vmem:[%s0 + $0x7c] sm:$0xf]
  %v75 = vld [vmem:[%s0 + $0x80] sm:$0xf]
  %v76 = vld [vmem:[%s0 + $0x84] sm:$0xf]
  %v77 = vld [vmem:[%s0 + $0x88] sm:$0xf]
  %v78 = vld [vmem:[%s0 + $0x8c] sm:$0xf]
  %v79 = vld [vmem:[%s0 + $0x90] sm:$0xf]
  %v80 = vld [vmem:[%s0 + $0x94] sm:$0xf]
  %v81 = vld [vmem:[%s0 + $0x98] sm:$0xf]
  %v82 = vld [vmem:[%s0 + $0x9c] sm:$0xf]
  %v83 = vld [vmem:[%s0 + $0xa0] sm:$0xf]
  %v84 = vld [vmem:[%s0 + $0xa4] sm:$0xf]
  %v85 = vld [vmem:[%s0 + $0xa8] sm:$0xf]
  %v86 = vld [vmem:[%s0 + $0xac] sm:$0xf]
  %v87 = vld [vmem:[%s0 + $0xb0] sm:$0xf]
  %v88 = vld [vmem:[%s0 + $0xb4] sm:$0xf]
  %v89 = vld [vmem:[%s0 + $0xb8] sm:$0xf]
  %v90 = vld [vmem:[%s0 + $0xbc] sm:$0xf]
  %v91 = vld [vmem:[%s0 + $0xc0] sm:$0xf]
  %v92 = vld [vmem:[%s0 + $0xc4] sm:$0xf]
  %v93 = vld [vmem:[%s0 + $0xc8] sm:$0xf]
  %v94 = vld [vmem:[%s0 + $0xcc] sm:$0xf]
  %v95 = vld [vmem:[%s0 + $0xd0] sm:$0xf]
  %v96 = vld [vmem:[%s0 + $0xd4] sm:$0xf]
  %v97 = vld [vmem:[%s0 + $0xd8] sm:$0xf]
  %v98 = vld [vmem:[%s0 + $0xdc] sm:$0xf]
  %v99 = vld [vmem:[%s0 + $0xe0] sm:$0xf]
  %v100 = vld [vmem:[%s0 + $0xe4] sm:$0xf]
  %v101 = vld [vmem:[%s0 + $0xe8] sm:$0xf]
  %v102 = vld [vmem:[%s0 + $0xec] sm:$0xf]
  %v103 = vld [vmem:[%s0 + $0xf0] sm:$0xf]
  %v104 = vld [vmem:[%s0 + $0xf4] sm:$0xf]
  %v105 = vld [vmem:[%s0 + $0xf8] sm:$0xf]
  %v106 = vld [vmem:[%s0 + $0xfc] sm:$0xf]
  %v107 = vld [vmem:[%s0 + $0x100] sm:$0xf]
  %v108 = vld [vmem:[%s0 + $0x104] sm:$0xf]
  %v109 = vld [vmem:[%s0 + $0x108] sm:$0xf]
  %v110 = vld [vmem:[%s0 + $0x10c] sm:$0xf]
  %v111 = vld [vmem:[%s0 + $0x110] sm:$0xf]
  %v112 = vld [vmem:[%s0 + $0x114] sm:$0xf]
  %v113 = vld [vmem:[%s0 + $0x118] sm:$0xf]
  %v114 = vld [vmem:[%s0 + $0x11c] sm:$0xf]
  %v127 = vunpack.c.l.b16 %v31
  %v128 = vunpack.c.h.b16 %v31
  %v129 = vunpack.c.l.b16 %v32
  %v130 = vunpack.c.h.b16 %v32
  %v131 = vunpack.c.l.b16 %v33
  %v132 = vunpack.c.l.b16 %v34
  %v133 = vunpack.c.h.b16 %v34
  %v134 = vunpack.c.l.b16 %v35
  %v135 = vunpack.c.h.b16 %v35
  %v136 = vunpack.c.l.b16 %v36
  %v137 = vunpack.c.l.b16 %v37
  %v138 = vunpack.c.h.b16 %v37
  %v139 = vunpack.c.l.b16 %v38
  %v140 = vunpack.c.h.b16 %v38
  %v141 = vunpack.c.l.b16 %v39
  %v142 = vunpack.c.l.b16 %v40
  %v143 = vunpack.c.h.b16 %v40
  %v144 = vunpack.c.l.b16 %v41
  %v145 = vunpack.c.h.b16 %v41
  %v146 = vunpack.c.l.b16 %v42
  %v147 = vpack.c.b16 %v132, %v127
  %v148 = vpack.c.b16 %v133, %v128
  %v149 = vpack.c.b16 %v134, %v129
  %v150 = vpack.c.b16 %v135, %v130
  %v151 = vpack.c.b16 %v136, %v131
  %v152 = vpack.c.b16 %v142, %v137
  %v153 = vpack.c.b16 %v143, %v138
  %v154 = vpack.c.b16 %v144, %v139
  %v155 = vpack.c.b16 %v145, %v140
  %v156 = vpack.c.b16 %v146, %v141
  %v237 = vunpack.c.l.b16 %v43
  %v238 = vunpack.c.l.b16 %v44
  %v239 = vunpack.c.l.b16 %v45
  %v240 = vunpack.c.l.b16 %v46
  %v241 = vunpack.c.l.b16 %v47
  %v242 = vunpack.c.l.b16 %v48
  %v243 = vunpack.c.l.b16 %v49
  %v244 = vunpack.c.l.b16 %v50
  %v245 = vunpack.c.l.b16 %v51
  %v246 = vunpack.c.l.b16 %v52
  %v247 = vunpack.c.l.b16 %v53
  %v248 = vunpack.c.l.b16 %v54
  %v249 = vunpack.c.l.b16 %v55
  %v250 = vunpack.c.l.b16 %v56
  %v251 = vunpack.c.l.b16 %v57
  %v252 = vunpack.c.l.b16 %v58
  %v253 = vunpack.c.l.b16 %v59
  %v254 = vunpack.c.l.b16 %v60
  %v255 = vunpack.c.l.b16 %v61
  %v256 = vunpack.c.l.b16 %v62
  %v257 = vunpack.c.l.b16 %v63
  %v258 = vunpack.c.l.b16 %v64
  %v259 = vunpack.c.l.b16 %v65
  %v260 = vunpack.c.l.b16 %v66
  %v261 = vunpack.c.l.b16 %v67
  %v262 = vunpack.c.l.b16 %v68
  %v263 = vunpack.c.l.b16 %v69
  %v264 = vunpack.c.l.b16 %v70
  %v265 = vunpack.c.l.b16 %v71
  %v266 = vunpack.c.l.b16 %v72
  %v267 = vunpack.c.l.b16 %v73
  %v268 = vunpack.c.l.b16 %v74
  %v269 = vunpack.c.l.b16 %v75
  %v270 = vunpack.c.l.b16 %v76
  %v271 = vunpack.c.l.b16 %v77
  %v272 = vunpack.c.l.b16 %v78
  %v273 = vunpack.c.l.b16 %v79
  %v274 = vunpack.c.l.b16 %v80
  %v275 = vunpack.c.l.b16 %v81
  %v276 = vunpack.c.l.b16 %v82
  %v277 = vunpack.c.l.b16 %v83
  %v278 = vunpack.c.l.b16 %v84
  %v279 = vunpack.c.l.b16 %v85
  %v280 = vunpack.c.l.b16 %v86
  %v281 = vunpack.c.l.b16 %v87
  %v282 = vunpack.c.l.b16 %v88
  %v283 = vunpack.c.l.b16 %v89
  %v284 = vunpack.c.l.b16 %v90
  %v285 = vunpack.c.l.b16 %v91
  %v286 = vunpack.c.l.b16 %v92
  %v287 = vunpack.c.l.b16 %v93
  %v288 = vunpack.c.l.b16 %v94
  %v289 = vunpack.c.l.b16 %v95
  %v290 = vunpack.c.l.b16 %v96
  %v291 = vunpack.c.l.b16 %v97
  %v292 = vunpack.c.l.b16 %v98
  %v293 = vunpack.c.l.b16 %v99
  %v294 = vunpack.c.l.b16 %v100
  %v295 = vunpack.c.l.b16 %v101
  %v296 = vunpack.c.l.b16 %v102
  %v297 = vunpack.c.l.b16 %v103
  %v298 = vunpack.c.l.b16 %v104
  %v299 = vunpack.c.l.b16 %v105
  %v300 = vunpack.c.l.b16 %v106
  %v301 = vunpack.c.l.b16 %v107
  %v302 = vunpack.c.l.b16 %v108
  %v303 = vunpack.c.l.b16 %v109
  %v304 = vunpack.c.l.b16 %v110
  %v305 = vunpack.c.l.b16 %v111
  %v306 = vunpack.c.l.b16 %v112
  %v307 = vunpack.c.l.b16 %v113
  %v308 = vunpack.c.l.b16 %v114
  %v309 = vpack.c.b16 %v238, %v237
  %v310 = vpack.c.b16 %v240, %v239
  %v311 = vpack.c.b16 %v242, %v241
  %v312 = vpack.c.b16 %v244, %v243
  %v313 = vpack.c.b16 %v246, %v245
  %v314 = vpack.c.b16 %v248, %v247
  %v315 = vpack.c.b16 %v250, %v249
  %v316 = vpack.c.b16 %v252, %v251
  %v317 = vpack.c.b16 %v254, %v253
  %v318 = vpack.c.b16 %v256, %v255
  %v319 = vpack.c.b16 %v258, %v257
  %v320 = vpack.c.b16 %v260, %v259
  %v321 = vpack.c.b16 %v262, %v261
  %v322 = vpack.c.b16 %v264, %v263
  %v323 = vpack.c.b16 %v266, %v265
  %v324 = vpack.c.b16 %v268, %v267
  %v325 = vpack.c.b16 %v270, %v269
  %v326 = vpack.c.b16 %v272, %v271
  %v327 = vpack.c.b16 %v274, %v273
  %v328 = vpack.c.b16 %v276, %v275
  %v329 = vpack.c.b16 %v278, %v277
  %v330 = vpack.c.b16 %v280, %v279
  %v331 = vpack.c.b16 %v282, %v281
  %v332 = vpack.c.b16 %v284, %v283
  %v333 = vpack.c.b16 %v286, %v285
  %v334 = vpack.c.b16 %v288, %v287
  %v335 = vpack.c.b16 %v290, %v289
  %v336 = vpack.c.b16 %v292, %v291
  %v337 = vpack.c.b16 %v294, %v293
  %v338 = vpack.c.b16 %v296, %v295
  %v339 = vpack.c.b16 %v298, %v297
  %v340 = vpack.c.b16 %v300, %v299
  %v341 = vpack.c.b16 %v302, %v301
  %v342 = vpack.c.b16 %v304, %v303
  %v343 = vpack.c.b16 %v306, %v305
  %v344 = vpack.c.b16 %v308, %v307
  %vm381 = vcmask 523264
  %v383 = vsel %vm381, %v151, 0
  %v386 = vsel %vm381, %v156, 0
  %388 = vmatprep.subr.bf16.mxu0 0
  %389 = vmatpush1.bf16.msra.mxu0 %v309
  %390 = vmatprep.subr.bf16.mxu0 0
  %391 = vmatpush1.bf16.msra.mxu0 %v310
  %392 = vmatprep.subr.bf16.mxu0 0
  %393 = vmatpush1.bf16.msra.mxu0 %v311
  %394 = vmatprep.subr.bf16.mxu0 0
  %395 = vmatpush1.bf16.msra.mxu0 %v312
  %396 = vmatprep.subr.bf16.mxu0 0
  %397 = vmatpush1.bf16.msra.mxu0 %v313
  %398 = vmatprep.subr.bf16.mxu0 0
  %399 = vmatpush1.bf16.msra.mxu0 %v314
  %400 = vmatprep.subr.bf16.mxu0 0
  %401 = vmatpush1.bf16.msra.mxu0 %v315
  %402 = vmatprep.subr.bf16.mxu0 0
  %403 = vmatpush1.bf16.msra.mxu0 %v316
  %404 = vmatprep.subr.bf16.mxu0 0
  %405 = vmatpush1.bf16.msra.mxu0 %v317
  %406 = vmatprep.subr.bf16.mxu0 0
  %407 = vmatpush1.bf16.msra.mxu0 %v318
  %408 = vmatprep.subr.bf16.mxu0 0
  %409 = vmatpush1.bf16.msra.mxu0 %v319
  %410 = vmatprep.subr.bf16.mxu0 0
  %411 = vmatpush1.bf16.msra.mxu0 %v320
  %412 = vmatprep.subr.bf16.mxu0 0
  %413 = vmatpush1.bf16.msra.mxu0 %v321
  %414 = vmatprep.subr.bf16.mxu0 0
  %415 = vmatpush1.bf16.msra.mxu0 %v322
  %416 = vmatprep.subr.bf16.mxu0 0
  %417 = vmatpush1.bf16.msra.mxu0 %v323
  %418 = vmatprep.subr.bf16.mxu0 0
  %419 = vmatpush1.bf16.msra.mxu0 %v324
  %420 = vmatprep.mubr.bf16.mxu0 %v148
  %421 = vmatmul.mubr.bf16.gmra.mrb[0].mxu0 %v147
  %v422 = vpop.f32.mrb[0].mxu0
  %v423 = vadd.f32 0.0, %v422
  %v424 = vpop.f32.mrb[0].mxu0
  %v425 = vpop.f32.mrb[0].mxu0
  %v426 = vadd.f32 0.0, %v425
  %v427 = vpop.f32.mrb[0].mxu0
  %428 = vmatprep.mubr.bf16.mxu0 %v153
  %429 = vmatmul.mubr.bf16.gmra.mrb[0].mxu0 %v152
  %v430 = vpop.f32.mrb[0].mxu0
  %v431 = vadd.f32 0.0, %v430
  %v432 = vpop.f32.mrb[0].mxu0
  %v433 = vpop.f32.mrb[0].mxu0
  %v434 = vadd.f32 0.0, %v433
  %v435 = vpop.f32.mrb[0].mxu0
  %436 = vdwg.mxu0
  %437 = vmatprep.subr.bf16.mxu0 0
  %438 = vmatpush1.bf16.msra.mxu0 %v325
  %439 = vmatprep.subr.bf16.mxu0 0
  %440 = vmatpush1.bf16.msra.mxu0 %v326
  %441 = vmatprep.subr.bf16.mxu0 0
  %442 = vmatpush1.bf16.msra.mxu0 %v327
  %443 = vmatprep.subr.bf16.mxu0 0
  %444 = vmatpush1.bf16.msra.mxu0 %v328
  %445 = vmatprep.subr.bf16.mxu0 0
  %446 = vmatpush1.bf16.msra.mxu0 %v329
  %447 = vmatprep.subr.bf16.mxu0 0
  %448 = vmatpush1.bf16.msra.mxu0 %v330
  %449 = vmatprep.subr.bf16.mxu0 0
  %450 = vmatpush1.bf16.msra.mxu0 %v331
  %451 = vmatprep.subr.bf16.mxu0 0
  %452 = vmatpush1.bf16.msra.mxu0 %v332
  %453 = vmatprep.subr.bf16.mxu0 0
  %454 = vmatpush1.bf16.msra.mxu0 %v333
  %455 = vmatprep.subr.bf16.mxu0 0
  %456 = vmatpush1.bf16.msra.mxu0 %v334
  %457 = vmatprep.subr.bf16.mxu0 0
  %458 = vmatpush1.bf16.msra.mxu0 %v335
  %459 = vmatprep.subr.bf16.mxu0 0
  %460 = vmatpush1.bf16.msra.mxu0 %v336
  %461 = vmatprep.subr.bf16.mxu0 0
  %462 = vmatpush1.bf16.msra.mxu0 %v337
  %463 = vmatprep.subr.bf16.mxu0 0
  %464 = vmatpush1.bf16.msra.mxu0 %v338
  %465 = vmatprep.subr.bf16.mxu0 0
  %466 = vmatpush1.bf16.msra.mxu0 %v339
  %467 = vmatprep.subr.bf16.mxu0 0
  %468 = vmatpush1.bf16.msra.mxu0 %v340
  %469 = vmatprep.mubr.bf16.mxu0 %v150
  %470 = vmatmul.mubr.bf16.gmra.mrb[0].mxu0 %v149
  %v471 = vpop.f32.mrb[0].mxu0
  %v472 = vadd.f32 %v423, %v471
  %v473 = vpop.f32.mrb[0].mxu0
  %v474 = vpop.f32.mrb[0].mxu0
  %v475 = vadd.f32 %v426, %v474
  %v476 = vpop.f32.mrb[0].mxu0
  %477 = vmatprep.mubr.bf16.mxu0 %v155
  %478 = vmatmul.mubr.bf16.gmra.mrb[0].mxu0 %v154
  %v479 = vpop.f32.mrb[0].mxu0
  %v480 = vadd.f32 %v431, %v479
  %v481 = vpop.f32.mrb[0].mxu0
  %v482 = vpop.f32.mrb[0].mxu0
  %v483 = vadd.f32 %v434, %v482
  %v484 = vpop.f32.mrb[0].mxu0
  %485 = vdwg.mxu0
  %486 = vmatprep.subr.bf16.mxu0 0
  %487 = vmatpush1.bf16.msra.mxu0 %v341
  %488 = vmatprep.subr.bf16.mxu0 0
  %489 = vmatpush1.bf16.msra.mxu0 %v342
  %490 = vmatprep.subr.bf16.mxu0 0
  %491 = vmatpush1.bf16.msra.mxu0 %v343
  %492 = vmatprep.subr.bf16.mxu0 0
  %493 = vmatpush1.bf16.msra.mxu0 %v344
  %494 = vmatprep.subr.bf16.mxu0 0
  %495 = vmatpush1.bf16.msra.mxu0 0
  %496 = vmatprep.subr.bf16.mxu0 0
  %497 = vmatpush1.bf16.msra.mxu0 0
  %498 = vmatprep.subr.bf16.mxu0 0
  %499 = vmatpush1.bf16.msra.mxu0 0
  %500 = vmatprep.subr.bf16.mxu0 0
  %501 = vmatpush1.bf16.msra.mxu0 0
  %502 = vmatprep.subr.bf16.mxu0 0
  %503 = vmatpush1.bf16.msra.mxu0 0
  %504 = vmatprep.subr.bf16.mxu0 0
  %505 = vmatpush1.bf16.msra.mxu0 0
  %506 = vmatprep.subr.bf16.mxu0 0
  %507 = vmatpush1.bf16.msra.mxu0 0
  %508 = vmatprep.subr.bf16.mxu0 0
  %509 = vmatpush1.bf16.msra.mxu0 0
  %510 = vmatprep.subr.bf16.mxu0 0
  %511 = vmatpush1.bf16.msra.mxu0 0
  %512 = vmatprep.subr.bf16.mxu0 0
  %513 = vmatpush1.bf16.msra.mxu0 0
  %514 = vmatprep.subr.bf16.mxu0 0
  %515 = vmatpush1.bf16.msra.mxu0 0
  %516 = vmatprep.subr.bf16.mxu0 0
  %517 = vmatpush1.bf16.msra.mxu0 0
  %518 = vmatprep.mubr.bf16.mxu0 0
  %519 = vmatmul.mubr.bf16.gmra.mrb[0].mxu0 %v383
  %v520 = vpop.f32.mrb[0].mxu0
  %v521 = vadd.f32 %v472, %v520
  %v522 = vpop.f32.mrb[0].mxu0
  %v523 = vpop.f32.mrb[0].mxu0
  %v524 = vadd.f32 %v475, %v523
  %v525 = vpop.f32.mrb[0].mxu0
  %526 = vmatprep.mubr.bf16.mxu0 0
  %527 = vmatmul.mubr.bf16.gmra.mrb[0].mxu0 %v386
  %v528 = vpop.f32.mrb[0].mxu0
  %v529 = vadd.f32 %v480, %v528
  %v530 = vpop.f32.mrb[0].mxu0
  %v531 = vpop.f32.mrb[0].mxu0
  %v532 = vadd.f32 %v483, %v531
  %v533 = vpop.f32.mrb[0].mxu0
  %534 = vdwg.mxu0
  %v535 = vld [vmem:[#allocation2] sm:$0xff]
  %v536 = vld [vmem:[#allocation2 + $0x8] sm:$0xff]
  %v537 = vld [vmem:[#allocation2 + $0x10] sm:$0xff]
  %v538 = vld [vmem:[#allocation2 + $0x18] sm:$0xff]
  %539 = vadd.xlane.f32.xlu0 %v521
  %v540 = vpop.xlane.xlu0 %539
  %541 = vadd.xlane.f32.xlu0 %v524
  %v542 = vpop.xlane.xlu0 %541
  %543 = vadd.xlane.f32.xlu0 %v529
  %v544 = vpop.xlane.xlu0 %543
  %545 = vadd.xlane.f32.xlu0 %v532
  %v546 = vpop.xlane.xlu0 %545
  %v547 = vadd.f32 %v535, %v540
  %v548 = vadd.f32 %v536, %v542
  %v549 = vadd.f32 %v537, %v544
  %v550 = vadd.f32 %v538, %v546
  %vm551 = vcmask 7168
  %552 = vst.msk [vmem:[#allocation2] sm:$0xff] %vm551, %v547
  %553 = vst.msk [vmem:[#allocation2 + $0x8] sm:$0xff] %vm551, %v548
  %554 = vst.msk [vmem:[#allocation2 + $0x10] sm:$0xff] %vm551, %v549
  %555 = vst.msk [vmem:[#allocation2 + $0x18] sm:$0xff] %vm551, %v550
  %v556 = vld [vmem:[#allocation3] sm:$0xff]
  %v557 = vld [vmem:[#allocation3 + $0x8] sm:$0xff]
  %v558 = vld [vmem:[#allocation3 + $0x10] sm:$0xff]
  %v559 = vld [vmem:[#allocation3 + $0x18] sm:$0xff]
  %v560 = vmul.f32 %v521, %v521
  %v561 = vmul.f32 %v524, %v524
  %v562 = vmul.f32 %v529, %v529
  %v563 = vmul.f32 %v532, %v532
  %564 = vadd.xlane.f32.xlu0 %v560
  %v565 = vpop.xlane.xlu0 %564
  %566 = vadd.xlane.f32.xlu0 %v561
  %v567 = vpop.xlane.xlu0 %566
  %568 = vadd.xlane.f32.xlu0 %v562
  %v569 = vpop.xlane.xlu0 %568
  %570 = vadd.xlane.f32.xlu0 %v563
  %v571 = vpop.xlane.xlu0 %570
  %v572 = vadd.f32 %v556, %v565
  %v573 = vadd.f32 %v557, %v567
  %v574 = vadd.f32 %v558, %v569
  %v575 = vadd.f32 %v559, %v571
  %576 = vst.msk [vmem:[#allocation3] sm:$0xff] %vm551, %v572
  %577 = vst.msk [vmem:[#allocation3 + $0x8] sm:$0xff] %vm551, %v573
  %578 = vst.msk [vmem:[#allocation3 + $0x10] sm:$0xff] %vm551, %v574
  %579 = vst.msk [vmem:[#allocation3 + $0x18] sm:$0xff] %vm551, %v575
  %s580 = smul.u32 0, 128
  %s581 = sshra.s32 %s580, 7
  %s582 = sand.u32 %s580, 127
  %s583 = scalar_lea.vmem %s4, %s581
  %584 = vst [vmem:[%s583] sm:$0xff] %v521
  %585 = vst [vmem:[%s583 + $0x8] sm:$0xff] %v524
  %586 = vst [vmem:[%s583 + $0x10] sm:$0xff] %v529
  %587 = vst [vmem:[%s583 + $0x18] sm:$0xff] %v532
  // Predicated region
  $region22: #{conv_cvae_forward.19} parent=0 // pred_check
    %p588 = pneg %p18
  $region23: #{conv_cvae_forward.19} parent=0 // pred_check_branch
    %590 = sbr.rel (%p588) target = $region25
  $region24: #{conv_cvae_forward.19} parent=0 // pred_region
    %v591 = vld [vmem:[#allocation2] sm:$0xff]
    %v592 = vld [vmem:[#allocation2 + $0x8] sm:$0xff]
    %v593 = vld [vmem:[#allocation2 + $0x10] sm:$0xff]
    %v594 = vld [vmem:[#allocation2 + $0x18] sm:$0xff]
    %v595 = vmul.f32 %v591, 0.03125
    %v596 = vmul.f32 %v592, 0.03125
    %v597 = vmul.f32 %v593, 0.03125
    %v598 = vmul.f32 %v594, 0.03125
    %v599 = vld [vmem:[#allocation3] sm:$0xff]
    %v600 = vld [vmem:[#allocation3 + $0x8] sm:$0xff]
    %v601 = vld [vmem:[#allocation3 + $0x10] sm:$0xff]
    %v602 = vld [vmem:[#allocation3 + $0x18] sm:$0xff]
    %v603 = vmul.f32 %v599, 0.03125
    %v604 = vmul.f32 %v600, 0.03125
    %v605 = vmul.f32 %v601, 0.03125
    %v606 = vmul.f32 %v602, 0.03125
    %v607 = vmul.f32 %v595, %v595
    %v608 = vmul.f32 %v596, %v596
    %v609 = vmul.f32 %v597, %v597
    %v610 = vmul.f32 %v598, %v598
    %v611 = vsub.f32 %v603, %v607
    %v612 = vsub.f32 %v604, %v608
    %v613 = vsub.f32 %v605, %v609
    %v614 = vsub.f32 %v606, %v610
    %v615 = vld [vmem:[%s2] sm:$0xff]
    %v616 = vld [vmem:[%s2 + $0x8] sm:$0xff]
    %v617 = vld [vmem:[%s2 + $0x10] sm:$0xff]
    %v618 = vld [vmem:[%s2 + $0x18] sm:$0xff]
    %v619 = vadd.f32 %v611, 1e-05
    %v620 = vadd.f32 %v612, 1e-05
    %v621 = vadd.f32 %v613, 1e-05
    %v622 = vadd.f32 %v614, 1e-05
    %v623 = vrsqrt.pop %v619
    %v624 = vrsqrt.pop %v620
    %v625 = vrsqrt.pop %v621
    %v626 = vrsqrt.pop %v622
    %v627 = vmul.f32 %v615, %v623
    %v628 = vmul.f32 %v616, %v624
    %v629 = vmul.f32 %v617, %v625
    %v630 = vmul.f32 %v618, %v626
    %v631 = vld [vmem:[%s3] sm:$0xff]
    %v632 = vld [vmem:[%s3 + $0x8] sm:$0xff]
    %v633 = vld [vmem:[%s3 + $0x10] sm:$0xff]
    %v634 = vld [vmem:[%s3 + $0x18] sm:$0xff]
    %v635 = vmul.f32 %v595, %v627
    %v636 = vmul.f32 %v596, %v628
    %v637 = vmul.f32 %v597, %v629
    %v638 = vmul.f32 %v598, %v630
    %v639 = vsub.f32 %v631, %v635
    %v640 = vsub.f32 %v632, %v636
    %v641 = vsub.f32 %v633, %v637
    %v642 = vsub.f32 %v634, %v638
    %v643 = vld [vmem:[%s4] sm:$0xff]
    %v644 = vld [vmem:[%s4 + $0x8] sm:$0xff]
    %v645 = vld [vmem:[%s4 + $0x10] sm:$0xff]
    %v646 = vld [vmem:[%s4 + $0x18] sm:$0xff]
    %648 = vset.pattern.permute.xlu0 0
    %649 = vperm.xlu0 %648, %v627
    %v650 = vpop.permute.xlu0 %649
    %653 = vset.pattern.permute.xlu0 0
    %654 = vperm.xlu0 %653, %v628
    %v655 = vpop.permute.xlu0 %654
    %658 = vset.pattern.permute.xlu0 0
    %659 = vperm.xlu0 %658, %v629
    %v660 = vpop.permute.xlu0 %659
    %663 = vset.pattern.permute.xlu0 0
    %664 = vperm.xlu0 %663, %v630
    %v665 = vpop.permute.xlu0 %664
    %v667 = vmul.f32 %v643, %v650
    %v668 = vmul.f32 %v644, %v655
    %v669 = vmul.f32 %v645, %v660
    %v670 = vmul.f32 %v646, %v665
    %672 = vset.pattern.permute.xlu0 0
    %673 = vperm.xlu0 %672, %v639
    %v674 = vpop.permute.xlu0 %673
    %677 = vset.pattern.permute.xlu0 0
    %678 = vperm.xlu0 %677, %v640
    %v679 = vpop.permute.xlu0 %678
    %682 = vset.pattern.permute.xlu0 0
    %683 = vperm.xlu0 %682, %v641
    %v684 = vpop.permute.xlu0 %683
    %687 = vset.pattern.permute.xlu0 0
    %688 = vperm.xlu0 %687, %v642
    %v689 = vpop.permute.xlu0 %688
    %v691 = vadd.f32 %v667, %v674
    %v692 = vadd.f32 %v668, %v679
    %v693 = vadd.f32 %v669, %v684
    %v694 = vadd.f32 %v670, %v689
    %vm695 = vcmp.ge.f32.partialorder %v691, 0.0
    %vm696 = vcmp.ge.f32.partialorder %v692, 0.0
    %vm697 = vcmp.ge.f32.partialorder %v693, 0.0
    %vm698 = vcmp.ge.f32.partialorder %v694, 0.0
    %v699 = vmul.f32 %v691, 0.01
    %v700 = vmul.f32 %v692, 0.01
    %v701 = vmul.f32 %v693, 0.01
    %v702 = vmul.f32 %v694, 0.01
    %v703 = vsel %vm695, %v691, %v699
    %v704 = vsel %vm696, %v692, %v700
    %v705 = vsel %vm697, %v693, %v701
    %v706 = vsel %vm698, %v694, %v702
    %707 = vst [vmem:[%s4] sm:$0xff] %v703
    %708 = vst [vmem:[%s4 + $0x8] sm:$0xff] %v704
    %709 = vst [vmem:[%s4 + $0x10] sm:$0xff] %v705
    %710 = vst [vmem:[%s4 + $0x18] sm:$0xff] %v706
  $region25: #{conv_cvae_forward.19} parent=0 // pred_fallthru
    _
  // Predicated region
  $region26: #{conv_cvae_forward.19} parent=0 // pred_check
    _
  $region27: #{conv_cvae_forward.19} parent=0 // pred_check_branch
    %712 = sbr.rel (0) target = $region29
  $region28: #{conv_cvae_forward.19} parent=0 // pred_region
    _
  $region29: #{conv_cvae_forward.19} parent=0 // pred_fallthru
    _
  // Predicated region
  $region30: #{conv_cvae_forward.19} parent=0 // pred_check
    _
  $region31: #{conv_cvae_forward.19} parent=0 // pred_check_branch
    %714 = sbr.rel (0) target = $region33
  $region32: #{conv_cvae_forward.19} parent=0 // pred_region
    _
  $region33: #{conv_cvae_forward.19} parent=0 // pred_fallthru
    _

// kernel: conv_cvae_forward.20
$region0: #{conv_cvae_forward.20}
  #allocation0 [shape = 'u32[]', space=smem, size = 0x4, offset = 0x4, fixed_abs, tag = 'smem constant byte address 0x4 - core index']
  #allocation1 [shape = 'u32[144,128]{1,0:T(1,128)}', space=vmem, size = 0x12000, scoped, tag = 'internal scratch']
  #allocation2 [shape = 'f32[16,1]{1,0:T(8,128)}', space=vmem, size = 0x2000, scoped, tag = 'scratch operand']
  #allocation3 [shape = 'f32[16,1]{1,0:T(8,128)}', space=vmem, size = 0x2000, scoped, tag = 'scratch operand']
  %s0 = inlined_call_operand.vmem [shape: bf16[288,128], index: 0, kind: input, shape index: {}]
  %s1 = inlined_call_operand.vmem [shape: bf16[16,288], index: 1, kind: input, shape index: {}]
  %s2 = inlined_call_operand.vmem [shape: f32[16,1], index: 2, kind: input, shape index: {}]
  %s3 = inlined_call_operand.vmem [shape: f32[16,1], index: 3, kind: input, shape index: {}]
  %s4 = inlined_call_operand.vmem [shape: f32[16,128], index: 4, kind: output, shape index: {}]
  %s5 = sld [smem:[#allocation0]]
  $region34: #{conv_cvae_forward.20} parent=0
    _
  %s7 = ssub.s32 1, %s5
  %s8 = scalar_select 0, %s7, %s5
  // Predicated region
  $region2: #{conv_cvae_forward.20} parent=0 // pred_check
    _
  $region3: #{conv_cvae_forward.20} parent=0 // pred_check_branch
    %10 = sbr.rel (0) target = $region5
  $region4: #{conv_cvae_forward.20} parent=0 // pred_region
    _
  $region5: #{conv_cvae_forward.20} parent=0 // pred_fallthru
    _
  // Predicated region
  $region6: #{conv_cvae_forward.20} parent=0 // pred_check
    _
  $region7: #{conv_cvae_forward.20} parent=0 // pred_check_branch
    %12 = sbr.rel (0) target = $region9
  $region8: #{conv_cvae_forward.20} parent=0 // pred_region
    _
  $region9: #{conv_cvae_forward.20} parent=0 // pred_fallthru
    _
  // Predicated region
  $region10: #{conv_cvae_forward.20} parent=0 // pred_check
    _
  $region11: #{conv_cvae_forward.20} parent=0 // pred_check_branch
    %14 = sbr.rel (0) target = $region13
  $region12: #{conv_cvae_forward.20} parent=0 // pred_region
    _
  $region13: #{conv_cvae_forward.20} parent=0 // pred_fallthru
    _
  // Predicated region
  $region14: #{conv_cvae_forward.20} parent=0 // pred_check
    _
  $region15: #{conv_cvae_forward.20} parent=0 // pred_check_branch
    %16 = sbr.rel (0) target = $region17
  $region16: #{conv_cvae_forward.20} parent=0 // pred_region
    _
  $region17: #{conv_cvae_forward.20} parent=0 // pred_fallthru
    _
  %p18 = scmp.eq.s32.totalorder 0, 0
  // Predicated region
  $region18: #{conv_cvae_forward.20} parent=0 // pred_check
    %p19 = pneg %p18
  $region19: #{conv_cvae_forward.20} parent=0 // pred_check_branch
    %21 = sbr.rel (%p19) target = $region21
  $region20: #{conv_cvae_forward.20} parent=0 // pred_region
    %vm22 = vcmask 7168
    %23 = vst.msk [vmem:[#allocation2] sm:$0xff] %vm22, 0.0
    %24 = vst.msk [vmem:[#allocation2 + $0x8] sm:$0xff] %vm22, 0.0
    %25 = vst.msk [vmem:[#allocation3] sm:$0xff] %vm22, 0.0
    %26 = vst.msk [vmem:[#allocation3 + $0x8] sm:$0xff] %vm22, 0.0
  $region21: #{conv_cvae_forward.20} parent=0 // pred_fallthru
    _
  %v27 = vld [vmem:[%s1] sm:$0xff]
  %v28 = vld [vmem:[%s1 + $0x8] sm:$0xf]
  %v29 = vld [vmem:[%s1 + $0xc] sm:$0xff]
  %v30 = vld [vmem:[%s1 + $0x14] sm:$0xf]
  %v31 = vld [vmem:[%s0] sm:$0xf]
  %v32 = vld [vmem:[%s0 + $0x4] sm:$0xf]
  %v33 = vld [vmem:[%s0 + $0x8] sm:$0xf]
  %v34 = vld [vmem:[%s0 + $0xc] sm:$0xf]
  %v35 = vld [vmem:[%s0 + $0x10] sm:$0xf]
  %v36 = vld [vmem:[%s0 + $0x14] sm:$0xf]
  %v37 = vld [vmem:[%s0 + $0x18] sm:$0xf]
  %v38 = vld [vmem:[%s0 + $0x1c] sm:$0xf]
  %v39 = vld [vmem:[%s0 + $0x20] sm:$0xf]
  %v40 = vld [vmem:[%s0 + $0x24] sm:$0xf]
  %v41 = vld [vmem:[%s0 + $0x28] sm:$0xf]
  %v42 = vld [vmem:[%s0 + $0x2c] sm:$0xf]
  %v43 = vld [vmem:[%s0 + $0x30] sm:$0xf]
  %v44 = vld [vmem:[%s0 + $0x34] sm:$0xf]
  %v45 = vld [vmem:[%s0 + $0x38] sm:$0xf]
  %v46 = vld [vmem:[%s0 + $0x3c] sm:$0xf]
  %v47 = vld [vmem:[%s0 + $0x40] sm:$0xf]
  %v48 = vld [vmem:[%s0 + $0x44] sm:$0xf]
  %v49 = vld [vmem:[%s0 + $0x48] sm:$0xf]
  %v50 = vld [vmem:[%s0 + $0x4c] sm:$0xf]
  %v51 = vld [vmem:[%s0 + $0x50] sm:$0xf]
  %v52 = vld [vmem:[%s0 + $0x54] sm:$0xf]
  %v53 = vld [vmem:[%s0 + $0x58] sm:$0xf]
  %v54 = vld [vmem:[%s0 + $0x5c] sm:$0xf]
  %v55 = vld [vmem:[%s0 + $0x60] sm:$0xf]
  %v56 = vld [vmem:[%s0 + $0x64] sm:$0xf]
  %v57 = vld [vmem:[%s0 + $0x68] sm:$0xf]
  %v58 = vld [vmem:[%s0 + $0x6c] sm:$0xf]
  %v59 = vld [vmem:[%s0 + $0x70] sm:$0xf]
  %v60 = vld [vmem:[%s0 + $0x74] sm:$0xf]
  %v61 = vld [vmem:[%s0 + $0x78] sm:$0xf]
  %v62 = vld [vmem:[%s0 + $0x7c] sm:$0xf]
  %v63 = vld [vmem:[%s0 + $0x80] sm:$0xf]
  %v64 = vld [vmem:[%s0 + $0x84] sm:$0xf]
  %v65 = vld [vmem:[%s0 + $0x88] sm:$0xf]
  %v66 = vld [vmem:[%s0 + $0x8c] sm:$0xf]
  %v71 = vunpack.c.l.b16 %v27
  %v72 = vunpack.c.h.b16 %v27
  %v73 = vunpack.c.l.b16 %v28
  %v74 = vunpack.c.l.b16 %v29
  %v75 = vunpack.c.h.b16 %v29
  %v76 = vunpack.c.l.b16 %v30
  %v77 = vpack.c.b16 %v74, %v71
  %v78 = vpack.c.b16 %v75, %v72
  %v79 = vpack.c.b16 %v76, %v73
  %v118 = vunpack.c.l.b16 %v31
  %v119 = vunpack.c.l.b16 %v32
  %v120 = vunpack.c.l.b16 %v33
  %v121 = vunpack.c.l.b16 %v34
  %v122 = vunpack.c.l.b16 %v35
  %v123 = vunpack.c.l.b16 %v36
  %v124 = vunpack.c.l.b16 %v37
  %v125 = vunpack.c.l.b16 %v38
  %v126 = vunpack.c.l.b16 %v39
  %v127 = vunpack.c.l.b16 %v40
  %v128 = vunpack.c.l.b16 %v41
  %v129 = vunpack.c.l.b16 %v42
  %v130 = vunpack.c.l.b16 %v43
  %v131 = vunpack.c.l.b16 %v44
  %v132 = vunpack.c.l.b16 %v45
  %v133 = vunpack.c.l.b16 %v46
  %v134 = vunpack.c.l.b16 %v47
  %v135 = vunpack.c.l.b16 %v48
  %v136 = vunpack.c.l.b16 %v49
  %v137 = vunpack.c.l.b16 %v50
  %v138 = vunpack.c.l.b16 %v51
  %v139 = vunpack.c.l.b16 %v52
  %v140 = vunpack.c.l.b16 %v53
  %v141 = vunpack.c.l.b16 %v54
  %v142 = vunpack.c.l.b16 %v55
  %v143 = vunpack.c.l.b16 %v56
  %v144 = vunpack.c.l.b16 %v57
  %v145 = vunpack.c.l.b16 %v58
  %v146 = vunpack.c.l.b16 %v59
  %v147 = vunpack.c.l.b16 %v60
  %v148 = vunpack.c.l.b16 %v61
  %v149 = vunpack.c.l.b16 %v62
  %v150 = vunpack.c.l.b16 %v63
  %v151 = vunpack.c.l.b16 %v64
  %v152 = vunpack.c.l.b16 %v65
  %v153 = vunpack.c.l.b16 %v66
  %v154 = vpack.c.b16 %v119, %v118
  %v155 = vpack.c.b16 %v121, %v120
  %v156 = vpack.c.b16 %v123, %v122
  %v157 = vpack.c.b16 %v125, %v124
  %v158 = vpack.c.b16 %v127, %v126
  %v159 = vpack.c.b16 %v129, %v128
  %v160 = vpack.c.b16 %v131, %v130
  %v161 = vpack.c.b16 %v133, %v132
  %v162 = vpack.c.b16 %v135, %v134
  %v163 = vpack.c.b16 %v137, %v136
  %v164 = vpack.c.b16 %v139, %v138
  %v165 = vpack.c.b16 %v141, %v140
  %v166 = vpack.c.b16 %v143, %v142
  %v167 = vpack.c.b16 %v145, %v144
  %v168 = vpack.c.b16 %v147, %v146
  %v169 = vpack.c.b16 %v149, %v148
  %v170 = vpack.c.b16 %v151, %v150
  %v171 = vpack.c.b16 %v153, %v152
  %vm190 = vcmask 261120
  %v192 = vsel %vm190, %v79, 0
  %194 = vmatprep.subr.bf16.mxu0 0
  %195 = vmatpush1.bf16.msra.mxu0 %v154
  %196 = vmatprep.subr.bf16.mxu0 0
  %197 = vmatpush1.bf16.msra.mxu0 %v155
  %198 = vmatprep.subr.bf16.mxu0 0
  %199 = vmatpush1.bf16.msra.mxu0 %v156
  %200 = vmatprep.subr.bf16.mxu0 0
  %201 = vmatpush1.bf16.msra.mxu0 %v157
  %202 = vmatprep.subr.bf16.mxu0 0
  %203 = vmatpush1.bf16.msra.mxu0 %v158
  %204 = vmatprep.subr.bf16.mxu0 0
  %205 = vmatpush1.bf16.msra.mxu0 %v159
  %206 = vmatprep.subr.bf16.mxu0 0
  %207 = vmatpush1.bf16.msra.mxu0 %v160
  %208 = vmatprep.subr.bf16.mxu0 0
  %209 = vmatpush1.bf16.msra.mxu0 %v161
  %210 = vmatprep.subr.bf16.mxu0 0
  %211 = vmatpush1.bf16.msra.mxu0 %v162
  %212 = vmatprep.subr.bf16.mxu0 0
  %213 = vmatpush1.bf16.msra.mxu0 %v163
  %214 = vmatprep.subr.bf16.mxu0 0
  %215 = vmatpush1.bf16.msra.mxu0 %v164
  %216 = vmatprep.subr.bf16.mxu0 0
  %217 = vmatpush1.bf16.msra.mxu0 %v165
  %218 = vmatprep.subr.bf16.mxu0 0
  %219 = vmatpush1.bf16.msra.mxu0 %v166
  %220 = vmatprep.subr.bf16.mxu0 0
  %221 = vmatpush1.bf16.msra.mxu0 %v167
  %222 = vmatprep.subr.bf16.mxu0 0
  %223 = vmatpush1.bf16.msra.mxu0 %v168
  %224 = vmatprep.subr.bf16.mxu0 0
  %225 = vmatpush1.bf16.msra.mxu0 %v169
  %226 = vmatprep.mubr.bf16.mxu0 %v78
  %227 = vmatmul.mubr.bf16.gmra.mrb[0].mxu0 %v77
  %v228 = vpop.f32.mrb[0].mxu0
  %v229 = vadd.f32 0.0, %v228
  %v230 = vpop.f32.mrb[0].mxu0
  %v231 = vpop.f32.mrb[0].mxu0
  %v232 = vadd.f32 0.0, %v231
  %v233 = vpop.f32.mrb[0].mxu0
  %234 = vdwg.mxu0
  %235 = vmatprep.subr.bf16.mxu0 0
  %236 = vmatpush1.bf16.msra.mxu0 %v170
  %237 = vmatprep.subr.bf16.mxu0 0
  %238 = vmatpush1.bf16.msra.mxu0 %v171
  %239 = vmatprep.subr.bf16.mxu0 0
  %240 = vmatpush1.bf16.msra.mxu0 0
  %241 = vmatprep.subr.bf16.mxu0 0
  %242 = vmatpush1.bf16.msra.mxu0 0
  %243 = vmatprep.subr.bf16.mxu0 0
  %244 = vmatpush1.bf16.msra.mxu0 0
  %245 = vmatprep.subr.bf16.mxu0 0
  %246 = vmatpush1.bf16.msra.mxu0 0
  %247 = vmatprep.subr.bf16.mxu0 0
  %248 = vmatpush1.bf16.msra.mxu0 0
  %249 = vmatprep.subr.bf16.mxu0 0
  %250 = vmatpush1.bf16.msra.mxu0 0
  %251 = vmatprep.subr.bf16.mxu0 0
  %252 = vmatpush1.bf16.msra.mxu0 0
  %253 = vmatprep.subr.bf16.mxu0 0
  %254 = vmatpush1.bf16.msra.mxu0 0
  %255 = vmatprep.subr.bf16.mxu0 0
  %256 = vmatpush1.bf16.msra.mxu0 0
  %257 = vmatprep.subr.bf16.mxu0 0
  %258 = vmatpush1.bf16.msra.mxu0 0
  %259 = vmatprep.subr.bf16.mxu0 0
  %260 = vmatpush1.bf16.msra.mxu0 0
  %261 = vmatprep.subr.bf16.mxu0 0
  %262 = vmatpush1.bf16.msra.mxu0 0
  %263 = vmatprep.subr.bf16.mxu0 0
  %264 = vmatpush1.bf16.msra.mxu0 0
  %265 = vmatprep.subr.bf16.mxu0 0
  %266 = vmatpush1.bf16.msra.mxu0 0
  %267 = vmatprep.mubr.bf16.mxu0 0
  %268 = vmatmul.mubr.bf16.gmra.mrb[0].mxu0 %v192
  %v269 = vpop.f32.mrb[0].mxu0
  %v270 = vadd.f32 %v229, %v269
  %v271 = vpop.f32.mrb[0].mxu0
  %v272 = vpop.f32.mrb[0].mxu0
  %v273 = vadd.f32 %v232, %v272
  %v274 = vpop.f32.mrb[0].mxu0
  %275 = vdwg.mxu0
  %v276 = vld [vmem:[#allocation2] sm:$0xff]
  %v277 = vld [vmem:[#allocation2 + $0x8] sm:$0xff]
  %278 = vadd.xlane.f32.xlu0 %v270
  %v279 = vpop.xlane.xlu0 %278
  %280 = vadd.xlane.f32.xlu0 %v273
  %v281 = vpop.xlane.xlu0 %280
  %v282 = vadd.f32 %v276, %v279
  %v283 = vadd.f32 %v277, %v281
  %vm284 = vcmask 7168
  %285 = vst.msk [vmem:[#allocation2] sm:$0xff] %vm284, %v282
  %286 = vst.msk [vmem:[#allocation2 + $0x8] sm:$0xff] %vm284, %v283
  %v287 = vld [vmem:[#allocation3] sm:$0xff]
  %v288 = vld [vmem:[#allocation3 + $0x8] sm:$0xff]
  %v289 = vmul.f32 %v270, %v270
  %v290 = vmul.f32 %v273, %v273
  %291 = vadd.xlane.f32.xlu0 %v289
  %v292 = vpop.xlane.xlu0 %291
  %293 = vadd.xlane.f32.xlu0 %v290
  %v294 = vpop.xlane.xlu0 %293
  %v295 = vadd.f32 %v287, %v292
  %v296 = vadd.f32 %v288, %v294
  %297 = vst.msk [vmem:[#allocation3] sm:$0xff] %vm284, %v295
  %298 = vst.msk [vmem:[#allocation3 + $0x8] sm:$0xff] %vm284, %v296
  %s299 = smul.u32 0, 128
  %s300 = sshra.s32 %s299, 7
  %s301 = sand.u32 %s299, 127
  %s302 = scalar_lea.vmem %s4, %s300
  %303 = vst [vmem:[%s302] sm:$0xff] %v270
  %304 = vst [vmem:[%s302 + $0x8] sm:$0xff] %v273
  // Predicated region
  $region22: #{conv_cvae_forward.20} parent=0 // pred_check
    %p305 = pneg %p18
  $region23: #{conv_cvae_forward.20} parent=0 // pred_check_branch
    %307 = sbr.rel (%p305) target = $region25
  $region24: #{conv_cvae_forward.20} parent=0 // pred_region
    %v308 = vld [vmem:[#allocation2] sm:$0xff]
    %v309 = vld [vmem:[#allocation2 + $0x8] sm:$0xff]
    %v310 = vmul.f32 %v308, 0.010204081
    %v311 = vmul.f32 %v309, 0.010204081
    %v312 = vld [vmem:[#allocation3] sm:$0xff]
    %v313 = vld [vmem:[#allocation3 + $0x8] sm:$0xff]
    %v314 = vmul.f32 %v312, 0.010204081
    %v315 = vmul.f32 %v313, 0.010204081
    %v316 = vmul.f32 %v310, %v310
    %v317 = vmul.f32 %v311, %v311
    %v318 = vsub.f32 %v314, %v316
    %v319 = vsub.f32 %v315, %v317
    %v320 = vld [vmem:[%s2] sm:$0xff]
    %v321 = vld [vmem:[%s2 + $0x8] sm:$0xff]
    %v322 = vadd.f32 %v318, 1e-05
    %v323 = vadd.f32 %v319, 1e-05
    %v324 = vrsqrt.pop %v322
    %v325 = vrsqrt.pop %v323
    %v326 = vmul.f32 %v320, %v324
    %v327 = vmul.f32 %v321, %v325
    %v328 = vld [vmem:[%s3] sm:$0xff]
    %v329 = vld [vmem:[%s3 + $0x8] sm:$0xff]
    %v330 = vmul.f32 %v310, %v326
    %v331 = vmul.f32 %v311, %v327
    %v332 = vsub.f32 %v328, %v330
    %v333 = vsub.f32 %v329, %v331
    %v334 = vld [vmem:[%s4] sm:$0xff]
    %v335 = vld [vmem:[%s4 + $0x8] sm:$0xff]
    %337 = vset.pattern.permute.xlu0 0
    %338 = vperm.xlu0 %337, %v326
    %v339 = vpop.permute.xlu0 %338
    %342 = vset.pattern.permute.xlu0 0
    %343 = vperm.xlu0 %342, %v327
    %v344 = vpop.permute.xlu0 %343
    %v346 = vmul.f32 %v334, %v339
    %v347 = vmul.f32 %v335, %v344
    %349 = vset.pattern.permute.xlu0 0
    %350 = vperm.xlu0 %349, %v332
    %v351 = vpop.permute.xlu0 %350
    %354 = vset.pattern.permute.xlu0 0
    %355 = vperm.xlu0 %354, %v333
    %v356 = vpop.permute.xlu0 %355
    %v358 = vadd.f32 %v346, %v351
    %v359 = vadd.f32 %v347, %v356
    %vm360 = vcmp.ge.f32.partialorder %v358, 0.0
    %vm361 = vcmp.ge.f32.partialorder %v359, 0.0
    %v362 = vmul.f32 %v358, 0.01
    %v363 = vmul.f32 %v359, 0.01
    %v364 = vsel %vm360, %v358, %v362
    %v365 = vsel %vm361, %v359, %v363
    %366 = vst [vmem:[%s4] sm:$0xff] %v364
    %367 = vst [vmem:[%s4 + $0x8] sm:$0xff] %v365
  $region25: #{conv_cvae_forward.20} parent=0 // pred_fallthru
    _
  // Predicated region
  $region26: #{conv_cvae_forward.20} parent=0 // pred_check
    _
  $region27: #{conv_cvae_forward.20} parent=0 // pred_check_branch
    %369 = sbr.rel (0) target = $region29
  $region28: #{conv_cvae_forward.20} parent=0 // pred_region
    _
  $region29: #{conv_cvae_forward.20} parent=0 // pred_fallthru
    _
  // Predicated region
  $region30: #{conv_cvae_forward.20} parent=0 // pred_check
    _
  $region31: #{conv_cvae_forward.20} parent=0 // pred_check_branch
    %371 = sbr.rel (0) target = $region33
  $region32: #{conv_cvae_forward.20} parent=0 // pred_region
    _
  $region33: #{conv_cvae_forward.20} parent=0 // pred_fallthru
    _

// kernel: conv_cvae_forward.21
$region0: #{conv_cvae_forward.21}
  #allocation0 [shape = 'u32[]', space=smem, size = 0x4, offset = 0x4, fixed_abs, tag = 'smem constant byte address 0x4 - core index']
  #allocation1 [shape = 'u32[144,128]{1,0:T(1,128)}', space=vmem, size = 0x12000, scoped, tag = 'internal scratch']
  #allocation2 [shape = 'f32[8,1]{1,0:T(8,128)}', space=vmem, size = 0x1000, scoped, tag = 'scratch operand']
  #allocation3 [shape = 'f32[8,1]{1,0:T(8,128)}', space=vmem, size = 0x1000, scoped, tag = 'scratch operand']
  %s0 = inlined_call_operand.vmem [shape: bf16[144,512], index: 0, kind: input, shape index: {}]
  %s1 = inlined_call_operand.vmem [shape: bf16[8,144], index: 1, kind: input, shape index: {}]
  %s2 = inlined_call_operand.vmem [shape: f32[8,1], index: 2, kind: input, shape index: {}]
  %s3 = inlined_call_operand.vmem [shape: f32[8,1], index: 3, kind: input, shape index: {}]
  %s4 = inlined_call_operand.vmem [shape: f32[8,512], index: 4, kind: output, shape index: {}]
  %s5 = sld [smem:[#allocation0]]
  $region34: #{conv_cvae_forward.21} parent=0
    _
  %s7 = ssub.s32 1, %s5
  %s8 = scalar_select 0, %s7, %s5
  // Predicated region
  $region2: #{conv_cvae_forward.21} parent=0 // pred_check
    _
  $region3: #{conv_cvae_forward.21} parent=0 // pred_check_branch
    %10 = sbr.rel (0) target = $region5
  $region4: #{conv_cvae_forward.21} parent=0 // pred_region
    _
  $region5: #{conv_cvae_forward.21} parent=0 // pred_fallthru
    _
  // Predicated region
  $region6: #{conv_cvae_forward.21} parent=0 // pred_check
    _
  $region7: #{conv_cvae_forward.21} parent=0 // pred_check_branch
    %12 = sbr.rel (0) target = $region9
  $region8: #{conv_cvae_forward.21} parent=0 // pred_region
    _
  $region9: #{conv_cvae_forward.21} parent=0 // pred_fallthru
    _
  // Predicated region
  $region10: #{conv_cvae_forward.21} parent=0 // pred_check
    _
  $region11: #{conv_cvae_forward.21} parent=0 // pred_check_branch
    %14 = sbr.rel (0) target = $region13
  $region12: #{conv_cvae_forward.21} parent=0 // pred_region
    _
  $region13: #{conv_cvae_forward.21} parent=0 // pred_fallthru
    _
  // Predicated region
  $region14: #{conv_cvae_forward.21} parent=0 // pred_check
    _
  $region15: #{conv_cvae_forward.21} parent=0 // pred_check_branch
    %16 = sbr.rel (0) target = $region17
  $region16: #{conv_cvae_forward.21} parent=0 // pred_region
    _
  $region17: #{conv_cvae_forward.21} parent=0 // pred_fallthru
    _
  %p18 = scmp.eq.s32.totalorder 0, 0
  // Predicated region
  $region18: #{conv_cvae_forward.21} parent=0 // pred_check
    %p19 = pneg %p18
  $region19: #{conv_cvae_forward.21} parent=0 // pred_check_branch
    %21 = sbr.rel (%p19) target = $region21
  $region20: #{conv_cvae_forward.21} parent=0 // pred_region
    %vm22 = vcmask 7168
    %23 = vst.msk [vmem:[#allocation2] sm:$0xff] %vm22, 0.0
    %24 = vst.msk [vmem:[#allocation3] sm:$0xff] %vm22, 0.0
  $region21: #{conv_cvae_forward.21} parent=0 // pred_fallthru
    _
  %v25 = vld [vmem:[%s1] sm:$0xff]
  %v26 = vld [vmem:[%s0] sm:$0xff]
  %v27 = vld [vmem:[%s0 + $0x8] sm:$0xff]
  %v28 = vld [vmem:[%s0 + $0x10] sm:$0xff]
  %v29 = vld [vmem:[%s0 + $0x18] sm:$0xff]
  %v30 = vld [vmem:[%s0 + $0x20] sm:$0xff]
  %v31 = vld [vmem:[%s0 + $0x28] sm:$0xff]
  %v32 = vld [vmem:[%s0 + $0x30] sm:$0xff]
  %v33 = vld [vmem:[%s0 + $0x38] sm:$0xff]
  %v34 = vld [vmem:[%s0 + $0x40] sm:$0xff]
  %v35 = vld [vmem:[%s0 + $0x48] sm:$0xff]
  %v36 = vld [vmem:[%s0 + $0x50] sm:$0xff]
  %v37 = vld [vmem:[%s0 + $0x58] sm:$0xff]
  %v38 = vld [vmem:[%s0 + $0x60] sm:$0xff]
  %v39 = vld [vmem:[%s0 + $0x68] sm:$0xff]
  %v40 = vld [vmem:[%s0 + $0x70] sm:$0xff]
  %v41 = vld [vmem:[%s0 + $0x78] sm:$0xff]
  %v42 = vld [vmem:[%s0 + $0x80] sm:$0xff]
  %v43 = vld [vmem:[%s0 + $0x88] sm:$0xff]
  %v44 = vld [vmem:[%s0 + $0x90] sm:$0xff]
  %v45 = vld [vmem:[%s0 + $0x98] sm:$0xff]
  %v46 = vld [vmem:[%s0 + $0xa0] sm:$0xff]
  %v47 = vld [vmem:[%s0 + $0xa8] sm:$0xff]
  %v48 = vld [vmem:[%s0 + $0xb0] sm:$0xff]
  %v49 = vld [vmem:[%s0 + $0xb8] sm:$0xff]
  %v50 = vld [vmem:[%s0 + $0xc0] sm:$0xff]
  %v51 = vld [vmem:[%s0 + $0xc8] sm:$0xff]
  %v52 = vld [vmem:[%s0 + $0xd0] sm:$0xff]
  %v53 = vld [vmem:[%s0 + $0xd8] sm:$0xff]
  %v54 = vld [vmem:[%s0 + $0xe0] sm:$0xff]
  %v55 = vld [vmem:[%s0 + $0xe8] sm:$0xff]
  %v56 = vld [vmem:[%s0 + $0xf0] sm:$0xff]
  %v57 = vld [vmem:[%s0 + $0xf8] sm:$0xff]
  %v58 = vld [vmem:[%s0 + $0x100] sm:$0xff]
  %v59 = vld [vmem:[%s0 + $0x108] sm:$0xff]
  %v60 = vld [vmem:[%s0 + $0x110] sm:$0xff]
  %v61 = vld [vmem:[%s0 + $0x118] sm:$0xff]
  %v63 = vunpack.c.l.b16 %v25
  %v64 = vunpack.c.h.b16 %v25
  %v65 = vpack.c.b16 %v63, %v63
  %v66 = vpack.c.b16 %v64, %v64
  %v104 = vunpack.c.l.b16 %v26
  %v105 = vunpack.c.h.b16 %v26
  %v106 = vunpack.c.l.b16 %v27
  %v107 = vunpack.c.h.b16 %v27
  %v108 = vunpack.c.l.b16 %v28
  %v109 = vunpack.c.h.b16 %v28
  %v110 = vunpack.c.l.b16 %v29
  %v111 = vunpack.c.h.b16 %v29
  %v112 = vunpack.c.l.b16 %v30
  %v113 = vunpack.c.h.b16 %v30
  %v114 = vunpack.c.l.b16 %v31
  %v115 = vunpack.c.h.b16 %v31
  %v116 = vunpack.c.l.b16 %v32
  %v117 = vunpack.c.h.b16 %v32
  %v118 = vunpack.c.l.b16 %v33
  %v119 = vunpack.c.h.b16 %v33
  %v120 = vunpack.c.l.b16 %v34
  %v121 = vunpack.c.h.b16 %v34
  %v122 = vunpack.c.l.b16 %v35
  %v123 = vunpack.c.h.b16 %v35
  %v124 = vunpack.c.l.b16 %v36
  %v125 = vunpack.c.h.b16 %v36
  %v126 = vunpack.c.l.b16 %v37
  %v127 = vunpack.c.h.b16 %v37
  %v128 = vunpack.c.l.b16 %v38
  %v129 = vunpack.c.h.b16 %v38
  %v130 = vunpack.c.l.b16 %v39
  %v131 = vunpack.c.h.b16 %v39
  %v132 = vunpack.c.l.b16 %v40
  %v133 = vunpack.c.h.b16 %v40
  %v134 = vunpack.c.l.b16 %v41
  %v135 = vunpack.c.h.b16 %v41
  %v136 = vunpack.c.l.b16 %v42
  %v137 = vunpack.c.h.b16 %v42
  %v138 = vunpack.c.l.b16 %v43
  %v139 = vunpack.c.h.b16 %v43
  %v140 = vunpack.c.l.b16 %v44
  %v141 = vunpack.c.h.b16 %v44
  %v142 = vunpack.c.l.b16 %v45
  %v143 = vunpack.c.h.b16 %v45
  %v144 = vunpack.c.l.b16 %v46
  %v145 = vunpack.c.h.b16 %v46
  %v146 = vunpack.c.l.b16 %v47
  %v147 = vunpack.c.h.b16 %v47
  %v148 = vunpack.c.l.b16 %v48
  %v149 = vunpack.c.h.b16 %v48
  %v150 = vunpack.c.l.b16 %v49
  %v151 = vunpack.c.h.b16 %v49
  %v152 = vunpack.c.l.b16 %v50
  %v153 = vunpack.c.h.b16 %v50
  %v154 = vunpack.c.l.b16 %v51
  %v155 = vunpack.c.h.b16 %v51
  %v156 = vunpack.c.l.b16 %v52
  %v157 = vunpack.c.h.b16 %v52
  %v158 = vunpack.c.l.b16 %v53
  %v159 = vunpack.c.h.b16 %v53
  %v160 = vunpack.c.l.b16 %v54
  %v161 = vunpack.c.h.b16 %v54
  %v162 = vunpack.c.l.b16 %v55
  %v163 = vunpack.c.h.b16 %v55
  %v164 = vunpack.c.l.b16 %v56
  %v165 = vunpack.c.h.b16 %v56
  %v166 = vunpack.c.l.b16 %v57
  %v167 = vunpack.c.h.b16 %v57
  %v168 = vunpack.c.l.b16 %v58
  %v169 = vunpack.c.h.b16 %v58
  %v170 = vunpack.c.l.b16 %v59
  %v171 = vunpack.c.h.b16 %v59
  %v172 = vunpack.c.l.b16 %v60
  %v173 = vunpack.c.h.b16 %v60
  %v174 = vunpack.c.l.b16 %v61
  %v175 = vunpack.c.h.b16 %v61
  %v176 = vpack.c.b16 %v108, %v104
  %v177 = vpack.c.b16 %v109, %v105
  %v178 = vpack.c.b16 %v110, %v106
  %v179 = vpack.c.b16 %v111, %v107
  %v180 = vpack.c.b16 %v116, %v112
  %v181 = vpack.c.b16 %v117, %v113
  %v182 = vpack.c.b16 %v118, %v114
  %v183 = vpack.c.b16 %v119, %v115
  %v184 = vpack.c.b16 %v124, %v120
  %v185 = vpack.c.b16 %v125, %v121
  %v186 = vpack.c.b16 %v126, %v122
  %v187 = vpack.c.b16 %v127, %v123
  %v188 = vpack.c.b16 %v132, %v128
  %v189 = vpack.c.b16 %v133, %v129
  %v190 = vpack.c.b16 %v134, %v130
  %v191 = vpack.c.b16 %v135, %v131
  %v192 = vpack.c.b16 %v140, %v136
  %v193 = vpack.c.b16 %v141, %v137
  %v194 = vpack.c.b16 %v142, %v138
  %v195 = vpack.c.b16 %v143, %v139
  %v196 = vpack.c.b16 %v148, %v144
  %v197 = vpack.c.b16 %v149, %v145
  %v198 = vpack.c.b16 %v150, %v146
  %v199 = vpack.c.b16 %v151, %v147
  %v200 = vpack.c.b16 %v156, %v152
  %v201 = vpack.c.b16 %v157, %v153
  %v202 = vpack.c.b16 %v158, %v154
  %v203 = vpack.c.b16 %v159, %v155
  %v204 = vpack.c.b16 %v164, %v160
  %v205 = vpack.c.b16 %v165, %v161
  %v206 = vpack.c.b16 %v166, %v162
  %v207 = vpack.c.b16 %v167, %v163
  %v208 = vpack.c.b16 %v172, %v168
  %v209 = vpack.c.b16 %v173, %v169
  %v210 = vpack.c.b16 %v174, %v170
  %v211 = vpack.c.b16 %v175, %v171
  %vm248 = vcmask 130048
  %v250 = vsel %vm248, %v66, 0
  %252 = vmatprep.subr.bf16.mxu0 %v177
  %253 = vmatpush1.bf16.msra.mxu0 %v176
  %254 = vmatprep.subr.bf16.mxu0 %v181
  %255 = vmatpush1.bf16.msra.mxu0 %v180
  %256 = vmatprep.subr.bf16.mxu0 %v185
  %257 = vmatpush1.bf16.msra.mxu0 %v184
  %258 = vmatprep.subr.bf16.mxu0 %v189
  %259 = vmatpush1.bf16.msra.mxu0 %v188
  %260 = vmatprep.subr.bf16.mxu0 %v193
  %261 = vmatpush1.bf16.msra.mxu0 %v192
  %262 = vmatprep.subr.bf16.mxu0 %v197
  %263 = vmatpush1.bf16.msra.mxu0 %v196
  %264 = vmatprep.subr.bf16.mxu0 %v201
  %265 = vmatpush1.bf16.msra.mxu0 %v200
  %266 = vmatprep.subr.bf16.mxu0 %v205
  %267 = vmatpush1.bf16.msra.mxu0 %v204
  %268 = vmatprep.subr.bf16.mxu0 %v209
  %269 = vmatpush1.bf16.msra.mxu0 %v208
  %270 = vmatprep.subr.bf16.mxu0 0
  %271 = vmatpush1.bf16.msra.mxu0 0
  %272 = vmatprep.subr.bf16.mxu0 0
  %273 = vmatpush1.bf16.msra.mxu0 0
  %274 = vmatprep.subr.bf16.mxu0 0
  %275 = vmatpush1.bf16.msra.mxu0 0
  %276 = vmatprep.subr.bf16.mxu0 0
  %277 = vmatpush1.bf16.msra.mxu0 0
  %278 = vmatprep.subr.bf16.mxu0 0
  %279 = vmatpush1.bf16.msra.mxu0 0
  %280 = vmatprep.subr.bf16.mxu0 0
  %281 = vmatpush1.bf16.msra.mxu0 0
  %282 = vmatprep.subr.bf16.mxu0 0
  %283 = vmatpush1.bf16.msra.mxu0 0
  %284 = vmatprep.mubr.bf16.mxu0 %v250
  %285 = vmatmul.mubr.bf16.gmra.mrb[0].mxu0 %v65
  %v286 = vpop.f32.mrb[0].mxu0
  %v287 = vadd.f32 0.0, %v286
  %v288 = vpop.f32.mrb[0].mxu0
  %v289 = vadd.f32 0.0, %v288
  %v290 = vpop.f32.mrb[0].mxu0
  %v291 = vpop.f32.mrb[0].mxu0
  %292 = vdwg.mxu0
  %293 = vmatprep.subr.bf16.mxu0 %v179
  %294 = vmatpush1.bf16.msra.mxu0 %v178
  %295 = vmatprep.subr.bf16.mxu0 %v183
  %296 = vmatpush1.bf16.msra.mxu0 %v182
  %297 = vmatprep.subr.bf16.mxu0 %v187
  %298 = vmatpush1.bf16.msra.mxu0 %v186
  %299 = vmatprep.subr.bf16.mxu0 %v191
  %300 = vmatpush1.bf16.msra.mxu0 %v190
  %301 = vmatprep.subr.bf16.mxu0 %v195
  %302 = vmatpush1.bf16.msra.mxu0 %v194
  %303 = vmatprep.subr.bf16.mxu0 %v199
  %304 = vmatpush1.bf16.msra.mxu0 %v198
  %305 = vmatprep.subr.bf16.mxu0 %v203
  %306 = vmatpush1.bf16.msra.mxu0 %v202
  %307 = vmatprep.subr.bf16.mxu0 %v207
  %308 = vmatpush1.bf16.msra.mxu0 %v206
  %309 = vmatprep.subr.bf16.mxu0 %v211
  %310 = vmatpush1.bf16.msra.mxu0 %v210
  %311 = vmatprep.subr.bf16.mxu0 0
  %312 = vmatpush1.bf16.msra.mxu0 0
  %313 = vmatprep.subr.bf16.mxu0 0
  %314 = vmatpush1.bf16.msra.mxu0 0
  %315 = vmatprep.subr.bf16.mxu0 0
  %316 = vmatpush1.bf16.msra.mxu0 0
  %317 = vmatprep.subr.bf16.mxu0 0
  %318 = vmatpush1.bf16.msra.mxu0 0
  %319 = vmatprep.subr.bf16.mxu0 0
  %320 = vmatpush1.bf16.msra.mxu0 0
  %321 = vmatprep.subr.bf16.mxu0 0
  %322 = vmatpush1.bf16.msra.mxu0 0
  %323 = vmatprep.subr.bf16.mxu0 0
  %324 = vmatpush1.bf16.msra.mxu0 0
  %325 = vmatprep.mubr.bf16.mxu0 %v250
  %326 = vmatmul.mubr.bf16.gmra.mrb[0].mxu0 %v65
  %v327 = vpop.f32.mrb[0].mxu0
  %v328 = vadd.f32 0.0, %v327
  %v329 = vpop.f32.mrb[0].mxu0
  %v330 = vadd.f32 0.0, %v329
  %v331 = vpop.f32.mrb[0].mxu0
  %v332 = vpop.f32.mrb[0].mxu0
  %333 = vdwg.mxu0
  %v334 = vld [vmem:[#allocation2] sm:$0xff]
  %v335 = vadd.f32 %v287, %v289
  %v336 = vadd.f32 %v335, %v328
  %v337 = vadd.f32 %v336, %v330
  %338 = vadd.xlane.f32.xlu0 %v337
  %v339 = vpop.xlane.xlu0 %338
  %v340 = vadd.f32 %v334, %v339
  %vm341 = vcmask 7168
  %342 = vst.msk [vmem:[#allocation2] sm:$0xff] %vm341, %v340
  %v343 = vld [vmem:[#allocation3] sm:$0xff]
  %v344 = vmul.f32 %v287, %v287
  %v345 = vmul.f32 %v289, %v289
  %v346 = vmul.f32 %v328, %v328
  %v347 = vmul.f32 %v330, %v330
  %v348 = vadd.f32 %v344, %v345
  %v349 = vadd.f32 %v348, %v346
  %v350 = vadd.f32 %v349, %v347
  %351 = vadd.xlane.f32.xlu0 %v350
  %v352 = vpop.xlane.xlu0 %351
  %v353 = vadd.f32 %v343, %v352
  %354 = vst.msk [vmem:[#allocation3] sm:$0xff] %vm341, %v353
  %s355 = smul.u32 0, 512
  %s356 = sshra.s32 %s355, 7
  %s357 = sand.u32 %s355, 127
  %s358 = smul.addr %s356, 8
  %s359 = scalar_lea.vmem %s4, %s358
  %360 = vst [vmem:[%s359] sm:$0xff] %v287
  %361 = vst [vmem:[%s359 + $0x8] sm:$0xff] %v289
  %362 = vst [vmem:[%s359 + $0x10] sm:$0xff] %v328
  %363 = vst [vmem:[%s359 + $0x18] sm:$0xff] %v330
  // Predicated region
  $region22: #{conv_cvae_forward.21} parent=0 // pred_check
    %p364 = pneg %p18
  $region23: #{conv_cvae_forward.21} parent=0 // pred_check_branch
    %366 = sbr.rel (%p364) target = $region25
  $region24: #{conv_cvae_forward.21} parent=0 // pred_region
    %v367 = vld [vmem:[#allocation2] sm:$0xff]
    %v368 = vmul.f32 %v367, 0.0025510204
    %v369 = vld [vmem:[#allocation3] sm:$0xff]
    %v370 = vmul.f32 %v369, 0.0025510204
    %v371 = vmul.f32 %v368, %v368
    %v372 = vsub.f32 %v370, %v371
    %v373 = vld [vmem:[%s2] sm:$0xff]
    %v374 = vadd.f32 %v372, 1e-05
    %v375 = vrsqrt.pop %v374
    %v376 = vmul.f32 %v373, %v375
    %v377 = vld [vmem:[%s3] sm:$0xff]
    %v378 = vmul.f32 %v368, %v376
    %v379 = vsub.f32 %v377, %v378
    %v380 = vld [vmem:[%s4] sm:$0xff]
    %v381 = vld [vmem:[%s4 + $0x8] sm:$0xff]
    %v382 = vld [vmem:[%s4 + $0x10] sm:$0xff]
    %v383 = vld [vmem:[%s4 + $0x18] sm:$0xff]
    %385 = vset.pattern.permute.xlu0 0
    %386 = vperm.xlu0 %385, %v376
    %v387 = vpop.permute.xlu0 %386
    %v389 = vmul.f32 %v380, %v387
    %v390 = vmul.f32 %v381, %v387
    %v391 = vmul.f32 %v382, %v387
    %v392 = vmul.f32 %v383, %v387
    %394 = vset.pattern.permute.xlu0 0
    %395 = vperm.xlu0 %394, %v379
    %v396 = vpop.permute.xlu0 %395
    %v398 = vadd.f32 %v389, %v396
    %v399 = vadd.f32 %v390, %v396
    %v400 = vadd.f32 %v391, %v396
    %v401 = vadd.f32 %v392, %v396
    %vm402 = vcmp.ge.f32.partialorder %v398, 0.0
    %vm403 = vcmp.ge.f32.partialorder %v399, 0.0
    %vm404 = vcmp.ge.f32.partialorder %v400, 0.0
    %vm405 = vcmp.ge.f32.partialorder %v401, 0.0
    %v406 = vmul.f32 %v398, 0.01
    %v407 = vmul.f32 %v399, 0.01
    %v408 = vmul.f32 %v400, 0.01
    %v409 = vmul.f32 %v401, 0.01
    %v410 = vsel %vm402, %v398, %v406
    %v411 = vsel %vm403, %v399, %v407
    %v412 = vsel %vm404, %v400, %v408
    %v413 = vsel %vm405, %v401, %v409
    %414 = vst [vmem:[%s4] sm:$0xff] %v410
    %415 = vst [vmem:[%s4 + $0x8] sm:$0xff] %v411
    %416 = vst [vmem:[%s4 + $0x10] sm:$0xff] %v412
    %417 = vst [vmem:[%s4 + $0x18] sm:$0xff] %v413
  $region25: #{conv_cvae_forward.21} parent=0 // pred_fallthru
    _
  // Predicated region
  $region26: #{conv_cvae_forward.21} parent=0 // pred_check
    _
  $region27: #{conv_cvae_forward.21} parent=0 // pred_check_branch
    %419 = sbr.rel (0) target = $region29
  $region28: #{conv_cvae_forward.21} parent=0 // pred_region
    _
  $region29: #{conv_cvae_forward.21} parent=0 // pred_fallthru
    _
  // Predicated region
  $region30: #{conv_cvae_forward.21} parent=0 // pred_check
    _
  $region31: #{conv_cvae_forward.21} parent=0 // pred_check_branch
    %421 = sbr.rel (0) target = $region33
  $region32: #{conv_cvae_forward.21} parent=0 // pred_region
    _
  $region33: #{conv_cvae_forward.21} parent=0 // pred_fallthru
    _

// kernel: conv_cvae_forward.22
$region0: #{conv_cvae_forward.22}
  #allocation0 [shape = 'u32[]', space=smem, size = 0x4, offset = 0x4, fixed_abs, tag = 'smem constant byte address 0x4 - core index']
  #allocation1 [shape = 'u32[144,128]{1,0:T(1,128)}', space=vmem, size = 0x12000, scoped, tag = 'internal scratch']
  #allocation2 [shape = 'f32[8,1]{1,0:T(8,128)}', space=vmem, size = 0x1000, scoped, tag = 'scratch operand']
  #allocation3 [shape = 'f32[8,1]{1,0:T(8,128)}', space=vmem, size = 0x1000, scoped, tag = 'scratch operand']
  %s0 = inlined_call_operand.vmem [shape: bf16[72,2048], index: 0, kind: input, shape index: {}]
  %s1 = inlined_call_operand.vmem [shape: bf16[8,72], index: 1, kind: input, shape index: {}]
  %s2 = inlined_call_operand.vmem [shape: f32[8,1], index: 2, kind: input, shape index: {}]
  %s3 = inlined_call_operand.vmem [shape: f32[8,1], index: 3, kind: input, shape index: {}]
  %s4 = inlined_call_operand.vmem [shape: f32[8,2048], index: 4, kind: output, shape index: {}]
  %s5 = sld [smem:[#allocation0]]
  $region80: #{conv_cvae_forward.22} parent=0
    _
  %s7 = ssub.s32 1, %s5
  %s8 = scalar_select 0, %s7, %s5
  $region1: #{conv_cvae_forward.22} parent=0
    #allocation4 [shape = 'u8[147456]{0}', space=vmem, size = 0x24000, scoped, tag = 'input window, operand 0']
    loop: start=0, step=1, limit=6
    $region2: #{conv_cvae_forward.22} parent=1 // loop_pre_header
      _
    $region3: #{conv_cvae_forward.22} parent=1 // loop_header
      %s10 = sphi 0, %s14
      %p11 = scmp.ge.s32.totalorder %s10, 6
      %s20 = sphi 0, %s22
      %s23 = sphi 0, %s20
      %s24 = sphi 0, %s23
      %s40 = sphi 0, %s24
      %s44 = sphi 0, %s44
      %s46 = sphi 0, %s44
      %s47 = sphi 0, %s46
      %s61 = sphi 0, %s47
      %s65 = sphi 0, %s65
      %s67 = sphi 0, %s65
      %s68 = sphi 0, %s67
      %s82 = sphi 0, %s68
      %s86 = sphi 0, %s86
      %s88 = sphi 0, %s86
      %s89 = sphi 0, %s88
      %s103 = sphi 0, %s89
      %s107 = sphi 0, %s107
      %s109 = sphi 0, %s107
      %s110 = sphi 0, %s109
      %s124 = sphi 0, %s110
    $region4: #{conv_cvae_forward.22} parent=1 // loop_header_branch
      %13 = sbr.rel (%p11) target = $region8
    $region5: #{conv_cvae_forward.22} parent=1 // loop_body
      %s15 = ssub.s32 %s10, 1
      %s16 = ssub.s32 %s10, 2
      %s17 = sadd.s32 %s10, 1
      %s18 = ssub.s32 %s10, %s17
      %p19 = scmp.eq.s32.totalorder %s18, 0
      %s21 = sadd.s32 %s20, 1
      %s22 = scalar_select %p19, %s20, %s21
      %p25 = pneg %p19
      %p26 = scmp.eq.s32.totalorder %s10, 3
      %p27 = por %p25, %p26
      %p28 = scmp.ne.s32.totalorder %s20, %s23
      %p29 = scmp.eq.s32.totalorder %s10, 0
      %p30 = por %p28, %p29
      %p31 = scmp.ne.s32.totalorder %s20, %s23
      %p32 = scmp.eq.s32.totalorder %s15, 3
      %p33 = por %p31, %p32
      %p34 = scmp.ne.s32.totalorder %s23, %s24
      %p35 = scmp.eq.s32.totalorder %s15, 0
      %p36 = por %p34, %p35
      %p37 = scmp.ne.s32.totalorder %s23, %s24
      %p38 = scmp.eq.s32.totalorder %s16, 3
      %p39 = por %p37, %p38
      %p41 = scmp.ne.s32.totalorder %s24, %s40
      %p42 = scmp.eq.s32.totalorder %s16, 0
      %p43 = por %p41, %p42
      %s45 = sadd.s32 %s44, 1
      %p48 = scmp.eq.s32.totalorder %s10, 3
      %p49 = scmp.ne.s32.totalorder %s44, %s46
      %p50 = scmp.eq.s32.totalorder %s10, 0
      %p51 = por %p49, %p50
      %p52 = scmp.ne.s32.totalorder %s44, %s46
      %p53 = scmp.eq.s32.totalorder %s15, 3
      %p54 = por %p52, %p53
      %p55 = scmp.ne.s32.totalorder %s46, %s47
      %p56 = scmp.eq.s32.totalorder %s15, 0
      %p57 = por %p55, %p56
      %p58 = scmp.ne.s32.totalorder %s46, %s47
      %p59 = scmp.eq.s32.totalorder %s16, 3
      %p60 = por %p58, %p59
      %p62 = scmp.ne.s32.totalorder %s47, %s61
      %p63 = scmp.eq.s32.totalorder %s16, 0
      %p64 = por %p62, %p63
      %s66 = sadd.s32 %s65, 1
      %p69 = scmp.eq.s32.totalorder %s10, 3
      %p70 = scmp.ne.s32.totalorder %s65, %s67
      %p71 = scmp.eq.s32.totalorder %s10, 0
      %p72 = por %p70, %p71
      %p73 = scmp.ne.s32.totalorder %s65, %s67
      %p74 = scmp.eq.s32.totalorder %s15, 3
      %p75 = por %p73, %p74
      %p76 = scmp.ne.s32.totalorder %s67, %s68
      %p77 = scmp.eq.s32.totalorder %s15, 0
      %p78 = por %p76, %p77
      %p79 = scmp.ne.s32.totalorder %s67, %s68
      %p80 = scmp.eq.s32.totalorder %s16, 3
      %p81 = por %p79, %p80
      %p83 = scmp.ne.s32.totalorder %s68, %s82
      %p84 = scmp.eq.s32.totalorder %s16, 0
      %p85 = por %p83, %p84
      %s87 = sadd.s32 %s86, 1
      %p90 = scmp.eq.s32.totalorder %s10, 3
      %p91 = scmp.ne.s32.totalorder %s86, %s88
      %p92 = scmp.eq.s32.totalorder %s10, 0
      %p93 = por %p91, %p92
      %p94 = scmp.ne.s32.totalorder %s86, %s88
      %p95 = scmp.eq.s32.totalorder %s15, 3
      %p96 = por %p94, %p95
      %p97 = scmp.ne.s32.totalorder %s88, %s89
      %p98 = scmp.eq.s32.totalorder %s15, 0
      %p99 = por %p97, %p98
      %p100 = scmp.ne.s32.totalorder %s88, %s89
      %p101 = scmp.eq.s32.totalorder %s16, 3
      %p102 = por %p100, %p101
      %p104 = scmp.ne.s32.totalorder %s89, %s103
      %p105 = scmp.eq.s32.totalorder %s16, 0
      %p106 = por %p104, %p105
      %s108 = sadd.s32 %s107, 1
      %p111 = scmp.eq.s32.totalorder %s10, 3
      %p112 = scmp.ne.s32.totalorder %s107, %s109
      %p113 = scmp.eq.s32.totalorder %s10, 0
      %p114 = por %p112, %p113
      %p115 = scmp.ne.s32.totalorder %s107, %s109
      %p116 = scmp.eq.s32.totalorder %s15, 3
      %p117 = por %p115, %p116
      %p118 = scmp.ne.s32.totalorder %s109, %s110
      %p119 = scmp.eq.s32.totalorder %s15, 0
      %p120 = por %p118, %p119
      %p121 = scmp.ne.s32.totalorder %s109, %s110
      %p122 = scmp.eq.s32.totalorder %s16, 3
      %p123 = por %p121, %p122
      %p125 = scmp.ne.s32.totalorder %s110, %s124
      %p126 = scmp.eq.s32.totalorder %s16, 0
      %p127 = por %p125, %p126
      %p128 = scmp.le.s32.totalorder 1, %s10
      %p129 = scmp.lt.s32.totalorder %s10, 5
      %p130 = pnand %p128, %p129
      %p131 = pneg %p130
      // Predicated region
      $region9: #{conv_cvae_forward.22} parent=5 // pred_check
        _
      $region10: #{conv_cvae_forward.22} parent=5 // pred_check_branch
        %133 = sbr.rel (%p130) target = $region12
      $region11: #{conv_cvae_forward.22} parent=5 // pred_region
        %s134 = ssub.s32 %s10, 1
        // Predicated region
        $region13: #{conv_cvae_forward.22} parent=11 // pred_check
          %p135 = pneg %p57
        $region14: #{conv_cvae_forward.22} parent=11 // pred_check_branch
          %137 = sbr.rel (%p135) target = $region16
        $region15: #{conv_cvae_forward.22} parent=11 // pred_region
          _
        $region16: #{conv_cvae_forward.22} parent=11 // pred_fallthru
          _
        // Predicated region
        $region17: #{conv_cvae_forward.22} parent=11 // pred_check
          %p138 = pneg %p78
        $region18: #{conv_cvae_forward.22} parent=11 // pred_check_branch
          %140 = sbr.rel (%p138) target = $region20
        $region19: #{conv_cvae_forward.22} parent=11 // pred_region
          _
        $region20: #{conv_cvae_forward.22} parent=11 // pred_fallthru
          _
        // Predicated region
        $region21: #{conv_cvae_forward.22} parent=11 // pred_check
          %p141 = pneg %p99
        $region22: #{conv_cvae_forward.22} parent=11 // pred_check_branch
          %143 = sbr.rel (%p141) target = $region24
        $region23: #{conv_cvae_forward.22} parent=11 // pred_region
          _
        $region24: #{conv_cvae_forward.22} parent=11 // pred_fallthru
          _
      $region12: #{conv_cvae_forward.22} parent=5 // pred_fallthru
        _
      %p144 = scmp.lt.s32.totalorder %s10, 4
      // Predicated region
      $region25: #{conv_cvae_forward.22} parent=5 // pred_check
        %p145 = pneg %p144
      $region26: #{conv_cvae_forward.22} parent=5 // pred_check_branch
        %147 = sbr.rel (%p145) target = $region28
      $region27: #{conv_cvae_forward.22} parent=5 // pred_region
        // Predicated region
        $region29: #{conv_cvae_forward.22} parent=27 // pred_check
          %p148 = pneg %p30
        $region30: #{conv_cvae_forward.22} parent=27 // pred_check_branch
          %150 = sbr.rel (%p148) target = $region32
        $region31: #{conv_cvae_forward.22} parent=27 // pred_region
          %s151 = sand.u32 %s20, 1
          %s152 = sand.u32 %s20, 1
          %s153 = smul.addr %s152, 144
          %s154 = scalar_lea.vmem [#allocation4], %s153
          %s155 = smul.u32 4, %s10
          %s156 = smul.addr %s155, 4
          %s157 = scalar_lea.vmem %s0, %s156
          // Predicated region
          $region33: #{conv_cvae_forward.22} parent=31 // pred_check
            _
          $region34: #{conv_cvae_forward.22} parent=31 // pred_check_branch
            %159 = sbr.rel (0) target = $region36
          $region35: #{conv_cvae_forward.22} parent=31 // pred_region
            // Predicated region
            $region37: #{conv_cvae_forward.22} parent=35 // pred_check
              _
            $region38: #{conv_cvae_forward.22} parent=35 // pred_check_branch
              %161 = sbr.rel (0) target = $region40
            $region39: #{conv_cvae_forward.22} parent=35 // pred_region
              loop: start=0, step=1, limit=1
              $region41: #{conv_cvae_forward.22} parent=39 // loop_pre_header
                _
              $region42: #{conv_cvae_forward.22} parent=39 // loop_header
                %s163 = sphi 0, %s167
                %p164 = scmp.ge.s32.totalorder %s163, 1
                %s168 = sphi %s157, %s157
                %s169 = sphi %s154, %s154
              $region43: #{conv_cvae_forward.22} parent=39 // loop_header_branch
                %166 = sbr.rel (%p164) target = $region47
              $region44: #{conv_cvae_forward.22} parent=39 // loop_body
                %v170 = vld [vmem:[%s168] sm:$0xff]
                %171 = vst [vmem:[%s169] sm:$0xff] %v170
                %v172 = vld [vmem:[%s168 + $0x8] sm:$0xff]
                %173 = vst [vmem:[%s169 + $0x8] sm:$0xff] %v172
                %v174 = vld [vmem:[%s168 + $0x40] sm:$0xff]
                %175 = vst [vmem:[%s169 + $0x10] sm:$0xff] %v174
                %v176 = vld [vmem:[%s168 + $0x48] sm:$0xff]
                %177 = vst [vmem:[%s169 + $0x18] sm:$0xff] %v176
                %v178 = vld [vmem:[%s168 + $0x80] sm:$0xff]
                %179 = vst [vmem:[%s169 + $0x20] sm:$0xff] %v178
                %v180 = vld [vmem:[%s168 + $0x88] sm:$0xff]
                %181 = vst [vmem:[%s169 + $0x28] sm:$0xff] %v180
                %v182 = vld [vmem:[%s168 + $0xc0] sm:$0xff]
                %183 = vst [vmem:[%s169 + $0x30] sm:$0xff] %v182
                %v184 = vld [vmem:[%s168 + $0xc8] sm:$0xff]
                %185 = vst [vmem:[%s169 + $0x38] sm:$0xff] %v184
                %v186 = vld [vmem:[%s168 + $0x100] sm:$0xff]
                %187 = vst [vmem:[%s169 + $0x40] sm:$0xff] %v186
                %v188 = vld [vmem:[%s168 + $0x108] sm:$0xff]
                %189 = vst [vmem:[%s169 + $0x48] sm:$0xff] %v188
                %v190 = vld [vmem:[%s168 + $0x140] sm:$0xff]
                %191 = vst [vmem:[%s169 + $0x50] sm:$0xff] %v190
                %v192 = vld [vmem:[%s168 + $0x148] sm:$0xff]
                %193 = vst [vmem:[%s169 + $0x58] sm:$0xff] %v192
                %v194 = vld [vmem:[%s168 + $0x180] sm:$0xff]
                %195 = vst [vmem:[%s169 + $0x60] sm:$0xff] %v194
                %v196 = vld [vmem:[%s168 + $0x188] sm:$0xff]
                %197 = vst [vmem:[%s169 + $0x68] sm:$0xff] %v196
                %v198 = vld [vmem:[%s168 + $0x1c0] sm:$0xff]
                %199 = vst [vmem:[%s169 + $0x70] sm:$0xff] %v198
                %v200 = vld [vmem:[%s168 + $0x1c8] sm:$0xff]
                %201 = vst [vmem:[%s169 + $0x78] sm:$0xff] %v200
                %v202 = vld [vmem:[%s168 + $0x200] sm:$0xff]
                %203 = vst [vmem:[%s169 + $0x80] sm:$0xff] %v202
                %v204 = vld [vmem:[%s168 + $0x208] sm:$0xff]
                %205 = vst [vmem:[%s169 + $0x88] sm:$0xff] %v204
              $region45: #{conv_cvae_forward.22} parent=39 // loop_footer
                %s167 = sadd.s32 1, %s163
              $region46: #{conv_cvae_forward.22} parent=39 // loop_footer_branch
                %162 = sbr.rel target = $region42
              $region47: #{conv_cvae_forward.22} parent=39 // loop_exit
                _
            $region40: #{conv_cvae_forward.22} parent=35 // pred_fallthru
              _
            // Predicated region
            $region48: #{conv_cvae_forward.22} parent=35 // pred_check
              _
            $region49: #{conv_cvae_forward.22} parent=35 // pred_check_branch
              %207 = sbr.rel target = $region51
            $region50: #{conv_cvae_forward.22} parent=35 // pred_region
              _
            $region51: #{conv_cvae_forward.22} parent=35 // pred_fallthru
              _
          $region36: #{conv_cvae_forward.22} parent=31 // pred_fallthru
            _
          %208 = vnop
        $region32: #{conv_cvae_forward.22} parent=27 // pred_fallthru
          _
      $region28: #{conv_cvae_forward.22} parent=5 // pred_fallthru
        _
      %p209 = scmp.le.s32.totalorder 1, %s10
      %p210 = scmp.lt.s32.totalorder %s10, 5
      %p211 = pnand %p209, %p210
      %p212 = pneg %p211
      // Predicated region
      $region52: #{conv_cvae_forward.22} parent=5 // pred_check
        _
      $region53: #{conv_cvae_forward.22} parent=5 // pred_check_branch
        %214 = sbr.rel (%p211) target = $region55
      $region54: #{conv_cvae_forward.22} parent=5 // pred_region
        %s215 = ssub.s32 %s10, 1
        %s216 = sand.u32 %s23, 1
        %s217 = sand.u32 %s23, 1
        %s218 = smul.addr %s217, 144
        %s219 = scalar_lea.vmem [#allocation4], %s218
        // Predicated region
        $region56: #{conv_cvae_forward.22} parent=54 // pred_check
          %p220 = pneg %p36
        $region57: #{conv_cvae_forward.22} parent=54 // pred_check_branch
          %222 = sbr.rel (%p220) target = $region59
        $region58: #{conv_cvae_forward.22} parent=54 // pred_region
          _
        $region59: #{conv_cvae_forward.22} parent=54 // pred_fallthru
          _
        %s223 = sand.u32 %s23, 1
        %s224 = sand.u32 %s23, 1
        %s225 = smul.addr %s224, 144
        %s226 = scalar_lea.vmem [#allocation4], %s225
        %p227 = pneg %p36
        %p228 = pneg %p33
        %p229 = pneg %p57
        %p230 = pneg %p54
        %p231 = pneg %p78
        %p232 = pneg %p75
        %p233 = pneg %p99
        %p234 = pneg %p96
        %p235 = pneg %p120
        %p236 = pneg %p117
        %s237 = smul.u32 4, %s15
        %p239 = scmp.eq.s32.totalorder %s15, 0
        // Predicated region
        $region60: #{conv_cvae_forward.22} parent=54 // pred_check
          %p240 = pneg %p239
        $region61: #{conv_cvae_forward.22} parent=54 // pred_check_branch
          %242 = sbr.rel (%p240) target = $region63
        $region62: #{conv_cvae_forward.22} parent=54 // pred_region
          %vm243 = vcmask 7168
          %244 = vst.msk [vmem:[#allocation2] sm:$0xff] %vm243, 0.0
          %245 = vst.msk [vmem:[#allocation3] sm:$0xff] %vm243, 0.0
        $region63: #{conv_cvae_forward.22} parent=54 // pred_fallthru
          _
        %v246 = vld [vmem:[%s1] sm:$0xf]
        %v247 = vld [vmem:[%s219] sm:$0xff]
        %v248 = vld [vmem:[%s219 + $0x8] sm:$0xff]
        %v249 = vld [vmem:[%s219 + $0x10] sm:$0xff]
        %v250 = vld [vmem:[%s219 + $0x18] sm:$0xff]
        %v251 = vld [vmem:[%s219 + $0x20] sm:$0xff]
        %v252 = vld [vmem:[%s219 + $0x28] sm:$0xff]
        %v253 = vld [vmem:[%s219 + $0x30] sm:$0xff]
        %v254 = vld [vmem:[%s219 + $0x38] sm:$0xff]
        %v255 = vld [vmem:[%s219 + $0x40] sm:$0xff]
        %v256 = vld [vmem:[%s219 + $0x48] sm:$0xff]
        %v257 = vld [vmem:[%s219 + $0x50] sm:$0xff]
        %v258 = vld [vmem:[%s219 + $0x58] sm:$0xff]
        %v259 = vld [vmem:[%s219 + $0x60] sm:$0xff]
        %v260 = vld [vmem:[%s219 + $0x68] sm:$0xff]
        %v261 = vld [vmem:[%s219 + $0x70] sm:$0xff]
        %v262 = vld [vmem:[%s219 + $0x78] sm:$0xff]
        %v263 = vld [vmem:[%s219 + $0x80] sm:$0xff]
        %v264 = vld [vmem:[%s219 + $0x88] sm:$0xff]
        %v283 = vunpack.c.l.b16 %v247
        %v284 = vunpack.c.h.b16 %v247
        %v285 = vunpack.c.l.b16 %v248
        %v286 = vunpack.c.h.b16 %v248
        %v287 = vunpack.c.l.b16 %v249
        %v288 = vunpack.c.h.b16 %v249
        %v289 = vunpack.c.l.b16 %v250
        %v290 = vunpack.c.h.b16 %v250
        %v291 = vunpack.c.l.b16 %v251
        %v292 = vunpack.c.h.b16 %v251
        %v293 = vunpack.c.l.b16 %v252
        %v294 = vunpack.c.h.b16 %v252
        %v295 = vunpack.c.l.b16 %v253
        %v296 = vunpack.c.h.b16 %v253
        %v297 = vunpack.c.l.b16 %v254
        %v298 = vunpack.c.h.b16 %v254
        %v299 = vunpack.c.l.b16 %v255
        %v300 = vunpack.c.h.b16 %v255
        %v301 = vunpack.c.l.b16 %v256
        %v302 = vunpack.c.h.b16 %v256
        %v303 = vunpack.c.l.b16 %v257
        %v304 = vunpack.c.h.b16 %v257
        %v305 = vunpack.c.l.b16 %v258
        %v306 = vunpack.c.h.b16 %v258
        %v307 = vunpack.c.l.b16 %v259
        %v308 = vunpack.c.h.b16 %v259
        %v309 = vunpack.c.l.b16 %v260
        %v310 = vunpack.c.h.b16 %v260
        %v311 = vunpack.c.l.b16 %v261
        %v312 = vunpack.c.h.b16 %v261
        %v313 = vunpack.c.l.b16 %v262
        %v314 = vunpack.c.h.b16 %v262
        %v315 = vunpack.c.l.b16 %v263
        %v316 = vunpack.c.h.b16 %v263
        %v317 = vunpack.c.l.b16 %v264
        %v318 = vunpack.c.h.b16 %v264
        %v319 = vpack.c.b16 %v287, %v283
        %v320 = vpack.c.b16 %v288, %v284
        %v321 = vpack.c.b16 %v289, %v285
        %v322 = vpack.c.b16 %v290, %v286
        %v323 = vpack.c.b16 %v295, %v291
        %v324 = vpack.c.b16 %v296, %v292
        %v325 = vpack.c.b16 %v297, %v293
        %v326 = vpack.c.b16 %v298, %v294
        %v327 = vpack.c.b16 %v303, %v299
        %v328 = vpack.c.b16 %v304, %v300
        %v329 = vpack.c.b16 %v305, %v301
        %v330 = vpack.c.b16 %v306, %v302
        %v331 = vpack.c.b16 %v311, %v307
        %v332 = vpack.c.b16 %v312, %v308
        %v333 = vpack.c.b16 %v313, %v309
        %v334 = vpack.c.b16 %v314, %v310
        %v335 = vpack.c.b16 %v315, %v315
        %v336 = vpack.c.b16 %v316, %v316
        %v337 = vpack.c.b16 %v317, %v317
        %v338 = vpack.c.b16 %v318, %v318
        %vm355 = vcmask 588800
        %v357 = vsel %vm355, %v246, 0
        %vm359 = vcmask 1043456
        %v361 = vsel %vm359, %v335, 0
        %v364 = vsel %vm359, %v336, 0
        %v367 = vsel %vm359, %v337, 0
        %v370 = vsel %vm359, %v338, 0
        %372 = vmatprep.subr.bf16.mxu0 %v320
        %373 = vmatpush1.bf16.msra.mxu0 %v319
        %374 = vmatprep.subr.bf16.mxu0 %v324
        %375 = vmatpush1.bf16.msra.mxu0 %v323
        %376 = vmatprep.subr.bf16.mxu0 %v328
        %377 = vmatpush1.bf16.msra.mxu0 %v327
        %378 = vmatprep.subr.bf16.mxu0 %v332
        %379 = vmatpush1.bf16.msra.mxu0 %v331
        %380 = vmatprep.subr.bf16.mxu0 %v364
        %381 = vmatpush1.bf16.msra.mxu0 %v361
        %382 = vmatprep.subr.bf16.mxu0 0
        %383 = vmatpush1.bf16.msra.mxu0 0
        %384 = vmatprep.subr.bf16.mxu0 0
        %385 = vmatpush1.bf16.msra.mxu0 0
        %386 = vmatprep.subr.bf16.mxu0 0
        %387 = vmatpush1.bf16.msra.mxu0 0
        %388 = vmatprep.subr.bf16.mxu0 0
        %389 = vmatpush1.bf16.msra.mxu0 0
        %390 = vmatprep.subr.bf16.mxu0 0
        %391 = vmatpush1.bf16.msra.mxu0 0
        %392 = vmatprep.subr.bf16.mxu0 0
        %393 = vmatpush1.bf16.msra.mxu0 0
        %394 = vmatprep.subr.bf16.mxu0 0
        %395 = vmatpush1.bf16.msra.mxu0 0
        %396 = vmatprep.subr.bf16.mxu0 0
        %397 = vmatpush1.bf16.msra.mxu0 0
        %398 = vmatprep.subr.bf16.mxu0 0
        %399 = vmatpush1.bf16.msra.mxu0 0
        %400 = vmatprep.subr.bf16.mxu0 0
        %401 = vmatpush1.bf16.msra.mxu0 0
        %402 = vmatprep.subr.bf16.mxu0 0
        %403 = vmatpush1.bf16.msra.mxu0 0
        %404 = vmatprep.mubr.bf16.mxu0 0
        %405 = vmatmul.mubr.bf16.gmra.mrb[0].mxu0 %v357
        %v406 = vpop.f32.mrb[0].mxu0
        %v407 = vadd.f32 0.0, %v406
        %v408 = vpop.f32.mrb[0].mxu0
        %v409 = vadd.f32 0.0, %v408
        %v410 = vpop.f32.mrb[0].mxu0
        %v411 = vpop.f32.mrb[0].mxu0
        %412 = vdwg.mxu0
        %413 = vmatprep.subr.bf16.mxu0 %v322
        %414 = vmatpush1.bf16.msra.mxu0 %v321
        %415 = vmatprep.subr.bf16.mxu0 %v326
        %416 = vmatpush1.bf16.msra.mxu0 %v325
        %417 = vmatprep.subr.bf16.mxu0 %v330
        %418 = vmatpush1.bf16.msra.mxu0 %v329
        %419 = vmatprep.subr.bf16.mxu0 %v334
        %420 = vmatpush1.bf16.msra.mxu0 %v333
        %421 = vmatprep.subr.bf16.mxu0 %v370
        %422 = vmatpush1.bf16.msra.mxu0 %v367
        %423 = vmatprep.subr.bf16.mxu0 0
        %424 = vmatpush1.bf16.msra.mxu0 0
        %425 = vmatprep.subr.bf16.mxu0 0
        %426 = vmatpush1.bf16.msra.mxu0 0
        %427 = vmatprep.subr.bf16.mxu0 0
        %428 = vmatpush1.bf16.msra.mxu0 0
        %429 = vmatprep.subr.bf16.mxu0 0
        %430 = vmatpush1.bf16.msra.mxu0 0
        %431 = vmatprep.subr.bf16.mxu0 0
        %432 = vmatpush1.bf16.msra.mxu0 0
        %433 = vmatprep.subr.bf16.mxu0 0
        %434 = vmatpush1.bf16.msra.mxu0 0
        %435 = vmatprep.subr.bf16.mxu0 0
        %436 = vmatpush1.bf16.msra.mxu0 0
        %437 = vmatprep.subr.bf16.mxu0 0
        %438 = vmatpush1.bf16.msra.mxu0 0
        %439 = vmatprep.subr.bf16.mxu0 0
        %440 = vmatpush1.bf16.msra.mxu0 0
        %441 = vmatprep.subr.bf16.mxu0 0
        %442 = vmatpush1.bf16.msra.mxu0 0
        %443 = vmatprep.subr.bf16.mxu0 0
        %444 = vmatpush1.bf16.msra.mxu0 0
        %445 = vmatprep.mubr.bf16.mxu0 0
        %446 = vmatmul.mubr.bf16.gmra.mrb[0].mxu0 %v357
        %v447 = vpop.f32.mrb[0].mxu0
        %v448 = vadd.f32 0.0, %v447
        %v449 = vpop.f32.mrb[0].mxu0
        %v450 = vadd.f32 0.0, %v449
        %v451 = vpop.f32.mrb[0].mxu0
        %v452 = vpop.f32.mrb[0].mxu0
        %453 = vdwg.mxu0
        %v454 = vld [vmem:[#allocation2] sm:$0xff]
        %v455 = vadd.f32 %v407, %v409
        %v456 = vadd.f32 %v455, %v448
        %v457 = vadd.f32 %v456, %v450
        %458 = vadd.xlane.f32.xlu0 %v457
        %v459 = vpop.xlane.xlu0 %458
        %v460 = vadd.f32 %v454, %v459
        %vm461 = vcmask 7168
        %462 = vst.msk [vmem:[#allocation2] sm:$0xff] %vm461, %v460
        %v463 = vld [vmem:[#allocation3] sm:$0xff]
        %v464 = vmul.f32 %v407, %v407
        %v465 = vmul.f32 %v409, %v409
        %v466 = vmul.f32 %v448, %v448
        %v467 = vmul.f32 %v450, %v450
        %v468 = vadd.f32 %v464, %v465
        %v469 = vadd.f32 %v468, %v466
        %v470 = vadd.f32 %v469, %v467
        %471 = vadd.xlane.f32.xlu0 %v470
        %v472 = vpop.xlane.xlu0 %471
        %v473 = vadd.f32 %v463, %v472
        %474 = vst.msk [vmem:[#allocation3] sm:$0xff] %vm461, %v473
        %s475 = smul.u32 %s15, 512
        %s476 = sshra.s32 %s475, 7
        %s477 = sand.u32 %s475, 127
        %s478 = smul.addr %s476, 8
        %s479 = scalar_lea.vmem %s4, %s478
        %480 = vst [vmem:[%s479] sm:$0xff] %v407
        %481 = vst [vmem:[%s479 + $0x8] sm:$0xff] %v409
        %482 = vst [vmem:[%s479 + $0x10] sm:$0xff] %v448
        %483 = vst [vmem:[%s479 + $0x18] sm:$0xff] %v450
        %p484 = scmp.eq.s32.totalorder %s15, 3
        // Predicated region
        $region64: #{conv_cvae_forward.22} parent=54 // pred_check
          %p485 = pneg %p484
        $region65: #{conv_cvae_forward.22} parent=54 // pred_check_branch
          %487 = sbr.rel (%p485) target = $region67
        $region66: #{conv_cvae_forward.22} parent=54 // pred_region
          %v488 = vld [vmem:[#allocation2] sm:$0xff]
          %v489 = vmul.f32 %v488, 0.0006377551
          %v490 = vld [vmem:[#allocation3] sm:$0xff]
          %v491 = vmul.f32 %v490, 0.0006377551
          %v492 = vmul.f32 %v489, %v489
          %v493 = vsub.f32 %v491, %v492
          %v494 = vld [vmem:[%s2] sm:$0xff]
          %v495 = vadd.f32 %v493, 1e-05
          %v496 = vrsqrt.pop %v495
          %v497 = vmul.f32 %v494, %v496
          %v498 = vld [vmem:[%s3] sm:$0xff]
          %v499 = vmul.f32 %v489, %v497
          %v500 = vsub.f32 %v498, %v499
          %v501 = vld [vmem:[%s4] sm:$0xff]
          %v502 = vld [vmem:[%s4 + $0x8] sm:$0xff]
          %v503 = vld [vmem:[%s4 + $0x10] sm:$0xff]
          %v504 = vld [vmem:[%s4 + $0x18] sm:$0xff]
          %v505 = vld [vmem:[%s4 + $0x20] sm:$0xff]
          %v506 = vld [vmem:[%s4 + $0x28] sm:$0xff]
          %v507 = vld [vmem:[%s4 + $0x30] sm:$0xff]
          %v508 = vld [vmem:[%s4 + $0x38] sm:$0xff]
          %v509 = vld [vmem:[%s4 + $0x40] sm:$0xff]
          %v510 = vld [vmem:[%s4 + $0x48] sm:$0xff]
          %v511 = vld [vmem:[%s4 + $0x50] sm:$0xff]
          %v512 = vld [vmem:[%s4 + $0x58] sm:$0xff]
          %v513 = vld [vmem:[%s4 + $0x60] sm:$0xff]
          %v514 = vld [vmem:[%s4 + $0x68] sm:$0xff]
          %v515 = vld [vmem:[%s4 + $0x70] sm:$0xff]
          %v516 = vld [vmem:[%s4 + $0x78] sm:$0xff]
          %518 = vset.pattern.permute.xlu0 0
          %519 = vperm.xlu0 %518, %v497
          %v520 = vpop.permute.xlu0 %519
          %v522 = vmul.f32 %v501, %v520
          %v523 = vmul.f32 %v502, %v520
          %v524 = vmul.f32 %v503, %v520
          %v525 = vmul.f32 %v504, %v520
          %v526 = vmul.f32 %v505, %v520
          %v527 = vmul.f32 %v506, %v520
          %v528 = vmul.f32 %v507, %v520
          %v529 = vmul.f32 %v508, %v520
          %v530 = vmul.f32 %v509, %v520
          %v531 = vmul.f32 %v510, %v520
          %v532 = vmul.f32 %v511, %v520
          %v533 = vmul.f32 %v512, %v520
          %v534 = vmul.f32 %v513, %v520
          %v535 = vmul.f32 %v514, %v520
          %v536 = vmul.f32 %v515, %v520
          %v537 = vmul.f32 %v516, %v520
          %539 = vset.pattern.permute.xlu0 0
          %540 = vperm.xlu0 %539, %v500
          %v541 = vpop.permute.xlu0 %540
          %v543 = vadd.f32 %v522, %v541
          %v544 = vadd.f32 %v523, %v541
          %v545 = vadd.f32 %v524, %v541
          %v546 = vadd.f32 %v525, %v541
          %v547 = vadd.f32 %v526, %v541
          %v548 = vadd.f32 %v527, %v541
          %v549 = vadd.f32 %v528, %v541
          %v550 = vadd.f32 %v529, %v541
          %v551 = vadd.f32 %v530, %v541
          %v552 = vadd.f32 %v531, %v541
          %v553 = vadd.f32 %v532, %v541
          %v554 = vadd.f32 %v533, %v541
          %v555 = vadd.f32 %v534, %v541
          %v556 = vadd.f32 %v535, %v541
          %v557 = vadd.f32 %v536, %v541
          %v558 = vadd.f32 %v537, %v541
          %vm559 = vcmp.ge.f32.partialorder %v543, 0.0
          %vm560 = vcmp.ge.f32.partialorder %v544, 0.0
          %vm561 = vcmp.ge.f32.partialorder %v545, 0.0
          %vm562 = vcmp.ge.f32.partialorder %v546, 0.0
          %vm563 = vcmp.ge.f32.partialorder %v547, 0.0
          %vm564 = vcmp.ge.f32.partialorder %v548, 0.0
          %vm565 = vcmp.ge.f32.partialorder %v549, 0.0
          %vm566 = vcmp.ge.f32.partialorder %v550, 0.0
          %vm567 = vcmp.ge.f32.partialorder %v551, 0.0
          %vm568 = vcmp.ge.f32.partialorder %v552, 0.0
          %vm569 = vcmp.ge.f32.partialorder %v553, 0.0
          %vm570 = vcmp.ge.f32.partialorder %v554, 0.0
          %vm571 = vcmp.ge.f32.partialorder %v555, 0.0
          %vm572 = vcmp.ge.f32.partialorder %v556, 0.0
          %vm573 = vcmp.ge.f32.partialorder %v557, 0.0
          %vm574 = vcmp.ge.f32.partialorder %v558, 0.0
          %v575 = vmul.f32 %v543, 0.01
          %v576 = vmul.f32 %v544, 0.01
          %v577 = vmul.f32 %v545, 0.01
          %v578 = vmul.f32 %v546, 0.01
          %v579 = vmul.f32 %v547, 0.01
          %v580 = vmul.f32 %v548, 0.01
          %v581 = vmul.f32 %v549, 0.01
          %v582 = vmul.f32 %v550, 0.01
          %v583 = vmul.f32 %v551, 0.01
          %v584 = vmul.f32 %v552, 0.01
          %v585 = vmul.f32 %v553, 0.01
          %v586 = vmul.f32 %v554, 0.01
          %v587 = vmul.f32 %v555, 0.01
          %v588 = vmul.f32 %v556, 0.01
          %v589 = vmul.f32 %v557, 0.01
          %v590 = vmul.f32 %v558, 0.01
          %v591 = vsel %vm559, %v543, %v575
          %v592 = vsel %vm560, %v544, %v576
          %v593 = vsel %vm561, %v545, %v577
          %v594 = vsel %vm562, %v546, %v578
          %v595 = vsel %vm563, %v547, %v579
          %v596 = vsel %vm564, %v548, %v580
          %v597 = vsel %vm565, %v549, %v581
          %v598 = vsel %vm566, %v550, %v582
          %v599 = vsel %vm567, %v551, %v583
          %v600 = vsel %vm568, %v552, %v584
          %v601 = vsel %vm569, %v553, %v585
          %v602 = vsel %vm570, %v554, %v586
          %v603 = vsel %vm571, %v555, %v587
          %v604 = vsel %vm572, %v556, %v588
          %v605 = vsel %vm573, %v557, %v589
          %v606 = vsel %vm574, %v558, %v590
          %607 = vst [vmem:[%s4] sm:$0xff] %v591
          %608 = vst [vmem:[%s4 + $0x8] sm:$0xff] %v592
          %609 = vst [vmem:[%s4 + $0x10] sm:$0xff] %v593
          %610 = vst [vmem:[%s4 + $0x18] sm:$0xff] %v594
          %611 = vst [vmem:[%s4 + $0x20] sm:$0xff] %v595
          %612 = vst [vmem:[%s4 + $0x28] sm:$0xff] %v596
          %613 = vst [vmem:[%s4 + $0x30] sm:$0xff] %v597
          %614 = vst [vmem:[%s4 + $0x38] sm:$0xff] %v598
          %615 = vst [vmem:[%s4 + $0x40] sm:$0xff] %v599
          %616 = vst [vmem:[%s4 + $0x48] sm:$0xff] %v600
          %617 = vst [vmem:[%s4 + $0x50] sm:$0xff] %v601
          %618 = vst [vmem:[%s4 + $0x58] sm:$0xff] %v602
          %619 = vst [vmem:[%s4 + $0x60] sm:$0xff] %v603
          %620 = vst [vmem:[%s4 + $0x68] sm:$0xff] %v604
          %621 = vst [vmem:[%s4 + $0x70] sm:$0xff] %v605
          %622 = vst [vmem:[%s4 + $0x78] sm:$0xff] %v606
        $region67: #{conv_cvae_forward.22} parent=54 // pred_fallthru
          _
        // Predicated region
        $region68: #{conv_cvae_forward.22} parent=54 // pred_check
          %p623 = pneg %p117
        $region69: #{conv_cvae_forward.22} parent=54 // pred_check_branch
          %625 = sbr.rel (%p623) target = $region71
        $region70: #{conv_cvae_forward.22} parent=54 // pred_region
          _
        $region71: #{conv_cvae_forward.22} parent=54 // pred_fallthru
          _
        // Predicated region
        $region72: #{conv_cvae_forward.22} parent=54 // pred_check
          %p626 = pneg %p117
        $region73: #{conv_cvae_forward.22} parent=54 // pred_check_branch
          %628 = sbr.rel (%p626) target = $region75
        $region74: #{conv_cvae_forward.22} parent=54 // pred_region
          _
        $region75: #{conv_cvae_forward.22} parent=54 // pred_fallthru
          _
      $region55: #{conv_cvae_forward.22} parent=5 // pred_fallthru
        _
      %p629 = scmp.le.s32.totalorder 2, %s10
      // Predicated region
      $region76: #{conv_cvae_forward.22} parent=5 // pred_check
        %p630 = pneg %p629
      $region77: #{conv_cvae_forward.22} parent=5 // pred_check_branch
        %632 = sbr.rel (%p630) target = $region79
      $region78: #{conv_cvae_forward.22} parent=5 // pred_region
        %s633 = ssub.s32 %s10, 2
      $region79: #{conv_cvae_forward.22} parent=5 // pred_fallthru
        _
    $region6: #{conv_cvae_forward.22} parent=1 // loop_footer
      %s14 = sadd.s32 1, %s10
    $region7: #{conv_cvae_forward.22} parent=1 // loop_footer_branch
      %9 = sbr.rel target = $region3
    $region8: #{conv_cvae_forward.22} parent=1 // loop_exit
      _

// kernel: conv_cvae_forward.23
$region0: #{conv_cvae_forward.23}
  #allocation0 [shape = 'u32[]', space=smem, size = 0x4, offset = 0x4, fixed_abs, tag = 'smem constant byte address 0x4 - core index']
  #allocation1 [shape = 'u32[144,128]{1,0:T(1,128)}', space=vmem, size = 0x12000, scoped, tag = 'internal scratch']
  #allocation2 [shape = 'f32[1,1]{1,0:T(1,128)S(1)}', space=vmem, size = 0x200, scoped, tag = 'scoped memory for conv_cvae_forward.23']
  %s0 = inlined_call_operand.vmem [shape: bf16[72,2048], index: 0, kind: input, shape index: {}]
  %s1 = inlined_call_operand.vmem [shape: bf16[1,72], index: 1, kind: input, shape index: {}]
  %s2 = inlined_call_operand.<no memory space> [shape: f32[1,1], index: 2, kind: input, shape index: {}]
  %s3 = inlined_call_operand.vmem [shape: f32[1,2048], index: 3, kind: output, shape index: {}]
  %s4 = sld [smem:[#allocation0]]
  $region68: #{conv_cvae_forward.23} parent=0
    _
  %s6 = ssub.s32 1, %s4
  %s7 = scalar_select 0, %s6, %s4
  %v8 = vstv %s2
  %9 = vst [vmem:[#allocation2] sm:$0x1] %v8
  $region1: #{conv_cvae_forward.23} parent=0
    #allocation3 [shape = 'u8[147456]{0}', space=vmem, size = 0x24000, scoped, tag = 'input window, operand 0']
    loop: start=0, step=1, limit=6
    $region2: #{conv_cvae_forward.23} parent=1 // loop_pre_header
      _
    $region3: #{conv_cvae_forward.23} parent=1 // loop_header
      %s11 = sphi 0, %s15
      %p12 = scmp.ge.s32.totalorder %s11, 6
      %s21 = sphi 0, %s23
      %s24 = sphi 0, %s21
      %s25 = sphi 0, %s24
      %s41 = sphi 0, %s25
      %s45 = sphi 0, %s45
      %s47 = sphi 0, %s45
      %s48 = sphi 0, %s47
      %s62 = sphi 0, %s48
      %s66 = sphi 0, %s66
      %s68 = sphi 0, %s66
      %s69 = sphi 0, %s68
      %s83 = sphi 0, %s69
      %s89 = sphi 0, %s91
      %s92 = sphi 0, %s89
      %s93 = sphi 0, %s92
      %s109 = sphi 0, %s93
    $region4: #{conv_cvae_forward.23} parent=1 // loop_header_branch
      %14 = sbr.rel (%p12) target = $region8
    $region5: #{conv_cvae_forward.23} parent=1 // loop_body
      %s16 = ssub.s32 %s11, 1
      %s17 = ssub.s32 %s11, 2
      %s18 = sadd.s32 %s11, 1
      %s19 = ssub.s32 %s11, %s18
      %p20 = scmp.eq.s32.totalorder %s19, 0
      %s22 = sadd.s32 %s21, 1
      %s23 = scalar_select %p20, %s21, %s22
      %p26 = pneg %p20
      %p27 = scmp.eq.s32.totalorder %s11, 3
      %p28 = por %p26, %p27
      %p29 = scmp.ne.s32.totalorder %s21, %s24
      %p30 = scmp.eq.s32.totalorder %s11, 0
      %p31 = por %p29, %p30
      %p32 = scmp.ne.s32.totalorder %s21, %s24
      %p33 = scmp.eq.s32.totalorder %s16, 3
      %p34 = por %p32, %p33
      %p35 = scmp.ne.s32.totalorder %s24, %s25
      %p36 = scmp.eq.s32.totalorder %s16, 0
      %p37 = por %p35, %p36
      %p38 = scmp.ne.s32.totalorder %s24, %s25
      %p39 = scmp.eq.s32.totalorder %s17, 3
      %p40 = por %p38, %p39
      %p42 = scmp.ne.s32.totalorder %s25, %s41
      %p43 = scmp.eq.s32.totalorder %s17, 0
      %p44 = por %p42, %p43
      %s46 = sadd.s32 %s45, 1
      %p49 = scmp.eq.s32.totalorder %s11, 3
      %p50 = scmp.ne.s32.totalorder %s45, %s47
      %p51 = scmp.eq.s32.totalorder %s11, 0
      %p52 = por %p50, %p51
      %p53 = scmp.ne.s32.totalorder %s45, %s47
      %p54 = scmp.eq.s32.totalorder %s16, 3
      %p55 = por %p53, %p54
      %p56 = scmp.ne.s32.totalorder %s47, %s48
      %p57 = scmp.eq.s32.totalorder %s16, 0
      %p58 = por %p56, %p57
      %p59 = scmp.ne.s32.totalorder %s47, %s48
      %p60 = scmp.eq.s32.totalorder %s17, 3
      %p61 = por %p59, %p60
      %p63 = scmp.ne.s32.totalorder %s48, %s62
      %p64 = scmp.eq.s32.totalorder %s17, 0
      %p65 = por %p63, %p64
      %s67 = sadd.s32 %s66, 1
      %p70 = scmp.eq.s32.totalorder %s11, 3
      %p71 = scmp.ne.s32.totalorder %s66, %s68
      %p72 = scmp.eq.s32.totalorder %s11, 0
      %p73 = por %p71, %p72
      %p74 = scmp.ne.s32.totalorder %s66, %s68
      %p75 = scmp.eq.s32.totalorder %s16, 3
      %p76 = por %p74, %p75
      %p77 = scmp.ne.s32.totalorder %s68, %s69
      %p78 = scmp.eq.s32.totalorder %s16, 0
      %p79 = por %p77, %p78
      %p80 = scmp.ne.s32.totalorder %s68, %s69
      %p81 = scmp.eq.s32.totalorder %s17, 3
      %p82 = por %p80, %p81
      %p84 = scmp.ne.s32.totalorder %s69, %s83
      %p85 = scmp.eq.s32.totalorder %s17, 0
      %p86 = por %p84, %p85
      %s87 = ssub.s32 %s11, %s18
      %p88 = scmp.eq.s32.totalorder %s87, 0
      %s90 = sadd.s32 %s89, 1
      %s91 = scalar_select %p88, %s89, %s90
      %p94 = pneg %p88
      %p95 = scmp.eq.s32.totalorder %s11, 3
      %p96 = por %p94, %p95
      %p97 = scmp.ne.s32.totalorder %s89, %s92
      %p98 = scmp.eq.s32.totalorder %s11, 0
      %p99 = por %p97, %p98
      %p100 = scmp.ne.s32.totalorder %s89, %s92
      %p101 = scmp.eq.s32.totalorder %s16, 3
      %p102 = por %p100, %p101
      %p103 = scmp.ne.s32.totalorder %s92, %s93
      %p104 = scmp.eq.s32.totalorder %s16, 0
      %p105 = por %p103, %p104
      %p106 = scmp.ne.s32.totalorder %s92, %s93
      %p107 = scmp.eq.s32.totalorder %s17, 3
      %p108 = por %p106, %p107
      %p110 = scmp.ne.s32.totalorder %s93, %s109
      %p111 = scmp.eq.s32.totalorder %s17, 0
      %p112 = por %p110, %p111
      %p113 = scmp.le.s32.totalorder 1, %s11
      %p114 = scmp.lt.s32.totalorder %s11, 5
      %p115 = pnand %p113, %p114
      %p116 = pneg %p115
      // Predicated region
      $region9: #{conv_cvae_forward.23} parent=5 // pred_check
        _
      $region10: #{conv_cvae_forward.23} parent=5 // pred_check_branch
        %118 = sbr.rel (%p115) target = $region12
      $region11: #{conv_cvae_forward.23} parent=5 // pred_region
        %s119 = ssub.s32 %s11, 1
        // Predicated region
        $region13: #{conv_cvae_forward.23} parent=11 // pred_check
          %p120 = pneg %p58
        $region14: #{conv_cvae_forward.23} parent=11 // pred_check_branch
          %122 = sbr.rel (%p120) target = $region16
        $region15: #{conv_cvae_forward.23} parent=11 // pred_region
          _
        $region16: #{conv_cvae_forward.23} parent=11 // pred_fallthru
          _
        // Predicated region
        $region17: #{conv_cvae_forward.23} parent=11 // pred_check
          %p123 = pneg %p79
        $region18: #{conv_cvae_forward.23} parent=11 // pred_check_branch
          %125 = sbr.rel (%p123) target = $region20
        $region19: #{conv_cvae_forward.23} parent=11 // pred_region
          _
        $region20: #{conv_cvae_forward.23} parent=11 // pred_fallthru
          _
      $region12: #{conv_cvae_forward.23} parent=5 // pred_fallthru
        _
      %p126 = scmp.lt.s32.totalorder %s11, 4
      // Predicated region
      $region21: #{conv_cvae_forward.23} parent=5 // pred_check
        %p127 = pneg %p126
      $region22: #{conv_cvae_forward.23} parent=5 // pred_check_branch
        %129 = sbr.rel (%p127) target = $region24
      $region23: #{conv_cvae_forward.23} parent=5 // pred_region
        // Predicated region
        $region25: #{conv_cvae_forward.23} parent=23 // pred_check
          %p130 = pneg %p31
        $region26: #{conv_cvae_forward.23} parent=23 // pred_check_branch
          %132 = sbr.rel (%p130) target = $region28
        $region27: #{conv_cvae_forward.23} parent=23 // pred_region
          %s133 = sand.u32 %s21, 1
          %s134 = sand.u32 %s21, 1
          %s135 = smul.addr %s134, 144
          %s136 = scalar_lea.vmem [#allocation3], %s135
          %s137 = smul.u32 4, %s11
          %s138 = smul.addr %s137, 4
          %s139 = scalar_lea.vmem %s0, %s138
          // Predicated region
          $region29: #{conv_cvae_forward.23} parent=27 // pred_check
            _
          $region30: #{conv_cvae_forward.23} parent=27 // pred_check_branch
            %141 = sbr.rel (0) target = $region32
          $region31: #{conv_cvae_forward.23} parent=27 // pred_region
            // Predicated region
            $region33: #{conv_cvae_forward.23} parent=31 // pred_check
              _
            $region34: #{conv_cvae_forward.23} parent=31 // pred_check_branch
              %143 = sbr.rel (0) target = $region36
            $region35: #{conv_cvae_forward.23} parent=31 // pred_region
              loop: start=0, step=1, limit=1
              $region37: #{conv_cvae_forward.23} parent=35 // loop_pre_header
                _
              $region38: #{conv_cvae_forward.23} parent=35 // loop_header
                %s145 = sphi 0, %s149
                %p146 = scmp.ge.s32.totalorder %s145, 1
                %s150 = sphi %s139, %s139
                %s151 = sphi %s136, %s136
              $region39: #{conv_cvae_forward.23} parent=35 // loop_header_branch
                %148 = sbr.rel (%p146) target = $region43
              $region40: #{conv_cvae_forward.23} parent=35 // loop_body
                %v152 = vld [vmem:[%s150] sm:$0xff]
                %153 = vst [vmem:[%s151] sm:$0xff] %v152
                %v154 = vld [vmem:[%s150 + $0x8] sm:$0xff]
                %155 = vst [vmem:[%s151 + $0x8] sm:$0xff] %v154
                %v156 = vld [vmem:[%s150 + $0x40] sm:$0xff]
                %157 = vst [vmem:[%s151 + $0x10] sm:$0xff] %v156
                %v158 = vld [vmem:[%s150 + $0x48] sm:$0xff]
                %159 = vst [vmem:[%s151 + $0x18] sm:$0xff] %v158
                %v160 = vld [vmem:[%s150 + $0x80] sm:$0xff]
                %161 = vst [vmem:[%s151 + $0x20] sm:$0xff] %v160
                %v162 = vld [vmem:[%s150 + $0x88] sm:$0xff]
                %163 = vst [vmem:[%s151 + $0x28] sm:$0xff] %v162
                %v164 = vld [vmem:[%s150 + $0xc0] sm:$0xff]
                %165 = vst [vmem:[%s151 + $0x30] sm:$0xff] %v164
                %v166 = vld [vmem:[%s150 + $0xc8] sm:$0xff]
                %167 = vst [vmem:[%s151 + $0x38] sm:$0xff] %v166
                %v168 = vld [vmem:[%s150 + $0x100] sm:$0xff]
                %169 = vst [vmem:[%s151 + $0x40] sm:$0xff] %v168
                %v170 = vld [vmem:[%s150 + $0x108] sm:$0xff]
                %171 = vst [vmem:[%s151 + $0x48] sm:$0xff] %v170
                %v172 = vld [vmem:[%s150 + $0x140] sm:$0xff]
                %173 = vst [vmem:[%s151 + $0x50] sm:$0xff] %v172
                %v174 = vld [vmem:[%s150 + $0x148] sm:$0xff]
                %175 = vst [vmem:[%s151 + $0x58] sm:$0xff] %v174
                %v176 = vld [vmem:[%s150 + $0x180] sm:$0xff]
                %177 = vst [vmem:[%s151 + $0x60] sm:$0xff] %v176
                %v178 = vld [vmem:[%s150 + $0x188] sm:$0xff]
                %179 = vst [vmem:[%s151 + $0x68] sm:$0xff] %v178
                %v180 = vld [vmem:[%s150 + $0x1c0] sm:$0xff]
                %181 = vst [vmem:[%s151 + $0x70] sm:$0xff] %v180
                %v182 = vld [vmem:[%s150 + $0x1c8] sm:$0xff]
                %183 = vst [vmem:[%s151 + $0x78] sm:$0xff] %v182
                %v184 = vld [vmem:[%s150 + $0x200] sm:$0xff]
                %185 = vst [vmem:[%s151 + $0x80] sm:$0xff] %v184
                %v186 = vld [vmem:[%s150 + $0x208] sm:$0xff]
                %187 = vst [vmem:[%s151 + $0x88] sm:$0xff] %v186
              $region41: #{conv_cvae_forward.23} parent=35 // loop_footer
                %s149 = sadd.s32 1, %s145
              $region42: #{conv_cvae_forward.23} parent=35 // loop_footer_branch
                %144 = sbr.rel target = $region38
              $region43: #{conv_cvae_forward.23} parent=35 // loop_exit
                _
            $region36: #{conv_cvae_forward.23} parent=31 // pred_fallthru
              _
            // Predicated region
            $region44: #{conv_cvae_forward.23} parent=31 // pred_check
              _
            $region45: #{conv_cvae_forward.23} parent=31 // pred_check_branch
              %189 = sbr.rel target = $region47
            $region46: #{conv_cvae_forward.23} parent=31 // pred_region
              _
            $region47: #{conv_cvae_forward.23} parent=31 // pred_fallthru
              _
          $region32: #{conv_cvae_forward.23} parent=27 // pred_fallthru
            _
          %190 = vnop
        $region28: #{conv_cvae_forward.23} parent=23 // pred_fallthru
          _
      $region24: #{conv_cvae_forward.23} parent=5 // pred_fallthru
        _
      %p191 = scmp.le.s32.totalorder 1, %s11
      %p192 = scmp.lt.s32.totalorder %s11, 5
      %p193 = pnand %p191, %p192
      %p194 = pneg %p193
      // Predicated region
      $region48: #{conv_cvae_forward.23} parent=5 // pred_check
        _
      $region49: #{conv_cvae_forward.23} parent=5 // pred_check_branch
        %196 = sbr.rel (%p193) target = $region51
      $region50: #{conv_cvae_forward.23} parent=5 // pred_region
        %s197 = ssub.s32 %s11, 1
        %s198 = sand.u32 %s24, 1
        %s199 = sand.u32 %s24, 1
        %s200 = smul.addr %s199, 144
        %s201 = scalar_lea.vmem [#allocation3], %s200
        // Predicated region
        $region52: #{conv_cvae_forward.23} parent=50 // pred_check
          %p202 = pneg %p37
        $region53: #{conv_cvae_forward.23} parent=50 // pred_check_branch
          %204 = sbr.rel (%p202) target = $region55
        $region54: #{conv_cvae_forward.23} parent=50 // pred_region
          _
        $region55: #{conv_cvae_forward.23} parent=50 // pred_fallthru
          _
        %s205 = sand.u32 %s24, 1
        %s206 = sand.u32 %s24, 1
        %s207 = smul.addr %s206, 144
        %s208 = scalar_lea.vmem [#allocation3], %s207
        %p209 = pneg %p37
        %p210 = pneg %p34
        %p211 = pneg %p58
        %p212 = pneg %p55
        %p213 = pneg %p79
        %p214 = pneg %p76
        %p215 = pneg %p105
        %p216 = pneg %p102
        %s217 = smul.u32 4, %s16
        %p218 = scmp.lt.s32.totalorder %s217, 15
        %s219 = scalar_select %p218, %s217, 15
        %s220 = scalar_lea.vmem %s3, %s219
        %s221 = smul.u32 4, %s16
        %s222 = smul.u32 4, %s16
        %p223 = scmp.lt.s32.totalorder %s222, 15
        %s224 = scalar_select %p223, %s222, 15
        %s225 = scalar_lea.vmem %s3, %s224
        %s226 = smul.u32 4, %s16
        %v228 = vld [vmem:[%s1] sm:$0x1]
        %v229 = vld [vmem:[%s201] sm:$0xff]
        %v230 = vld [vmem:[%s201 + $0x8] sm:$0xff]
        %v231 = vld [vmem:[%s201 + $0x10] sm:$0xff]
        %v232 = vld [vmem:[%s201 + $0x18] sm:$0xff]
        %v233 = vld [vmem:[%s201 + $0x20] sm:$0xff]
        %v234 = vld [vmem:[%s201 + $0x28] sm:$0xff]
        %v235 = vld [vmem:[%s201 + $0x30] sm:$0xff]
        %v236 = vld [vmem:[%s201 + $0x38] sm:$0xff]
        %v237 = vld [vmem:[%s201 + $0x40] sm:$0xff]
        %v238 = vld [vmem:[%s201 + $0x48] sm:$0xff]
        %v239 = vld [vmem:[%s201 + $0x50] sm:$0xff]
        %v240 = vld [vmem:[%s201 + $0x58] sm:$0xff]
        %v241 = vld [vmem:[%s201 + $0x60] sm:$0xff]
        %v242 = vld [vmem:[%s201 + $0x68] sm:$0xff]
        %v243 = vld [vmem:[%s201 + $0x70] sm:$0xff]
        %v244 = vld [vmem:[%s201 + $0x78] sm:$0xff]
        %v245 = vld [vmem:[%s201 + $0x80] sm:$0xff]
        %v246 = vld [vmem:[%s201 + $0x88] sm:$0xff]
        %v247 = vld [vmem:[#allocation2] sm:$0x1]
        %249 = vset.pattern.permute.xlu0 0
        %250 = vperm.xlu0 %249, %v247
        %v251 = vpop.permute.xlu0 %250
        %v253 = vlaneseq
        %v254 = vshrl.u32 %v253, 7
        %v255 = vsub.s32 0, %v254
        %v256 = vrot.slane %v251, %v255
        %v275 = vunpack.c.l.b16 %v229
        %v276 = vunpack.c.h.b16 %v229
        %v277 = vunpack.c.l.b16 %v230
        %v278 = vunpack.c.h.b16 %v230
        %v279 = vunpack.c.l.b16 %v231
        %v280 = vunpack.c.h.b16 %v231
        %v281 = vunpack.c.l.b16 %v232
        %v282 = vunpack.c.h.b16 %v232
        %v283 = vunpack.c.l.b16 %v233
        %v284 = vunpack.c.h.b16 %v233
        %v285 = vunpack.c.l.b16 %v234
        %v286 = vunpack.c.h.b16 %v234
        %v287 = vunpack.c.l.b16 %v235
        %v288 = vunpack.c.h.b16 %v235
        %v289 = vunpack.c.l.b16 %v236
        %v290 = vunpack.c.h.b16 %v236
        %v291 = vunpack.c.l.b16 %v237
        %v292 = vunpack.c.h.b16 %v237
        %v293 = vunpack.c.l.b16 %v238
        %v294 = vunpack.c.h.b16 %v238
        %v295 = vunpack.c.l.b16 %v239
        %v296 = vunpack.c.h.b16 %v239
        %v297 = vunpack.c.l.b16 %v240
        %v298 = vunpack.c.h.b16 %v240
        %v299 = vunpack.c.l.b16 %v241
        %v300 = vunpack.c.h.b16 %v241
        %v301 = vunpack.c.l.b16 %v242
        %v302 = vunpack.c.h.b16 %v242
        %v303 = vunpack.c.l.b16 %v243
        %v304 = vunpack.c.h.b16 %v243
        %v305 = vunpack.c.l.b16 %v244
        %v306 = vunpack.c.h.b16 %v244
        %v307 = vunpack.c.l.b16 %v245
        %v308 = vunpack.c.h.b16 %v245
        %v309 = vunpack.c.l.b16 %v246
        %v310 = vunpack.c.h.b16 %v246
        %v311 = vpack.c.b16 %v279, %v275
        %v312 = vpack.c.b16 %v280, %v276
        %v313 = vpack.c.b16 %v281, %v277
        %v314 = vpack.c.b16 %v282, %v278
        %v315 = vpack.c.b16 %v287, %v283
        %v316 = vpack.c.b16 %v288, %v284
        %v317 = vpack.c.b16 %v289, %v285
        %v318 = vpack.c.b16 %v290, %v286
        %v319 = vpack.c.b16 %v295, %v291
        %v320 = vpack.c.b16 %v296, %v292
        %v321 = vpack.c.b16 %v297, %v293
        %v322 = vpack.c.b16 %v298, %v294
        %v323 = vpack.c.b16 %v303, %v299
        %v324 = vpack.c.b16 %v304, %v300
        %v325 = vpack.c.b16 %v305, %v301
        %v326 = vpack.c.b16 %v306, %v302
        %v327 = vpack.c.b16 %v307, %v307
        %v328 = vpack.c.b16 %v308, %v308
        %v329 = vpack.c.b16 %v309, %v309
        %v330 = vpack.c.b16 %v310, %v310
        %vm347 = vcmask 588800
        %v349 = vsel %vm347, %v228, 0
        %vm351 = vcmask 1043456
        %v353 = vsel %vm351, %v327, 0
        %v356 = vsel %vm351, %v328, 0
        %v359 = vsel %vm351, %v329, 0
        %v362 = vsel %vm351, %v330, 0
        %364 = vmatprep.subr.bf16.mxu0 %v312
        %365 = vmatpush1.bf16.msra.mxu0 %v311
        %366 = vmatprep.subr.bf16.mxu0 %v316
        %367 = vmatpush1.bf16.msra.mxu0 %v315
        %368 = vmatprep.subr.bf16.mxu0 %v320
        %369 = vmatpush1.bf16.msra.mxu0 %v319
        %370 = vmatprep.subr.bf16.mxu0 %v324
        %371 = vmatpush1.bf16.msra.mxu0 %v323
        %372 = vmatprep.subr.bf16.mxu0 %v356
        %373 = vmatpush1.bf16.msra.mxu0 %v353
        %374 = vmatprep.subr.bf16.mxu0 0
        %375 = vmatpush1.bf16.msra.mxu0 0
        %376 = vmatprep.subr.bf16.mxu0 0
        %377 = vmatpush1.bf16.msra.mxu0 0
        %378 = vmatprep.subr.bf16.mxu0 0
        %379 = vmatpush1.bf16.msra.mxu0 0
        %380 = vmatprep.subr.bf16.mxu0 0
        %381 = vmatpush1.bf16.msra.mxu0 0
        %382 = vmatprep.subr.bf16.mxu0 0
        %383 = vmatpush1.bf16.msra.mxu0 0
        %384 = vmatprep.subr.bf16.mxu0 0
        %385 = vmatpush1.bf16.msra.mxu0 0
        %386 = vmatprep.subr.bf16.mxu0 0
        %387 = vmatpush1.bf16.msra.mxu0 0
        %388 = vmatprep.subr.bf16.mxu0 0
        %389 = vmatpush1.bf16.msra.mxu0 0
        %390 = vmatprep.subr.bf16.mxu0 0
        %391 = vmatpush1.bf16.msra.mxu0 0
        %392 = vmatprep.subr.bf16.mxu0 0
        %393 = vmatpush1.bf16.msra.mxu0 0
        %394 = vmatprep.subr.bf16.mxu0 0
        %395 = vmatpush1.bf16.msra.mxu0 0
        %396 = vmatprep.mubr.bf16.mxu0 0
        %397 = vmatmul.mubr.bf16.gmra.mrb[0].mxu0 %v349
        %v398 = vpop.f32.mrb[0].mxu0
        %v399 = vadd.f32 %v256, %v398
        %v400 = vpop.f32.mrb[0].mxu0
        %v401 = vadd.f32 %v256, %v400
        %v402 = vpop.f32.mrb[0].mxu0
        %v403 = vpop.f32.mrb[0].mxu0
        %404 = vdwg.mxu0
        %405 = vmatprep.subr.bf16.mxu0 %v314
        %406 = vmatpush1.bf16.msra.mxu0 %v313
        %407 = vmatprep.subr.bf16.mxu0 %v318
        %408 = vmatpush1.bf16.msra.mxu0 %v317
        %409 = vmatprep.subr.bf16.mxu0 %v322
        %410 = vmatpush1.bf16.msra.mxu0 %v321
        %411 = vmatprep.subr.bf16.mxu0 %v326
        %412 = vmatpush1.bf16.msra.mxu0 %v325
        %413 = vmatprep.subr.bf16.mxu0 %v362
        %414 = vmatpush1.bf16.msra.mxu0 %v359
        %415 = vmatprep.subr.bf16.mxu0 0
        %416 = vmatpush1.bf16.msra.mxu0 0
        %417 = vmatprep.subr.bf16.mxu0 0
        %418 = vmatpush1.bf16.msra.mxu0 0
        %419 = vmatprep.subr.bf16.mxu0 0
        %420 = vmatpush1.bf16.msra.mxu0 0
        %421 = vmatprep.subr.bf16.mxu0 0
        %422 = vmatpush1.bf16.msra.mxu0 0
        %423 = vmatprep.subr.bf16.mxu0 0
        %424 = vmatpush1.bf16.msra.mxu0 0
        %425 = vmatprep.subr.bf16.mxu0 0
        %426 = vmatpush1.bf16.msra.mxu0 0
        %427 = vmatprep.subr.bf16.mxu0 0
        %428 = vmatpush1.bf16.msra.mxu0 0
        %429 = vmatprep.subr.bf16.mxu0 0
        %430 = vmatpush1.bf16.msra.mxu0 0
        %431 = vmatprep.subr.bf16.mxu0 0
        %432 = vmatpush1.bf16.msra.mxu0 0
        %433 = vmatprep.subr.bf16.mxu0 0
        %434 = vmatpush1.bf16.msra.mxu0 0
        %435 = vmatprep.subr.bf16.mxu0 0
        %436 = vmatpush1.bf16.msra.mxu0 0
        %437 = vmatprep.mubr.bf16.mxu0 0
        %438 = vmatmul.mubr.bf16.gmra.mrb[0].mxu0 %v349
        %v439 = vpop.f32.mrb[0].mxu0
        %v440 = vadd.f32 %v256, %v439
        %v441 = vpop.f32.mrb[0].mxu0
        %v442 = vadd.f32 %v256, %v441
        %v443 = vpop.f32.mrb[0].mxu0
        %v444 = vpop.f32.mrb[0].mxu0
        %445 = vdwg.mxu0
        %v446 = vtanh.pop %v399
        %v447 = vtanh.pop %v401
        %v448 = vtanh.pop %v440
        %v449 = vtanh.pop %v442
        %v454 = vcombine.low %v446, %v447
        %v455 = vcombine.low %v448, %v449
        %v457 = vunpack.c.l.s4 1966171168
        %v458 = vunpack.c.0.s8 %v457
        %v459 = vlaneseq
        %v460 = vshrl.u32 %v459, 7
        %v461 = vsub.s32 %v458, %v460
        %v462 = vrot.slane %v454, %v461
        %v464 = vunpack.c.l.s4 1966171168
        %v465 = vunpack.c.0.s8 %v464
        %v466 = vlaneseq
        %v467 = vshrl.u32 %v466, 7
        %v468 = vsub.s32 %v465, %v467
        %v469 = vrot.slane %v455, %v468
        %v470 = vcombine.low %v462, %v469
        %v472 = vunpack.c.l.s4 1966171168
        %v473 = vunpack.c.0.s8 %v472
        %v474 = vlaneseq
        %v475 = vshrl.u32 %v474, 7
        %v476 = vsub.s32 %v473, %v475
        %v477 = vrot.slane %v470, %v476
        %v479 = vlaneseq
        %vm480 = vcmp.ge.s32.totalorder %v479, 0
        %vm481 = vcmp.lt.s32.totalorder %v479, 512
        %vm482 = vmand %vm480, %vm481
        %483 = vst.msk [vmem:[%s225] sm:$0xf] %vm482, %v477
        %s484 = smul.u32 4, %s16
        %p485 = scmp.lt.s32.totalorder %s484, 15
        %s486 = scalar_select %p485, %s484, 15
        %s487 = scalar_lea.vmem %s3, %s486
        // Predicated region
        $region56: #{conv_cvae_forward.23} parent=50 // pred_check
          %p488 = pneg %p102
        $region57: #{conv_cvae_forward.23} parent=50 // pred_check_branch
          %490 = sbr.rel (%p488) target = $region59
        $region58: #{conv_cvae_forward.23} parent=50 // pred_region
          %s491 = smul.u32 4, %s16
        $region59: #{conv_cvae_forward.23} parent=50 // pred_fallthru
          _
      $region51: #{conv_cvae_forward.23} parent=5 // pred_fallthru
        _
      %p492 = scmp.le.s32.totalorder 2, %s11
      // Predicated region
      $region60: #{conv_cvae_forward.23} parent=5 // pred_check
        %p493 = pneg %p492
      $region61: #{conv_cvae_forward.23} parent=5 // pred_check_branch
        %495 = sbr.rel (%p493) target = $region63
      $region62: #{conv_cvae_forward.23} parent=5 // pred_region
        %s496 = ssub.s32 %s11, 2
        // Predicated region
        $region64: #{conv_cvae_forward.23} parent=62 // pred_check
          %p497 = pneg %p108
        $region65: #{conv_cvae_forward.23} parent=62 // pred_check_branch
          %499 = sbr.rel (%p497) target = $region67
        $region66: #{conv_cvae_forward.23} parent=62 // pred_region
          %s500 = smul.u32 4, %s17
          %p501 = scmp.lt.s32.totalorder %s500, 15
          %s502 = scalar_select %p501, %s500, 15
          %s503 = scalar_lea.vmem %s3, %s502
        $region67: #{conv_cvae_forward.23} parent=62 // pred_fallthru
          _
      $region63: #{conv_cvae_forward.23} parent=5 // pred_fallthru
        _
    $region6: #{conv_cvae_forward.23} parent=1 // loop_footer
      %s15 = sadd.s32 1, %s11
    $region7: #{conv_cvae_forward.23} parent=1 // loop_footer_branch
      %10 = sbr.rel target = $region3
    $region8: #{conv_cvae_forward.23} parent=1 // loop_exit
      _

</llo_original>
